<compile_context>
chip_gen: v7x
topology: tpu7x:2x2x1
jax: 0.10.0
libtpu: 0.0.40
codegen_flags: <defaults>
</compile_context>

<pallas_src>
import functools

import jax
import jax.numpy as jnp
from jax.experimental import pallas as pl
from jax.experimental.pallas import tpu as pltpu

# ---- model hyper-parameters (small, shape-consistent with the module) ----
VOCAB_SIZE = 65
VOCAB_PAD = 128            # token-embedding table rows padded (never indexed past vocab)
N_EMBED = 128              # lane-dense residual stream
N_HEAD = 4
HEAD_SIZE = N_EMBED // N_HEAD
FF_DIM = 4 * N_EMBED
CONTEXT_LENGTH = 16
N_LAYER = 2
LN_EPS = 1e-5
LM_PAD = 128               # lm_head padded vocab 65 -> 128 lanes (lane-dense store)
NVEC = 6 * N_LAYER + 3     # packed 1-D params: per-layer 6 rows + lnf_g/lnf_b/lm_b

assert LM_PAD == N_EMBED   # lm_b shares the packed (NVEC, 128) vector array


# ------------------------------ fused kernel ------------------------------

def _layernorm(x, gamma, beta):
    mean = jnp.mean(x, axis=-1, keepdims=True)
    var = jnp.mean(jnp.square(x - mean), axis=-1, keepdims=True)
    return (x - mean) * jax.lax.rsqrt(var + LN_EPS) * gamma + beta


def _model_kernel(idx_ref,                      # SMEM scalar prefetch: (B, T) int32
                  tok_ref, pos_ref,             # embedding tables (f32, VMEM)
                  wqkv_ref, wo_ref,             # attention weights (bf16)
                  w1_ref, w2_ref, b1_ref,       # FFN weights (bf16) + bias (f32)
                  vecs_ref, lmw_ref,            # packed 1-D params (f32), lm_head (bf16)
                  o_ref,                        # (T, LM_PAD) output block (f32)
                  x_scratch,                    # (T, C) f32 scratch
                  *, seqlen):
    b = pl.program_id(0)
    T = seqlen
    C = N_EMBED

    # ---- fused token + position embedding gather (idx read from SMEM) ----
    for t in range(T):                          # T small & static -> unrolled
        tok = idx_ref[b, t]
        x_scratch[pl.ds(t, 1), :] = (tok_ref[pl.ds(tok, 1), :]
                                     + pos_ref[pl.ds(t, 1), :])
    x = x_scratch[...]                          # (T, C) f32 residual stream

    # Additive causal bias, computed once (hoisted out of layer/head loops).
    row = jax.lax.broadcasted_iota(jnp.int32, (T, T), 0)
    col = jax.lax.broadcasted_iota(jnp.int32, (T, T), 1)
    causal_bias = jnp.where(col <= row, 0.0, -1e30).astype(jnp.float32)

    for l in range(N_LAYER):
        base = 6 * l
        g1 = vecs_ref[pl.ds(base + 0, 1), :]
        be1 = vecs_ref[pl.ds(base + 1, 1), :]
        g2 = vecs_ref[pl.ds(base + 2, 1), :]
        be2 = vecs_ref[pl.ds(base + 3, 1), :]
        bo = vecs_ref[pl.ds(base + 4, 1), :]    # attention proj bias
        b2 = vecs_ref[pl.ds(base + 5, 1), :]    # FFN second linear bias

        # ---------------- multi-head self-attention (pre-LN, residual) ------
        h16 = _layernorm(x, g1, be1).astype(jnp.bfloat16)   # bf16 MXU operand
        sa = jnp.zeros((T, C), jnp.float32)
        for hh in range(N_HEAD):
            # Per-head q/k/v from their own matmuls: no lane slicing/concat.
            q = jnp.dot(h16, wqkv_ref[l, 0, hh], preferred_element_type=jnp.float32)
            k = jnp.dot(h16, wqkv_ref[l, 1, hh], preferred_element_type=jnp.float32)
            v = jnp.dot(h16, wqkv_ref[l, 2, hh], preferred_element_type=jnp.float32)
            # Scale (n_embed**-0.5, as in the reference) is folded into wq.
            s = jnp.einsum("td,sd->ts",
                           q.astype(jnp.bfloat16), k.astype(jnp.bfloat16),
                           preferred_element_type=jnp.float32) + causal_bias
            s = s - jnp.max(s, axis=-1, keepdims=True)
            e = jnp.exp(s)                                   # EUP
            p = e * pl.reciprocal(jnp.sum(e, axis=-1, keepdims=True), approx=True)
            att = jnp.dot(p.astype(jnp.bfloat16), v.astype(jnp.bfloat16),
                          preferred_element_type=jnp.float32)            # (T, HS)
            # Accumulate att_h @ wo_h instead of lane-concat + single proj.
            sa = sa + jnp.dot(att.astype(jnp.bfloat16), wo_ref[l, hh],
                              preferred_element_type=jnp.float32)        # (T, C)
        x = x + sa + bo                          # dropout = identity (eval)

        # ---------------- feed-forward (pre-LN, residual) -------------------
        h2 = _layernorm(x, g2, be2).astype(jnp.bfloat16)
        f = jnp.dot(h2, w1_ref[l], preferred_element_type=jnp.float32) + b1_ref[l]
        f = jnp.maximum(f, 0.0)
        f = jnp.dot(f.astype(jnp.bfloat16), w2_ref[l],
                    preferred_element_type=jnp.float32) + b2
        x = x + f                                # dropout = identity (eval)

    # -------------------- final LN + lm_head (lane-dense store) ------------
    gf = vecs_ref[pl.ds(6 * N_LAYER + 0, 1), :]
    bf = vecs_ref[pl.ds(6 * N_LAYER + 1, 1), :]
    lmb = vecs_ref[pl.ds(6 * N_LAYER + 2, 1), :]
    xf = _layernorm(x, gf, bf).astype(jnp.bfloat16)
    logits = jnp.dot(xf, lmw_ref[...], preferred_element_type=jnp.float32) + lmb
    o_ref[...] = logits.astype(o_ref.dtype)      # single lane-dense (T, 128) store


# ---------------------------- pallas wrapper -------------------------------

def fused_forward(idx, params, *, seqlen):
    B, T = idx.shape
    assert T == seqlen and T <= CONTEXT_LENGTH
    C = N_EMBED

    weight_inputs = (params["tok_emb"], params["pos_emb"], params["wqkv"],
                     params["wo"], params["w1"], params["w2"], params["b1"],
                     params["vecs"], params["lm_w"])

    def full_spec(shape):
        zeros = (0,) * len(shape)
        # index_map receives (grid index, prefetch ref); same block every step.
        return pl.BlockSpec(shape, lambda b, idx_ref, z=zeros: z)

    grid_spec = pltpu.PrefetchScalarGridSpec(
        num_scalar_prefetch=1,
        grid=(B,),
        in_specs=[full_spec(a.shape) for a in weight_inputs],
        out_specs=pl.BlockSpec((None, T, LM_PAD), lambda b, idx_ref: (b, 0, 0)),
        scratch_shapes=[pltpu.VMEM((T, C), jnp.float32)],
    )

    per_layer_flops = (2 * T * C * (3 * C)          # q/k/v projections (all heads)
                       + 4 * T * T * C              # scores + prob @ v
                       + 2 * T * C * C              # output projection
                       + 2 * (2 * T * C * FF_DIM))  # FFN
    flops = B * (N_LAYER * per_layer_flops + 2 * T * C * LM_PAD)
    transcendentals = B * (N_LAYER * N_HEAD * T * T      # exp
                           + (2 * N_LAYER + 1) * T       # LN rsqrt
                           + N_LAYER * N_HEAD * T)       # softmax reciprocal
    bytes_accessed = (int(idx.size) * 4 + B * T * LM_PAD * 4
                      + sum(int(a.size) * a.dtype.itemsize for a in weight_inputs))

    return pl.pallas_call(
        functools.partial(_model_kernel, seqlen=T),
        grid_spec=grid_spec,
        out_shape=jax.ShapeDtypeStruct((B, T, LM_PAD), jnp.float32),
        compiler_params=pltpu.CompilerParams(
            dimension_semantics=("parallel",)),          # batch axis -> megacore
        cost_estimate=pl.CostEstimate(flops=flops,
                                      transcendentals=transcendentals,
                                      bytes_accessed=bytes_accessed),
    )(idx, *weight_inputs)


# ------------------------------ parameters ---------------------------------

def init_params(key):
    def nrm(k, shape, scale=0.02):
        return (scale * jax.random.normal(k, shape)).astype(jnp.float32)

    keys = iter(jax.random.split(key, 9 * N_LAYER + 4))
    attn_scale = float(N_EMBED) ** -0.5    # reference: wei = q @ k.T * C**-0.5

    wqkv, wo, w1, b1, w2 = [], [], [], [], []
    vec_rows = []
    for _ in range(N_LAYER):
        # Per-head Linear(n_embed, head_size, bias=False) weights, head-major.
        # attn_scale is folded into the query weights (mathematically identical).
        wq = nrm(next(keys), (N_HEAD, N_EMBED, HEAD_SIZE)) * attn_scale
        wk = nrm(next(keys), (N_HEAD, N_EMBED, HEAD_SIZE))
        wv = nrm(next(keys), (N_HEAD, N_EMBED, HEAD_SIZE))
        wqkv.append(jnp.stack([wq, wk, wv], axis=0))          # (3, H, C, HS)
        # Output projection (C, C), split head-major along its input dim so
        # concat(heads) @ W == sum_h att_h @ W[h].
        wo_full = nrm(next(keys), (N_EMBED, N_EMBED))
        wo.append(wo_full.reshape(N_HEAD, HEAD_SIZE, N_EMBED))  # (H, HS, C)
        bo = nrm(next(keys), (N_EMBED,), 0.01)
        w1.append(nrm(next(keys), (N_EMBED, FF_DIM)))
        b1.append(nrm(next(keys), (1, FF_DIM), 0.01))
        w2.append(nrm(next(keys), (FF_DIM, N_EMBED)))
        b2 = nrm(next(keys), (N_EMBED,), 0.01)
        ln1_g = jnp.ones((N_EMBED,), jnp.float32)
        ln1_b = jnp.zeros((N_EMBED,), jnp.float32)
        ln2_g = jnp.ones((N_EMBED,), jnp.float32)
        ln2_b = jnp.zeros((N_EMBED,), jnp.float32)
        vec_rows += [ln1_g, ln1_b, ln2_g, ln2_b, bo, b2]

    # lm_head padded to 128 lanes (real vocab = 65); bias row shares vecs.
    lm_w = nrm(next(keys), (N_EMBED, VOCAB_SIZE))
    lm_w_pad = jnp.zeros((N_EMBED, LM_PAD), jnp.float32).at[:, :VOCAB_SIZE].set(lm_w)
    lm_b = nrm(next(keys), (VOCAB_SIZE,), 0.01)
    lm_b_pad = jnp.zeros((LM_PAD,), jnp.float32).at[:VOCAB_SIZE].set(lm_b)
    vec_rows += [jnp.ones((N_EMBED,), jnp.float32),
                 jnp.zeros((N_EMBED,), jnp.float32),
                 lm_b_pad]

    tok = nrm(next(keys), (VOCAB_SIZE, N_EMBED))
    tok_pad = jnp.zeros((VOCAB_PAD, N_EMBED), jnp.float32).at[:VOCAB_SIZE].set(tok)
    pos = nrm(next(keys), (CONTEXT_LENGTH, N_EMBED))

    return {
        "tok_emb": tok_pad,                                   # (VOCAB_PAD, C) f32
        "pos_emb": pos,                                       # (CTX, C) f32
        "wqkv": jnp.stack(wqkv).astype(jnp.bfloat16),         # (L, 3, H, C, HS)
        "wo": jnp.stack(wo).astype(jnp.bfloat16),             # (L, H, HS, C)
        "w1": jnp.stack(w1).astype(jnp.bfloat16),             # (L, C, 4C)
        "w2": jnp.stack(w2).astype(jnp.bfloat16),             # (L, 4C, C)
        "b1": jnp.stack(b1),                                  # (L, 1, 4C) f32
        "vecs": jnp.stack(vec_rows),                          # (6L+3, 128) f32
        "lm_w": lm_w_pad.astype(jnp.bfloat16),                # (C, 128)
    }


# ------------------------------- forward -----------------------------------

def transformer_forward(params, idx):
    B, T = idx.shape
    logits_padded = fused_forward(idx, params, seqlen=T)      # (B, T, 128)
    logits = logits_padded[..., :VOCAB_SIZE]                  # real vocab slice
    # TODO(synk): cross-entropy loss path (targets is not None) not implemented;
    # forward returns logits only (matches targets=None reference path).
    return logits


# --------------------------------- main -------------------------------------

if __name__ == "__main__":
    key = jax.random.PRNGKey(0)
    pkey, ikey = jax.random.split(key)
    params = init_params(pkey)

    B, T = 2, 8
    idx = jax.random.randint(ikey, (B, T), 0, VOCAB_SIZE, dtype=jnp.int32)

    fwd = jax.jit(transformer_forward)
    logits = fwd(params, idx)
    jax.block_until_ready(logits)
    assert logits.shape == (B, T, VOCAB_SIZE)
    assert bool(jnp.all(jnp.isfinite(logits)))
    print("KERNEL_OK")
</pallas_src>

<mosaic_0001>
module attributes {stable_mosaic.version = 11 : i64} {
  func.func @_model_kernel(%arg0: i32, %arg1: memref<2x8xi32, #tpu.memory_space<smem>>, %arg2: memref<128x128xf32, #tpu.memory_space<vmem>>, %arg3: memref<16x128xf32, #tpu.memory_space<vmem>>, %arg4: memref<2x3x4x128x32xbf16, #tpu.memory_space<vmem>>, %arg5: memref<2x4x32x128xbf16, #tpu.memory_space<vmem>>, %arg6: memref<2x128x512xbf16, #tpu.memory_space<vmem>>, %arg7: memref<2x512x128xbf16, #tpu.memory_space<vmem>>, %arg8: memref<2x1x512xf32, #tpu.memory_space<vmem>>, %arg9: memref<15x128xf32, #tpu.memory_space<vmem>>, %arg10: memref<128x128xbf16, #tpu.memory_space<vmem>>, %arg11: memref<1x8x128xf32, #tpu.memory_space<vmem>>, %arg12: memref<8x128xf32, #tpu.memory_space<vmem>>) attributes {dimension_semantics = [#tpu.dimension_semantics<parallel>], iteration_bounds = array<i64: 2>, scalar_prefetch = 1 : i64, scratch_operands = 1 : i64, tpu.core_type = #tpu.core_type<tc>, window_params = [{pipeline_mode = #tpu.pipeline_mode<synchronous>, transform_indices = @transform_0, window_bounds = array<i64: 128, 128>}, {pipeline_mode = #tpu.pipeline_mode<synchronous>, transform_indices = @transform_1, window_bounds = array<i64: 16, 128>}, {pipeline_mode = #tpu.pipeline_mode<synchronous>, transform_indices = @transform_2, window_bounds = array<i64: 2, 3, 4, 128, 32>}, {pipeline_mode = #tpu.pipeline_mode<synchronous>, transform_indices = @transform_3, window_bounds = array<i64: 2, 4, 32, 128>}, {pipeline_mode = #tpu.pipeline_mode<synchronous>, transform_indices = @transform_4, window_bounds = array<i64: 2, 128, 512>}, {pipeline_mode = #tpu.pipeline_mode<synchronous>, transform_indices = @transform_5, window_bounds = array<i64: 2, 512, 128>}, {pipeline_mode = #tpu.pipeline_mode<synchronous>, transform_indices = @transform_6, window_bounds = array<i64: 2, 1, 512>}, {pipeline_mode = #tpu.pipeline_mode<synchronous>, transform_indices = @transform_7, window_bounds = array<i64: 15, 128>}, {pipeline_mode = #tpu.pipeline_mode<synchronous>, transform_indices = @transform_8, window_bounds = array<i64: 128, 128>}, {transform_indices = @transform_9, window_bounds = array<i64: 1, 8, 128>}]} {
    %0 = arith.index_cast %arg0 : i32 to index
    %c0 = arith.constant 0 : index
    %1 = memref.load %arg1[%0, %c0] : memref<2x8xi32, #tpu.memory_space<smem>>
    %2 = arith.index_cast %1 : i32 to index
    %c0_0 = arith.constant 0 : index
    %3 = vector.load %arg2[%2, %c0_0] : memref<128x128xf32, #tpu.memory_space<vmem>>, vector<1x128xf32>
    %c0_1 = arith.constant 0 : index
    %c0_2 = arith.constant 0 : index
    %4 = vector.load %arg3[%c0_1, %c0_2] : memref<16x128xf32, #tpu.memory_space<vmem>>, vector<1x128xf32>
    %5 = arith.addf %3, %4 : vector<1x128xf32>
    %c0_3 = arith.constant 0 : index
    %c0_4 = arith.constant 0 : index
    %6 = vector.load %arg12[%c0_3, %c0_4] : memref<8x128xf32, #tpu.memory_space<vmem>>, vector<1x128xf32>
    tpu.vector_store %arg12[%c0_3, %c0_4], %5 {strides = array<i32>} : memref<8x128xf32, #tpu.memory_space<vmem>>, vector<1x128xf32>,
    %7 = arith.index_cast %arg0 : i32 to index
    %c1 = arith.constant 1 : index
    %8 = memref.load %arg1[%7, %c1] : memref<2x8xi32, #tpu.memory_space<smem>>
    %9 = arith.index_cast %8 : i32 to index
    %c0_5 = arith.constant 0 : index
    %10 = vector.load %arg2[%9, %c0_5] : memref<128x128xf32, #tpu.memory_space<vmem>>, vector<1x128xf32>
    %c1_6 = arith.constant 1 : index
    %c0_7 = arith.constant 0 : index
    %11 = vector.load %arg3[%c1_6, %c0_7] : memref<16x128xf32, #tpu.memory_space<vmem>>, vector<1x128xf32>
    %12 = arith.addf %10, %11 : vector<1x128xf32>
    %c1_8 = arith.constant 1 : index
    %c0_9 = arith.constant 0 : index
    %13 = vector.load %arg12[%c1_8, %c0_9] : memref<8x128xf32, #tpu.memory_space<vmem>>, vector<1x128xf32>
    tpu.vector_store %arg12[%c1_8, %c0_9], %12 {strides = array<i32>} : memref<8x128xf32, #tpu.memory_space<vmem>>, vector<1x128xf32>,
    %14 = arith.index_cast %arg0 : i32 to index
    %c2 = arith.constant 2 : index
    %15 = memref.load %arg1[%14, %c2] : memref<2x8xi32, #tpu.memory_space<smem>>
    %16 = arith.index_cast %15 : i32 to index
    %c0_10 = arith.constant 0 : index
    %17 = vector.load %arg2[%16, %c0_10] : memref<128x128xf32, #tpu.memory_space<vmem>>, vector<1x128xf32>
    %c2_11 = arith.constant 2 : index
    %c0_12 = arith.constant 0 : index
    %18 = vector.load %arg3[%c2_11, %c0_12] : memref<16x128xf32, #tpu.memory_space<vmem>>, vector<1x128xf32>
    %19 = arith.addf %17, %18 : vector<1x128xf32>
    %c2_13 = arith.constant 2 : index
    %c0_14 = arith.constant 0 : index
    %20 = vector.load %arg12[%c2_13, %c0_14] : memref<8x128xf32, #tpu.memory_space<vmem>>, vector<1x128xf32>
    tpu.vector_store %arg12[%c2_13, %c0_14], %19 {strides = array<i32>} : memref<8x128xf32, #tpu.memory_space<vmem>>, vector<1x128xf32>,
    %21 = arith.index_cast %arg0 : i32 to index
    %c3 = arith.constant 3 : index
    %22 = memref.load %arg1[%21, %c3] : memref<2x8xi32, #tpu.memory_space<smem>>
    %23 = arith.index_cast %22 : i32 to index
    %c0_15 = arith.constant 0 : index
    %24 = vector.load %arg2[%23, %c0_15] : memref<128x128xf32, #tpu.memory_space<vmem>>, vector<1x128xf32>
    %c3_16 = arith.constant 3 : index
    %c0_17 = arith.constant 0 : index
    %25 = vector.load %arg3[%c3_16, %c0_17] : memref<16x128xf32, #tpu.memory_space<vmem>>, vector<1x128xf32>
    %26 = arith.addf %24, %25 : vector<1x128xf32>
    %c3_18 = arith.constant 3 : index
    %c0_19 = arith.constant 0 : index
    %27 = vector.load %arg12[%c3_18, %c0_19] : memref<8x128xf32, #tpu.memory_space<vmem>>, vector<1x128xf32>
    tpu.vector_store %arg12[%c3_18, %c0_19], %26 {strides = array<i32>} : memref<8x128xf32, #tpu.memory_space<vmem>>, vector<1x128xf32>,
    %28 = arith.index_cast %arg0 : i32 to index
    %c4 = arith.constant 4 : index
    %29 = memref.load %arg1[%28, %c4] : memref<2x8xi32, #tpu.memory_space<smem>>
    %30 = arith.index_cast %29 : i32 to index
    %c0_20 = arith.constant 0 : index
    %31 = vector.load %arg2[%30, %c0_20] : memref<128x128xf32, #tpu.memory_space<vmem>>, vector<1x128xf32>
    %c4_21 = arith.constant 4 : index
    %c0_22 = arith.constant 0 : index
    %32 = vector.load %arg3[%c4_21, %c0_22] : memref<16x128xf32, #tpu.memory_space<vmem>>, vector<1x128xf32>
    %33 = arith.addf %31, %32 : vector<1x128xf32>
    %c4_23 = arith.constant 4 : index
    %c0_24 = arith.constant 0 : index
    %34 = vector.load %arg12[%c4_23, %c0_24] : memref<8x128xf32, #tpu.memory_space<vmem>>, vector<1x128xf32>
    tpu.vector_store %arg12[%c4_23, %c0_24], %33 {strides = array<i32>} : memref<8x128xf32, #tpu.memory_space<vmem>>, vector<1x128xf32>,
    %35 = arith.index_cast %arg0 : i32 to index
    %c5 = arith.constant 5 : index
    %36 = memref.load %arg1[%35, %c5] : memref<2x8xi32, #tpu.memory_space<smem>>
    %37 = arith.index_cast %36 : i32 to index
    %c0_25 = arith.constant 0 : index
    %38 = vector.load %arg2[%37, %c0_25] : memref<128x128xf32, #tpu.memory_space<vmem>>, vector<1x128xf32>
    %c5_26 = arith.constant 5 : index
    %c0_27 = arith.constant 0 : index
    %39 = vector.load %arg3[%c5_26, %c0_27] : memref<16x128xf32, #tpu.memory_space<vmem>>, vector<1x128xf32>
    %40 = arith.addf %38, %39 : vector<1x128xf32>
    %c5_28 = arith.constant 5 : index
    %c0_29 = arith.constant 0 : index
    %41 = vector.load %arg12[%c5_28, %c0_29] : memref<8x128xf32, #tpu.memory_space<vmem>>, vector<1x128xf32>
    tpu.vector_store %arg12[%c5_28, %c0_29], %40 {strides = array<i32>} : memref<8x128xf32, #tpu.memory_space<vmem>>, vector<1x128xf32>,
    %42 = arith.index_cast %arg0 : i32 to index
    %c6 = arith.constant 6 : index
    %43 = memref.load %arg1[%42, %c6] : memref<2x8xi32, #tpu.memory_space<smem>>
    %44 = arith.index_cast %43 : i32 to index
    %c0_30 = arith.constant 0 : index
    %45 = vector.load %arg2[%44, %c0_30] : memref<128x128xf32, #tpu.memory_space<vmem>>, vector<1x128xf32>
    %c6_31 = arith.constant 6 : index
    %c0_32 = arith.constant 0 : index
    %46 = vector.load %arg3[%c6_31, %c0_32] : memref<16x128xf32, #tpu.memory_space<vmem>>, vector<1x128xf32>
    %47 = arith.addf %45, %46 : vector<1x128xf32>
    %c6_33 = arith.constant 6 : index
    %c0_34 = arith.constant 0 : index
    %48 = vector.load %arg12[%c6_33, %c0_34] : memref<8x128xf32, #tpu.memory_space<vmem>>, vector<1x128xf32>
    tpu.vector_store %arg12[%c6_33, %c0_34], %47 {strides = array<i32>} : memref<8x128xf32, #tpu.memory_space<vmem>>, vector<1x128xf32>,
    %49 = arith.index_cast %arg0 : i32 to index
    %c7 = arith.constant 7 : index
    %50 = memref.load %arg1[%49, %c7] : memref<2x8xi32, #tpu.memory_space<smem>>
    %51 = arith.index_cast %50 : i32 to index
    %c0_35 = arith.constant 0 : index
    %52 = vector.load %arg2[%51, %c0_35] : memref<128x128xf32, #tpu.memory_space<vmem>>, vector<1x128xf32>
    %c7_36 = arith.constant 7 : index
    %c0_37 = arith.constant 0 : index
    %53 = vector.load %arg3[%c7_36, %c0_37] : memref<16x128xf32, #tpu.memory_space<vmem>>, vector<1x128xf32>
    %54 = arith.addf %52, %53 : vector<1x128xf32>
    %c7_38 = arith.constant 7 : index
    %c0_39 = arith.constant 0 : index
    %55 = vector.load %arg12[%c7_38, %c0_39] : memref<8x128xf32, #tpu.memory_space<vmem>>, vector<1x128xf32>
    tpu.vector_store %arg12[%c7_38, %c0_39], %54 {strides = array<i32>} : memref<8x128xf32, #tpu.memory_space<vmem>>, vector<1x128xf32>,
    %c0_40 = arith.constant 0 : index
    %c0_41 = arith.constant 0 : index
    %56 = vector.load %arg12[%c0_40, %c0_41] : memref<8x128xf32, #tpu.memory_space<vmem>>, vector<8x128xf32>
    %57 = tpu.iota {dimensions = array<i32: 0>} : vector<8x8xi32>
    %58 = tpu.iota {dimensions = array<i32: 1>} : vector<8x8xi32>
    %59 = arith.cmpi sle, %58, %57 : vector<8x8xi32>
    %cst = arith.constant 0.000000e+00 : f32
    %cst_42 = arith.constant -1.000000e+30 : f32
    %60 = vector.broadcast %cst : f32 to vector<8x8xf32>
    %61 = vector.broadcast %cst_42 : f32 to vector<8x8xf32>
    %62 = arith.select %59, %60, %61 : vector<8x8xi1>, vector<8x8xf32>
    %c0_43 = arith.constant 0 : index
    %c0_44 = arith.constant 0 : index
    %63 = vector.load %arg9[%c0_43, %c0_44] : memref<15x128xf32, #tpu.memory_space<vmem>>, vector<1x128xf32>
    %c1_45 = arith.constant 1 : index
    %c0_46 = arith.constant 0 : index
    %64 = vector.load %arg9[%c1_45, %c0_46] : memref<15x128xf32, #tpu.memory_space<vmem>>, vector<1x128xf32>
    %c2_47 = arith.constant 2 : index
    %c0_48 = arith.constant 0 : index
    %65 = vector.load %arg9[%c2_47, %c0_48] : memref<15x128xf32, #tpu.memory_space<vmem>>, vector<1x128xf32>
    %c3_49 = arith.constant 3 : index
    %c0_50 = arith.constant 0 : index
    %66 = vector.load %arg9[%c3_49, %c0_50] : memref<15x128xf32, #tpu.memory_space<vmem>>, vector<1x128xf32>
    %c4_51 = arith.constant 4 : index
    %c0_52 = arith.constant 0 : index
    %67 = vector.load %arg9[%c4_51, %c0_52] : memref<15x128xf32, #tpu.memory_space<vmem>>, vector<1x128xf32>
    %c5_53 = arith.constant 5 : index
    %c0_54 = arith.constant 0 : index
    %68 = vector.load %arg9[%c5_53, %c0_54] : memref<15x128xf32, #tpu.memory_space<vmem>>, vector<1x128xf32>
    %cst_55 = arith.constant dense<0.000000e+00> : vector<8xf32>
    %69 = vector.multi_reduction <add>, %56, %cst_55 [1] : vector<8x128xf32> to vector<8xf32>
    %70 = vector.shape_cast %69 : vector<8xf32> to vector<8x1xf32>
    %cst_56 = arith.constant 1.280000e+02 : f32
    %71 = vector.broadcast %cst_56 : f32 to vector<8x1xf32>
    %72 = arith.divf %70, %71 : vector<8x1xf32>
    %73 = vector.broadcast %72 : vector<8x1xf32> to vector<8x128xf32>
    %74 = arith.subf %56, %73 : vector<8x128xf32>
    %75 = arith.mulf %74, %74 : vector<8x128xf32>
    %cst_57 = arith.constant dense<0.000000e+00> : vector<8xf32>
    %76 = vector.multi_reduction <add>, %75, %cst_57 [1] : vector<8x128xf32> to vector<8xf32>
    %77 = vector.shape_cast %76 : vector<8xf32> to vector<8x1xf32>
    %cst_58 = arith.constant 1.280000e+02 : f32
    %78 = vector.broadcast %cst_58 : f32 to vector<8x1xf32>
    %79 = arith.divf %77, %78 : vector<8x1xf32>
    %80 = vector.broadcast %72 : vector<8x1xf32> to vector<8x128xf32>
    %81 = arith.subf %56, %80 : vector<8x128xf32>
    %cst_59 = arith.constant 9.99999974E-6 : f32
    %82 = vector.broadcast %cst_59 : f32 to vector<8x1xf32>
    %83 = arith.addf %79, %82 : vector<8x1xf32>
    %84 = math.rsqrt %83 : vector<8x1xf32>
    %85 = vector.broadcast %84 : vector<8x1xf32> to vector<8x128xf32>
    %86 = arith.mulf %81, %85 : vector<8x128xf32>
    %87 = vector.broadcast %63 : vector<1x128xf32> to vector<8x128xf32>
    %88 = arith.mulf %86, %87 : vector<8x128xf32>
    %89 = vector.broadcast %64 : vector<1x128xf32> to vector<8x128xf32>
    %90 = arith.addf %88, %89 : vector<8x128xf32>
    %91 = arith.truncf %90 : vector<8x128xf32> to vector<8x128xbf16>
    %cst_60 = arith.constant 0.000000e+00 : f32
    %92 = vector.broadcast %cst_60 : f32 to vector<8x128xf32>
    %c0_61 = arith.constant 0 : index
    %c0_62 = arith.constant 0 : index
    %c0_63 = arith.constant 0 : index
    %c0_64 = arith.constant 0 : index
    %c0_65 = arith.constant 0 : index
    %93 = vector.load %arg4[%c0_61, %c0_62, %c0_63, %c0_64, %c0_65] : memref<2x3x4x128x32xbf16, #tpu.memory_space<vmem>>, vector<1x1x1x128x32xbf16>
    %94 = vector.shape_cast %93 : vector<1x1x1x128x32xbf16> to vector<128x32xbf16>
    %cst_66 = arith.constant dense<0.000000e+00> : vector<8x32xf32>
    %95 = tpu.matmul %91, %94, %cst_66 {dimension_numbers = #tpu.dot_dimension_numbers<[1], [0], [0], [1], [0, 0, 1, 1], [], []>} : vector<8x128xbf16>, vector<128x32xbf16>, vector<8x32xf32> -> vector<8x32xf32>
    %c0_67 = arith.constant 0 : index
    %c1_68 = arith.constant 1 : index
    %c0_69 = arith.constant 0 : index
    %c0_70 = arith.constant 0 : index
    %c0_71 = arith.constant 0 : index
    %96 = vector.load %arg4[%c0_67, %c1_68, %c0_69, %c0_70, %c0_71] : memref<2x3x4x128x32xbf16, #tpu.memory_space<vmem>>, vector<1x1x1x128x32xbf16>
    %97 = vector.shape_cast %96 : vector<1x1x1x128x32xbf16> to vector<128x32xbf16>
    %cst_72 = arith.constant dense<0.000000e+00> : vector<8x32xf32>
    %98 = tpu.matmul %91, %97, %cst_72 {dimension_numbers = #tpu.dot_dimension_numbers<[1], [0], [0], [1], [0, 0, 1, 1], [], []>} : vector<8x128xbf16>, vector<128x32xbf16>, vector<8x32xf32> -> vector<8x32xf32>
    %c0_73 = arith.constant 0 : index
    %c2_74 = arith.constant 2 : index
    %c0_75 = arith.constant 0 : index
    %c0_76 = arith.constant 0 : index
    %c0_77 = arith.constant 0 : index
    %99 = vector.load %arg4[%c0_73, %c2_74, %c0_75, %c0_76, %c0_77] : memref<2x3x4x128x32xbf16, #tpu.memory_space<vmem>>, vector<1x1x1x128x32xbf16>
    %100 = vector.shape_cast %99 : vector<1x1x1x128x32xbf16> to vector<128x32xbf16>
    %cst_78 = arith.constant dense<0.000000e+00> : vector<8x32xf32>
    %101 = tpu.matmul %91, %100, %cst_78 {dimension_numbers = #tpu.dot_dimension_numbers<[1], [0], [0], [1], [0, 0, 1, 1], [], []>} : vector<8x128xbf16>, vector<128x32xbf16>, vector<8x32xf32> -> vector<8x32xf32>
    %102 = arith.truncf %95 : vector<8x32xf32> to vector<8x32xbf16>
    %103 = arith.truncf %98 : vector<8x32xf32> to vector<8x32xbf16>
    "tpu.trace_start"() <{level = 10 : i32, message = "td,sd->ts"}> : () -> ()
    %cst_79 = arith.constant dense<0.000000e+00> : vector<8x8xf32>
    %104 = tpu.matmul %102, %103, %cst_79 {dimension_numbers = #tpu.dot_dimension_numbers<[1], [1], [0], [0], [0, 0, 1, 0], [], []>} : vector<8x32xbf16>, vector<8x32xbf16>, vector<8x8xf32> -> vector<8x8xf32>
    "tpu.trace_stop"() : () -> ()
    %105 = arith.addf %104, %62 : vector<8x8xf32>
    %cst_80 = arith.constant dense<0xFF800000> : vector<8xf32>
    %106 = vector.multi_reduction <maximumf>, %105, %cst_80 [1] : vector<8x8xf32> to vector<8xf32>
    %107 = vector.shape_cast %106 : vector<8xf32> to vector<8x1xf32>
    %108 = vector.broadcast %107 : vector<8x1xf32> to vector<8x8xf32>
    %109 = arith.subf %105, %108 : vector<8x8xf32>
    %110 = math.exp %109 : vector<8x8xf32>
    %cst_81 = arith.constant dense<0.000000e+00> : vector<8xf32>
    %111 = vector.multi_reduction <add>, %110, %cst_81 [1] : vector<8x8xf32> to vector<8xf32>
    %112 = vector.shape_cast %111 : vector<8xf32> to vector<8x1xf32>
    %113 = tpu.reciprocal %112 {approx = true} : vector<8x1xf32> -> vector<8x1xf32>
    %114 = vector.broadcast %113 : vector<8x1xf32> to vector<8x8xf32>
    %115 = arith.mulf %110, %114 : vector<8x8xf32>
    %116 = arith.truncf %115 : vector<8x8xf32> to vector<8x8xbf16>
    %117 = arith.truncf %101 : vector<8x32xf32> to vector<8x32xbf16>
    %cst_82 = arith.constant dense<0.000000e+00> : vector<8x32xf32>
    %118 = tpu.matmul %116, %117, %cst_82 {dimension_numbers = #tpu.dot_dimension_numbers<[1], [0], [0], [1], [0, 0, 1, 1], [], []>} : vector<8x8xbf16>, vector<8x32xbf16>, vector<8x32xf32> -> vector<8x32xf32>
    %119 = arith.truncf %118 : vector<8x32xf32> to vector<8x32xbf16>
    %c0_83 = arith.constant 0 : index
    %c0_84 = arith.constant 0 : index
    %c0_85 = arith.constant 0 : index
    %c0_86 = arith.constant 0 : index
    %120 = vector.load %arg5[%c0_83, %c0_84, %c0_85, %c0_86] : memref<2x4x32x128xbf16, #tpu.memory_space<vmem>>, vector<1x1x32x128xbf16>
    %121 = vector.shape_cast %120 : vector<1x1x32x128xbf16> to vector<32x128xbf16>
    %cst_87 = arith.constant dense<0.000000e+00> : vector<8x128xf32>
    %122 = tpu.matmul %119, %121, %cst_87 {dimension_numbers = #tpu.dot_dimension_numbers<[1], [0], [0], [1], [0, 0, 1, 1], [], []>} : vector<8x32xbf16>, vector<32x128xbf16>, vector<8x128xf32> -> vector<8x128xf32>
    %123 = arith.addf %92, %122 : vector<8x128xf32>
    %c0_88 = arith.constant 0 : index
    %c0_89 = arith.constant 0 : index
    %c1_90 = arith.constant 1 : index
    %c0_91 = arith.constant 0 : index
    %c0_92 = arith.constant 0 : index
    %124 = vector.load %arg4[%c0_88, %c0_89, %c1_90, %c0_91, %c0_92] : memref<2x3x4x128x32xbf16, #tpu.memory_space<vmem>>, vector<1x1x1x128x32xbf16>
    %125 = vector.shape_cast %124 : vector<1x1x1x128x32xbf16> to vector<128x32xbf16>
    %cst_93 = arith.constant dense<0.000000e+00> : vector<8x32xf32>
    %126 = tpu.matmul %91, %125, %cst_93 {dimension_numbers = #tpu.dot_dimension_numbers<[1], [0], [0], [1], [0, 0, 1, 1], [], []>} : vector<8x128xbf16>, vector<128x32xbf16>, vector<8x32xf32> -> vector<8x32xf32>
    %c0_94 = arith.constant 0 : index
    %c1_95 = arith.constant 1 : index
    %c1_96 = arith.constant 1 : index
    %c0_97 = arith.constant 0 : index
    %c0_98 = arith.constant 0 : index
    %127 = vector.load %arg4[%c0_94, %c1_95, %c1_96, %c0_97, %c0_98] : memref<2x3x4x128x32xbf16, #tpu.memory_space<vmem>>, vector<1x1x1x128x32xbf16>
    %128 = vector.shape_cast %127 : vector<1x1x1x128x32xbf16> to vector<128x32xbf16>
    %cst_99 = arith.constant dense<0.000000e+00> : vector<8x32xf32>
    %129 = tpu.matmul %91, %128, %cst_99 {dimension_numbers = #tpu.dot_dimension_numbers<[1], [0], [0], [1], [0, 0, 1, 1], [], []>} : vector<8x128xbf16>, vector<128x32xbf16>, vector<8x32xf32> -> vector<8x32xf32>
    %c0_100 = arith.constant 0 : index
    %c2_101 = arith.constant 2 : index
    %c1_102 = arith.constant 1 : index
    %c0_103 = arith.constant 0 : index
    %c0_104 = arith.constant 0 : index
    %130 = vector.load %arg4[%c0_100, %c2_101, %c1_102, %c0_103, %c0_104] : memref<2x3x4x128x32xbf16, #tpu.memory_space<vmem>>, vector<1x1x1x128x32xbf16>
    %131 = vector.shape_cast %130 : vector<1x1x1x128x32xbf16> to vector<128x32xbf16>
    %cst_105 = arith.constant dense<0.000000e+00> : vector<8x32xf32>
    %132 = tpu.matmul %91, %131, %cst_105 {dimension_numbers = #tpu.dot_dimension_numbers<[1], [0], [0], [1], [0, 0, 1, 1], [], []>} : vector<8x128xbf16>, vector<128x32xbf16>, vector<8x32xf32> -> vector<8x32xf32>
    %133 = arith.truncf %126 : vector<8x32xf32> to vector<8x32xbf16>
    %134 = arith.truncf %129 : vector<8x32xf32> to vector<8x32xbf16>
    "tpu.trace_start"() <{level = 10 : i32, message = "td,sd->ts"}> : () -> ()
    %cst_106 = arith.constant dense<0.000000e+00> : vector<8x8xf32>
    %135 = tpu.matmul %133, %134, %cst_106 {dimension_numbers = #tpu.dot_dimension_numbers<[1], [1], [0], [0], [0, 0, 1, 0], [], []>} : vector<8x32xbf16>, vector<8x32xbf16>, vector<8x8xf32> -> vector<8x8xf32>
    "tpu.trace_stop"() : () -> ()
    %136 = arith.addf %135, %62 : vector<8x8xf32>
    %cst_107 = arith.constant dense<0xFF800000> : vector<8xf32>
    %137 = vector.multi_reduction <maximumf>, %136, %cst_107 [1] : vector<8x8xf32> to vector<8xf32>
    %138 = vector.shape_cast %137 : vector<8xf32> to vector<8x1xf32>
    %139 = vector.broadcast %138 : vector<8x1xf32> to vector<8x8xf32>
    %140 = arith.subf %136, %139 : vector<8x8xf32>
    %141 = math.exp %140 : vector<8x8xf32>
    %cst_108 = arith.constant dense<0.000000e+00> : vector<8xf32>
    %142 = vector.multi_reduction <add>, %141, %cst_108 [1] : vector<8x8xf32> to vector<8xf32>
    %143 = vector.shape_cast %142 : vector<8xf32> to vector<8x1xf32>
    %144 = tpu.reciprocal %143 {approx = true} : vector<8x1xf32> -> vector<8x1xf32>
    %145 = vector.broadcast %144 : vector<8x1xf32> to vector<8x8xf32>
    %146 = arith.mulf %141, %145 : vector<8x8xf32>
    %147 = arith.truncf %146 : vector<8x8xf32> to vector<8x8xbf16>
    %148 = arith.truncf %132 : vector<8x32xf32> to vector<8x32xbf16>
    %cst_109 = arith.constant dense<0.000000e+00> : vector<8x32xf32>
    %149 = tpu.matmul %147, %148, %cst_109 {dimension_numbers = #tpu.dot_dimension_numbers<[1], [0], [0], [1], [0, 0, 1, 1], [], []>} : vector<8x8xbf16>, vector<8x32xbf16>, vector<8x32xf32> -> vector<8x32xf32>
    %150 = arith.truncf %149 : vector<8x32xf32> to vector<8x32xbf16>
    %c0_110 = arith.constant 0 : index
    %c1_111 = arith.constant 1 : index
    %c0_112 = arith.constant 0 : index
    %c0_113 = arith.constant 0 : index
    %151 = vector.load %arg5[%c0_110, %c1_111, %c0_112, %c0_113] : memref<2x4x32x128xbf16, #tpu.memory_space<vmem>>, vector<1x1x32x128xbf16>
    %152 = vector.shape_cast %151 : vector<1x1x32x128xbf16> to vector<32x128xbf16>
    %cst_114 = arith.constant dense<0.000000e+00> : vector<8x128xf32>
    %153 = tpu.matmul %150, %152, %cst_114 {dimension_numbers = #tpu.dot_dimension_numbers<[1], [0], [0], [1], [0, 0, 1, 1], [], []>} : vector<8x32xbf16>, vector<32x128xbf16>, vector<8x128xf32> -> vector<8x128xf32>
    %154 = arith.addf %123, %153 : vector<8x128xf32>
    %c0_115 = arith.constant 0 : index
    %c0_116 = arith.constant 0 : index
    %c2_117 = arith.constant 2 : index
    %c0_118 = arith.constant 0 : index
    %c0_119 = arith.constant 0 : index
    %155 = vector.load %arg4[%c0_115, %c0_116, %c2_117, %c0_118, %c0_119] : memref<2x3x4x128x32xbf16, #tpu.memory_space<vmem>>, vector<1x1x1x128x32xbf16>
    %156 = vector.shape_cast %155 : vector<1x1x1x128x32xbf16> to vector<128x32xbf16>
    %cst_120 = arith.constant dense<0.000000e+00> : vector<8x32xf32>
    %157 = tpu.matmul %91, %156, %cst_120 {dimension_numbers = #tpu.dot_dimension_numbers<[1], [0], [0], [1], [0, 0, 1, 1], [], []>} : vector<8x128xbf16>, vector<128x32xbf16>, vector<8x32xf32> -> vector<8x32xf32>
    %c0_121 = arith.constant 0 : index
    %c1_122 = arith.constant 1 : index
    %c2_123 = arith.constant 2 : index
    %c0_124 = arith.constant 0 : index
    %c0_125 = arith.constant 0 : index
    %158 = vector.load %arg4[%c0_121, %c1_122, %c2_123, %c0_124, %c0_125] : memref<2x3x4x128x32xbf16, #tpu.memory_space<vmem>>, vector<1x1x1x128x32xbf16>
    %159 = vector.shape_cast %158 : vector<1x1x1x128x32xbf16> to vector<128x32xbf16>
    %cst_126 = arith.constant dense<0.000000e+00> : vector<8x32xf32>
    %160 = tpu.matmul %91, %159, %cst_126 {dimension_numbers = #tpu.dot_dimension_numbers<[1], [0], [0], [1], [0, 0, 1, 1], [], []>} : vector<8x128xbf16>, vector<128x32xbf16>, vector<8x32xf32> -> vector<8x32xf32>
    %c0_127 = arith.constant 0 : index
    %c2_128 = arith.constant 2 : index
    %c2_129 = arith.constant 2 : index
    %c0_130 = arith.constant 0 : index
    %c0_131 = arith.constant 0 : index
    %161 = vector.load %arg4[%c0_127, %c2_128, %c2_129, %c0_130, %c0_131] : memref<2x3x4x128x32xbf16, #tpu.memory_space<vmem>>, vector<1x1x1x128x32xbf16>
    %162 = vector.shape_cast %161 : vector<1x1x1x128x32xbf16> to vector<128x32xbf16>
    %cst_132 = arith.constant dense<0.000000e+00> : vector<8x32xf32>
    %163 = tpu.matmul %91, %162, %cst_132 {dimension_numbers = #tpu.dot_dimension_numbers<[1], [0], [0], [1], [0, 0, 1, 1], [], []>} : vector<8x128xbf16>, vector<128x32xbf16>, vector<8x32xf32> -> vector<8x32xf32>
    %164 = arith.truncf %157 : vector<8x32xf32> to vector<8x32xbf16>
    %165 = arith.truncf %160 : vector<8x32xf32> to vector<8x32xbf16>
    "tpu.trace_start"() <{level = 10 : i32, message = "td,sd->ts"}> : () -> ()
    %cst_133 = arith.constant dense<0.000000e+00> : vector<8x8xf32>
    %166 = tpu.matmul %164, %165, %cst_133 {dimension_numbers = #tpu.dot_dimension_numbers<[1], [1], [0], [0], [0, 0, 1, 0], [], []>} : vector<8x32xbf16>, vector<8x32xbf16>, vector<8x8xf32> -> vector<8x8xf32>
    "tpu.trace_stop"() : () -> ()
    %167 = arith.addf %166, %62 : vector<8x8xf32>
    %cst_134 = arith.constant dense<0xFF800000> : vector<8xf32>
    %168 = vector.multi_reduction <maximumf>, %167, %cst_134 [1] : vector<8x8xf32> to vector<8xf32>
    %169 = vector.shape_cast %168 : vector<8xf32> to vector<8x1xf32>
    %170 = vector.broadcast %169 : vector<8x1xf32> to vector<8x8xf32>
    %171 = arith.subf %167, %170 : vector<8x8xf32>
    %172 = math.exp %171 : vector<8x8xf32>
    %cst_135 = arith.constant dense<0.000000e+00> : vector<8xf32>
    %173 = vector.multi_reduction <add>, %172, %cst_135 [1] : vector<8x8xf32> to vector<8xf32>
    %174 = vector.shape_cast %173 : vector<8xf32> to vector<8x1xf32>
    %175 = tpu.reciprocal %174 {approx = true} : vector<8x1xf32> -> vector<8x1xf32>
    %176 = vector.broadcast %175 : vector<8x1xf32> to vector<8x8xf32>
    %177 = arith.mulf %172, %176 : vector<8x8xf32>
    %178 = arith.truncf %177 : vector<8x8xf32> to vector<8x8xbf16>
    %179 = arith.truncf %163 : vector<8x32xf32> to vector<8x32xbf16>
    %cst_136 = arith.constant dense<0.000000e+00> : vector<8x32xf32>
    %180 = tpu.matmul %178, %179, %cst_136 {dimension_numbers = #tpu.dot_dimension_numbers<[1], [0], [0], [1], [0, 0, 1, 1], [], []>} : vector<8x8xbf16>, vector<8x32xbf16>, vector<8x32xf32> -> vector<8x32xf32>
    %181 = arith.truncf %180 : vector<8x32xf32> to vector<8x32xbf16>
    %c0_137 = arith.constant 0 : index
    %c2_138 = arith.constant 2 : index
    %c0_139 = arith.constant 0 : index
    %c0_140 = arith.constant 0 : index
    %182 = vector.load %arg5[%c0_137, %c2_138, %c0_139, %c0_140] : memref<2x4x32x128xbf16, #tpu.memory_space<vmem>>, vector<1x1x32x128xbf16>
    %183 = vector.shape_cast %182 : vector<1x1x32x128xbf16> to vector<32x128xbf16>
    %cst_141 = arith.constant dense<0.000000e+00> : vector<8x128xf32>
    %184 = tpu.matmul %181, %183, %cst_141 {dimension_numbers = #tpu.dot_dimension_numbers<[1], [0], [0], [1], [0, 0, 1, 1], [], []>} : vector<8x32xbf16>, vector<32x128xbf16>, vector<8x128xf32> -> vector<8x128xf32>
    %185 = arith.addf %154, %184 : vector<8x128xf32>
    %c0_142 = arith.constant 0 : index
    %c0_143 = arith.constant 0 : index
    %c3_144 = arith.constant 3 : index
    %c0_145 = arith.constant 0 : index
    %c0_146 = arith.constant 0 : index
    %186 = vector.load %arg4[%c0_142, %c0_143, %c3_144, %c0_145, %c0_146] : memref<2x3x4x128x32xbf16, #tpu.memory_space<vmem>>, vector<1x1x1x128x32xbf16>
    %187 = vector.shape_cast %186 : vector<1x1x1x128x32xbf16> to vector<128x32xbf16>
    %cst_147 = arith.constant dense<0.000000e+00> : vector<8x32xf32>
    %188 = tpu.matmul %91, %187, %cst_147 {dimension_numbers = #tpu.dot_dimension_numbers<[1], [0], [0], [1], [0, 0, 1, 1], [], []>} : vector<8x128xbf16>, vector<128x32xbf16>, vector<8x32xf32> -> vector<8x32xf32>
    %c0_148 = arith.constant 0 : index
    %c1_149 = arith.constant 1 : index
    %c3_150 = arith.constant 3 : index
    %c0_151 = arith.constant 0 : index
    %c0_152 = arith.constant 0 : index
    %189 = vector.load %arg4[%c0_148, %c1_149, %c3_150, %c0_151, %c0_152] : memref<2x3x4x128x32xbf16, #tpu.memory_space<vmem>>, vector<1x1x1x128x32xbf16>
    %190 = vector.shape_cast %189 : vector<1x1x1x128x32xbf16> to vector<128x32xbf16>
    %cst_153 = arith.constant dense<0.000000e+00> : vector<8x32xf32>
    %191 = tpu.matmul %91, %190, %cst_153 {dimension_numbers = #tpu.dot_dimension_numbers<[1], [0], [0], [1], [0, 0, 1, 1], [], []>} : vector<8x128xbf16>, vector<128x32xbf16>, vector<8x32xf32> -> vector<8x32xf32>
    %c0_154 = arith.constant 0 : index
    %c2_155 = arith.constant 2 : index
    %c3_156 = arith.constant 3 : index
    %c0_157 = arith.constant 0 : index
    %c0_158 = arith.constant 0 : index
    %192 = vector.load %arg4[%c0_154, %c2_155, %c3_156, %c0_157, %c0_158] : memref<2x3x4x128x32xbf16, #tpu.memory_space<vmem>>, vector<1x1x1x128x32xbf16>
    %193 = vector.shape_cast %192 : vector<1x1x1x128x32xbf16> to vector<128x32xbf16>
    %cst_159 = arith.constant dense<0.000000e+00> : vector<8x32xf32>
    %194 = tpu.matmul %91, %193, %cst_159 {dimension_numbers = #tpu.dot_dimension_numbers<[1], [0], [0], [1], [0, 0, 1, 1], [], []>} : vector<8x128xbf16>, vector<128x32xbf16>, vector<8x32xf32> -> vector<8x32xf32>
    %195 = arith.truncf %188 : vector<8x32xf32> to vector<8x32xbf16>
    %196 = arith.truncf %191 : vector<8x32xf32> to vector<8x32xbf16>
    "tpu.trace_start"() <{level = 10 : i32, message = "td,sd->ts"}> : () -> ()
    %cst_160 = arith.constant dense<0.000000e+00> : vector<8x8xf32>
    %197 = tpu.matmul %195, %196, %cst_160 {dimension_numbers = #tpu.dot_dimension_numbers<[1], [1], [0], [0], [0, 0, 1, 0], [], []>} : vector<8x32xbf16>, vector<8x32xbf16>, vector<8x8xf32> -> vector<8x8xf32>
    "tpu.trace_stop"() : () -> ()
    %198 = arith.addf %197, %62 : vector<8x8xf32>
    %cst_161 = arith.constant dense<0xFF800000> : vector<8xf32>
    %199 = vector.multi_reduction <maximumf>, %198, %cst_161 [1] : vector<8x8xf32> to vector<8xf32>
    %200 = vector.shape_cast %199 : vector<8xf32> to vector<8x1xf32>
    %201 = vector.broadcast %200 : vector<8x1xf32> to vector<8x8xf32>
    %202 = arith.subf %198, %201 : vector<8x8xf32>
    %203 = math.exp %202 : vector<8x8xf32>
    %cst_162 = arith.constant dense<0.000000e+00> : vector<8xf32>
    %204 = vector.multi_reduction <add>, %203, %cst_162 [1] : vector<8x8xf32> to vector<8xf32>
    %205 = vector.shape_cast %204 : vector<8xf32> to vector<8x1xf32>
    %206 = tpu.reciprocal %205 {approx = true} : vector<8x1xf32> -> vector<8x1xf32>
    %207 = vector.broadcast %206 : vector<8x1xf32> to vector<8x8xf32>
    %208 = arith.mulf %203, %207 : vector<8x8xf32>
    %209 = arith.truncf %208 : vector<8x8xf32> to vector<8x8xbf16>
    %210 = arith.truncf %194 : vector<8x32xf32> to vector<8x32xbf16>
    %cst_163 = arith.constant dense<0.000000e+00> : vector<8x32xf32>
    %211 = tpu.matmul %209, %210, %cst_163 {dimension_numbers = #tpu.dot_dimension_numbers<[1], [0], [0], [1], [0, 0, 1, 1], [], []>} : vector<8x8xbf16>, vector<8x32xbf16>, vector<8x32xf32> -> vector<8x32xf32>
    %212 = arith.truncf %211 : vector<8x32xf32> to vector<8x32xbf16>
    %c0_164 = arith.constant 0 : index
    %c3_165 = arith.constant 3 : index
    %c0_166 = arith.constant 0 : index
    %c0_167 = arith.constant 0 : index
    %213 = vector.load %arg5[%c0_164, %c3_165, %c0_166, %c0_167] : memref<2x4x32x128xbf16, #tpu.memory_space<vmem>>, vector<1x1x32x128xbf16>
    %214 = vector.shape_cast %213 : vector<1x1x32x128xbf16> to vector<32x128xbf16>
    %cst_168 = arith.constant dense<0.000000e+00> : vector<8x128xf32>
    %215 = tpu.matmul %212, %214, %cst_168 {dimension_numbers = #tpu.dot_dimension_numbers<[1], [0], [0], [1], [0, 0, 1, 1], [], []>} : vector<8x32xbf16>, vector<32x128xbf16>, vector<8x128xf32> -> vector<8x128xf32>
    %216 = arith.addf %185, %215 : vector<8x128xf32>
    %217 = arith.addf %56, %216 : vector<8x128xf32>
    %218 = vector.broadcast %67 : vector<1x128xf32> to vector<8x128xf32>
    %219 = arith.addf %217, %218 : vector<8x128xf32>
    %cst_169 = arith.constant dense<0.000000e+00> : vector<8xf32>
    %220 = vector.multi_reduction <add>, %219, %cst_169 [1] : vector<8x128xf32> to vector<8xf32>
    %221 = vector.shape_cast %220 : vector<8xf32> to vector<8x1xf32>
    %cst_170 = arith.constant 1.280000e+02 : f32
    %222 = vector.broadcast %cst_170 : f32 to vector<8x1xf32>
    %223 = arith.divf %221, %222 : vector<8x1xf32>
    %224 = vector.broadcast %223 : vector<8x1xf32> to vector<8x128xf32>
    %225 = arith.subf %219, %224 : vector<8x128xf32>
    %226 = arith.mulf %225, %225 : vector<8x128xf32>
    %cst_171 = arith.constant dense<0.000000e+00> : vector<8xf32>
    %227 = vector.multi_reduction <add>, %226, %cst_171 [1] : vector<8x128xf32> to vector<8xf32>
    %228 = vector.shape_cast %227 : vector<8xf32> to vector<8x1xf32>
    %cst_172 = arith.constant 1.280000e+02 : f32
    %229 = vector.broadcast %cst_172 : f32 to vector<8x1xf32>
    %230 = arith.divf %228, %229 : vector<8x1xf32>
    %231 = vector.broadcast %223 : vector<8x1xf32> to vector<8x128xf32>
    %232 = arith.subf %219, %231 : vector<8x128xf32>
    %cst_173 = arith.constant 9.99999974E-6 : f32
    %233 = vector.broadcast %cst_173 : f32 to vector<8x1xf32>
    %234 = arith.addf %230, %233 : vector<8x1xf32>
    %235 = math.rsqrt %234 : vector<8x1xf32>
    %236 = vector.broadcast %235 : vector<8x1xf32> to vector<8x128xf32>
    %237 = arith.mulf %232, %236 : vector<8x128xf32>
    %238 = vector.broadcast %65 : vector<1x128xf32> to vector<8x128xf32>
    %239 = arith.mulf %237, %238 : vector<8x128xf32>
    %240 = vector.broadcast %66 : vector<1x128xf32> to vector<8x128xf32>
    %241 = arith.addf %239, %240 : vector<8x128xf32>
    %242 = arith.truncf %241 : vector<8x128xf32> to vector<8x128xbf16>
    %c0_174 = arith.constant 0 : index
    %c0_175 = arith.constant 0 : index
    %c0_176 = arith.constant 0 : index
    %243 = vector.load %arg6[%c0_174, %c0_175, %c0_176] : memref<2x128x512xbf16, #tpu.memory_space<vmem>>, vector<1x128x512xbf16>
    %244 = vector.shape_cast %243 : vector<1x128x512xbf16> to vector<128x512xbf16>
    %cst_177 = arith.constant dense<0.000000e+00> : vector<8x512xf32>
    %245 = tpu.matmul %242, %244, %cst_177 {dimension_numbers = #tpu.dot_dimension_numbers<[1], [0], [0], [1], [0, 0, 1, 1], [], []>} : vector<8x128xbf16>, vector<128x512xbf16>, vector<8x512xf32> -> vector<8x512xf32>
    %c0_178 = arith.constant 0 : index
    %c0_179 = arith.constant 0 : index
    %c0_180 = arith.constant 0 : index
    %246 = vector.load %arg8[%c0_178, %c0_179, %c0_180] : memref<2x1x512xf32, #tpu.memory_space<vmem>>, vector<1x1x512xf32>
    %247 = vector.shape_cast %246 : vector<1x1x512xf32> to vector<1x512xf32>
    %248 = vector.broadcast %247 : vector<1x512xf32> to vector<8x512xf32>
    %249 = arith.addf %245, %248 : vector<8x512xf32>
    %cst_181 = arith.constant 0.000000e+00 : f32
    %250 = vector.broadcast %cst_181 : f32 to vector<8x512xf32>
    %251 = arith.maximumf %249, %250 : vector<8x512xf32>
    %252 = arith.truncf %251 : vector<8x512xf32> to vector<8x512xbf16>
    %c0_182 = arith.constant 0 : index
    %c0_183 = arith.constant 0 : index
    %c0_184 = arith.constant 0 : index
    %253 = vector.load %arg7[%c0_182, %c0_183, %c0_184] : memref<2x512x128xbf16, #tpu.memory_space<vmem>>, vector<1x512x128xbf16>
    %254 = vector.shape_cast %253 : vector<1x512x128xbf16> to vector<512x128xbf16>
    %cst_185 = arith.constant dense<0.000000e+00> : vector<8x128xf32>
    %255 = tpu.matmul %252, %254, %cst_185 {dimension_numbers = #tpu.dot_dimension_numbers<[1], [0], [0], [1], [0, 0, 1, 1], [], []>} : vector<8x512xbf16>, vector<512x128xbf16>, vector<8x128xf32> -> vector<8x128xf32>
    %256 = vector.broadcast %68 : vector<1x128xf32> to vector<8x128xf32>
    %257 = arith.addf %255, %256 : vector<8x128xf32>
    %258 = arith.addf %219, %257 : vector<8x128xf32>
    %c6_186 = arith.constant 6 : index
    %c0_187 = arith.constant 0 : index
    %259 = vector.load %arg9[%c6_186, %c0_187] : memref<15x128xf32, #tpu.memory_space<vmem>>, vector<1x128xf32>
    %c7_188 = arith.constant 7 : index
    %c0_189 = arith.constant 0 : index
    %260 = vector.load %arg9[%c7_188, %c0_189] : memref<15x128xf32, #tpu.memory_space<vmem>>, vector<1x128xf32>
    %c8 = arith.constant 8 : index
    %c0_190 = arith.constant 0 : index
    %261 = vector.load %arg9[%c8, %c0_190] : memref<15x128xf32, #tpu.memory_space<vmem>>, vector<1x128xf32>
    %c9 = arith.constant 9 : index
    %c0_191 = arith.constant 0 : index
    %262 = vector.load %arg9[%c9, %c0_191] : memref<15x128xf32, #tpu.memory_space<vmem>>, vector<1x128xf32>
    %c10 = arith.constant 10 : index
    %c0_192 = arith.constant 0 : index
    %263 = vector.load %arg9[%c10, %c0_192] : memref<15x128xf32, #tpu.memory_space<vmem>>, vector<1x128xf32>
    %c11 = arith.constant 11 : index
    %c0_193 = arith.constant 0 : index
    %264 = vector.load %arg9[%c11, %c0_193] : memref<15x128xf32, #tpu.memory_space<vmem>>, vector<1x128xf32>
    %cst_194 = arith.constant dense<0.000000e+00> : vector<8xf32>
    %265 = vector.multi_reduction <add>, %258, %cst_194 [1] : vector<8x128xf32> to vector<8xf32>
    %266 = vector.shape_cast %265 : vector<8xf32> to vector<8x1xf32>
    %cst_195 = arith.constant 1.280000e+02 : f32
    %267 = vector.broadcast %cst_195 : f32 to vector<8x1xf32>
    %268 = arith.divf %266, %267 : vector<8x1xf32>
    %269 = vector.broadcast %268 : vector<8x1xf32> to vector<8x128xf32>
    %270 = arith.subf %258, %269 : vector<8x128xf32>
    %271 = arith.mulf %270, %270 : vector<8x128xf32>
    %cst_196 = arith.constant dense<0.000000e+00> : vector<8xf32>
    %272 = vector.multi_reduction <add>, %271, %cst_196 [1] : vector<8x128xf32> to vector<8xf32>
    %273 = vector.shape_cast %272 : vector<8xf32> to vector<8x1xf32>
    %cst_197 = arith.constant 1.280000e+02 : f32
    %274 = vector.broadcast %cst_197 : f32 to vector<8x1xf32>
    %275 = arith.divf %273, %274 : vector<8x1xf32>
    %276 = vector.broadcast %268 : vector<8x1xf32> to vector<8x128xf32>
    %277 = arith.subf %258, %276 : vector<8x128xf32>
    %cst_198 = arith.constant 9.99999974E-6 : f32
    %278 = vector.broadcast %cst_198 : f32 to vector<8x1xf32>
    %279 = arith.addf %275, %278 : vector<8x1xf32>
    %280 = math.rsqrt %279 : vector<8x1xf32>
    %281 = vector.broadcast %280 : vector<8x1xf32> to vector<8x128xf32>
    %282 = arith.mulf %277, %281 : vector<8x128xf32>
    %283 = vector.broadcast %259 : vector<1x128xf32> to vector<8x128xf32>
    %284 = arith.mulf %282, %283 : vector<8x128xf32>
    %285 = vector.broadcast %260 : vector<1x128xf32> to vector<8x128xf32>
    %286 = arith.addf %284, %285 : vector<8x128xf32>
    %287 = arith.truncf %286 : vector<8x128xf32> to vector<8x128xbf16>
    %cst_199 = arith.constant 0.000000e+00 : f32
    %288 = vector.broadcast %cst_199 : f32 to vector<8x128xf32>
    %c1_200 = arith.constant 1 : index
    %c0_201 = arith.constant 0 : index
    %c0_202 = arith.constant 0 : index
    %c0_203 = arith.constant 0 : index
    %c0_204 = arith.constant 0 : index
    %289 = vector.load %arg4[%c1_200, %c0_201, %c0_202, %c0_203, %c0_204] : memref<2x3x4x128x32xbf16, #tpu.memory_space<vmem>>, vector<1x1x1x128x32xbf16>
    %290 = vector.shape_cast %289 : vector<1x1x1x128x32xbf16> to vector<128x32xbf16>
    %cst_205 = arith.constant dense<0.000000e+00> : vector<8x32xf32>
    %291 = tpu.matmul %287, %290, %cst_205 {dimension_numbers = #tpu.dot_dimension_numbers<[1], [0], [0], [1], [0, 0, 1, 1], [], []>} : vector<8x128xbf16>, vector<128x32xbf16>, vector<8x32xf32> -> vector<8x32xf32>
    %c1_206 = arith.constant 1 : index
    %c1_207 = arith.constant 1 : index
    %c0_208 = arith.constant 0 : index
    %c0_209 = arith.constant 0 : index
    %c0_210 = arith.constant 0 : index
    %292 = vector.load %arg4[%c1_206, %c1_207, %c0_208, %c0_209, %c0_210] : memref<2x3x4x128x32xbf16, #tpu.memory_space<vmem>>, vector<1x1x1x128x32xbf16>
    %293 = vector.shape_cast %292 : vector<1x1x1x128x32xbf16> to vector<128x32xbf16>
    %cst_211 = arith.constant dense<0.000000e+00> : vector<8x32xf32>
    %294 = tpu.matmul %287, %293, %cst_211 {dimension_numbers = #tpu.dot_dimension_numbers<[1], [0], [0], [1], [0, 0, 1, 1], [], []>} : vector<8x128xbf16>, vector<128x32xbf16>, vector<8x32xf32> -> vector<8x32xf32>
    %c1_212 = arith.constant 1 : index
    %c2_213 = arith.constant 2 : index
    %c0_214 = arith.constant 0 : index
    %c0_215 = arith.constant 0 : index
    %c0_216 = arith.constant 0 : index
    %295 = vector.load %arg4[%c1_212, %c2_213, %c0_214, %c0_215, %c0_216] : memref<2x3x4x128x32xbf16, #tpu.memory_space<vmem>>, vector<1x1x1x128x32xbf16>
    %296 = vector.shape_cast %295 : vector<1x1x1x128x32xbf16> to vector<128x32xbf16>
    %cst_217 = arith.constant dense<0.000000e+00> : vector<8x32xf32>
    %297 = tpu.matmul %287, %296, %cst_217 {dimension_numbers = #tpu.dot_dimension_numbers<[1], [0], [0], [1], [0, 0, 1, 1], [], []>} : vector<8x128xbf16>, vector<128x32xbf16>, vector<8x32xf32> -> vector<8x32xf32>
    %298 = arith.truncf %291 : vector<8x32xf32> to vector<8x32xbf16>
    %299 = arith.truncf %294 : vector<8x32xf32> to vector<8x32xbf16>
    "tpu.trace_start"() <{level = 10 : i32, message = "td,sd->ts"}> : () -> ()
    %cst_218 = arith.constant dense<0.000000e+00> : vector<8x8xf32>
    %300 = tpu.matmul %298, %299, %cst_218 {dimension_numbers = #tpu.dot_dimension_numbers<[1], [1], [0], [0], [0, 0, 1, 0], [], []>} : vector<8x32xbf16>, vector<8x32xbf16>, vector<8x8xf32> -> vector<8x8xf32>
    "tpu.trace_stop"() : () -> ()
    %301 = arith.addf %300, %62 : vector<8x8xf32>
    %cst_219 = arith.constant dense<0xFF800000> : vector<8xf32>
    %302 = vector.multi_reduction <maximumf>, %301, %cst_219 [1] : vector<8x8xf32> to vector<8xf32>
    %303 = vector.shape_cast %302 : vector<8xf32> to vector<8x1xf32>
    %304 = vector.broadcast %303 : vector<8x1xf32> to vector<8x8xf32>
    %305 = arith.subf %301, %304 : vector<8x8xf32>
    %306 = math.exp %305 : vector<8x8xf32>
    %cst_220 = arith.constant dense<0.000000e+00> : vector<8xf32>
    %307 = vector.multi_reduction <add>, %306, %cst_220 [1] : vector<8x8xf32> to vector<8xf32>
    %308 = vector.shape_cast %307 : vector<8xf32> to vector<8x1xf32>
    %309 = tpu.reciprocal %308 {approx = true} : vector<8x1xf32> -> vector<8x1xf32>
    %310 = vector.broadcast %309 : vector<8x1xf32> to vector<8x8xf32>
    %311 = arith.mulf %306, %310 : vector<8x8xf32>
    %312 = arith.truncf %311 : vector<8x8xf32> to vector<8x8xbf16>
    %313 = arith.truncf %297 : vector<8x32xf32> to vector<8x32xbf16>
    %cst_221 = arith.constant dense<0.000000e+00> : vector<8x32xf32>
    %314 = tpu.matmul %312, %313, %cst_221 {dimension_numbers = #tpu.dot_dimension_numbers<[1], [0], [0], [1], [0, 0, 1, 1], [], []>} : vector<8x8xbf16>, vector<8x32xbf16>, vector<8x32xf32> -> vector<8x32xf32>
    %315 = arith.truncf %314 : vector<8x32xf32> to vector<8x32xbf16>
    %c1_222 = arith.constant 1 : index
    %c0_223 = arith.constant 0 : index
    %c0_224 = arith.constant 0 : index
    %c0_225 = arith.constant 0 : index
    %316 = vector.load %arg5[%c1_222, %c0_223, %c0_224, %c0_225] : memref<2x4x32x128xbf16, #tpu.memory_space<vmem>>, vector<1x1x32x128xbf16>
    %317 = vector.shape_cast %316 : vector<1x1x32x128xbf16> to vector<32x128xbf16>
    %cst_226 = arith.constant dense<0.000000e+00> : vector<8x128xf32>
    %318 = tpu.matmul %315, %317, %cst_226 {dimension_numbers = #tpu.dot_dimension_numbers<[1], [0], [0], [1], [0, 0, 1, 1], [], []>} : vector<8x32xbf16>, vector<32x128xbf16>, vector<8x128xf32> -> vector<8x128xf32>
    %319 = arith.addf %288, %318 : vector<8x128xf32>
    %c1_227 = arith.constant 1 : index
    %c0_228 = arith.constant 0 : index
    %c1_229 = arith.constant 1 : index
    %c0_230 = arith.constant 0 : index
    %c0_231 = arith.constant 0 : index
    %320 = vector.load %arg4[%c1_227, %c0_228, %c1_229, %c0_230, %c0_231] : memref<2x3x4x128x32xbf16, #tpu.memory_space<vmem>>, vector<1x1x1x128x32xbf16>
    %321 = vector.shape_cast %320 : vector<1x1x1x128x32xbf16> to vector<128x32xbf16>
    %cst_232 = arith.constant dense<0.000000e+00> : vector<8x32xf32>
    %322 = tpu.matmul %287, %321, %cst_232 {dimension_numbers = #tpu.dot_dimension_numbers<[1], [0], [0], [1], [0, 0, 1, 1], [], []>} : vector<8x128xbf16>, vector<128x32xbf16>, vector<8x32xf32> -> vector<8x32xf32>
    %c1_233 = arith.constant 1 : index
    %c1_234 = arith.constant 1 : index
    %c1_235 = arith.constant 1 : index
    %c0_236 = arith.constant 0 : index
    %c0_237 = arith.constant 0 : index
    %323 = vector.load %arg4[%c1_233, %c1_234, %c1_235, %c0_236, %c0_237] : memref<2x3x4x128x32xbf16, #tpu.memory_space<vmem>>, vector<1x1x1x128x32xbf16>
    %324 = vector.shape_cast %323 : vector<1x1x1x128x32xbf16> to vector<128x32xbf16>
    %cst_238 = arith.constant dense<0.000000e+00> : vector<8x32xf32>
    %325 = tpu.matmul %287, %324, %cst_238 {dimension_numbers = #tpu.dot_dimension_numbers<[1], [0], [0], [1], [0, 0, 1, 1], [], []>} : vector<8x128xbf16>, vector<128x32xbf16>, vector<8x32xf32> -> vector<8x32xf32>
    %c1_239 = arith.constant 1 : index
    %c2_240 = arith.constant 2 : index
    %c1_241 = arith.constant 1 : index
    %c0_242 = arith.constant 0 : index
    %c0_243 = arith.constant 0 : index
    %326 = vector.load %arg4[%c1_239, %c2_240, %c1_241, %c0_242, %c0_243] : memref<2x3x4x128x32xbf16, #tpu.memory_space<vmem>>, vector<1x1x1x128x32xbf16>
    %327 = vector.shape_cast %326 : vector<1x1x1x128x32xbf16> to vector<128x32xbf16>
    %cst_244 = arith.constant dense<0.000000e+00> : vector<8x32xf32>
    %328 = tpu.matmul %287, %327, %cst_244 {dimension_numbers = #tpu.dot_dimension_numbers<[1], [0], [0], [1], [0, 0, 1, 1], [], []>} : vector<8x128xbf16>, vector<128x32xbf16>, vector<8x32xf32> -> vector<8x32xf32>
    %329 = arith.truncf %322 : vector<8x32xf32> to vector<8x32xbf16>
    %330 = arith.truncf %325 : vector<8x32xf32> to vector<8x32xbf16>
    "tpu.trace_start"() <{level = 10 : i32, message = "td,sd->ts"}> : () -> ()
    %cst_245 = arith.constant dense<0.000000e+00> : vector<8x8xf32>
    %331 = tpu.matmul %329, %330, %cst_245 {dimension_numbers = #tpu.dot_dimension_numbers<[1], [1], [0], [0], [0, 0, 1, 0], [], []>} : vector<8x32xbf16>, vector<8x32xbf16>, vector<8x8xf32> -> vector<8x8xf32>
    "tpu.trace_stop"() : () -> ()
    %332 = arith.addf %331, %62 : vector<8x8xf32>
    %cst_246 = arith.constant dense<0xFF800000> : vector<8xf32>
    %333 = vector.multi_reduction <maximumf>, %332, %cst_246 [1] : vector<8x8xf32> to vector<8xf32>
    %334 = vector.shape_cast %333 : vector<8xf32> to vector<8x1xf32>
    %335 = vector.broadcast %334 : vector<8x1xf32> to vector<8x8xf32>
    %336 = arith.subf %332, %335 : vector<8x8xf32>
    %337 = math.exp %336 : vector<8x8xf32>
    %cst_247 = arith.constant dense<0.000000e+00> : vector<8xf32>
    %338 = vector.multi_reduction <add>, %337, %cst_247 [1] : vector<8x8xf32> to vector<8xf32>
    %339 = vector.shape_cast %338 : vector<8xf32> to vector<8x1xf32>
    %340 = tpu.reciprocal %339 {approx = true} : vector<8x1xf32> -> vector<8x1xf32>
    %341 = vector.broadcast %340 : vector<8x1xf32> to vector<8x8xf32>
    %342 = arith.mulf %337, %341 : vector<8x8xf32>
    %343 = arith.truncf %342 : vector<8x8xf32> to vector<8x8xbf16>
    %344 = arith.truncf %328 : vector<8x32xf32> to vector<8x32xbf16>
    %cst_248 = arith.constant dense<0.000000e+00> : vector<8x32xf32>
    %345 = tpu.matmul %343, %344, %cst_248 {dimension_numbers = #tpu.dot_dimension_numbers<[1], [0], [0], [1], [0, 0, 1, 1], [], []>} : vector<8x8xbf16>, vector<8x32xbf16>, vector<8x32xf32> -> vector<8x32xf32>
    %346 = arith.truncf %345 : vector<8x32xf32> to vector<8x32xbf16>
    %c1_249 = arith.constant 1 : index
    %c1_250 = arith.constant 1 : index
    %c0_251 = arith.constant 0 : index
    %c0_252 = arith.constant 0 : index
    %347 = vector.load %arg5[%c1_249, %c1_250, %c0_251, %c0_252] : memref<2x4x32x128xbf16, #tpu.memory_space<vmem>>, vector<1x1x32x128xbf16>
    %348 = vector.shape_cast %347 : vector<1x1x32x128xbf16> to vector<32x128xbf16>
    %cst_253 = arith.constant dense<0.000000e+00> : vector<8x128xf32>
    %349 = tpu.matmul %346, %348, %cst_253 {dimension_numbers = #tpu.dot_dimension_numbers<[1], [0], [0], [1], [0, 0, 1, 1], [], []>} : vector<8x32xbf16>, vector<32x128xbf16>, vector<8x128xf32> -> vector<8x128xf32>
    %350 = arith.addf %319, %349 : vector<8x128xf32>
    %c1_254 = arith.constant 1 : index
    %c0_255 = arith.constant 0 : index
    %c2_256 = arith.constant 2 : index
    %c0_257 = arith.constant 0 : index
    %c0_258 = arith.constant 0 : index
    %351 = vector.load %arg4[%c1_254, %c0_255, %c2_256, %c0_257, %c0_258] : memref<2x3x4x128x32xbf16, #tpu.memory_space<vmem>>, vector<1x1x1x128x32xbf16>
    %352 = vector.shape_cast %351 : vector<1x1x1x128x32xbf16> to vector<128x32xbf16>
    %cst_259 = arith.constant dense<0.000000e+00> : vector<8x32xf32>
    %353 = tpu.matmul %287, %352, %cst_259 {dimension_numbers = #tpu.dot_dimension_numbers<[1], [0], [0], [1], [0, 0, 1, 1], [], []>} : vector<8x128xbf16>, vector<128x32xbf16>, vector<8x32xf32> -> vector<8x32xf32>
    %c1_260 = arith.constant 1 : index
    %c1_261 = arith.constant 1 : index
    %c2_262 = arith.constant 2 : index
    %c0_263 = arith.constant 0 : index
    %c0_264 = arith.constant 0 : index
    %354 = vector.load %arg4[%c1_260, %c1_261, %c2_262, %c0_263, %c0_264] : memref<2x3x4x128x32xbf16, #tpu.memory_space<vmem>>, vector<1x1x1x128x32xbf16>
    %355 = vector.shape_cast %354 : vector<1x1x1x128x32xbf16> to vector<128x32xbf16>
    %cst_265 = arith.constant dense<0.000000e+00> : vector<8x32xf32>
    %356 = tpu.matmul %287, %355, %cst_265 {dimension_numbers = #tpu.dot_dimension_numbers<[1], [0], [0], [1], [0, 0, 1, 1], [], []>} : vector<8x128xbf16>, vector<128x32xbf16>, vector<8x32xf32> -> vector<8x32xf32>
    %c1_266 = arith.constant 1 : index
    %c2_267 = arith.constant 2 : index
    %c2_268 = arith.constant 2 : index
    %c0_269 = arith.constant 0 : index
    %c0_270 = arith.constant 0 : index
    %357 = vector.load %arg4[%c1_266, %c2_267, %c2_268, %c0_269, %c0_270] : memref<2x3x4x128x32xbf16, #tpu.memory_space<vmem>>, vector<1x1x1x128x32xbf16>
    %358 = vector.shape_cast %357 : vector<1x1x1x128x32xbf16> to vector<128x32xbf16>
    %cst_271 = arith.constant dense<0.000000e+00> : vector<8x32xf32>
    %359 = tpu.matmul %287, %358, %cst_271 {dimension_numbers = #tpu.dot_dimension_numbers<[1], [0], [0], [1], [0, 0, 1, 1], [], []>} : vector<8x128xbf16>, vector<128x32xbf16>, vector<8x32xf32> -> vector<8x32xf32>
    %360 = arith.truncf %353 : vector<8x32xf32> to vector<8x32xbf16>
    %361 = arith.truncf %356 : vector<8x32xf32> to vector<8x32xbf16>
    "tpu.trace_start"() <{level = 10 : i32, message = "td,sd->ts"}> : () -> ()
    %cst_272 = arith.constant dense<0.000000e+00> : vector<8x8xf32>
    %362 = tpu.matmul %360, %361, %cst_272 {dimension_numbers = #tpu.dot_dimension_numbers<[1], [1], [0], [0], [0, 0, 1, 0], [], []>} : vector<8x32xbf16>, vector<8x32xbf16>, vector<8x8xf32> -> vector<8x8xf32>
    "tpu.trace_stop"() : () -> ()
    %363 = arith.addf %362, %62 : vector<8x8xf32>
    %cst_273 = arith.constant dense<0xFF800000> : vector<8xf32>
    %364 = vector.multi_reduction <maximumf>, %363, %cst_273 [1] : vector<8x8xf32> to vector<8xf32>
    %365 = vector.shape_cast %364 : vector<8xf32> to vector<8x1xf32>
    %366 = vector.broadcast %365 : vector<8x1xf32> to vector<8x8xf32>
    %367 = arith.subf %363, %366 : vector<8x8xf32>
    %368 = math.exp %367 : vector<8x8xf32>
    %cst_274 = arith.constant dense<0.000000e+00> : vector<8xf32>
    %369 = vector.multi_reduction <add>, %368, %cst_274 [1] : vector<8x8xf32> to vector<8xf32>
    %370 = vector.shape_cast %369 : vector<8xf32> to vector<8x1xf32>
    %371 = tpu.reciprocal %370 {approx = true} : vector<8x1xf32> -> vector<8x1xf32>
    %372 = vector.broadcast %371 : vector<8x1xf32> to vector<8x8xf32>
    %373 = arith.mulf %368, %372 : vector<8x8xf32>
    %374 = arith.truncf %373 : vector<8x8xf32> to vector<8x8xbf16>
    %375 = arith.truncf %359 : vector<8x32xf32> to vector<8x32xbf16>
    %cst_275 = arith.constant dense<0.000000e+00> : vector<8x32xf32>
    %376 = tpu.matmul %374, %375, %cst_275 {dimension_numbers = #tpu.dot_dimension_numbers<[1], [0], [0], [1], [0, 0, 1, 1], [], []>} : vector<8x8xbf16>, vector<8x32xbf16>, vector<8x32xf32> -> vector<8x32xf32>
    %377 = arith.truncf %376 : vector<8x32xf32> to vector<8x32xbf16>
    %c1_276 = arith.constant 1 : index
    %c2_277 = arith.constant 2 : index
    %c0_278 = arith.constant 0 : index
    %c0_279 = arith.constant 0 : index
    %378 = vector.load %arg5[%c1_276, %c2_277, %c0_278, %c0_279] : memref<2x4x32x128xbf16, #tpu.memory_space<vmem>>, vector<1x1x32x128xbf16>
    %379 = vector.shape_cast %378 : vector<1x1x32x128xbf16> to vector<32x128xbf16>
    %cst_280 = arith.constant dense<0.000000e+00> : vector<8x128xf32>
    %380 = tpu.matmul %377, %379, %cst_280 {dimension_numbers = #tpu.dot_dimension_numbers<[1], [0], [0], [1], [0, 0, 1, 1], [], []>} : vector<8x32xbf16>, vector<32x128xbf16>, vector<8x128xf32> -> vector<8x128xf32>
    %381 = arith.addf %350, %380 : vector<8x128xf32>
    %c1_281 = arith.constant 1 : index
    %c0_282 = arith.constant 0 : index
    %c3_283 = arith.constant 3 : index
    %c0_284 = arith.constant 0 : index
    %c0_285 = arith.constant 0 : index
    %382 = vector.load %arg4[%c1_281, %c0_282, %c3_283, %c0_284, %c0_285] : memref<2x3x4x128x32xbf16, #tpu.memory_space<vmem>>, vector<1x1x1x128x32xbf16>
    %383 = vector.shape_cast %382 : vector<1x1x1x128x32xbf16> to vector<128x32xbf16>
    %cst_286 = arith.constant dense<0.000000e+00> : vector<8x32xf32>
    %384 = tpu.matmul %287, %383, %cst_286 {dimension_numbers = #tpu.dot_dimension_numbers<[1], [0], [0], [1], [0, 0, 1, 1], [], []>} : vector<8x128xbf16>, vector<128x32xbf16>, vector<8x32xf32> -> vector<8x32xf32>
    %c1_287 = arith.constant 1 : index
    %c1_288 = arith.constant 1 : index
    %c3_289 = arith.constant 3 : index
    %c0_290 = arith.constant 0 : index
    %c0_291 = arith.constant 0 : index
    %385 = vector.load %arg4[%c1_287, %c1_288, %c3_289, %c0_290, %c0_291] : memref<2x3x4x128x32xbf16, #tpu.memory_space<vmem>>, vector<1x1x1x128x32xbf16>
    %386 = vector.shape_cast %385 : vector<1x1x1x128x32xbf16> to vector<128x32xbf16>
    %cst_292 = arith.constant dense<0.000000e+00> : vector<8x32xf32>
    %387 = tpu.matmul %287, %386, %cst_292 {dimension_numbers = #tpu.dot_dimension_numbers<[1], [0], [0], [1], [0, 0, 1, 1], [], []>} : vector<8x128xbf16>, vector<128x32xbf16>, vector<8x32xf32> -> vector<8x32xf32>
    %c1_293 = arith.constant 1 : index
    %c2_294 = arith.constant 2 : index
    %c3_295 = arith.constant 3 : index
    %c0_296 = arith.constant 0 : index
    %c0_297 = arith.constant 0 : index
    %388 = vector.load %arg4[%c1_293, %c2_294, %c3_295, %c0_296, %c0_297] : memref<2x3x4x128x32xbf16, #tpu.memory_space<vmem>>, vector<1x1x1x128x32xbf16>
    %389 = vector.shape_cast %388 : vector<1x1x1x128x32xbf16> to vector<128x32xbf16>
    %cst_298 = arith.constant dense<0.000000e+00> : vector<8x32xf32>
    %390 = tpu.matmul %287, %389, %cst_298 {dimension_numbers = #tpu.dot_dimension_numbers<[1], [0], [0], [1], [0, 0, 1, 1], [], []>} : vector<8x128xbf16>, vector<128x32xbf16>, vector<8x32xf32> -> vector<8x32xf32>
    %391 = arith.truncf %384 : vector<8x32xf32> to vector<8x32xbf16>
    %392 = arith.truncf %387 : vector<8x32xf32> to vector<8x32xbf16>
    "tpu.trace_start"() <{level = 10 : i32, message = "td,sd->ts"}> : () -> ()
    %cst_299 = arith.constant dense<0.000000e+00> : vector<8x8xf32>
    %393 = tpu.matmul %391, %392, %cst_299 {dimension_numbers = #tpu.dot_dimension_numbers<[1], [1], [0], [0], [0, 0, 1, 0], [], []>} : vector<8x32xbf16>, vector<8x32xbf16>, vector<8x8xf32> -> vector<8x8xf32>
    "tpu.trace_stop"() : () -> ()
    %394 = arith.addf %393, %62 : vector<8x8xf32>
    %cst_300 = arith.constant dense<0xFF800000> : vector<8xf32>
    %395 = vector.multi_reduction <maximumf>, %394, %cst_300 [1] : vector<8x8xf32> to vector<8xf32>
    %396 = vector.shape_cast %395 : vector<8xf32> to vector<8x1xf32>
    %397 = vector.broadcast %396 : vector<8x1xf32> to vector<8x8xf32>
    %398 = arith.subf %394, %397 : vector<8x8xf32>
    %399 = math.exp %398 : vector<8x8xf32>
    %cst_301 = arith.constant dense<0.000000e+00> : vector<8xf32>
    %400 = vector.multi_reduction <add>, %399, %cst_301 [1] : vector<8x8xf32> to vector<8xf32>
    %401 = vector.shape_cast %400 : vector<8xf32> to vector<8x1xf32>
    %402 = tpu.reciprocal %401 {approx = true} : vector<8x1xf32> -> vector<8x1xf32>
    %403 = vector.broadcast %402 : vector<8x1xf32> to vector<8x8xf32>
    %404 = arith.mulf %399, %403 : vector<8x8xf32>
    %405 = arith.truncf %404 : vector<8x8xf32> to vector<8x8xbf16>
    %406 = arith.truncf %390 : vector<8x32xf32> to vector<8x32xbf16>
    %cst_302 = arith.constant dense<0.000000e+00> : vector<8x32xf32>
    %407 = tpu.matmul %405, %406, %cst_302 {dimension_numbers = #tpu.dot_dimension_numbers<[1], [0], [0], [1], [0, 0, 1, 1], [], []>} : vector<8x8xbf16>, vector<8x32xbf16>, vector<8x32xf32> -> vector<8x32xf32>
    %408 = arith.truncf %407 : vector<8x32xf32> to vector<8x32xbf16>
    %c1_303 = arith.constant 1 : index
    %c3_304 = arith.constant 3 : index
    %c0_305 = arith.constant 0 : index
    %c0_306 = arith.constant 0 : index
    %409 = vector.load %arg5[%c1_303, %c3_304, %c0_305, %c0_306] : memref<2x4x32x128xbf16, #tpu.memory_space<vmem>>, vector<1x1x32x128xbf16>
    %410 = vector.shape_cast %409 : vector<1x1x32x128xbf16> to vector<32x128xbf16>
    %cst_307 = arith.constant dense<0.000000e+00> : vector<8x128xf32>
    %411 = tpu.matmul %408, %410, %cst_307 {dimension_numbers = #tpu.dot_dimension_numbers<[1], [0], [0], [1], [0, 0, 1, 1], [], []>} : vector<8x32xbf16>, vector<32x128xbf16>, vector<8x128xf32> -> vector<8x128xf32>
    %412 = arith.addf %381, %411 : vector<8x128xf32>
    %413 = arith.addf %258, %412 : vector<8x128xf32>
    %414 = vector.broadcast %263 : vector<1x128xf32> to vector<8x128xf32>
    %415 = arith.addf %413, %414 : vector<8x128xf32>
    %cst_308 = arith.constant dense<0.000000e+00> : vector<8xf32>
    %416 = vector.multi_reduction <add>, %415, %cst_308 [1] : vector<8x128xf32> to vector<8xf32>
    %417 = vector.shape_cast %416 : vector<8xf32> to vector<8x1xf32>
    %cst_309 = arith.constant 1.280000e+02 : f32
    %418 = vector.broadcast %cst_309 : f32 to vector<8x1xf32>
    %419 = arith.divf %417, %418 : vector<8x1xf32>
    %420 = vector.broadcast %419 : vector<8x1xf32> to vector<8x128xf32>
    %421 = arith.subf %415, %420 : vector<8x128xf32>
    %422 = arith.mulf %421, %421 : vector<8x128xf32>
    %cst_310 = arith.constant dense<0.000000e+00> : vector<8xf32>
    %423 = vector.multi_reduction <add>, %422, %cst_310 [1] : vector<8x128xf32> to vector<8xf32>
    %424 = vector.shape_cast %423 : vector<8xf32> to vector<8x1xf32>
    %cst_311 = arith.constant 1.280000e+02 : f32
    %425 = vector.broadcast %cst_311 : f32 to vector<8x1xf32>
    %426 = arith.divf %424, %425 : vector<8x1xf32>
    %427 = vector.broadcast %419 : vector<8x1xf32> to vector<8x128xf32>
    %428 = arith.subf %415, %427 : vector<8x128xf32>
    %cst_312 = arith.constant 9.99999974E-6 : f32
    %429 = vector.broadcast %cst_312 : f32 to vector<8x1xf32>
    %430 = arith.addf %426, %429 : vector<8x1xf32>
    %431 = math.rsqrt %430 : vector<8x1xf32>
    %432 = vector.broadcast %431 : vector<8x1xf32> to vector<8x128xf32>
    %433 = arith.mulf %428, %432 : vector<8x128xf32>
    %434 = vector.broadcast %261 : vector<1x128xf32> to vector<8x128xf32>
    %435 = arith.mulf %433, %434 : vector<8x128xf32>
    %436 = vector.broadcast %262 : vector<1x128xf32> to vector<8x128xf32>
    %437 = arith.addf %435, %436 : vector<8x128xf32>
    %438 = arith.truncf %437 : vector<8x128xf32> to vector<8x128xbf16>
    %c1_313 = arith.constant 1 : index
    %c0_314 = arith.constant 0 : index
    %c0_315 = arith.constant 0 : index
    %439 = vector.load %arg6[%c1_313, %c0_314, %c0_315] : memref<2x128x512xbf16, #tpu.memory_space<vmem>>, vector<1x128x512xbf16>
    %440 = vector.shape_cast %439 : vector<1x128x512xbf16> to vector<128x512xbf16>
    %cst_316 = arith.constant dense<0.000000e+00> : vector<8x512xf32>
    %441 = tpu.matmul %438, %440, %cst_316 {dimension_numbers = #tpu.dot_dimension_numbers<[1], [0], [0], [1], [0, 0, 1, 1], [], []>} : vector<8x128xbf16>, vector<128x512xbf16>, vector<8x512xf32> -> vector<8x512xf32>
    %c1_317 = arith.constant 1 : index
    %c0_318 = arith.constant 0 : index
    %c0_319 = arith.constant 0 : index
    %442 = vector.load %arg8[%c1_317, %c0_318, %c0_319] : memref<2x1x512xf32, #tpu.memory_space<vmem>>, vector<1x1x512xf32>
    %443 = vector.shape_cast %442 : vector<1x1x512xf32> to vector<1x512xf32>
    %444 = vector.broadcast %443 : vector<1x512xf32> to vector<8x512xf32>
    %445 = arith.addf %441, %444 : vector<8x512xf32>
    %cst_320 = arith.constant 0.000000e+00 : f32
    %446 = vector.broadcast %cst_320 : f32 to vector<8x512xf32>
    %447 = arith.maximumf %445, %446 : vector<8x512xf32>
    %448 = arith.truncf %447 : vector<8x512xf32> to vector<8x512xbf16>
    %c1_321 = arith.constant 1 : index
    %c0_322 = arith.constant 0 : index
    %c0_323 = arith.constant 0 : index
    %449 = vector.load %arg7[%c1_321, %c0_322, %c0_323] : memref<2x512x128xbf16, #tpu.memory_space<vmem>>, vector<1x512x128xbf16>
    %450 = vector.shape_cast %449 : vector<1x512x128xbf16> to vector<512x128xbf16>
    %cst_324 = arith.constant dense<0.000000e+00> : vector<8x128xf32>
    %451 = tpu.matmul %448, %450, %cst_324 {dimension_numbers = #tpu.dot_dimension_numbers<[1], [0], [0], [1], [0, 0, 1, 1], [], []>} : vector<8x512xbf16>, vector<512x128xbf16>, vector<8x128xf32> -> vector<8x128xf32>
    %452 = vector.broadcast %264 : vector<1x128xf32> to vector<8x128xf32>
    %453 = arith.addf %451, %452 : vector<8x128xf32>
    %454 = arith.addf %415, %453 : vector<8x128xf32>
    %c12 = arith.constant 12 : index
    %c0_325 = arith.constant 0 : index
    %455 = vector.load %arg9[%c12, %c0_325] : memref<15x128xf32, #tpu.memory_space<vmem>>, vector<1x128xf32>
    %c13 = arith.constant 13 : index
    %c0_326 = arith.constant 0 : index
    %456 = vector.load %arg9[%c13, %c0_326] : memref<15x128xf32, #tpu.memory_space<vmem>>, vector<1x128xf32>
    %c14 = arith.constant 14 : index
    %c0_327 = arith.constant 0 : index
    %457 = vector.load %arg9[%c14, %c0_327] : memref<15x128xf32, #tpu.memory_space<vmem>>, vector<1x128xf32>
    %cst_328 = arith.constant dense<0.000000e+00> : vector<8xf32>
    %458 = vector.multi_reduction <add>, %454, %cst_328 [1] : vector<8x128xf32> to vector<8xf32>
    %459 = vector.shape_cast %458 : vector<8xf32> to vector<8x1xf32>
    %cst_329 = arith.constant 1.280000e+02 : f32
    %460 = vector.broadcast %cst_329 : f32 to vector<8x1xf32>
    %461 = arith.divf %459, %460 : vector<8x1xf32>
    %462 = vector.broadcast %461 : vector<8x1xf32> to vector<8x128xf32>
    %463 = arith.subf %454, %462 : vector<8x128xf32>
    %464 = arith.mulf %463, %463 : vector<8x128xf32>
    %cst_330 = arith.constant dense<0.000000e+00> : vector<8xf32>
    %465 = vector.multi_reduction <add>, %464, %cst_330 [1] : vector<8x128xf32> to vector<8xf32>
    %466 = vector.shape_cast %465 : vector<8xf32> to vector<8x1xf32>
    %cst_331 = arith.constant 1.280000e+02 : f32
    %467 = vector.broadcast %cst_331 : f32 to vector<8x1xf32>
    %468 = arith.divf %466, %467 : vector<8x1xf32>
    %469 = vector.broadcast %461 : vector<8x1xf32> to vector<8x128xf32>
    %470 = arith.subf %454, %469 : vector<8x128xf32>
    %cst_332 = arith.constant 9.99999974E-6 : f32
    %471 = vector.broadcast %cst_332 : f32 to vector<8x1xf32>
    %472 = arith.addf %468, %471 : vector<8x1xf32>
    %473 = math.rsqrt %472 : vector<8x1xf32>
    %474 = vector.broadcast %473 : vector<8x1xf32> to vector<8x128xf32>
    %475 = arith.mulf %470, %474 : vector<8x128xf32>
    %476 = vector.broadcast %455 : vector<1x128xf32> to vector<8x128xf32>
    %477 = arith.mulf %475, %476 : vector<8x128xf32>
    %478 = vector.broadcast %456 : vector<1x128xf32> to vector<8x128xf32>
    %479 = arith.addf %477, %478 : vector<8x128xf32>
    %480 = arith.truncf %479 : vector<8x128xf32> to vector<8x128xbf16>
    %c0_333 = arith.constant 0 : index
    %c0_334 = arith.constant 0 : index
    %481 = vector.load %arg10[%c0_333, %c0_334] : memref<128x128xbf16, #tpu.memory_space<vmem>>, vector<128x128xbf16>
    %cst_335 = arith.constant dense<0.000000e+00> : vector<8x128xf32>
    %482 = tpu.matmul %480, %481, %cst_335 {dimension_numbers = #tpu.dot_dimension_numbers<[1], [0], [0], [1], [0, 0, 1, 1], [], []>} : vector<8x128xbf16>, vector<128x128xbf16>, vector<8x128xf32> -> vector<8x128xf32>
    %483 = vector.broadcast %457 : vector<1x128xf32> to vector<8x128xf32>
    %484 = arith.addf %482, %483 : vector<8x128xf32>
    %c0_336 = arith.constant 0 : index
    %c0_337 = arith.constant 0 : index
    %c0_338 = arith.constant 0 : index
    %485 = vector.load %arg11[%c0_336, %c0_337, %c0_338] : memref<1x8x128xf32, #tpu.memory_space<vmem>>, vector<1x8x128xf32>
    %486 = vector.shape_cast %485 : vector<1x8x128xf32> to vector<8x128xf32>
    %487 = vector.shape_cast %484 : vector<8x128xf32> to vector<1x8x128xf32>
    tpu.vector_store %arg11[%c0_336, %c0_337, %c0_338], %487 {strides = array<i32>} : memref<1x8x128xf32, #tpu.memory_space<vmem>>, vector<1x8x128xf32>,
    return
  }
  func.func @transform_0(%arg0: i32, %arg1: memref<2x8xi32, #tpu.memory_space<smem>>) -> (i32, i32) {
    %c0_i32 = arith.constant 0 : i32
    %c0_i32_0 = arith.constant 0 : i32
    %c0_i32_1 = arith.constant 0 : i32
    return %c0_i32, %c0_i32_0 : i32, i32
  }
  func.func @transform_1(%arg0: i32, %arg1: memref<2x8xi32, #tpu.memory_space<smem>>) -> (i32, i32) {
    %c0_i32 = arith.constant 0 : i32
    %c0_i32_0 = arith.constant 0 : i32
    %c0_i32_1 = arith.constant 0 : i32
    return %c0_i32, %c0_i32_0 : i32, i32
  }
  func.func @transform_2(%arg0: i32, %arg1: memref<2x8xi32, #tpu.memory_space<smem>>) -> (i32, i32, i32, i32, i32) {
    %c0_i32 = arith.constant 0 : i32
    %c0_i32_0 = arith.constant 0 : i32
    %c0_i32_1 = arith.constant 0 : i32
    %c0_i32_2 = arith.constant 0 : i32
    %c0_i32_3 = arith.constant 0 : i32
    %c0_i32_4 = arith.constant 0 : i32
    return %c0_i32, %c0_i32_0, %c0_i32_1, %c0_i32_2, %c0_i32_3 : i32, i32, i32, i32, i32
  }
  func.func @transform_3(%arg0: i32, %arg1: memref<2x8xi32, #tpu.memory_space<smem>>) -> (i32, i32, i32, i32) {
    %c0_i32 = arith.constant 0 : i32
    %c0_i32_0 = arith.constant 0 : i32
    %c0_i32_1 = arith.constant 0 : i32
    %c0_i32_2 = arith.constant 0 : i32
    %c0_i32_3 = arith.constant 0 : i32
    return %c0_i32, %c0_i32_0, %c0_i32_1, %c0_i32_2 : i32, i32, i32, i32
  }
  func.func @transform_4(%arg0: i32, %arg1: memref<2x8xi32, #tpu.memory_space<smem>>) -> (i32, i32, i32) {
    %c0_i32 = arith.constant 0 : i32
    %c0_i32_0 = arith.constant 0 : i32
    %c0_i32_1 = arith.constant 0 : i32
    %c0_i32_2 = arith.constant 0 : i32
    return %c0_i32, %c0_i32_0, %c0_i32_1 : i32, i32, i32
  }
  func.func @transform_5(%arg0: i32, %arg1: memref<2x8xi32, #tpu.memory_space<smem>>) -> (i32, i32, i32) {
    %c0_i32 = arith.constant 0 : i32
    %c0_i32_0 = arith.constant 0 : i32
    %c0_i32_1 = arith.constant 0 : i32
    %c0_i32_2 = arith.constant 0 : i32
    return %c0_i32, %c0_i32_0, %c0_i32_1 : i32, i32, i32
  }
  func.func @transform_6(%arg0: i32, %arg1: memref<2x8xi32, #tpu.memory_space<smem>>) -> (i32, i32, i32) {
    %c0_i32 = arith.constant 0 : i32
    %c0_i32_0 = arith.constant 0 : i32
    %c0_i32_1 = arith.constant 0 : i32
    %c0_i32_2 = arith.constant 0 : i32
    return %c0_i32, %c0_i32_0, %c0_i32_1 : i32, i32, i32
  }
  func.func @transform_7(%arg0: i32, %arg1: memref<2x8xi32, #tpu.memory_space<smem>>) -> (i32, i32) {
    %c0_i32 = arith.constant 0 : i32
    %c0_i32_0 = arith.constant 0 : i32
    %c0_i32_1 = arith.constant 0 : i32
    return %c0_i32, %c0_i32_0 : i32, i32
  }
  func.func @transform_8(%arg0: i32, %arg1: memref<2x8xi32, #tpu.memory_space<smem>>) -> (i32, i32) {
    %c0_i32 = arith.constant 0 : i32
    %c0_i32_0 = arith.constant 0 : i32
    %c0_i32_1 = arith.constant 0 : i32
    return %c0_i32, %c0_i32_0 : i32, i32
  }
  func.func @transform_9(%arg0: i32, %arg1: memref<2x8xi32, #tpu.memory_space<smem>>) -> (i32, i32, i32) {
    %c0_i32 = arith.constant 0 : i32
    %c0_i32_0 = arith.constant 0 : i32
    %c0_i32_1 = arith.constant 0 : i32
    return %arg0, %c0_i32, %c0_i32_0 : i32, i32, i32
  }
}

</mosaic_0001>

<llo_original>
// kernel: transformer_forward.1
$region0: #{transformer_forward.1}
  #allocation0 [shape = 'u32[]', space=smem, size = 0x4, offset = 0x4, fixed_abs, tag = 'smem constant byte address 0x4 - core index']
  #allocation1 [shape = 'u32[144,128]{1,0:T(1,128)}', space=vmem, size = 0x12000, scoped, tag = 'internal scratch']
  #allocation2 [shape = 'f32[8,128]{1,0:T(8,128)}', space=vmem, size = 0x1000, scoped, tag = 'scratch operand']
  #allocation3 [shape = 's32[1]{0}', space=sflag, size = 0x4, scoped, tag = 'scoped memory for transformer_forward.1']
  #allocation4 [shape = 'u8[1024]{0}', space=smem, size = 0x400, scoped, tag = 'prefetched SMEM operand 0']
  %s0 = inlined_call_operand.vmem [shape: s32[2,8], index: 0, kind: input, shape index: {}]
  %s1 = inlined_call_operand.vmem [shape: f32[128,128], index: 1, kind: input, shape index: {}]
  %s2 = inlined_call_operand.vmem [shape: f32[16,128], index: 2, kind: input, shape index: {}]
  %s3 = inlined_call_operand.vmem [shape: bf16[2,3,4,128,32], index: 3, kind: input, shape index: {}]
  %s4 = inlined_call_operand.vmem [shape: bf16[2,4,32,128], index: 4, kind: input, shape index: {}]
  %s5 = inlined_call_operand.vmem [shape: bf16[2,128,512], index: 5, kind: input, shape index: {}]
  %s6 = inlined_call_operand.vmem [shape: bf16[2,512,128], index: 6, kind: input, shape index: {}]
  %s7 = inlined_call_operand.vmem [shape: f32[2,1,512], index: 7, kind: input, shape index: {}]
  %s8 = inlined_call_operand.vmem [shape: f32[15,128], index: 8, kind: input, shape index: {}]
  %s9 = inlined_call_operand.vmem [shape: bf16[128,128], index: 9, kind: input, shape index: {}]
  %s10 = inlined_call_operand.hbm [shape: f32[2,8,128], index: 10, kind: output, shape index: {}]
  %s11 = sld [smem:[#allocation0]]
  $region69: #{transformer_forward.1} parent=0
    _
  %s13 = ssub.s32 1, %s11
  %s14 = scalar_select 0, %s13, %s11
  %s15 = sshll.u32 %s0, 4
  %s16 = int_to_ptr.vmem [resolvable:$true] %s15
  %18 = dma.vmem_to_smem %s16, 32, [#allocation4], [#allocation3]
  %19 = dma.done [#allocation3], 32
  %20 = sfence
  $region1: #{transformer_forward.1} parent=0
    #allocation5 [shape = 'u8[8192]{0}', space=vmem, size = 0x2000, scoped, tag = 'output window, operand 0']
    #allocation6 [shape = 's32[2]{0}', space=sflag, size = 0x8, scoped, tag = 'scoped memory for transformer_forward.1']
    %21 = vsyncpa [#allocation6], 0
    %s22 = scalar_lea.sflag [#allocation6], 1
    %23 = vsyncpa %s22, 0
    loop: start=0, step=1, limit=4
    $region2: #{transformer_forward.1} parent=1 // loop_pre_header
      _
    $region3: #{transformer_forward.1} parent=1 // loop_header
      %s25 = sphi 0, %s29
      %p26 = scmp.ge.s32.totalorder %s25, 4
      %s33 = sphi 0, %s33
      %s35 = sphi 0, %s33
      %s36 = sphi 0, %s35
      %s50 = sphi 0, %s36
      %s54 = sphi 0, %s54
      %s56 = sphi 0, %s54
      %s57 = sphi 0, %s56
      %s71 = sphi 0, %s57
      %s75 = sphi 0, %s75
      %s77 = sphi 0, %s75
      %s78 = sphi 0, %s77
      %s92 = sphi 0, %s78
      %s96 = sphi 0, %s96
      %s98 = sphi 0, %s96
      %s99 = sphi 0, %s98
      %s113 = sphi 0, %s99
      %s117 = sphi 0, %s117
      %s119 = sphi 0, %s117
      %s120 = sphi 0, %s119
      %s134 = sphi 0, %s120
      %s138 = sphi 0, %s138
      %s140 = sphi 0, %s138
      %s141 = sphi 0, %s140
      %s155 = sphi 0, %s141
      %s159 = sphi 0, %s159
      %s161 = sphi 0, %s159
      %s162 = sphi 0, %s161
      %s176 = sphi 0, %s162
      %s180 = sphi 0, %s180
      %s182 = sphi 0, %s180
      %s183 = sphi 0, %s182
      %s197 = sphi 0, %s183
      %s201 = sphi 0, %s201
      %s203 = sphi 0, %s201
      %s204 = sphi 0, %s203
      %s218 = sphi 0, %s204
      %s224 = sphi 0, %s226
      %s227 = sphi 0, %s224
      %s228 = sphi 0, %s227
      %s244 = sphi 0, %s228
    $region4: #{transformer_forward.1} parent=1 // loop_header_branch
      %28 = sbr.rel (%p26) target = $region8
    $region5: #{transformer_forward.1} parent=1 // loop_body
      %s30 = ssub.s32 %s25, 1
      %s31 = ssub.s32 %s25, 2
      %s32 = sadd.s32 %s25, 1
      %s34 = sadd.s32 %s33, 1
      %p37 = scmp.eq.s32.totalorder %s25, 1
      %p38 = scmp.ne.s32.totalorder %s33, %s35
      %p39 = scmp.eq.s32.totalorder %s25, 0
      %p40 = por %p38, %p39
      %p41 = scmp.ne.s32.totalorder %s33, %s35
      %p42 = scmp.eq.s32.totalorder %s30, 1
      %p43 = por %p41, %p42
      %p44 = scmp.ne.s32.totalorder %s35, %s36
      %p45 = scmp.eq.s32.totalorder %s30, 0
      %p46 = por %p44, %p45
      %p47 = scmp.ne.s32.totalorder %s35, %s36
      %p48 = scmp.eq.s32.totalorder %s31, 1
      %p49 = por %p47, %p48
      %p51 = scmp.ne.s32.totalorder %s36, %s50
      %p52 = scmp.eq.s32.totalorder %s31, 0
      %p53 = por %p51, %p52
      %s55 = sadd.s32 %s54, 1
      %p58 = scmp.eq.s32.totalorder %s25, 1
      %p59 = scmp.ne.s32.totalorder %s54, %s56
      %p60 = scmp.eq.s32.totalorder %s25, 0
      %p61 = por %p59, %p60
      %p62 = scmp.ne.s32.totalorder %s54, %s56
      %p63 = scmp.eq.s32.totalorder %s30, 1
      %p64 = por %p62, %p63
      %p65 = scmp.ne.s32.totalorder %s56, %s57
      %p66 = scmp.eq.s32.totalorder %s30, 0
      %p67 = por %p65, %p66
      %p68 = scmp.ne.s32.totalorder %s56, %s57
      %p69 = scmp.eq.s32.totalorder %s31, 1
      %p70 = por %p68, %p69
      %p72 = scmp.ne.s32.totalorder %s57, %s71
      %p73 = scmp.eq.s32.totalorder %s31, 0
      %p74 = por %p72, %p73
      %s76 = sadd.s32 %s75, 1
      %p79 = scmp.eq.s32.totalorder %s25, 1
      %p80 = scmp.ne.s32.totalorder %s75, %s77
      %p81 = scmp.eq.s32.totalorder %s25, 0
      %p82 = por %p80, %p81
      %p83 = scmp.ne.s32.totalorder %s75, %s77
      %p84 = scmp.eq.s32.totalorder %s30, 1
      %p85 = por %p83, %p84
      %p86 = scmp.ne.s32.totalorder %s77, %s78
      %p87 = scmp.eq.s32.totalorder %s30, 0
      %p88 = por %p86, %p87
      %p89 = scmp.ne.s32.totalorder %s77, %s78
      %p90 = scmp.eq.s32.totalorder %s31, 1
      %p91 = por %p89, %p90
      %p93 = scmp.ne.s32.totalorder %s78, %s92
      %p94 = scmp.eq.s32.totalorder %s31, 0
      %p95 = por %p93, %p94
      %s97 = sadd.s32 %s96, 1
      %p100 = scmp.eq.s32.totalorder %s25, 1
      %p101 = scmp.ne.s32.totalorder %s96, %s98
      %p102 = scmp.eq.s32.totalorder %s25, 0
      %p103 = por %p101, %p102
      %p104 = scmp.ne.s32.totalorder %s96, %s98
      %p105 = scmp.eq.s32.totalorder %s30, 1
      %p106 = por %p104, %p105
      %p107 = scmp.ne.s32.totalorder %s98, %s99
      %p108 = scmp.eq.s32.totalorder %s30, 0
      %p109 = por %p107, %p108
      %p110 = scmp.ne.s32.totalorder %s98, %s99
      %p111 = scmp.eq.s32.totalorder %s31, 1
      %p112 = por %p110, %p111
      %p114 = scmp.ne.s32.totalorder %s99, %s113
      %p115 = scmp.eq.s32.totalorder %s31, 0
      %p116 = por %p114, %p115
      %s118 = sadd.s32 %s117, 1
      %p121 = scmp.eq.s32.totalorder %s25, 1
      %p122 = scmp.ne.s32.totalorder %s117, %s119
      %p123 = scmp.eq.s32.totalorder %s25, 0
      %p124 = por %p122, %p123
      %p125 = scmp.ne.s32.totalorder %s117, %s119
      %p126 = scmp.eq.s32.totalorder %s30, 1
      %p127 = por %p125, %p126
      %p128 = scmp.ne.s32.totalorder %s119, %s120
      %p129 = scmp.eq.s32.totalorder %s30, 0
      %p130 = por %p128, %p129
      %p131 = scmp.ne.s32.totalorder %s119, %s120
      %p132 = scmp.eq.s32.totalorder %s31, 1
      %p133 = por %p131, %p132
      %p135 = scmp.ne.s32.totalorder %s120, %s134
      %p136 = scmp.eq.s32.totalorder %s31, 0
      %p137 = por %p135, %p136
      %s139 = sadd.s32 %s138, 1
      %p142 = scmp.eq.s32.totalorder %s25, 1
      %p143 = scmp.ne.s32.totalorder %s138, %s140
      %p144 = scmp.eq.s32.totalorder %s25, 0
      %p145 = por %p143, %p144
      %p146 = scmp.ne.s32.totalorder %s138, %s140
      %p147 = scmp.eq.s32.totalorder %s30, 1
      %p148 = por %p146, %p147
      %p149 = scmp.ne.s32.totalorder %s140, %s141
      %p150 = scmp.eq.s32.totalorder %s30, 0
      %p151 = por %p149, %p150
      %p152 = scmp.ne.s32.totalorder %s140, %s141
      %p153 = scmp.eq.s32.totalorder %s31, 1
      %p154 = por %p152, %p153
      %p156 = scmp.ne.s32.totalorder %s141, %s155
      %p157 = scmp.eq.s32.totalorder %s31, 0
      %p158 = por %p156, %p157
      %s160 = sadd.s32 %s159, 1
      %p163 = scmp.eq.s32.totalorder %s25, 1
      %p164 = scmp.ne.s32.totalorder %s159, %s161
      %p165 = scmp.eq.s32.totalorder %s25, 0
      %p166 = por %p164, %p165
      %p167 = scmp.ne.s32.totalorder %s159, %s161
      %p168 = scmp.eq.s32.totalorder %s30, 1
      %p169 = por %p167, %p168
      %p170 = scmp.ne.s32.totalorder %s161, %s162
      %p171 = scmp.eq.s32.totalorder %s30, 0
      %p172 = por %p170, %p171
      %p173 = scmp.ne.s32.totalorder %s161, %s162
      %p174 = scmp.eq.s32.totalorder %s31, 1
      %p175 = por %p173, %p174
      %p177 = scmp.ne.s32.totalorder %s162, %s176
      %p178 = scmp.eq.s32.totalorder %s31, 0
      %p179 = por %p177, %p178
      %s181 = sadd.s32 %s180, 1
      %p184 = scmp.eq.s32.totalorder %s25, 1
      %p185 = scmp.ne.s32.totalorder %s180, %s182
      %p186 = scmp.eq.s32.totalorder %s25, 0
      %p187 = por %p185, %p186
      %p188 = scmp.ne.s32.totalorder %s180, %s182
      %p189 = scmp.eq.s32.totalorder %s30, 1
      %p190 = por %p188, %p189
      %p191 = scmp.ne.s32.totalorder %s182, %s183
      %p192 = scmp.eq.s32.totalorder %s30, 0
      %p193 = por %p191, %p192
      %p194 = scmp.ne.s32.totalorder %s182, %s183
      %p195 = scmp.eq.s32.totalorder %s31, 1
      %p196 = por %p194, %p195
      %p198 = scmp.ne.s32.totalorder %s183, %s197
      %p199 = scmp.eq.s32.totalorder %s31, 0
      %p200 = por %p198, %p199
      %s202 = sadd.s32 %s201, 1
      %p205 = scmp.eq.s32.totalorder %s25, 1
      %p206 = scmp.ne.s32.totalorder %s201, %s203
      %p207 = scmp.eq.s32.totalorder %s25, 0
      %p208 = por %p206, %p207
      %p209 = scmp.ne.s32.totalorder %s201, %s203
      %p210 = scmp.eq.s32.totalorder %s30, 1
      %p211 = por %p209, %p210
      %p212 = scmp.ne.s32.totalorder %s203, %s204
      %p213 = scmp.eq.s32.totalorder %s30, 0
      %p214 = por %p212, %p213
      %p215 = scmp.ne.s32.totalorder %s203, %s204
      %p216 = scmp.eq.s32.totalorder %s31, 1
      %p217 = por %p215, %p216
      %p219 = scmp.ne.s32.totalorder %s204, %s218
      %p220 = scmp.eq.s32.totalorder %s31, 0
      %p221 = por %p219, %p220
      %s222 = ssub.s32 %s25, %s32
      %p223 = scmp.eq.s32.totalorder %s222, 0
      %s225 = sadd.s32 %s224, 1
      %s226 = scalar_select %p223, %s224, %s225
      %p229 = pneg %p223
      %p230 = scmp.eq.s32.totalorder %s25, 1
      %p231 = por %p229, %p230
      %p232 = scmp.ne.s32.totalorder %s224, %s227
      %p233 = scmp.eq.s32.totalorder %s25, 0
      %p234 = por %p232, %p233
      %p235 = scmp.ne.s32.totalorder %s224, %s227
      %p236 = scmp.eq.s32.totalorder %s30, 1
      %p237 = por %p235, %p236
      %p238 = scmp.ne.s32.totalorder %s227, %s228
      %p239 = scmp.eq.s32.totalorder %s30, 0
      %p240 = por %p238, %p239
      %p241 = scmp.ne.s32.totalorder %s227, %s228
      %p242 = scmp.eq.s32.totalorder %s31, 1
      %p243 = por %p241, %p242
      %p245 = scmp.ne.s32.totalorder %s228, %s244
      %p246 = scmp.eq.s32.totalorder %s31, 0
      %p247 = por %p245, %p246
      %p248 = scmp.le.s32.totalorder 1, %s25
      %p249 = scmp.lt.s32.totalorder %s25, 3
      %p250 = pnand %p248, %p249
      %p251 = pneg %p250
      // Predicated region
      $region9: #{transformer_forward.1} parent=5 // pred_check
        _
      $region10: #{transformer_forward.1} parent=5 // pred_check_branch
        %253 = sbr.rel (%p250) target = $region12
      $region11: #{transformer_forward.1} parent=5 // pred_region
        %s254 = ssub.s32 %s25, 1
        // Predicated region
        $region13: #{transformer_forward.1} parent=11 // pred_check
          %p255 = pneg %p46
        $region14: #{transformer_forward.1} parent=11 // pred_check_branch
          %257 = sbr.rel (%p255) target = $region16
        $region15: #{transformer_forward.1} parent=11 // pred_region
          _
        $region16: #{transformer_forward.1} parent=11 // pred_fallthru
          _
        // Predicated region
        $region17: #{transformer_forward.1} parent=11 // pred_check
          %p258 = pneg %p67
        $region18: #{transformer_forward.1} parent=11 // pred_check_branch
          %260 = sbr.rel (%p258) target = $region20
        $region19: #{transformer_forward.1} parent=11 // pred_region
          _
        $region20: #{transformer_forward.1} parent=11 // pred_fallthru
          _
        // Predicated region
        $region21: #{transformer_forward.1} parent=11 // pred_check
          %p261 = pneg %p88
        $region22: #{transformer_forward.1} parent=11 // pred_check_branch
          %263 = sbr.rel (%p261) target = $region24
        $region23: #{transformer_forward.1} parent=11 // pred_region
          _
        $region24: #{transformer_forward.1} parent=11 // pred_fallthru
          _
        // Predicated region
        $region25: #{transformer_forward.1} parent=11 // pred_check
          %p264 = pneg %p109
        $region26: #{transformer_forward.1} parent=11 // pred_check_branch
          %266 = sbr.rel (%p264) target = $region28
        $region27: #{transformer_forward.1} parent=11 // pred_region
          _
        $region28: #{transformer_forward.1} parent=11 // pred_fallthru
          _
        // Predicated region
        $region29: #{transformer_forward.1} parent=11 // pred_check
          %p267 = pneg %p130
        $region30: #{transformer_forward.1} parent=11 // pred_check_branch
          %269 = sbr.rel (%p267) target = $region32
        $region31: #{transformer_forward.1} parent=11 // pred_region
          _
        $region32: #{transformer_forward.1} parent=11 // pred_fallthru
          _
        // Predicated region
        $region33: #{transformer_forward.1} parent=11 // pred_check
          %p270 = pneg %p151
        $region34: #{transformer_forward.1} parent=11 // pred_check_branch
          %272 = sbr.rel (%p270) target = $region36
        $region35: #{transformer_forward.1} parent=11 // pred_region
          _
        $region36: #{transformer_forward.1} parent=11 // pred_fallthru
          _
        // Predicated region
        $region37: #{transformer_forward.1} parent=11 // pred_check
          %p273 = pneg %p172
        $region38: #{transformer_forward.1} parent=11 // pred_check_branch
          %275 = sbr.rel (%p273) target = $region40
        $region39: #{transformer_forward.1} parent=11 // pred_region
          _
        $region40: #{transformer_forward.1} parent=11 // pred_fallthru
          _
        // Predicated region
        $region41: #{transformer_forward.1} parent=11 // pred_check
          %p276 = pneg %p193
        $region42: #{transformer_forward.1} parent=11 // pred_check_branch
          %278 = sbr.rel (%p276) target = $region44
        $region43: #{transformer_forward.1} parent=11 // pred_region
          _
        $region44: #{transformer_forward.1} parent=11 // pred_fallthru
          _
        // Predicated region
        $region45: #{transformer_forward.1} parent=11 // pred_check
          %p279 = pneg %p214
        $region46: #{transformer_forward.1} parent=11 // pred_check_branch
          %281 = sbr.rel (%p279) target = $region48
        $region47: #{transformer_forward.1} parent=11 // pred_region
          _
        $region48: #{transformer_forward.1} parent=11 // pred_fallthru
          _
      $region12: #{transformer_forward.1} parent=5 // pred_fallthru
        _
      %p282 = scmp.lt.s32.totalorder %s25, 2
      // Predicated region
      $region49: #{transformer_forward.1} parent=5 // pred_check
        %p283 = pneg %p282
      $region50: #{transformer_forward.1} parent=5 // pred_check_branch
        %285 = sbr.rel (%p283) target = $region52
      $region51: #{transformer_forward.1} parent=5 // pred_region
        _
      $region52: #{transformer_forward.1} parent=5 // pred_fallthru
        _
      %p286 = scmp.le.s32.totalorder 1, %s25
      %p287 = scmp.lt.s32.totalorder %s25, 3
      %p288 = pnand %p286, %p287
      %p289 = pneg %p288
      // Predicated region
      $region53: #{transformer_forward.1} parent=5 // pred_check
        _
      $region54: #{transformer_forward.1} parent=5 // pred_check_branch
        %291 = sbr.rel (%p288) target = $region56
      $region55: #{transformer_forward.1} parent=5 // pred_region
        %s292 = ssub.s32 %s25, 1
        %p293 = pneg %p46
        %p294 = pneg %p43
        %p295 = pneg %p67
        %p296 = pneg %p64
        %p297 = pneg %p88
        %p298 = pneg %p85
        %p299 = pneg %p109
        %p300 = pneg %p106
        %p301 = pneg %p130
        %p302 = pneg %p127
        %p303 = pneg %p151
        %p304 = pneg %p148
        %p305 = pneg %p172
        %p306 = pneg %p169
        %p307 = pneg %p193
        %p308 = pneg %p190
        %p309 = pneg %p214
        %p310 = pneg %p211
        %p311 = pneg %p240
        %p312 = pneg %p237
        %s313 = sand.u32 %s227, 1
        %s314 = scalar_lea.sflag [#allocation6], %s313
        %s315 = sand.u32 %s227, 1
        %s316 = smul.addr %s315, 8
        %s317 = scalar_lea.vmem [#allocation5], %s316
        %s319 = smul.u32 %s30, 128
        %s320 = sld [smem:[#allocation4 + %s319]]
        %s321 = scalar_lea.vmem %s1, %s320
        %v322 = vld [vmem:[%s321] sm:$0x1]
        %v323 = vld [vmem:[%s2] sm:$0x1]
        %v324 = vadd.f32 %v322, %v323
        %325 = vst [vmem:[#allocation2] sm:$0x1] %v324
        %s326 = sadd.s32 %s319, 1
        %s327 = sld [smem:[#allocation4 + %s326]]
        %s328 = scalar_lea.vmem %s1, %s327
        %v329 = vld [vmem:[%s328] sm:$0x1]
        %v330 = vld [vmem:[%s2 + $0x1] sm:$0x1]
        %v331 = vadd.f32 %v329, %v330
        %332 = vst [vmem:[#allocation2 + $0x1] sm:$0x1] %v331
        %s333 = sadd.s32 %s319, 2
        %s334 = sld [smem:[#allocation4 + %s333]]
        %s335 = scalar_lea.vmem %s1, %s334
        %v336 = vld [vmem:[%s335] sm:$0x1]
        %v337 = vld [vmem:[%s2 + $0x2] sm:$0x1]
        %v338 = vadd.f32 %v336, %v337
        %339 = vst [vmem:[#allocation2 + $0x2] sm:$0x1] %v338
        %s340 = sadd.s32 %s319, 3
        %s341 = sld [smem:[#allocation4 + %s340]]
        %s342 = scalar_lea.vmem %s1, %s341
        %v343 = vld [vmem:[%s342] sm:$0x1]
        %v344 = vld [vmem:[%s2 + $0x3] sm:$0x1]
        %v345 = vadd.f32 %v343, %v344
        %346 = vst [vmem:[#allocation2 + $0x3] sm:$0x1] %v345
        %s347 = sadd.s32 %s319, 4
        %s348 = sld [smem:[#allocation4 + %s347]]
        %s349 = scalar_lea.vmem %s1, %s348
        %v350 = vld [vmem:[%s349] sm:$0x1]
        %v351 = vld [vmem:[%s2 + $0x4] sm:$0x1]
        %v352 = vadd.f32 %v350, %v351
        %353 = vst [vmem:[#allocation2 + $0x4] sm:$0x1] %v352
        %s354 = sadd.s32 %s319, 5
        %s355 = sld [smem:[#allocation4 + %s354]]
        %s356 = scalar_lea.vmem %s1, %s355
        %v357 = vld [vmem:[%s356] sm:$0x1]
        %v358 = vld [vmem:[%s2 + $0x5] sm:$0x1]
        %v359 = vadd.f32 %v357, %v358
        %360 = vst [vmem:[#allocation2 + $0x5] sm:$0x1] %v359
        %s361 = sadd.s32 %s319, 6
        %s362 = sld [smem:[#allocation4 + %s361]]
        %s363 = scalar_lea.vmem %s1, %s362
        %v364 = vld [vmem:[%s363] sm:$0x1]
        %v365 = vld [vmem:[%s2 + $0x6] sm:$0x1]
        %v366 = vadd.f32 %v364, %v365
        %367 = vst [vmem:[#allocation2 + $0x6] sm:$0x1] %v366
        %s368 = sadd.s32 %s319, 7
        %s369 = sld [smem:[#allocation4 + %s368]]
        %s370 = scalar_lea.vmem %s1, %s369
        %v371 = vld [vmem:[%s370] sm:$0x1]
        %v372 = vld [vmem:[%s2 + $0x7] sm:$0x1]
        %v373 = vadd.f32 %v371, %v372
        %374 = vst [vmem:[#allocation2 + $0x7] sm:$0x1] %v373
        %v375 = vld [vmem:[#allocation2] sm:$0xff]
        %v376 = vlaneseq
        %v377 = vshrl.u32 %v376, 7
        %v378 = vlaneseq
        %v379 = vand.u32 %v378, 127
        %vm380 = vcmp.le.s32.totalorder %v379, %v377
        %v381 = vsel %vm380, 0.0, -1e+30
        %v382 = vld [vmem:[%s8] sm:$0x1]
        %v383 = vld [vmem:[%s8 + $0x1] sm:$0x1]
        %v384 = vld [vmem:[%s8 + $0x2] sm:$0x1]
        %v385 = vld [vmem:[%s8 + $0x3] sm:$0x1]
        %v386 = vld [vmem:[%s8 + $0x4] sm:$0x1]
        %v387 = vld [vmem:[%s8 + $0x5] sm:$0x1]
        %388 = vadd.xlane.f32.xlu0 %v375
        %v389 = vpop.xlane.xlu0 %388
        %v390 = vrcp.pop 128.0
        %v391 = vmul.f32 %v389, %v390
        %v392 = vsub.f32 %v375, %v391
        %v393 = vmul.f32 %v392, %v392
        %394 = vadd.xlane.f32.xlu0 %v393
        %v395 = vpop.xlane.xlu0 %394
        %v396 = vmul.f32 %v395, %v390
        %v397 = vadd.f32 %v396, 1e-05
        %v398 = vrsqrt.pop %v397
        %v399 = vmul.f32 %v392, %v398
        %v400 = vlaneseq
        %v401 = vshrl.u32 %v400, 7
        %v402 = vsub.s32 0, %v401
        %v403 = vrot.slane %v382, %v402
        %v404 = vmul.f32 %v399, %v403
        %v405 = vlaneseq
        %v406 = vshrl.u32 %v405, 7
        %v407 = vsub.s32 0, %v406
        %v408 = vrot.slane %v383, %v407
        %v409 = vadd.f32 %v404, %v408
        %v410 = vpack.c.bf16 %v409, %v409
        %v411 = vld [vmem:[%s3] sm:$0xf]
        %v412 = vld [vmem:[%s3 + $0x4] sm:$0xf]
        %v413 = vld [vmem:[%s3 + $0x8] sm:$0xf]
        %v414 = vld [vmem:[%s3 + $0xc] sm:$0xf]
        %v415 = vld [vmem:[%s3 + $0x10] sm:$0xf]
        %v416 = vld [vmem:[%s3 + $0x14] sm:$0xf]
        %v417 = vld [vmem:[%s3 + $0x18] sm:$0xf]
        %v418 = vld [vmem:[%s3 + $0x1c] sm:$0xf]
        %v419 = vld [vmem:[%s3 + $0x20] sm:$0xf]
        %v420 = vld [vmem:[%s3 + $0x24] sm:$0xf]
        %v421 = vld [vmem:[%s3 + $0x28] sm:$0xf]
        %v422 = vld [vmem:[%s3 + $0x2c] sm:$0xf]
        %v423 = vld [vmem:[%s3 + $0x30] sm:$0xf]
        %v424 = vld [vmem:[%s3 + $0x34] sm:$0xf]
        %v425 = vld [vmem:[%s3 + $0x38] sm:$0xf]
        %v426 = vld [vmem:[%s3 + $0x3c] sm:$0xf]
        %v443 = vunpack.c.l.b16 %v411
        %v444 = vunpack.c.l.b16 %v412
        %v445 = vunpack.c.l.b16 %v413
        %v446 = vunpack.c.l.b16 %v414
        %v447 = vunpack.c.l.b16 %v415
        %v448 = vunpack.c.l.b16 %v416
        %v449 = vunpack.c.l.b16 %v417
        %v450 = vunpack.c.l.b16 %v418
        %v451 = vunpack.c.l.b16 %v419
        %v452 = vunpack.c.l.b16 %v420
        %v453 = vunpack.c.l.b16 %v421
        %v454 = vunpack.c.l.b16 %v422
        %v455 = vunpack.c.l.b16 %v423
        %v456 = vunpack.c.l.b16 %v424
        %v457 = vunpack.c.l.b16 %v425
        %v458 = vunpack.c.l.b16 %v426
        %v459 = vpack.c.b16 %v444, %v443
        %v460 = vpack.c.b16 %v446, %v445
        %v461 = vpack.c.b16 %v448, %v447
        %v462 = vpack.c.b16 %v450, %v449
        %v463 = vpack.c.b16 %v452, %v451
        %v464 = vpack.c.b16 %v454, %v453
        %v465 = vpack.c.b16 %v456, %v455
        %v466 = vpack.c.b16 %v458, %v457
        %475 = vmatprep.subr.bf16.mxu0 0
        %476 = vmatpush1.bf16.msra.mxu0 %v459
        %477 = vmatprep.subr.bf16.mxu0 0
        %478 = vmatpush1.bf16.msra.mxu0 %v460
        %479 = vmatprep.subr.bf16.mxu0 0
        %480 = vmatpush1.bf16.msra.mxu0 %v461
        %481 = vmatprep.subr.bf16.mxu0 0
        %482 = vmatpush1.bf16.msra.mxu0 %v462
        %483 = vmatprep.subr.bf16.mxu0 0
        %484 = vmatpush1.bf16.msra.mxu0 %v463
        %485 = vmatprep.subr.bf16.mxu0 0
        %486 = vmatpush1.bf16.msra.mxu0 %v464
        %487 = vmatprep.subr.bf16.mxu0 0
        %488 = vmatpush1.bf16.msra.mxu0 %v465
        %489 = vmatprep.subr.bf16.mxu0 0
        %490 = vmatpush1.bf16.msra.mxu0 %v466
        %491 = vmatprep.subr.bf16.mxu0 0
        %492 = vmatpush1.bf16.msra.mxu0 0
        %493 = vmatprep.subr.bf16.mxu0 0
        %494 = vmatpush1.bf16.msra.mxu0 0
        %495 = vmatprep.subr.bf16.mxu0 0
        %496 = vmatpush1.bf16.msra.mxu0 0
        %497 = vmatprep.subr.bf16.mxu0 0
        %498 = vmatpush1.bf16.msra.mxu0 0
        %499 = vmatprep.subr.bf16.mxu0 0
        %500 = vmatpush1.bf16.msra.mxu0 0
        %501 = vmatprep.subr.bf16.mxu0 0
        %502 = vmatpush1.bf16.msra.mxu0 0
        %503 = vmatprep.subr.bf16.mxu0 0
        %504 = vmatpush1.bf16.msra.mxu0 0
        %505 = vmatprep.subr.bf16.mxu0 0
        %506 = vmatpush1.bf16.msra.mxu0 0
        %507 = vmatprep.mubr.bf16.mxu0 0
        %508 = vmatmul.mubr.bf16.gmra.mrb[0].mxu0 %v410
        %v509 = vpop.f32.mrb[0].mxu0
        %v510 = vadd.f32 0.0, %v509
        %v511 = vpop.f32.mrb[0].mxu0
        %v512 = vpop.f32.mrb[0].mxu0
        %v513 = vpop.f32.mrb[0].mxu0
        %514 = vdwg.mxu0
        %s515 = scalar_lea.vmem %s3, 256
        %v516 = vld [vmem:[%s515] sm:$0xf]
        %v517 = vld [vmem:[%s515 + $0x4] sm:$0xf]
        %v518 = vld [vmem:[%s515 + $0x8] sm:$0xf]
        %v519 = vld [vmem:[%s515 + $0xc] sm:$0xf]
        %v520 = vld [vmem:[%s515 + $0x10] sm:$0xf]
        %v521 = vld [vmem:[%s515 + $0x14] sm:$0xf]
        %v522 = vld [vmem:[%s515 + $0x18] sm:$0xf]
        %v523 = vld [vmem:[%s515 + $0x1c] sm:$0xf]
        %v524 = vld [vmem:[%s515 + $0x20] sm:$0xf]
        %v525 = vld [vmem:[%s515 + $0x24] sm:$0xf]
        %v526 = vld [vmem:[%s515 + $0x28] sm:$0xf]
        %v527 = vld [vmem:[%s515 + $0x2c] sm:$0xf]
        %v528 = vld [vmem:[%s515 + $0x30] sm:$0xf]
        %v529 = vld [vmem:[%s515 + $0x34] sm:$0xf]
        %v530 = vld [vmem:[%s515 + $0x38] sm:$0xf]
        %v531 = vld [vmem:[%s515 + $0x3c] sm:$0xf]
        %v548 = vunpack.c.l.b16 %v516
        %v549 = vunpack.c.l.b16 %v517
        %v550 = vunpack.c.l.b16 %v518
        %v551 = vunpack.c.l.b16 %v519
        %v552 = vunpack.c.l.b16 %v520
        %v553 = vunpack.c.l.b16 %v521
        %v554 = vunpack.c.l.b16 %v522
        %v555 = vunpack.c.l.b16 %v523
        %v556 = vunpack.c.l.b16 %v524
        %v557 = vunpack.c.l.b16 %v525
        %v558 = vunpack.c.l.b16 %v526
        %v559 = vunpack.c.l.b16 %v527
        %v560 = vunpack.c.l.b16 %v528
        %v561 = vunpack.c.l.b16 %v529
        %v562 = vunpack.c.l.b16 %v530
        %v563 = vunpack.c.l.b16 %v531
        %v564 = vpack.c.b16 %v549, %v548
        %v565 = vpack.c.b16 %v551, %v550
        %v566 = vpack.c.b16 %v553, %v552
        %v567 = vpack.c.b16 %v555, %v554
        %v568 = vpack.c.b16 %v557, %v556
        %v569 = vpack.c.b16 %v559, %v558
        %v570 = vpack.c.b16 %v561, %v560
        %v571 = vpack.c.b16 %v563, %v562
        %580 = vmatprep.subr.bf16.mxu0 0
        %581 = vmatpush1.bf16.msra.mxu0 %v564
        %582 = vmatprep.subr.bf16.mxu0 0
        %583 = vmatpush1.bf16.msra.mxu0 %v565
        %584 = vmatprep.subr.bf16.mxu0 0
        %585 = vmatpush1.bf16.msra.mxu0 %v566
        %586 = vmatprep.subr.bf16.mxu0 0
        %587 = vmatpush1.bf16.msra.mxu0 %v567
        %588 = vmatprep.subr.bf16.mxu0 0
        %589 = vmatpush1.bf16.msra.mxu0 %v568
        %590 = vmatprep.subr.bf16.mxu0 0
        %591 = vmatpush1.bf16.msra.mxu0 %v569
        %592 = vmatprep.subr.bf16.mxu0 0
        %593 = vmatpush1.bf16.msra.mxu0 %v570
        %594 = vmatprep.subr.bf16.mxu0 0
        %595 = vmatpush1.bf16.msra.mxu0 %v571
        %596 = vmatprep.subr.bf16.mxu0 0
        %597 = vmatpush1.bf16.msra.mxu0 0
        %598 = vmatprep.subr.bf16.mxu0 0
        %599 = vmatpush1.bf16.msra.mxu0 0
        %600 = vmatprep.subr.bf16.mxu0 0
        %601 = vmatpush1.bf16.msra.mxu0 0
        %602 = vmatprep.subr.bf16.mxu0 0
        %603 = vmatpush1.bf16.msra.mxu0 0
        %604 = vmatprep.subr.bf16.mxu0 0
        %605 = vmatpush1.bf16.msra.mxu0 0
        %606 = vmatprep.subr.bf16.mxu0 0
        %607 = vmatpush1.bf16.msra.mxu0 0
        %608 = vmatprep.subr.bf16.mxu0 0
        %609 = vmatpush1.bf16.msra.mxu0 0
        %610 = vmatprep.subr.bf16.mxu0 0
        %611 = vmatpush1.bf16.msra.mxu0 0
        %612 = vmatprep.mubr.bf16.mxu0 0
        %613 = vmatmul.mubr.bf16.gmra.mrb[0].mxu0 %v410
        %v614 = vpop.f32.mrb[0].mxu0
        %v615 = vadd.f32 0.0, %v614
        %v616 = vpop.f32.mrb[0].mxu0
        %v617 = vpop.f32.mrb[0].mxu0
        %v618 = vpop.f32.mrb[0].mxu0
        %619 = vdwg.mxu0
        %s620 = scalar_lea.vmem %s3, 512
        %v621 = vld [vmem:[%s620] sm:$0xf]
        %v622 = vld [vmem:[%s620 + $0x4] sm:$0xf]
        %v623 = vld [vmem:[%s620 + $0x8] sm:$0xf]
        %v624 = vld [vmem:[%s620 + $0xc] sm:$0xf]
        %v625 = vld [vmem:[%s620 + $0x10] sm:$0xf]
        %v626 = vld [vmem:[%s620 + $0x14] sm:$0xf]
        %v627 = vld [vmem:[%s620 + $0x18] sm:$0xf]
        %v628 = vld [vmem:[%s620 + $0x1c] sm:$0xf]
        %v629 = vld [vmem:[%s620 + $0x20] sm:$0xf]
        %v630 = vld [vmem:[%s620 + $0x24] sm:$0xf]
        %v631 = vld [vmem:[%s620 + $0x28] sm:$0xf]
        %v632 = vld [vmem:[%s620 + $0x2c] sm:$0xf]
        %v633 = vld [vmem:[%s620 + $0x30] sm:$0xf]
        %v634 = vld [vmem:[%s620 + $0x34] sm:$0xf]
        %v635 = vld [vmem:[%s620 + $0x38] sm:$0xf]
        %v636 = vld [vmem:[%s620 + $0x3c] sm:$0xf]
        %v653 = vunpack.c.l.b16 %v621
        %v654 = vunpack.c.l.b16 %v622
        %v655 = vunpack.c.l.b16 %v623
        %v656 = vunpack.c.l.b16 %v624
        %v657 = vunpack.c.l.b16 %v625
        %v658 = vunpack.c.l.b16 %v626
        %v659 = vunpack.c.l.b16 %v627
        %v660 = vunpack.c.l.b16 %v628
        %v661 = vunpack.c.l.b16 %v629
        %v662 = vunpack.c.l.b16 %v630
        %v663 = vunpack.c.l.b16 %v631
        %v664 = vunpack.c.l.b16 %v632
        %v665 = vunpack.c.l.b16 %v633
        %v666 = vunpack.c.l.b16 %v634
        %v667 = vunpack.c.l.b16 %v635
        %v668 = vunpack.c.l.b16 %v636
        %v669 = vpack.c.b16 %v654, %v653
        %v670 = vpack.c.b16 %v656, %v655
        %v671 = vpack.c.b16 %v658, %v657
        %v672 = vpack.c.b16 %v660, %v659
        %v673 = vpack.c.b16 %v662, %v661
        %v674 = vpack.c.b16 %v664, %v663
        %v675 = vpack.c.b16 %v666, %v665
        %v676 = vpack.c.b16 %v668, %v667
        %685 = vmatprep.subr.bf16.mxu0 0
        %686 = vmatpush1.bf16.msra.mxu0 %v669
        %687 = vmatprep.subr.bf16.mxu0 0
        %688 = vmatpush1.bf16.msra.mxu0 %v670
        %689 = vmatprep.subr.bf16.mxu0 0
        %690 = vmatpush1.bf16.msra.mxu0 %v671
        %691 = vmatprep.subr.bf16.mxu0 0
        %692 = vmatpush1.bf16.msra.mxu0 %v672
        %693 = vmatprep.subr.bf16.mxu0 0
        %694 = vmatpush1.bf16.msra.mxu0 %v673
        %695 = vmatprep.subr.bf16.mxu0 0
        %696 = vmatpush1.bf16.msra.mxu0 %v674
        %697 = vmatprep.subr.bf16.mxu0 0
        %698 = vmatpush1.bf16.msra.mxu0 %v675
        %699 = vmatprep.subr.bf16.mxu0 0
        %700 = vmatpush1.bf16.msra.mxu0 %v676
        %701 = vmatprep.subr.bf16.mxu0 0
        %702 = vmatpush1.bf16.msra.mxu0 0
        %703 = vmatprep.subr.bf16.mxu0 0
        %704 = vmatpush1.bf16.msra.mxu0 0
        %705 = vmatprep.subr.bf16.mxu0 0
        %706 = vmatpush1.bf16.msra.mxu0 0
        %707 = vmatprep.subr.bf16.mxu0 0
        %708 = vmatpush1.bf16.msra.mxu0 0
        %709 = vmatprep.subr.bf16.mxu0 0
        %710 = vmatpush1.bf16.msra.mxu0 0
        %711 = vmatprep.subr.bf16.mxu0 0
        %712 = vmatpush1.bf16.msra.mxu0 0
        %713 = vmatprep.subr.bf16.mxu0 0
        %714 = vmatpush1.bf16.msra.mxu0 0
        %715 = vmatprep.subr.bf16.mxu0 0
        %716 = vmatpush1.bf16.msra.mxu0 0
        %717 = vmatprep.mubr.bf16.mxu0 0
        %718 = vmatmul.mubr.bf16.gmra.mrb[0].mxu0 %v410
        %v719 = vpop.f32.mrb[0].mxu0
        %v720 = vadd.f32 0.0, %v719
        %v721 = vpop.f32.mrb[0].mxu0
        %v722 = vpop.f32.mrb[0].mxu0
        %v723 = vpop.f32.mrb[0].mxu0
        %724 = vdwg.mxu0
        %v725 = vpack.c.bf16 %v510, %v510
        %v726 = vpack.c.bf16 %v615, %v615
        %vm727 = vcmask 261120
        %v729 = vsel %vm727, %v725, 0
        %v732 = vsel %vm727, %v726, 0
        %734 = vmatprep.subr.bf16.mxu0 0
        %735 = vmatpush1.bf16.xpose.msra.mxu0 %v732
        %736 = vmatprep.subr.bf16.mxu0 0
        %737 = vmatpush1.bf16.xpose.msra.mxu0 0
        %738 = vmatprep.subr.bf16.mxu0 0
        %739 = vmatpush1.bf16.xpose.msra.mxu0 0
        %740 = vmatprep.subr.bf16.mxu0 0
        %741 = vmatpush1.bf16.xpose.msra.mxu0 0
        %742 = vmatprep.subr.bf16.mxu0 0
        %743 = vmatpush1.bf16.xpose.msra.mxu0 0
        %744 = vmatprep.subr.bf16.mxu0 0
        %745 = vmatpush1.bf16.xpose.msra.mxu0 0
        %746 = vmatprep.subr.bf16.mxu0 0
        %747 = vmatpush1.bf16.xpose.msra.mxu0 0
        %748 = vmatprep.subr.bf16.mxu0 0
        %749 = vmatpush1.bf16.xpose.msra.mxu0 0
        %750 = vmatprep.subr.bf16.mxu0 0
        %751 = vmatpush1.bf16.xpose.msra.mxu0 0
        %752 = vmatprep.subr.bf16.mxu0 0
        %753 = vmatpush1.bf16.xpose.msra.mxu0 0
        %754 = vmatprep.subr.bf16.mxu0 0
        %755 = vmatpush1.bf16.xpose.msra.mxu0 0
        %756 = vmatprep.subr.bf16.mxu0 0
        %757 = vmatpush1.bf16.xpose.msra.mxu0 0
        %758 = vmatprep.subr.bf16.mxu0 0
        %759 = vmatpush1.bf16.xpose.msra.mxu0 0
        %760 = vmatprep.subr.bf16.mxu0 0
        %761 = vmatpush1.bf16.xpose.msra.mxu0 0
        %762 = vmatprep.subr.bf16.mxu0 0
        %763 = vmatpush1.bf16.xpose.msra.mxu0 0
        %764 = vmatprep.subr.bf16.mxu0 0
        %765 = vmatpush1.bf16.xpose.msra.mxu0 0
        %766 = vmatprep.mubr.bf16.mxu0 0
        %767 = vmatmul.mubr.bf16.gmra.mrb[0].mxu0 %v729
        %v768 = vpop.f32.mrb[0].mxu0
        %v769 = vadd.f32 %v381, %v768
        %v770 = vpop.f32.mrb[0].mxu0
        %v771 = vpop.f32.mrb[0].mxu0
        %v772 = vpop.f32.mrb[0].mxu0
        %773 = vdwg.mxu0
        %vm774 = vcmask 64512
        %v775 = vsel %vm774, %v769, -inf
        %776 = vmax.xlane.f32.xlu0 %v775
        %v777 = vpop.xlane.xlu0 %776
        %v778 = vsub.f32 %v769, %v777
        %v779 = vmul.f32 %v778, 1.442695
        %v780 = vpow.pop %v779
        %v781 = vsel %vm774, %v780, 0.0
        %782 = vadd.xlane.f32.xlu0 %v781
        %v783 = vpop.xlane.xlu0 %782
        %v784 = vrcp.pop %v783
        %v785 = vmul.f32 %v780, %v784
        %v786 = vpack.c.bf16 %v785, %v785
        %v787 = vpack.c.bf16 %v720, %v720
        %v789 = vsel %vm774, %v786, 0
        %vm791 = vcmask 1043456
        %v793 = vsel %vm791, %v787, 0
        %795 = vmatprep.subr.bf16.mxu0 0
        %796 = vmatpush1.bf16.msra.mxu0 %v793
        %797 = vmatprep.subr.bf16.mxu0 0
        %798 = vmatpush1.bf16.msra.mxu0 0
        %799 = vmatprep.subr.bf16.mxu0 0
        %800 = vmatpush1.bf16.msra.mxu0 0
        %801 = vmatprep.subr.bf16.mxu0 0
        %802 = vmatpush1.bf16.msra.mxu0 0
        %803 = vmatprep.subr.bf16.mxu0 0
        %804 = vmatpush1.bf16.msra.mxu0 0
        %805 = vmatprep.subr.bf16.mxu0 0
        %806 = vmatpush1.bf16.msra.mxu0 0
        %807 = vmatprep.subr.bf16.mxu0 0
        %808 = vmatpush1.bf16.msra.mxu0 0
        %809 = vmatprep.subr.bf16.mxu0 0
        %810 = vmatpush1.bf16.msra.mxu0 0
        %811 = vmatprep.subr.bf16.mxu0 0
        %812 = vmatpush1.bf16.msra.mxu0 0
        %813 = vmatprep.subr.bf16.mxu0 0
        %814 = vmatpush1.bf16.msra.mxu0 0
        %815 = vmatprep.subr.bf16.mxu0 0
        %816 = vmatpush1.bf16.msra.mxu0 0
        %817 = vmatprep.subr.bf16.mxu0 0
        %818 = vmatpush1.bf16.msra.mxu0 0
        %819 = vmatprep.subr.bf16.mxu0 0
        %820 = vmatpush1.bf16.msra.mxu0 0
        %821 = vmatprep.subr.bf16.mxu0 0
        %822 = vmatpush1.bf16.msra.mxu0 0
        %823 = vmatprep.subr.bf16.mxu0 0
        %824 = vmatpush1.bf16.msra.mxu0 0
        %825 = vmatprep.subr.bf16.mxu0 0
        %826 = vmatpush1.bf16.msra.mxu0 0
        %827 = vmatprep.mubr.bf16.mxu0 0
        %828 = vmatmul.mubr.bf16.gmra.mrb[0].mxu0 %v789
        %v829 = vpop.f32.mrb[0].mxu0
        %v830 = vadd.f32 0.0, %v829
        %v831 = vpop.f32.mrb[0].mxu0
        %v832 = vpop.f32.mrb[0].mxu0
        %v833 = vpop.f32.mrb[0].mxu0
        %834 = vdwg.mxu0
        %v835 = vpack.c.bf16 %v830, %v830
        %v836 = vld [vmem:[%s4] sm:$0xf]
        %v837 = vld [vmem:[%s4 + $0x4] sm:$0xf]
        %v838 = vld [vmem:[%s4 + $0x8] sm:$0xf]
        %v839 = vld [vmem:[%s4 + $0xc] sm:$0xf]
        %s840 = scalar_lea.vmem %s3, 64
        %v841 = vld [vmem:[%s840] sm:$0xf]
        %v842 = vld [vmem:[%s840 + $0x4] sm:$0xf]
        %v843 = vld [vmem:[%s840 + $0x8] sm:$0xf]
        %v844 = vld [vmem:[%s840 + $0xc] sm:$0xf]
        %v845 = vld [vmem:[%s840 + $0x10] sm:$0xf]
        %v846 = vld [vmem:[%s840 + $0x14] sm:$0xf]
        %v847 = vld [vmem:[%s840 + $0x18] sm:$0xf]
        %v848 = vld [vmem:[%s840 + $0x1c] sm:$0xf]
        %v849 = vld [vmem:[%s840 + $0x20] sm:$0xf]
        %v850 = vld [vmem:[%s840 + $0x24] sm:$0xf]
        %v851 = vld [vmem:[%s840 + $0x28] sm:$0xf]
        %v852 = vld [vmem:[%s840 + $0x2c] sm:$0xf]
        %v853 = vld [vmem:[%s840 + $0x30] sm:$0xf]
        %v854 = vld [vmem:[%s840 + $0x34] sm:$0xf]
        %v855 = vld [vmem:[%s840 + $0x38] sm:$0xf]
        %v856 = vld [vmem:[%s840 + $0x3c] sm:$0xf]
        %v873 = vunpack.c.l.b16 %v841
        %v874 = vunpack.c.l.b16 %v842
        %v875 = vunpack.c.l.b16 %v843
        %v876 = vunpack.c.l.b16 %v844
        %v877 = vunpack.c.l.b16 %v845
        %v878 = vunpack.c.l.b16 %v846
        %v879 = vunpack.c.l.b16 %v847
        %v880 = vunpack.c.l.b16 %v848
        %v881 = vunpack.c.l.b16 %v849
        %v882 = vunpack.c.l.b16 %v850
        %v883 = vunpack.c.l.b16 %v851
        %v884 = vunpack.c.l.b16 %v852
        %v885 = vunpack.c.l.b16 %v853
        %v886 = vunpack.c.l.b16 %v854
        %v887 = vunpack.c.l.b16 %v855
        %v888 = vunpack.c.l.b16 %v856
        %v889 = vpack.c.b16 %v874, %v873
        %v890 = vpack.c.b16 %v876, %v875
        %v891 = vpack.c.b16 %v878, %v877
        %v892 = vpack.c.b16 %v880, %v879
        %v893 = vpack.c.b16 %v882, %v881
        %v894 = vpack.c.b16 %v884, %v883
        %v895 = vpack.c.b16 %v886, %v885
        %v896 = vpack.c.b16 %v888, %v887
        %905 = vmatprep.subr.bf16.mxu0 0
        %906 = vmatpush1.bf16.msra.mxu0 %v889
        %907 = vmatprep.subr.bf16.mxu0 0
        %908 = vmatpush1.bf16.msra.mxu0 %v890
        %909 = vmatprep.subr.bf16.mxu0 0
        %910 = vmatpush1.bf16.msra.mxu0 %v891
        %911 = vmatprep.subr.bf16.mxu0 0
        %912 = vmatpush1.bf16.msra.mxu0 %v892
        %913 = vmatprep.subr.bf16.mxu0 0
        %914 = vmatpush1.bf16.msra.mxu0 %v893
        %915 = vmatprep.subr.bf16.mxu0 0
        %916 = vmatpush1.bf16.msra.mxu0 %v894
        %917 = vmatprep.subr.bf16.mxu0 0
        %918 = vmatpush1.bf16.msra.mxu0 %v895
        %919 = vmatprep.subr.bf16.mxu0 0
        %920 = vmatpush1.bf16.msra.mxu0 %v896
        %921 = vmatprep.subr.bf16.mxu0 0
        %922 = vmatpush1.bf16.msra.mxu0 0
        %923 = vmatprep.subr.bf16.mxu0 0
        %924 = vmatpush1.bf16.msra.mxu0 0
        %925 = vmatprep.subr.bf16.mxu0 0
        %926 = vmatpush1.bf16.msra.mxu0 0
        %927 = vmatprep.subr.bf16.mxu0 0
        %928 = vmatpush1.bf16.msra.mxu0 0
        %929 = vmatprep.subr.bf16.mxu0 0
        %930 = vmatpush1.bf16.msra.mxu0 0
        %931 = vmatprep.subr.bf16.mxu0 0
        %932 = vmatpush1.bf16.msra.mxu0 0
        %933 = vmatprep.subr.bf16.mxu0 0
        %934 = vmatpush1.bf16.msra.mxu0 0
        %935 = vmatprep.subr.bf16.mxu0 0
        %936 = vmatpush1.bf16.msra.mxu0 0
        %937 = vmatprep.mubr.bf16.mxu0 0
        %938 = vmatmul.mubr.bf16.gmra.mrb[0].mxu0 %v410
        %v939 = vpop.f32.mrb[0].mxu0
        %v940 = vadd.f32 0.0, %v939
        %v941 = vpop.f32.mrb[0].mxu0
        %v942 = vpop.f32.mrb[0].mxu0
        %v943 = vpop.f32.mrb[0].mxu0
        %944 = vdwg.mxu0
        %s945 = scalar_lea.vmem %s3, 320
        %v946 = vld [vmem:[%s945] sm:$0xf]
        %v947 = vld [vmem:[%s945 + $0x4] sm:$0xf]
        %v948 = vld [vmem:[%s945 + $0x8] sm:$0xf]
        %v949 = vld [vmem:[%s945 + $0xc] sm:$0xf]
        %v950 = vld [vmem:[%s945 + $0x10] sm:$0xf]
        %v951 = vld [vmem:[%s945 + $0x14] sm:$0xf]
        %v952 = vld [vmem:[%s945 + $0x18] sm:$0xf]
        %v953 = vld [vmem:[%s945 + $0x1c] sm:$0xf]
        %v954 = vld [vmem:[%s945 + $0x20] sm:$0xf]
        %v955 = vld [vmem:[%s945 + $0x24] sm:$0xf]
        %v956 = vld [vmem:[%s945 + $0x28] sm:$0xf]
        %v957 = vld [vmem:[%s945 + $0x2c] sm:$0xf]
        %v958 = vld [vmem:[%s945 + $0x30] sm:$0xf]
        %v959 = vld [vmem:[%s945 + $0x34] sm:$0xf]
        %v960 = vld [vmem:[%s945 + $0x38] sm:$0xf]
        %v961 = vld [vmem:[%s945 + $0x3c] sm:$0xf]
        %v978 = vunpack.c.l.b16 %v946
        %v979 = vunpack.c.l.b16 %v947
        %v980 = vunpack.c.l.b16 %v948
        %v981 = vunpack.c.l.b16 %v949
        %v982 = vunpack.c.l.b16 %v950
        %v983 = vunpack.c.l.b16 %v951
        %v984 = vunpack.c.l.b16 %v952
        %v985 = vunpack.c.l.b16 %v953
        %v986 = vunpack.c.l.b16 %v954
        %v987 = vunpack.c.l.b16 %v955
        %v988 = vunpack.c.l.b16 %v956
        %v989 = vunpack.c.l.b16 %v957
        %v990 = vunpack.c.l.b16 %v958
        %v991 = vunpack.c.l.b16 %v959
        %v992 = vunpack.c.l.b16 %v960
        %v993 = vunpack.c.l.b16 %v961
        %v994 = vpack.c.b16 %v979, %v978
        %v995 = vpack.c.b16 %v981, %v980
        %v996 = vpack.c.b16 %v983, %v982
        %v997 = vpack.c.b16 %v985, %v984
        %v998 = vpack.c.b16 %v987, %v986
        %v999 = vpack.c.b16 %v989, %v988
        %v1000 = vpack.c.b16 %v991, %v990
        %v1001 = vpack.c.b16 %v993, %v992
        %1010 = vmatprep.subr.bf16.mxu0 0
        %1011 = vmatpush1.bf16.msra.mxu0 %v994
        %1012 = vmatprep.subr.bf16.mxu0 0
        %1013 = vmatpush1.bf16.msra.mxu0 %v995
        %1014 = vmatprep.subr.bf16.mxu0 0
        %1015 = vmatpush1.bf16.msra.mxu0 %v996
        %1016 = vmatprep.subr.bf16.mxu0 0
        %1017 = vmatpush1.bf16.msra.mxu0 %v997
        %1018 = vmatprep.subr.bf16.mxu0 0
        %1019 = vmatpush1.bf16.msra.mxu0 %v998
        %1020 = vmatprep.subr.bf16.mxu0 0
        %1021 = vmatpush1.bf16.msra.mxu0 %v999
        %1022 = vmatprep.subr.bf16.mxu0 0
        %1023 = vmatpush1.bf16.msra.mxu0 %v1000
        %1024 = vmatprep.subr.bf16.mxu0 0
        %1025 = vmatpush1.bf16.msra.mxu0 %v1001
        %1026 = vmatprep.subr.bf16.mxu0 0
        %1027 = vmatpush1.bf16.msra.mxu0 0
        %1028 = vmatprep.subr.bf16.mxu0 0
        %1029 = vmatpush1.bf16.msra.mxu0 0
        %1030 = vmatprep.subr.bf16.mxu0 0
        %1031 = vmatpush1.bf16.msra.mxu0 0
        %1032 = vmatprep.subr.bf16.mxu0 0
        %1033 = vmatpush1.bf16.msra.mxu0 0
        %1034 = vmatprep.subr.bf16.mxu0 0
        %1035 = vmatpush1.bf16.msra.mxu0 0
        %1036 = vmatprep.subr.bf16.mxu0 0
        %1037 = vmatpush1.bf16.msra.mxu0 0
        %1038 = vmatprep.subr.bf16.mxu0 0
        %1039 = vmatpush1.bf16.msra.mxu0 0
        %1040 = vmatprep.subr.bf16.mxu0 0
        %1041 = vmatpush1.bf16.msra.mxu0 0
        %1042 = vmatprep.mubr.bf16.mxu0 0
        %1043 = vmatmul.mubr.bf16.gmra.mrb[0].mxu0 %v410
        %v1044 = vpop.f32.mrb[0].mxu0
        %v1045 = vadd.f32 0.0, %v1044
        %v1046 = vpop.f32.mrb[0].mxu0
        %v1047 = vpop.f32.mrb[0].mxu0
        %v1048 = vpop.f32.mrb[0].mxu0
        %1049 = vdwg.mxu0
        %s1050 = scalar_lea.vmem %s3, 576
        %v1051 = vld [vmem:[%s1050] sm:$0xf]
        %v1052 = vld [vmem:[%s1050 + $0x4] sm:$0xf]
        %v1053 = vld [vmem:[%s1050 + $0x8] sm:$0xf]
        %v1054 = vld [vmem:[%s1050 + $0xc] sm:$0xf]
        %v1055 = vld [vmem:[%s1050 + $0x10] sm:$0xf]
        %v1056 = vld [vmem:[%s1050 + $0x14] sm:$0xf]
        %v1057 = vld [vmem:[%s1050 + $0x18] sm:$0xf]
        %v1058 = vld [vmem:[%s1050 + $0x1c] sm:$0xf]
        %v1059 = vld [vmem:[%s1050 + $0x20] sm:$0xf]
        %v1060 = vld [vmem:[%s1050 + $0x24] sm:$0xf]
        %v1061 = vld [vmem:[%s1050 + $0x28] sm:$0xf]
        %v1062 = vld [vmem:[%s1050 + $0x2c] sm:$0xf]
        %v1063 = vld [vmem:[%s1050 + $0x30] sm:$0xf]
        %v1064 = vld [vmem:[%s1050 + $0x34] sm:$0xf]
        %v1065 = vld [vmem:[%s1050 + $0x38] sm:$0xf]
        %v1066 = vld [vmem:[%s1050 + $0x3c] sm:$0xf]
        %v1083 = vunpack.c.l.b16 %v1051
        %v1084 = vunpack.c.l.b16 %v1052
        %v1085 = vunpack.c.l.b16 %v1053
        %v1086 = vunpack.c.l.b16 %v1054
        %v1087 = vunpack.c.l.b16 %v1055
        %v1088 = vunpack.c.l.b16 %v1056
        %v1089 = vunpack.c.l.b16 %v1057
        %v1090 = vunpack.c.l.b16 %v1058
        %v1091 = vunpack.c.l.b16 %v1059
        %v1092 = vunpack.c.l.b16 %v1060
        %v1093 = vunpack.c.l.b16 %v1061
        %v1094 = vunpack.c.l.b16 %v1062
        %v1095 = vunpack.c.l.b16 %v1063
        %v1096 = vunpack.c.l.b16 %v1064
        %v1097 = vunpack.c.l.b16 %v1065
        %v1098 = vunpack.c.l.b16 %v1066
        %v1099 = vpack.c.b16 %v1084, %v1083
        %v1100 = vpack.c.b16 %v1086, %v1085
        %v1101 = vpack.c.b16 %v1088, %v1087
        %v1102 = vpack.c.b16 %v1090, %v1089
        %v1103 = vpack.c.b16 %v1092, %v1091
        %v1104 = vpack.c.b16 %v1094, %v1093
        %v1105 = vpack.c.b16 %v1096, %v1095
        %v1106 = vpack.c.b16 %v1098, %v1097
        %1115 = vmatprep.subr.bf16.mxu0 0
        %1116 = vmatpush1.bf16.msra.mxu0 %v1099
        %1117 = vmatprep.subr.bf16.mxu0 0
        %1118 = vmatpush1.bf16.msra.mxu0 %v1100
        %1119 = vmatprep.subr.bf16.mxu0 0
        %1120 = vmatpush1.bf16.msra.mxu0 %v1101
        %1121 = vmatprep.subr.bf16.mxu0 0
        %1122 = vmatpush1.bf16.msra.mxu0 %v1102
        %1123 = vmatprep.subr.bf16.mxu0 0
        %1124 = vmatpush1.bf16.msra.mxu0 %v1103
        %1125 = vmatprep.subr.bf16.mxu0 0
        %1126 = vmatpush1.bf16.msra.mxu0 %v1104
        %1127 = vmatprep.subr.bf16.mxu0 0
        %1128 = vmatpush1.bf16.msra.mxu0 %v1105
        %1129 = vmatprep.subr.bf16.mxu0 0
        %1130 = vmatpush1.bf16.msra.mxu0 %v1106
        %1131 = vmatprep.subr.bf16.mxu0 0
        %1132 = vmatpush1.bf16.msra.mxu0 0
        %1133 = vmatprep.subr.bf16.mxu0 0
        %1134 = vmatpush1.bf16.msra.mxu0 0
        %1135 = vmatprep.subr.bf16.mxu0 0
        %1136 = vmatpush1.bf16.msra.mxu0 0
        %1137 = vmatprep.subr.bf16.mxu0 0
        %1138 = vmatpush1.bf16.msra.mxu0 0
        %1139 = vmatprep.subr.bf16.mxu0 0
        %1140 = vmatpush1.bf16.msra.mxu0 0
        %1141 = vmatprep.subr.bf16.mxu0 0
        %1142 = vmatpush1.bf16.msra.mxu0 0
        %1143 = vmatprep.subr.bf16.mxu0 0
        %1144 = vmatpush1.bf16.msra.mxu0 0
        %1145 = vmatprep.subr.bf16.mxu0 0
        %1146 = vmatpush1.bf16.msra.mxu0 0
        %1147 = vmatprep.mubr.bf16.mxu0 0
        %1148 = vmatmul.mubr.bf16.gmra.mrb[0].mxu0 %v410
        %v1149 = vpop.f32.mrb[0].mxu0
        %v1150 = vadd.f32 0.0, %v1149
        %v1151 = vpop.f32.mrb[0].mxu0
        %v1152 = vpop.f32.mrb[0].mxu0
        %v1153 = vpop.f32.mrb[0].mxu0
        %1154 = vdwg.mxu0
        %v1155 = vpack.c.bf16 %v940, %v940
        %v1156 = vpack.c.bf16 %v1045, %v1045
        %v1158 = vsel %vm727, %v1155, 0
        %v1161 = vsel %vm727, %v1156, 0
        %1163 = vmatprep.subr.bf16.mxu0 0
        %1164 = vmatpush1.bf16.xpose.msra.mxu0 %v1161
        %1165 = vmatprep.subr.bf16.mxu0 0
        %1166 = vmatpush1.bf16.xpose.msra.mxu0 0
        %1167 = vmatprep.subr.bf16.mxu0 0
        %1168 = vmatpush1.bf16.xpose.msra.mxu0 0
        %1169 = vmatprep.subr.bf16.mxu0 0
        %1170 = vmatpush1.bf16.xpose.msra.mxu0 0
        %1171 = vmatprep.subr.bf16.mxu0 0
        %1172 = vmatpush1.bf16.xpose.msra.mxu0 0
        %1173 = vmatprep.subr.bf16.mxu0 0
        %1174 = vmatpush1.bf16.xpose.msra.mxu0 0
        %1175 = vmatprep.subr.bf16.mxu0 0
        %1176 = vmatpush1.bf16.xpose.msra.mxu0 0
        %1177 = vmatprep.subr.bf16.mxu0 0
        %1178 = vmatpush1.bf16.xpose.msra.mxu0 0
        %1179 = vmatprep.subr.bf16.mxu0 0
        %1180 = vmatpush1.bf16.xpose.msra.mxu0 0
        %1181 = vmatprep.subr.bf16.mxu0 0
        %1182 = vmatpush1.bf16.xpose.msra.mxu0 0
        %1183 = vmatprep.subr.bf16.mxu0 0
        %1184 = vmatpush1.bf16.xpose.msra.mxu0 0
        %1185 = vmatprep.subr.bf16.mxu0 0
        %1186 = vmatpush1.bf16.xpose.msra.mxu0 0
        %1187 = vmatprep.subr.bf16.mxu0 0
        %1188 = vmatpush1.bf16.xpose.msra.mxu0 0
        %1189 = vmatprep.subr.bf16.mxu0 0
        %1190 = vmatpush1.bf16.xpose.msra.mxu0 0
        %1191 = vmatprep.subr.bf16.mxu0 0
        %1192 = vmatpush1.bf16.xpose.msra.mxu0 0
        %1193 = vmatprep.subr.bf16.mxu0 0
        %1194 = vmatpush1.bf16.xpose.msra.mxu0 0
        %1195 = vmatprep.mubr.bf16.mxu0 0
        %1196 = vmatmul.mubr.bf16.gmra.mrb[0].mxu0 %v1158
        %v1197 = vpop.f32.mrb[0].mxu0
        %v1198 = vadd.f32 %v381, %v1197
        %v1199 = vpop.f32.mrb[0].mxu0
        %v1200 = vpop.f32.mrb[0].mxu0
        %v1201 = vpop.f32.mrb[0].mxu0
        %1202 = vdwg.mxu0
        %v1203 = vsel %vm774, %v1198, -inf
        %1204 = vmax.xlane.f32.xlu0 %v1203
        %v1205 = vpop.xlane.xlu0 %1204
        %v1206 = vsub.f32 %v1198, %v1205
        %v1207 = vmul.f32 %v1206, 1.442695
        %v1208 = vpow.pop %v1207
        %v1209 = vsel %vm774, %v1208, 0.0
        %1210 = vadd.xlane.f32.xlu0 %v1209
        %v1211 = vpop.xlane.xlu0 %1210
        %v1212 = vrcp.pop %v1211
        %v1213 = vmul.f32 %v1208, %v1212
        %v1214 = vpack.c.bf16 %v1213, %v1213
        %v1215 = vpack.c.bf16 %v1150, %v1150
        %v1217 = vsel %vm774, %v1214, 0
        %v1220 = vsel %vm791, %v1215, 0
        %1222 = vmatprep.subr.bf16.mxu0 0
        %1223 = vmatpush1.bf16.msra.mxu0 %v1220
        %1224 = vmatprep.subr.bf16.mxu0 0
        %1225 = vmatpush1.bf16.msra.mxu0 0
        %1226 = vmatprep.subr.bf16.mxu0 0
        %1227 = vmatpush1.bf16.msra.mxu0 0
        %1228 = vmatprep.subr.bf16.mxu0 0
        %1229 = vmatpush1.bf16.msra.mxu0 0
        %1230 = vmatprep.subr.bf16.mxu0 0
        %1231 = vmatpush1.bf16.msra.mxu0 0
        %1232 = vmatprep.subr.bf16.mxu0 0
        %1233 = vmatpush1.bf16.msra.mxu0 0
        %1234 = vmatprep.subr.bf16.mxu0 0
        %1235 = vmatpush1.bf16.msra.mxu0 0
        %1236 = vmatprep.subr.bf16.mxu0 0
        %1237 = vmatpush1.bf16.msra.mxu0 0
        %1238 = vmatprep.subr.bf16.mxu0 0
        %1239 = vmatpush1.bf16.msra.mxu0 0
        %1240 = vmatprep.subr.bf16.mxu0 0
        %1241 = vmatpush1.bf16.msra.mxu0 0
        %1242 = vmatprep.subr.bf16.mxu0 0
        %1243 = vmatpush1.bf16.msra.mxu0 0
        %1244 = vmatprep.subr.bf16.mxu0 0
        %1245 = vmatpush1.bf16.msra.mxu0 0
        %1246 = vmatprep.subr.bf16.mxu0 0
        %1247 = vmatpush1.bf16.msra.mxu0 0
        %1248 = vmatprep.subr.bf16.mxu0 0
        %1249 = vmatpush1.bf16.msra.mxu0 0
        %1250 = vmatprep.subr.bf16.mxu0 0
        %1251 = vmatpush1.bf16.msra.mxu0 0
        %1252 = vmatprep.subr.bf16.mxu0 0
        %1253 = vmatpush1.bf16.msra.mxu0 0
        %1254 = vmatprep.mubr.bf16.mxu0 0
        %1255 = vmatmul.mubr.bf16.gmra.mrb[0].mxu0 %v1217
        %v1256 = vpop.f32.mrb[0].mxu0
        %v1257 = vadd.f32 0.0, %v1256
        %v1258 = vpop.f32.mrb[0].mxu0
        %v1259 = vpop.f32.mrb[0].mxu0
        %v1260 = vpop.f32.mrb[0].mxu0
        %1261 = vdwg.mxu0
        %v1262 = vpack.c.bf16 %v1257, %v1257
        %s1263 = scalar_lea.vmem %s4, 16
        %v1264 = vld [vmem:[%s1263] sm:$0xf]
        %v1265 = vld [vmem:[%s1263 + $0x4] sm:$0xf]
        %v1266 = vld [vmem:[%s1263 + $0x8] sm:$0xf]
        %v1267 = vld [vmem:[%s1263 + $0xc] sm:$0xf]
        %v1272 = vunpack.c.l.b16 %v1264
        %v1273 = vunpack.c.l.b16 %v1265
        %v1274 = vunpack.c.l.b16 %v1266
        %v1275 = vunpack.c.l.b16 %v1267
        %v1276 = vpack.c.b16 %v1273, %v1272
        %v1277 = vpack.c.b16 %v1275, %v1274
        %v1281 = vsel %vm727, %v1262, 0
        %1283 = vmatprep.subr.bf16.mxu0 0
        %1284 = vmatpush1.bf16.msra.mxu0 %v1276
        %1285 = vmatprep.subr.bf16.mxu0 0
        %1286 = vmatpush1.bf16.msra.mxu0 %v1277
        %1287 = vmatprep.subr.bf16.mxu0 0
        %1288 = vmatpush1.bf16.msra.mxu0 0
        %1289 = vmatprep.subr.bf16.mxu0 0
        %1290 = vmatpush1.bf16.msra.mxu0 0
        %1291 = vmatprep.subr.bf16.mxu0 0
        %1292 = vmatpush1.bf16.msra.mxu0 0
        %1293 = vmatprep.subr.bf16.mxu0 0
        %1294 = vmatpush1.bf16.msra.mxu0 0
        %1295 = vmatprep.subr.bf16.mxu0 0
        %1296 = vmatpush1.bf16.msra.mxu0 0
        %1297 = vmatprep.subr.bf16.mxu0 0
        %1298 = vmatpush1.bf16.msra.mxu0 0
        %1299 = vmatprep.subr.bf16.mxu0 0
        %1300 = vmatpush1.bf16.msra.mxu0 0
        %1301 = vmatprep.subr.bf16.mxu0 0
        %1302 = vmatpush1.bf16.msra.mxu0 0
        %1303 = vmatprep.subr.bf16.mxu0 0
        %1304 = vmatpush1.bf16.msra.mxu0 0
        %1305 = vmatprep.subr.bf16.mxu0 0
        %1306 = vmatpush1.bf16.msra.mxu0 0
        %1307 = vmatprep.subr.bf16.mxu0 0
        %1308 = vmatpush1.bf16.msra.mxu0 0
        %1309 = vmatprep.subr.bf16.mxu0 0
        %1310 = vmatpush1.bf16.msra.mxu0 0
        %1311 = vmatprep.subr.bf16.mxu0 0
        %1312 = vmatpush1.bf16.msra.mxu0 0
        %1313 = vmatprep.subr.bf16.mxu0 0
        %1314 = vmatpush1.bf16.msra.mxu0 0
        %1315 = vmatprep.mubr.bf16.mxu0 0
        %1316 = vmatmul.mubr.bf16.gmra.mrb[0].mxu0 %v1281
        %v1317 = vpop.f32.mrb[0].mxu0
        %v1318 = vadd.f32 0.0, %v1317
        %v1319 = vpop.f32.mrb[0].mxu0
        %v1320 = vpop.f32.mrb[0].mxu0
        %v1321 = vpop.f32.mrb[0].mxu0
        %1322 = vdwg.mxu0
        %v1327 = vunpack.c.l.b16 %v836
        %v1328 = vunpack.c.l.b16 %v837
        %v1329 = vunpack.c.l.b16 %v838
        %v1330 = vunpack.c.l.b16 %v839
        %v1331 = vpack.c.b16 %v1328, %v1327
        %v1332 = vpack.c.b16 %v1330, %v1329
        %v1336 = vsel %vm727, %v835, 0
        %1338 = vmatprep.subr.bf16.mxu0 0
        %1339 = vmatpush1.bf16.msra.mxu0 %v1331
        %1340 = vmatprep.subr.bf16.mxu0 0
        %1341 = vmatpush1.bf16.msra.mxu0 %v1332
        %1342 = vmatprep.subr.bf16.mxu0 0
        %1343 = vmatpush1.bf16.msra.mxu0 0
        %1344 = vmatprep.subr.bf16.mxu0 0
        %1345 = vmatpush1.bf16.msra.mxu0 0
        %1346 = vmatprep.subr.bf16.mxu0 0
        %1347 = vmatpush1.bf16.msra.mxu0 0
        %1348 = vmatprep.subr.bf16.mxu0 0
        %1349 = vmatpush1.bf16.msra.mxu0 0
        %1350 = vmatprep.subr.bf16.mxu0 0
        %1351 = vmatpush1.bf16.msra.mxu0 0
        %1352 = vmatprep.subr.bf16.mxu0 0
        %1353 = vmatpush1.bf16.msra.mxu0 0
        %1354 = vmatprep.subr.bf16.mxu0 0
        %1355 = vmatpush1.bf16.msra.mxu0 0
        %1356 = vmatprep.subr.bf16.mxu0 0
        %1357 = vmatpush1.bf16.msra.mxu0 0
        %1358 = vmatprep.subr.bf16.mxu0 0
        %1359 = vmatpush1.bf16.msra.mxu0 0
        %1360 = vmatprep.subr.bf16.mxu0 0
        %1361 = vmatpush1.bf16.msra.mxu0 0
        %1362 = vmatprep.subr.bf16.mxu0 0
        %1363 = vmatpush1.bf16.msra.mxu0 0
        %1364 = vmatprep.subr.bf16.mxu0 0
        %1365 = vmatpush1.bf16.msra.mxu0 0
        %1366 = vmatprep.subr.bf16.mxu0 0
        %1367 = vmatpush1.bf16.msra.mxu0 0
        %1368 = vmatprep.subr.bf16.mxu0 0
        %1369 = vmatpush1.bf16.msra.mxu0 0
        %1370 = vmatprep.mubr.bf16.mxu0 0
        %1371 = vmatmul.mubr.bf16.gmra.mrb[0].mxu0 %v1336
        %v1372 = vpop.f32.mrb[0].mxu0
        %v1373 = vadd.f32 %v1318, %v1372
        %v1374 = vpop.f32.mrb[0].mxu0
        %v1375 = vpop.f32.mrb[0].mxu0
        %v1376 = vpop.f32.mrb[0].mxu0
        %1377 = vdwg.mxu0
        %s1378 = scalar_lea.vmem %s3, 128
        %v1379 = vld [vmem:[%s1378] sm:$0xf]
        %v1380 = vld [vmem:[%s1378 + $0x4] sm:$0xf]
        %v1381 = vld [vmem:[%s1378 + $0x8] sm:$0xf]
        %v1382 = vld [vmem:[%s1378 + $0xc] sm:$0xf]
        %v1383 = vld [vmem:[%s1378 + $0x10] sm:$0xf]
        %v1384 = vld [vmem:[%s1378 + $0x14] sm:$0xf]
        %v1385 = vld [vmem:[%s1378 + $0x18] sm:$0xf]
        %v1386 = vld [vmem:[%s1378 + $0x1c] sm:$0xf]
        %v1387 = vld [vmem:[%s1378 + $0x20] sm:$0xf]
        %v1388 = vld [vmem:[%s1378 + $0x24] sm:$0xf]
        %v1389 = vld [vmem:[%s1378 + $0x28] sm:$0xf]
        %v1390 = vld [vmem:[%s1378 + $0x2c] sm:$0xf]
        %v1391 = vld [vmem:[%s1378 + $0x30] sm:$0xf]
        %v1392 = vld [vmem:[%s1378 + $0x34] sm:$0xf]
        %v1393 = vld [vmem:[%s1378 + $0x38] sm:$0xf]
        %v1394 = vld [vmem:[%s1378 + $0x3c] sm:$0xf]
        %v1411 = vunpack.c.l.b16 %v1379
        %v1412 = vunpack.c.l.b16 %v1380
        %v1413 = vunpack.c.l.b16 %v1381
        %v1414 = vunpack.c.l.b16 %v1382
        %v1415 = vunpack.c.l.b16 %v1383
        %v1416 = vunpack.c.l.b16 %v1384
        %v1417 = vunpack.c.l.b16 %v1385
        %v1418 = vunpack.c.l.b16 %v1386
        %v1419 = vunpack.c.l.b16 %v1387
        %v1420 = vunpack.c.l.b16 %v1388
        %v1421 = vunpack.c.l.b16 %v1389
        %v1422 = vunpack.c.l.b16 %v1390
        %v1423 = vunpack.c.l.b16 %v1391
        %v1424 = vunpack.c.l.b16 %v1392
        %v1425 = vunpack.c.l.b16 %v1393
        %v1426 = vunpack.c.l.b16 %v1394
        %v1427 = vpack.c.b16 %v1412, %v1411
        %v1428 = vpack.c.b16 %v1414, %v1413
        %v1429 = vpack.c.b16 %v1416, %v1415
        %v1430 = vpack.c.b16 %v1418, %v1417
        %v1431 = vpack.c.b16 %v1420, %v1419
        %v1432 = vpack.c.b16 %v1422, %v1421
        %v1433 = vpack.c.b16 %v1424, %v1423
        %v1434 = vpack.c.b16 %v1426, %v1425
        %1443 = vmatprep.subr.bf16.mxu0 0
        %1444 = vmatpush1.bf16.msra.mxu0 %v1427
        %1445 = vmatprep.subr.bf16.mxu0 0
        %1446 = vmatpush1.bf16.msra.mxu0 %v1428
        %1447 = vmatprep.subr.bf16.mxu0 0
        %1448 = vmatpush1.bf16.msra.mxu0 %v1429
        %1449 = vmatprep.subr.bf16.mxu0 0
        %1450 = vmatpush1.bf16.msra.mxu0 %v1430
        %1451 = vmatprep.subr.bf16.mxu0 0
        %1452 = vmatpush1.bf16.msra.mxu0 %v1431
        %1453 = vmatprep.subr.bf16.mxu0 0
        %1454 = vmatpush1.bf16.msra.mxu0 %v1432
        %1455 = vmatprep.subr.bf16.mxu0 0
        %1456 = vmatpush1.bf16.msra.mxu0 %v1433
        %1457 = vmatprep.subr.bf16.mxu0 0
        %1458 = vmatpush1.bf16.msra.mxu0 %v1434
        %1459 = vmatprep.subr.bf16.mxu0 0
        %1460 = vmatpush1.bf16.msra.mxu0 0
        %1461 = vmatprep.subr.bf16.mxu0 0
        %1462 = vmatpush1.bf16.msra.mxu0 0
        %1463 = vmatprep.subr.bf16.mxu0 0
        %1464 = vmatpush1.bf16.msra.mxu0 0
        %1465 = vmatprep.subr.bf16.mxu0 0
        %1466 = vmatpush1.bf16.msra.mxu0 0
        %1467 = vmatprep.subr.bf16.mxu0 0
        %1468 = vmatpush1.bf16.msra.mxu0 0
        %1469 = vmatprep.subr.bf16.mxu0 0
        %1470 = vmatpush1.bf16.msra.mxu0 0
        %1471 = vmatprep.subr.bf16.mxu0 0
        %1472 = vmatpush1.bf16.msra.mxu0 0
        %1473 = vmatprep.subr.bf16.mxu0 0
        %1474 = vmatpush1.bf16.msra.mxu0 0
        %1475 = vmatprep.mubr.bf16.mxu0 0
        %1476 = vmatmul.mubr.bf16.gmra.mrb[0].mxu0 %v410
        %v1477 = vpop.f32.mrb[0].mxu0
        %v1478 = vadd.f32 0.0, %v1477
        %v1479 = vpop.f32.mrb[0].mxu0
        %v1480 = vpop.f32.mrb[0].mxu0
        %v1481 = vpop.f32.mrb[0].mxu0
        %1482 = vdwg.mxu0
        %s1483 = scalar_lea.vmem %s3, 384
        %v1484 = vld [vmem:[%s1483] sm:$0xf]
        %v1485 = vld [vmem:[%s1483 + $0x4] sm:$0xf]
        %v1486 = vld [vmem:[%s1483 + $0x8] sm:$0xf]
        %v1487 = vld [vmem:[%s1483 + $0xc] sm:$0xf]
        %v1488 = vld [vmem:[%s1483 + $0x10] sm:$0xf]
        %v1489 = vld [vmem:[%s1483 + $0x14] sm:$0xf]
        %v1490 = vld [vmem:[%s1483 + $0x18] sm:$0xf]
        %v1491 = vld [vmem:[%s1483 + $0x1c] sm:$0xf]
        %v1492 = vld [vmem:[%s1483 + $0x20] sm:$0xf]
        %v1493 = vld [vmem:[%s1483 + $0x24] sm:$0xf]
        %v1494 = vld [vmem:[%s1483 + $0x28] sm:$0xf]
        %v1495 = vld [vmem:[%s1483 + $0x2c] sm:$0xf]
        %v1496 = vld [vmem:[%s1483 + $0x30] sm:$0xf]
        %v1497 = vld [vmem:[%s1483 + $0x34] sm:$0xf]
        %v1498 = vld [vmem:[%s1483 + $0x38] sm:$0xf]
        %v1499 = vld [vmem:[%s1483 + $0x3c] sm:$0xf]
        %v1516 = vunpack.c.l.b16 %v1484
        %v1517 = vunpack.c.l.b16 %v1485
        %v1518 = vunpack.c.l.b16 %v1486
        %v1519 = vunpack.c.l.b16 %v1487
        %v1520 = vunpack.c.l.b16 %v1488
        %v1521 = vunpack.c.l.b16 %v1489
        %v1522 = vunpack.c.l.b16 %v1490
        %v1523 = vunpack.c.l.b16 %v1491
        %v1524 = vunpack.c.l.b16 %v1492
        %v1525 = vunpack.c.l.b16 %v1493
        %v1526 = vunpack.c.l.b16 %v1494
        %v1527 = vunpack.c.l.b16 %v1495
        %v1528 = vunpack.c.l.b16 %v1496
        %v1529 = vunpack.c.l.b16 %v1497
        %v1530 = vunpack.c.l.b16 %v1498
        %v1531 = vunpack.c.l.b16 %v1499
        %v1532 = vpack.c.b16 %v1517, %v1516
        %v1533 = vpack.c.b16 %v1519, %v1518
        %v1534 = vpack.c.b16 %v1521, %v1520
        %v1535 = vpack.c.b16 %v1523, %v1522
        %v1536 = vpack.c.b16 %v1525, %v1524
        %v1537 = vpack.c.b16 %v1527, %v1526
        %v1538 = vpack.c.b16 %v1529, %v1528
        %v1539 = vpack.c.b16 %v1531, %v1530
        %1548 = vmatprep.subr.bf16.mxu0 0
        %1549 = vmatpush1.bf16.msra.mxu0 %v1532
        %1550 = vmatprep.subr.bf16.mxu0 0
        %1551 = vmatpush1.bf16.msra.mxu0 %v1533
        %1552 = vmatprep.subr.bf16.mxu0 0
        %1553 = vmatpush1.bf16.msra.mxu0 %v1534
        %1554 = vmatprep.subr.bf16.mxu0 0
        %1555 = vmatpush1.bf16.msra.mxu0 %v1535
        %1556 = vmatprep.subr.bf16.mxu0 0
        %1557 = vmatpush1.bf16.msra.mxu0 %v1536
        %1558 = vmatprep.subr.bf16.mxu0 0
        %1559 = vmatpush1.bf16.msra.mxu0 %v1537
        %1560 = vmatprep.subr.bf16.mxu0 0
        %1561 = vmatpush1.bf16.msra.mxu0 %v1538
        %1562 = vmatprep.subr.bf16.mxu0 0
        %1563 = vmatpush1.bf16.msra.mxu0 %v1539
        %1564 = vmatprep.subr.bf16.mxu0 0
        %1565 = vmatpush1.bf16.msra.mxu0 0
        %1566 = vmatprep.subr.bf16.mxu0 0
        %1567 = vmatpush1.bf16.msra.mxu0 0
        %1568 = vmatprep.subr.bf16.mxu0 0
        %1569 = vmatpush1.bf16.msra.mxu0 0
        %1570 = vmatprep.subr.bf16.mxu0 0
        %1571 = vmatpush1.bf16.msra.mxu0 0
        %1572 = vmatprep.subr.bf16.mxu0 0
        %1573 = vmatpush1.bf16.msra.mxu0 0
        %1574 = vmatprep.subr.bf16.mxu0 0
        %1575 = vmatpush1.bf16.msra.mxu0 0
        %1576 = vmatprep.subr.bf16.mxu0 0
        %1577 = vmatpush1.bf16.msra.mxu0 0
        %1578 = vmatprep.subr.bf16.mxu0 0
        %1579 = vmatpush1.bf16.msra.mxu0 0
        %1580 = vmatprep.mubr.bf16.mxu0 0
        %1581 = vmatmul.mubr.bf16.gmra.mrb[0].mxu0 %v410
        %v1582 = vpop.f32.mrb[0].mxu0
        %v1583 = vadd.f32 0.0, %v1582
        %v1584 = vpop.f32.mrb[0].mxu0
        %v1585 = vpop.f32.mrb[0].mxu0
        %v1586 = vpop.f32.mrb[0].mxu0
        %1587 = vdwg.mxu0
        %s1588 = scalar_lea.vmem %s3, 640
        %v1589 = vld [vmem:[%s1588] sm:$0xf]
        %v1590 = vld [vmem:[%s1588 + $0x4] sm:$0xf]
        %v1591 = vld [vmem:[%s1588 + $0x8] sm:$0xf]
        %v1592 = vld [vmem:[%s1588 + $0xc] sm:$0xf]
        %v1593 = vld [vmem:[%s1588 + $0x10] sm:$0xf]
        %v1594 = vld [vmem:[%s1588 + $0x14] sm:$0xf]
        %v1595 = vld [vmem:[%s1588 + $0x18] sm:$0xf]
        %v1596 = vld [vmem:[%s1588 + $0x1c] sm:$0xf]
        %v1597 = vld [vmem:[%s1588 + $0x20] sm:$0xf]
        %v1598 = vld [vmem:[%s1588 + $0x24] sm:$0xf]
        %v1599 = vld [vmem:[%s1588 + $0x28] sm:$0xf]
        %v1600 = vld [vmem:[%s1588 + $0x2c] sm:$0xf]
        %v1601 = vld [vmem:[%s1588 + $0x30] sm:$0xf]
        %v1602 = vld [vmem:[%s1588 + $0x34] sm:$0xf]
        %v1603 = vld [vmem:[%s1588 + $0x38] sm:$0xf]
        %v1604 = vld [vmem:[%s1588 + $0x3c] sm:$0xf]
        %v1621 = vunpack.c.l.b16 %v1589
        %v1622 = vunpack.c.l.b16 %v1590
        %v1623 = vunpack.c.l.b16 %v1591
        %v1624 = vunpack.c.l.b16 %v1592
        %v1625 = vunpack.c.l.b16 %v1593
        %v1626 = vunpack.c.l.b16 %v1594
        %v1627 = vunpack.c.l.b16 %v1595
        %v1628 = vunpack.c.l.b16 %v1596
        %v1629 = vunpack.c.l.b16 %v1597
        %v1630 = vunpack.c.l.b16 %v1598
        %v1631 = vunpack.c.l.b16 %v1599
        %v1632 = vunpack.c.l.b16 %v1600
        %v1633 = vunpack.c.l.b16 %v1601
        %v1634 = vunpack.c.l.b16 %v1602
        %v1635 = vunpack.c.l.b16 %v1603
        %v1636 = vunpack.c.l.b16 %v1604
        %v1637 = vpack.c.b16 %v1622, %v1621
        %v1638 = vpack.c.b16 %v1624, %v1623
        %v1639 = vpack.c.b16 %v1626, %v1625
        %v1640 = vpack.c.b16 %v1628, %v1627
        %v1641 = vpack.c.b16 %v1630, %v1629
        %v1642 = vpack.c.b16 %v1632, %v1631
        %v1643 = vpack.c.b16 %v1634, %v1633
        %v1644 = vpack.c.b16 %v1636, %v1635
        %1653 = vmatprep.subr.bf16.mxu0 0
        %1654 = vmatpush1.bf16.msra.mxu0 %v1637
        %1655 = vmatprep.subr.bf16.mxu0 0
        %1656 = vmatpush1.bf16.msra.mxu0 %v1638
        %1657 = vmatprep.subr.bf16.mxu0 0
        %1658 = vmatpush1.bf16.msra.mxu0 %v1639
        %1659 = vmatprep.subr.bf16.mxu0 0
        %1660 = vmatpush1.bf16.msra.mxu0 %v1640
        %1661 = vmatprep.subr.bf16.mxu0 0
        %1662 = vmatpush1.bf16.msra.mxu0 %v1641
        %1663 = vmatprep.subr.bf16.mxu0 0
        %1664 = vmatpush1.bf16.msra.mxu0 %v1642
        %1665 = vmatprep.subr.bf16.mxu0 0
        %1666 = vmatpush1.bf16.msra.mxu0 %v1643
        %1667 = vmatprep.subr.bf16.mxu0 0
        %1668 = vmatpush1.bf16.msra.mxu0 %v1644
        %1669 = vmatprep.subr.bf16.mxu0 0
        %1670 = vmatpush1.bf16.msra.mxu0 0
        %1671 = vmatprep.subr.bf16.mxu0 0
        %1672 = vmatpush1.bf16.msra.mxu0 0
        %1673 = vmatprep.subr.bf16.mxu0 0
        %1674 = vmatpush1.bf16.msra.mxu0 0
        %1675 = vmatprep.subr.bf16.mxu0 0
        %1676 = vmatpush1.bf16.msra.mxu0 0
        %1677 = vmatprep.subr.bf16.mxu0 0
        %1678 = vmatpush1.bf16.msra.mxu0 0
        %1679 = vmatprep.subr.bf16.mxu0 0
        %1680 = vmatpush1.bf16.msra.mxu0 0
        %1681 = vmatprep.subr.bf16.mxu0 0
        %1682 = vmatpush1.bf16.msra.mxu0 0
        %1683 = vmatprep.subr.bf16.mxu0 0
        %1684 = vmatpush1.bf16.msra.mxu0 0
        %1685 = vmatprep.mubr.bf16.mxu0 0
        %1686 = vmatmul.mubr.bf16.gmra.mrb[0].mxu0 %v410
        %v1687 = vpop.f32.mrb[0].mxu0
        %v1688 = vadd.f32 0.0, %v1687
        %v1689 = vpop.f32.mrb[0].mxu0
        %v1690 = vpop.f32.mrb[0].mxu0
        %v1691 = vpop.f32.mrb[0].mxu0
        %1692 = vdwg.mxu0
        %v1693 = vpack.c.bf16 %v1478, %v1478
        %v1694 = vpack.c.bf16 %v1583, %v1583
        %v1696 = vsel %vm727, %v1693, 0
        %v1699 = vsel %vm727, %v1694, 0
        %1701 = vmatprep.subr.bf16.mxu0 0
        %1702 = vmatpush1.bf16.xpose.msra.mxu0 %v1699
        %1703 = vmatprep.subr.bf16.mxu0 0
        %1704 = vmatpush1.bf16.xpose.msra.mxu0 0
        %1705 = vmatprep.subr.bf16.mxu0 0
        %1706 = vmatpush1.bf16.xpose.msra.mxu0 0
        %1707 = vmatprep.subr.bf16.mxu0 0
        %1708 = vmatpush1.bf16.xpose.msra.mxu0 0
        %1709 = vmatprep.subr.bf16.mxu0 0
        %1710 = vmatpush1.bf16.xpose.msra.mxu0 0
        %1711 = vmatprep.subr.bf16.mxu0 0
        %1712 = vmatpush1.bf16.xpose.msra.mxu0 0
        %1713 = vmatprep.subr.bf16.mxu0 0
        %1714 = vmatpush1.bf16.xpose.msra.mxu0 0
        %1715 = vmatprep.subr.bf16.mxu0 0
        %1716 = vmatpush1.bf16.xpose.msra.mxu0 0
        %1717 = vmatprep.subr.bf16.mxu0 0
        %1718 = vmatpush1.bf16.xpose.msra.mxu0 0
        %1719 = vmatprep.subr.bf16.mxu0 0
        %1720 = vmatpush1.bf16.xpose.msra.mxu0 0
        %1721 = vmatprep.subr.bf16.mxu0 0
        %1722 = vmatpush1.bf16.xpose.msra.mxu0 0
        %1723 = vmatprep.subr.bf16.mxu0 0
        %1724 = vmatpush1.bf16.xpose.msra.mxu0 0
        %1725 = vmatprep.subr.bf16.mxu0 0
        %1726 = vmatpush1.bf16.xpose.msra.mxu0 0
        %1727 = vmatprep.subr.bf16.mxu0 0
        %1728 = vmatpush1.bf16.xpose.msra.mxu0 0
        %1729 = vmatprep.subr.bf16.mxu0 0
        %1730 = vmatpush1.bf16.xpose.msra.mxu0 0
        %1731 = vmatprep.subr.bf16.mxu0 0
        %1732 = vmatpush1.bf16.xpose.msra.mxu0 0
        %1733 = vmatprep.mubr.bf16.mxu0 0
        %1734 = vmatmul.mubr.bf16.gmra.mrb[0].mxu0 %v1696
        %v1735 = vpop.f32.mrb[0].mxu0
        %v1736 = vadd.f32 %v381, %v1735
        %v1737 = vpop.f32.mrb[0].mxu0
        %v1738 = vpop.f32.mrb[0].mxu0
        %v1739 = vpop.f32.mrb[0].mxu0
        %1740 = vdwg.mxu0
        %v1741 = vsel %vm774, %v1736, -inf
        %1742 = vmax.xlane.f32.xlu0 %v1741
        %v1743 = vpop.xlane.xlu0 %1742
        %v1744 = vsub.f32 %v1736, %v1743
        %v1745 = vmul.f32 %v1744, 1.442695
        %v1746 = vpow.pop %v1745
        %v1747 = vsel %vm774, %v1746, 0.0
        %1748 = vadd.xlane.f32.xlu0 %v1747
        %v1749 = vpop.xlane.xlu0 %1748
        %v1750 = vrcp.pop %v1749
        %v1751 = vmul.f32 %v1746, %v1750
        %v1752 = vpack.c.bf16 %v1751, %v1751
        %v1753 = vpack.c.bf16 %v1688, %v1688
        %v1755 = vsel %vm774, %v1752, 0
        %v1758 = vsel %vm791, %v1753, 0
        %1760 = vmatprep.subr.bf16.mxu0 0
        %1761 = vmatpush1.bf16.msra.mxu0 %v1758
        %1762 = vmatprep.subr.bf16.mxu0 0
        %1763 = vmatpush1.bf16.msra.mxu0 0
        %1764 = vmatprep.subr.bf16.mxu0 0
        %1765 = vmatpush1.bf16.msra.mxu0 0
        %1766 = vmatprep.subr.bf16.mxu0 0
        %1767 = vmatpush1.bf16.msra.mxu0 0
        %1768 = vmatprep.subr.bf16.mxu0 0
        %1769 = vmatpush1.bf16.msra.mxu0 0
        %1770 = vmatprep.subr.bf16.mxu0 0
        %1771 = vmatpush1.bf16.msra.mxu0 0
        %1772 = vmatprep.subr.bf16.mxu0 0
        %1773 = vmatpush1.bf16.msra.mxu0 0
        %1774 = vmatprep.subr.bf16.mxu0 0
        %1775 = vmatpush1.bf16.msra.mxu0 0
        %1776 = vmatprep.subr.bf16.mxu0 0
        %1777 = vmatpush1.bf16.msra.mxu0 0
        %1778 = vmatprep.subr.bf16.mxu0 0
        %1779 = vmatpush1.bf16.msra.mxu0 0
        %1780 = vmatprep.subr.bf16.mxu0 0
        %1781 = vmatpush1.bf16.msra.mxu0 0
        %1782 = vmatprep.subr.bf16.mxu0 0
        %1783 = vmatpush1.bf16.msra.mxu0 0
        %1784 = vmatprep.subr.bf16.mxu0 0
        %1785 = vmatpush1.bf16.msra.mxu0 0
        %1786 = vmatprep.subr.bf16.mxu0 0
        %1787 = vmatpush1.bf16.msra.mxu0 0
        %1788 = vmatprep.subr.bf16.mxu0 0
        %1789 = vmatpush1.bf16.msra.mxu0 0
        %1790 = vmatprep.subr.bf16.mxu0 0
        %1791 = vmatpush1.bf16.msra.mxu0 0
        %1792 = vmatprep.mubr.bf16.mxu0 0
        %1793 = vmatmul.mubr.bf16.gmra.mrb[0].mxu0 %v1755
        %v1794 = vpop.f32.mrb[0].mxu0
        %v1795 = vadd.f32 0.0, %v1794
        %v1796 = vpop.f32.mrb[0].mxu0
        %v1797 = vpop.f32.mrb[0].mxu0
        %v1798 = vpop.f32.mrb[0].mxu0
        %1799 = vdwg.mxu0
        %v1800 = vpack.c.bf16 %v1795, %v1795
        %s1801 = scalar_lea.vmem %s4, 32
        %v1802 = vld [vmem:[%s1801] sm:$0xf]
        %v1803 = vld [vmem:[%s1801 + $0x4] sm:$0xf]
        %v1804 = vld [vmem:[%s1801 + $0x8] sm:$0xf]
        %v1805 = vld [vmem:[%s1801 + $0xc] sm:$0xf]
        %v1810 = vunpack.c.l.b16 %v1802
        %v1811 = vunpack.c.l.b16 %v1803
        %v1812 = vunpack.c.l.b16 %v1804
        %v1813 = vunpack.c.l.b16 %v1805
        %v1814 = vpack.c.b16 %v1811, %v1810
        %v1815 = vpack.c.b16 %v1813, %v1812
        %v1819 = vsel %vm727, %v1800, 0
        %1821 = vmatprep.subr.bf16.mxu0 0
        %1822 = vmatpush1.bf16.msra.mxu0 %v1814
        %1823 = vmatprep.subr.bf16.mxu0 0
        %1824 = vmatpush1.bf16.msra.mxu0 %v1815
        %1825 = vmatprep.subr.bf16.mxu0 0
        %1826 = vmatpush1.bf16.msra.mxu0 0
        %1827 = vmatprep.subr.bf16.mxu0 0
        %1828 = vmatpush1.bf16.msra.mxu0 0
        %1829 = vmatprep.subr.bf16.mxu0 0
        %1830 = vmatpush1.bf16.msra.mxu0 0
        %1831 = vmatprep.subr.bf16.mxu0 0
        %1832 = vmatpush1.bf16.msra.mxu0 0
        %1833 = vmatprep.subr.bf16.mxu0 0
        %1834 = vmatpush1.bf16.msra.mxu0 0
        %1835 = vmatprep.subr.bf16.mxu0 0
        %1836 = vmatpush1.bf16.msra.mxu0 0
        %1837 = vmatprep.subr.bf16.mxu0 0
        %1838 = vmatpush1.bf16.msra.mxu0 0
        %1839 = vmatprep.subr.bf16.mxu0 0
        %1840 = vmatpush1.bf16.msra.mxu0 0
        %1841 = vmatprep.subr.bf16.mxu0 0
        %1842 = vmatpush1.bf16.msra.mxu0 0
        %1843 = vmatprep.subr.bf16.mxu0 0
        %1844 = vmatpush1.bf16.msra.mxu0 0
        %1845 = vmatprep.subr.bf16.mxu0 0
        %1846 = vmatpush1.bf16.msra.mxu0 0
        %1847 = vmatprep.subr.bf16.mxu0 0
        %1848 = vmatpush1.bf16.msra.mxu0 0
        %1849 = vmatprep.subr.bf16.mxu0 0
        %1850 = vmatpush1.bf16.msra.mxu0 0
        %1851 = vmatprep.subr.bf16.mxu0 0
        %1852 = vmatpush1.bf16.msra.mxu0 0
        %1853 = vmatprep.mubr.bf16.mxu0 0
        %1854 = vmatmul.mubr.bf16.gmra.mrb[0].mxu0 %v1819
        %v1855 = vpop.f32.mrb[0].mxu0
        %v1856 = vadd.f32 0.0, %v1855
        %v1857 = vpop.f32.mrb[0].mxu0
        %v1858 = vpop.f32.mrb[0].mxu0
        %v1859 = vpop.f32.mrb[0].mxu0
        %1860 = vdwg.mxu0
        %v1861 = vadd.f32 %v1373, %v1856
        %s1862 = scalar_lea.vmem %s3, 192
        %v1863 = vld [vmem:[%s1862] sm:$0xf]
        %v1864 = vld [vmem:[%s1862 + $0x4] sm:$0xf]
        %v1865 = vld [vmem:[%s1862 + $0x8] sm:$0xf]
        %v1866 = vld [vmem:[%s1862 + $0xc] sm:$0xf]
        %v1867 = vld [vmem:[%s1862 + $0x10] sm:$0xf]
        %v1868 = vld [vmem:[%s1862 + $0x14] sm:$0xf]
        %v1869 = vld [vmem:[%s1862 + $0x18] sm:$0xf]
        %v1870 = vld [vmem:[%s1862 + $0x1c] sm:$0xf]
        %v1871 = vld [vmem:[%s1862 + $0x20] sm:$0xf]
        %v1872 = vld [vmem:[%s1862 + $0x24] sm:$0xf]
        %v1873 = vld [vmem:[%s1862 + $0x28] sm:$0xf]
        %v1874 = vld [vmem:[%s1862 + $0x2c] sm:$0xf]
        %v1875 = vld [vmem:[%s1862 + $0x30] sm:$0xf]
        %v1876 = vld [vmem:[%s1862 + $0x34] sm:$0xf]
        %v1877 = vld [vmem:[%s1862 + $0x38] sm:$0xf]
        %v1878 = vld [vmem:[%s1862 + $0x3c] sm:$0xf]
        %v1895 = vunpack.c.l.b16 %v1863
        %v1896 = vunpack.c.l.b16 %v1864
        %v1897 = vunpack.c.l.b16 %v1865
        %v1898 = vunpack.c.l.b16 %v1866
        %v1899 = vunpack.c.l.b16 %v1867
        %v1900 = vunpack.c.l.b16 %v1868
        %v1901 = vunpack.c.l.b16 %v1869
        %v1902 = vunpack.c.l.b16 %v1870
        %v1903 = vunpack.c.l.b16 %v1871
        %v1904 = vunpack.c.l.b16 %v1872
        %v1905 = vunpack.c.l.b16 %v1873
        %v1906 = vunpack.c.l.b16 %v1874
        %v1907 = vunpack.c.l.b16 %v1875
        %v1908 = vunpack.c.l.b16 %v1876
        %v1909 = vunpack.c.l.b16 %v1877
        %v1910 = vunpack.c.l.b16 %v1878
        %v1911 = vpack.c.b16 %v1896, %v1895
        %v1912 = vpack.c.b16 %v1898, %v1897
        %v1913 = vpack.c.b16 %v1900, %v1899
        %v1914 = vpack.c.b16 %v1902, %v1901
        %v1915 = vpack.c.b16 %v1904, %v1903
        %v1916 = vpack.c.b16 %v1906, %v1905
        %v1917 = vpack.c.b16 %v1908, %v1907
        %v1918 = vpack.c.b16 %v1910, %v1909
        %1927 = vmatprep.subr.bf16.mxu0 0
        %1928 = vmatpush1.bf16.msra.mxu0 %v1911
        %1929 = vmatprep.subr.bf16.mxu0 0
        %1930 = vmatpush1.bf16.msra.mxu0 %v1912
        %1931 = vmatprep.subr.bf16.mxu0 0
        %1932 = vmatpush1.bf16.msra.mxu0 %v1913
        %1933 = vmatprep.subr.bf16.mxu0 0
        %1934 = vmatpush1.bf16.msra.mxu0 %v1914
        %1935 = vmatprep.subr.bf16.mxu0 0
        %1936 = vmatpush1.bf16.msra.mxu0 %v1915
        %1937 = vmatprep.subr.bf16.mxu0 0
        %1938 = vmatpush1.bf16.msra.mxu0 %v1916
        %1939 = vmatprep.subr.bf16.mxu0 0
        %1940 = vmatpush1.bf16.msra.mxu0 %v1917
        %1941 = vmatprep.subr.bf16.mxu0 0
        %1942 = vmatpush1.bf16.msra.mxu0 %v1918
        %1943 = vmatprep.subr.bf16.mxu0 0
        %1944 = vmatpush1.bf16.msra.mxu0 0
        %1945 = vmatprep.subr.bf16.mxu0 0
        %1946 = vmatpush1.bf16.msra.mxu0 0
        %1947 = vmatprep.subr.bf16.mxu0 0
        %1948 = vmatpush1.bf16.msra.mxu0 0
        %1949 = vmatprep.subr.bf16.mxu0 0
        %1950 = vmatpush1.bf16.msra.mxu0 0
        %1951 = vmatprep.subr.bf16.mxu0 0
        %1952 = vmatpush1.bf16.msra.mxu0 0
        %1953 = vmatprep.subr.bf16.mxu0 0
        %1954 = vmatpush1.bf16.msra.mxu0 0
        %1955 = vmatprep.subr.bf16.mxu0 0
        %1956 = vmatpush1.bf16.msra.mxu0 0
        %1957 = vmatprep.subr.bf16.mxu0 0
        %1958 = vmatpush1.bf16.msra.mxu0 0
        %1959 = vmatprep.mubr.bf16.mxu0 0
        %1960 = vmatmul.mubr.bf16.gmra.mrb[0].mxu0 %v410
        %v1961 = vpop.f32.mrb[0].mxu0
        %v1962 = vadd.f32 0.0, %v1961
        %v1963 = vpop.f32.mrb[0].mxu0
        %v1964 = vpop.f32.mrb[0].mxu0
        %v1965 = vpop.f32.mrb[0].mxu0
        %1966 = vdwg.mxu0
        %s1967 = scalar_lea.vmem %s3, 448
        %v1968 = vld [vmem:[%s1967] sm:$0xf]
        %v1969 = vld [vmem:[%s1967 + $0x4] sm:$0xf]
        %v1970 = vld [vmem:[%s1967 + $0x8] sm:$0xf]
        %v1971 = vld [vmem:[%s1967 + $0xc] sm:$0xf]
        %v1972 = vld [vmem:[%s1967 + $0x10] sm:$0xf]
        %v1973 = vld [vmem:[%s1967 + $0x14] sm:$0xf]
        %v1974 = vld [vmem:[%s1967 + $0x18] sm:$0xf]
        %v1975 = vld [vmem:[%s1967 + $0x1c] sm:$0xf]
        %v1976 = vld [vmem:[%s1967 + $0x20] sm:$0xf]
        %v1977 = vld [vmem:[%s1967 + $0x24] sm:$0xf]
        %v1978 = vld [vmem:[%s1967 + $0x28] sm:$0xf]
        %v1979 = vld [vmem:[%s1967 + $0x2c] sm:$0xf]
        %v1980 = vld [vmem:[%s1967 + $0x30] sm:$0xf]
        %v1981 = vld [vmem:[%s1967 + $0x34] sm:$0xf]
        %v1982 = vld [vmem:[%s1967 + $0x38] sm:$0xf]
        %v1983 = vld [vmem:[%s1967 + $0x3c] sm:$0xf]
        %v2000 = vunpack.c.l.b16 %v1968
        %v2001 = vunpack.c.l.b16 %v1969
        %v2002 = vunpack.c.l.b16 %v1970
        %v2003 = vunpack.c.l.b16 %v1971
        %v2004 = vunpack.c.l.b16 %v1972
        %v2005 = vunpack.c.l.b16 %v1973
        %v2006 = vunpack.c.l.b16 %v1974
        %v2007 = vunpack.c.l.b16 %v1975
        %v2008 = vunpack.c.l.b16 %v1976
        %v2009 = vunpack.c.l.b16 %v1977
        %v2010 = vunpack.c.l.b16 %v1978
        %v2011 = vunpack.c.l.b16 %v1979
        %v2012 = vunpack.c.l.b16 %v1980
        %v2013 = vunpack.c.l.b16 %v1981
        %v2014 = vunpack.c.l.b16 %v1982
        %v2015 = vunpack.c.l.b16 %v1983
        %v2016 = vpack.c.b16 %v2001, %v2000
        %v2017 = vpack.c.b16 %v2003, %v2002
        %v2018 = vpack.c.b16 %v2005, %v2004
        %v2019 = vpack.c.b16 %v2007, %v2006
        %v2020 = vpack.c.b16 %v2009, %v2008
        %v2021 = vpack.c.b16 %v2011, %v2010
        %v2022 = vpack.c.b16 %v2013, %v2012
        %v2023 = vpack.c.b16 %v2015, %v2014
        %2032 = vmatprep.subr.bf16.mxu0 0
        %2033 = vmatpush1.bf16.msra.mxu0 %v2016
        %2034 = vmatprep.subr.bf16.mxu0 0
        %2035 = vmatpush1.bf16.msra.mxu0 %v2017
        %2036 = vmatprep.subr.bf16.mxu0 0
        %2037 = vmatpush1.bf16.msra.mxu0 %v2018
        %2038 = vmatprep.subr.bf16.mxu0 0
        %2039 = vmatpush1.bf16.msra.mxu0 %v2019
        %2040 = vmatprep.subr.bf16.mxu0 0
        %2041 = vmatpush1.bf16.msra.mxu0 %v2020
        %2042 = vmatprep.subr.bf16.mxu0 0
        %2043 = vmatpush1.bf16.msra.mxu0 %v2021
        %2044 = vmatprep.subr.bf16.mxu0 0
        %2045 = vmatpush1.bf16.msra.mxu0 %v2022
        %2046 = vmatprep.subr.bf16.mxu0 0
        %2047 = vmatpush1.bf16.msra.mxu0 %v2023
        %2048 = vmatprep.subr.bf16.mxu0 0
        %2049 = vmatpush1.bf16.msra.mxu0 0
        %2050 = vmatprep.subr.bf16.mxu0 0
        %2051 = vmatpush1.bf16.msra.mxu0 0
        %2052 = vmatprep.subr.bf16.mxu0 0
        %2053 = vmatpush1.bf16.msra.mxu0 0
        %2054 = vmatprep.subr.bf16.mxu0 0
        %2055 = vmatpush1.bf16.msra.mxu0 0
        %2056 = vmatprep.subr.bf16.mxu0 0
        %2057 = vmatpush1.bf16.msra.mxu0 0
        %2058 = vmatprep.subr.bf16.mxu0 0
        %2059 = vmatpush1.bf16.msra.mxu0 0
        %2060 = vmatprep.subr.bf16.mxu0 0
        %2061 = vmatpush1.bf16.msra.mxu0 0
        %2062 = vmatprep.subr.bf16.mxu0 0
        %2063 = vmatpush1.bf16.msra.mxu0 0
        %2064 = vmatprep.mubr.bf16.mxu0 0
        %2065 = vmatmul.mubr.bf16.gmra.mrb[0].mxu0 %v410
        %v2066 = vpop.f32.mrb[0].mxu0
        %v2067 = vadd.f32 0.0, %v2066
        %v2068 = vpop.f32.mrb[0].mxu0
        %v2069 = vpop.f32.mrb[0].mxu0
        %v2070 = vpop.f32.mrb[0].mxu0
        %2071 = vdwg.mxu0
        %s2072 = scalar_lea.vmem %s3, 704
        %v2073 = vld [vmem:[%s2072] sm:$0xf]
        %v2074 = vld [vmem:[%s2072 + $0x4] sm:$0xf]
        %v2075 = vld [vmem:[%s2072 + $0x8] sm:$0xf]
        %v2076 = vld [vmem:[%s2072 + $0xc] sm:$0xf]
        %v2077 = vld [vmem:[%s2072 + $0x10] sm:$0xf]
        %v2078 = vld [vmem:[%s2072 + $0x14] sm:$0xf]
        %v2079 = vld [vmem:[%s2072 + $0x18] sm:$0xf]
        %v2080 = vld [vmem:[%s2072 + $0x1c] sm:$0xf]
        %v2081 = vld [vmem:[%s2072 + $0x20] sm:$0xf]
        %v2082 = vld [vmem:[%s2072 + $0x24] sm:$0xf]
        %v2083 = vld [vmem:[%s2072 + $0x28] sm:$0xf]
        %v2084 = vld [vmem:[%s2072 + $0x2c] sm:$0xf]
        %v2085 = vld [vmem:[%s2072 + $0x30] sm:$0xf]
        %v2086 = vld [vmem:[%s2072 + $0x34] sm:$0xf]
        %v2087 = vld [vmem:[%s2072 + $0x38] sm:$0xf]
        %v2088 = vld [vmem:[%s2072 + $0x3c] sm:$0xf]
        %v2105 = vunpack.c.l.b16 %v2073
        %v2106 = vunpack.c.l.b16 %v2074
        %v2107 = vunpack.c.l.b16 %v2075
        %v2108 = vunpack.c.l.b16 %v2076
        %v2109 = vunpack.c.l.b16 %v2077
        %v2110 = vunpack.c.l.b16 %v2078
        %v2111 = vunpack.c.l.b16 %v2079
        %v2112 = vunpack.c.l.b16 %v2080
        %v2113 = vunpack.c.l.b16 %v2081
        %v2114 = vunpack.c.l.b16 %v2082
        %v2115 = vunpack.c.l.b16 %v2083
        %v2116 = vunpack.c.l.b16 %v2084
        %v2117 = vunpack.c.l.b16 %v2085
        %v2118 = vunpack.c.l.b16 %v2086
        %v2119 = vunpack.c.l.b16 %v2087
        %v2120 = vunpack.c.l.b16 %v2088
        %v2121 = vpack.c.b16 %v2106, %v2105
        %v2122 = vpack.c.b16 %v2108, %v2107
        %v2123 = vpack.c.b16 %v2110, %v2109
        %v2124 = vpack.c.b16 %v2112, %v2111
        %v2125 = vpack.c.b16 %v2114, %v2113
        %v2126 = vpack.c.b16 %v2116, %v2115
        %v2127 = vpack.c.b16 %v2118, %v2117
        %v2128 = vpack.c.b16 %v2120, %v2119
        %2137 = vmatprep.subr.bf16.mxu0 0
        %2138 = vmatpush1.bf16.msra.mxu0 %v2121
        %2139 = vmatprep.subr.bf16.mxu0 0
        %2140 = vmatpush1.bf16.msra.mxu0 %v2122
        %2141 = vmatprep.subr.bf16.mxu0 0
        %2142 = vmatpush1.bf16.msra.mxu0 %v2123
        %2143 = vmatprep.subr.bf16.mxu0 0
        %2144 = vmatpush1.bf16.msra.mxu0 %v2124
        %2145 = vmatprep.subr.bf16.mxu0 0
        %2146 = vmatpush1.bf16.msra.mxu0 %v2125
        %2147 = vmatprep.subr.bf16.mxu0 0
        %2148 = vmatpush1.bf16.msra.mxu0 %v2126
        %2149 = vmatprep.subr.bf16.mxu0 0
        %2150 = vmatpush1.bf16.msra.mxu0 %v2127
        %2151 = vmatprep.subr.bf16.mxu0 0
        %2152 = vmatpush1.bf16.msra.mxu0 %v2128
        %2153 = vmatprep.subr.bf16.mxu0 0
        %2154 = vmatpush1.bf16.msra.mxu0 0
        %2155 = vmatprep.subr.bf16.mxu0 0
        %2156 = vmatpush1.bf16.msra.mxu0 0
        %2157 = vmatprep.subr.bf16.mxu0 0
        %2158 = vmatpush1.bf16.msra.mxu0 0
        %2159 = vmatprep.subr.bf16.mxu0 0
        %2160 = vmatpush1.bf16.msra.mxu0 0
        %2161 = vmatprep.subr.bf16.mxu0 0
        %2162 = vmatpush1.bf16.msra.mxu0 0
        %2163 = vmatprep.subr.bf16.mxu0 0
        %2164 = vmatpush1.bf16.msra.mxu0 0
        %2165 = vmatprep.subr.bf16.mxu0 0
        %2166 = vmatpush1.bf16.msra.mxu0 0
        %2167 = vmatprep.subr.bf16.mxu0 0
        %2168 = vmatpush1.bf16.msra.mxu0 0
        %2169 = vmatprep.mubr.bf16.mxu0 0
        %2170 = vmatmul.mubr.bf16.gmra.mrb[0].mxu0 %v410
        %v2171 = vpop.f32.mrb[0].mxu0
        %v2172 = vadd.f32 0.0, %v2171
        %v2173 = vpop.f32.mrb[0].mxu0
        %v2174 = vpop.f32.mrb[0].mxu0
        %v2175 = vpop.f32.mrb[0].mxu0
        %2176 = vdwg.mxu0
        %v2177 = vpack.c.bf16 %v1962, %v1962
        %v2178 = vpack.c.bf16 %v2067, %v2067
        %v2180 = vsel %vm727, %v2177, 0
        %v2183 = vsel %vm727, %v2178, 0
        %2185 = vmatprep.subr.bf16.mxu0 0
        %2186 = vmatpush1.bf16.xpose.msra.mxu0 %v2183
        %2187 = vmatprep.subr.bf16.mxu0 0
        %2188 = vmatpush1.bf16.xpose.msra.mxu0 0
        %2189 = vmatprep.subr.bf16.mxu0 0
        %2190 = vmatpush1.bf16.xpose.msra.mxu0 0
        %2191 = vmatprep.subr.bf16.mxu0 0
        %2192 = vmatpush1.bf16.xpose.msra.mxu0 0
        %2193 = vmatprep.subr.bf16.mxu0 0
        %2194 = vmatpush1.bf16.xpose.msra.mxu0 0
        %2195 = vmatprep.subr.bf16.mxu0 0
        %2196 = vmatpush1.bf16.xpose.msra.mxu0 0
        %2197 = vmatprep.subr.bf16.mxu0 0
        %2198 = vmatpush1.bf16.xpose.msra.mxu0 0
        %2199 = vmatprep.subr.bf16.mxu0 0
        %2200 = vmatpush1.bf16.xpose.msra.mxu0 0
        %2201 = vmatprep.subr.bf16.mxu0 0
        %2202 = vmatpush1.bf16.xpose.msra.mxu0 0
        %2203 = vmatprep.subr.bf16.mxu0 0
        %2204 = vmatpush1.bf16.xpose.msra.mxu0 0
        %2205 = vmatprep.subr.bf16.mxu0 0
        %2206 = vmatpush1.bf16.xpose.msra.mxu0 0
        %2207 = vmatprep.subr.bf16.mxu0 0
        %2208 = vmatpush1.bf16.xpose.msra.mxu0 0
        %2209 = vmatprep.subr.bf16.mxu0 0
        %2210 = vmatpush1.bf16.xpose.msra.mxu0 0
        %2211 = vmatprep.subr.bf16.mxu0 0
        %2212 = vmatpush1.bf16.xpose.msra.mxu0 0
        %2213 = vmatprep.subr.bf16.mxu0 0
        %2214 = vmatpush1.bf16.xpose.msra.mxu0 0
        %2215 = vmatprep.subr.bf16.mxu0 0
        %2216 = vmatpush1.bf16.xpose.msra.mxu0 0
        %2217 = vmatprep.mubr.bf16.mxu0 0
        %2218 = vmatmul.mubr.bf16.gmra.mrb[0].mxu0 %v2180
        %v2219 = vpop.f32.mrb[0].mxu0
        %v2220 = vadd.f32 %v381, %v2219
        %v2221 = vpop.f32.mrb[0].mxu0
        %v2222 = vpop.f32.mrb[0].mxu0
        %v2223 = vpop.f32.mrb[0].mxu0
        %2224 = vdwg.mxu0
        %v2225 = vsel %vm774, %v2220, -inf
        %2226 = vmax.xlane.f32.xlu0 %v2225
        %v2227 = vpop.xlane.xlu0 %2226
        %v2228 = vsub.f32 %v2220, %v2227
        %v2229 = vmul.f32 %v2228, 1.442695
        %v2230 = vpow.pop %v2229
        %v2231 = vsel %vm774, %v2230, 0.0
        %2232 = vadd.xlane.f32.xlu0 %v2231
        %v2233 = vpop.xlane.xlu0 %2232
        %v2234 = vrcp.pop %v2233
        %v2235 = vmul.f32 %v2230, %v2234
        %v2236 = vpack.c.bf16 %v2235, %v2235
        %v2237 = vpack.c.bf16 %v2172, %v2172
        %v2239 = vsel %vm774, %v2236, 0
        %v2242 = vsel %vm791, %v2237, 0
        %2244 = vmatprep.subr.bf16.mxu0 0
        %2245 = vmatpush1.bf16.msra.mxu0 %v2242
        %2246 = vmatprep.subr.bf16.mxu0 0
        %2247 = vmatpush1.bf16.msra.mxu0 0
        %2248 = vmatprep.subr.bf16.mxu0 0
        %2249 = vmatpush1.bf16.msra.mxu0 0
        %2250 = vmatprep.subr.bf16.mxu0 0
        %2251 = vmatpush1.bf16.msra.mxu0 0
        %2252 = vmatprep.subr.bf16.mxu0 0
        %2253 = vmatpush1.bf16.msra.mxu0 0
        %2254 = vmatprep.subr.bf16.mxu0 0
        %2255 = vmatpush1.bf16.msra.mxu0 0
        %2256 = vmatprep.subr.bf16.mxu0 0
        %2257 = vmatpush1.bf16.msra.mxu0 0
        %2258 = vmatprep.subr.bf16.mxu0 0
        %2259 = vmatpush1.bf16.msra.mxu0 0
        %2260 = vmatprep.subr.bf16.mxu0 0
        %2261 = vmatpush1.bf16.msra.mxu0 0
        %2262 = vmatprep.subr.bf16.mxu0 0
        %2263 = vmatpush1.bf16.msra.mxu0 0
        %2264 = vmatprep.subr.bf16.mxu0 0
        %2265 = vmatpush1.bf16.msra.mxu0 0
        %2266 = vmatprep.subr.bf16.mxu0 0
        %2267 = vmatpush1.bf16.msra.mxu0 0
        %2268 = vmatprep.subr.bf16.mxu0 0
        %2269 = vmatpush1.bf16.msra.mxu0 0
        %2270 = vmatprep.subr.bf16.mxu0 0
        %2271 = vmatpush1.bf16.msra.mxu0 0
        %2272 = vmatprep.subr.bf16.mxu0 0
        %2273 = vmatpush1.bf16.msra.mxu0 0
        %2274 = vmatprep.subr.bf16.mxu0 0
        %2275 = vmatpush1.bf16.msra.mxu0 0
        %2276 = vmatprep.mubr.bf16.mxu0 0
        %2277 = vmatmul.mubr.bf16.gmra.mrb[0].mxu0 %v2239
        %v2278 = vpop.f32.mrb[0].mxu0
        %v2279 = vadd.f32 0.0, %v2278
        %v2280 = vpop.f32.mrb[0].mxu0
        %v2281 = vpop.f32.mrb[0].mxu0
        %v2282 = vpop.f32.mrb[0].mxu0
        %2283 = vdwg.mxu0
        %v2284 = vpack.c.bf16 %v2279, %v2279
        %s2285 = scalar_lea.vmem %s4, 48
        %v2286 = vld [vmem:[%s2285] sm:$0xf]
        %v2287 = vld [vmem:[%s2285 + $0x4] sm:$0xf]
        %v2288 = vld [vmem:[%s2285 + $0x8] sm:$0xf]
        %v2289 = vld [vmem:[%s2285 + $0xc] sm:$0xf]
        %v2294 = vunpack.c.l.b16 %v2286
        %v2295 = vunpack.c.l.b16 %v2287
        %v2296 = vunpack.c.l.b16 %v2288
        %v2297 = vunpack.c.l.b16 %v2289
        %v2298 = vpack.c.b16 %v2295, %v2294
        %v2299 = vpack.c.b16 %v2297, %v2296
        %v2303 = vsel %vm727, %v2284, 0
        %2305 = vmatprep.subr.bf16.mxu0 0
        %2306 = vmatpush1.bf16.msra.mxu0 %v2298
        %2307 = vmatprep.subr.bf16.mxu0 0
        %2308 = vmatpush1.bf16.msra.mxu0 %v2299
        %2309 = vmatprep.subr.bf16.mxu0 0
        %2310 = vmatpush1.bf16.msra.mxu0 0
        %2311 = vmatprep.subr.bf16.mxu0 0
        %2312 = vmatpush1.bf16.msra.mxu0 0
        %2313 = vmatprep.subr.bf16.mxu0 0
        %2314 = vmatpush1.bf16.msra.mxu0 0
        %2315 = vmatprep.subr.bf16.mxu0 0
        %2316 = vmatpush1.bf16.msra.mxu0 0
        %2317 = vmatprep.subr.bf16.mxu0 0
        %2318 = vmatpush1.bf16.msra.mxu0 0
        %2319 = vmatprep.subr.bf16.mxu0 0
        %2320 = vmatpush1.bf16.msra.mxu0 0
        %2321 = vmatprep.subr.bf16.mxu0 0
        %2322 = vmatpush1.bf16.msra.mxu0 0
        %2323 = vmatprep.subr.bf16.mxu0 0
        %2324 = vmatpush1.bf16.msra.mxu0 0
        %2325 = vmatprep.subr.bf16.mxu0 0
        %2326 = vmatpush1.bf16.msra.mxu0 0
        %2327 = vmatprep.subr.bf16.mxu0 0
        %2328 = vmatpush1.bf16.msra.mxu0 0
        %2329 = vmatprep.subr.bf16.mxu0 0
        %2330 = vmatpush1.bf16.msra.mxu0 0
        %2331 = vmatprep.subr.bf16.mxu0 0
        %2332 = vmatpush1.bf16.msra.mxu0 0
        %2333 = vmatprep.subr.bf16.mxu0 0
        %2334 = vmatpush1.bf16.msra.mxu0 0
        %2335 = vmatprep.subr.bf16.mxu0 0
        %2336 = vmatpush1.bf16.msra.mxu0 0
        %2337 = vmatprep.mubr.bf16.mxu0 0
        %2338 = vmatmul.mubr.bf16.gmra.mrb[0].mxu0 %v2303
        %v2339 = vpop.f32.mrb[0].mxu0
        %v2340 = vadd.f32 0.0, %v2339
        %v2341 = vpop.f32.mrb[0].mxu0
        %v2342 = vpop.f32.mrb[0].mxu0
        %v2343 = vpop.f32.mrb[0].mxu0
        %2344 = vdwg.mxu0
        %v2345 = vadd.f32 %v1861, %v2340
        %v2346 = vadd.f32 %v375, %v2345
        %v2347 = vlaneseq
        %v2348 = vshrl.u32 %v2347, 7
        %v2349 = vsub.s32 0, %v2348
        %v2350 = vrot.slane %v386, %v2349
        %v2351 = vadd.f32 %v2346, %v2350
        %2352 = vadd.xlane.f32.xlu0 %v2351
        %v2353 = vpop.xlane.xlu0 %2352
        %v2354 = vmul.f32 %v2353, %v390
        %v2355 = vsub.f32 %v2351, %v2354
        %v2356 = vmul.f32 %v2355, %v2355
        %2357 = vadd.xlane.f32.xlu0 %v2356
        %v2358 = vpop.xlane.xlu0 %2357
        %v2359 = vmul.f32 %v2358, %v390
        %v2360 = vadd.f32 %v2359, 1e-05
        %v2361 = vrsqrt.pop %v2360
        %v2362 = vmul.f32 %v2355, %v2361
        %v2363 = vlaneseq
        %v2364 = vshrl.u32 %v2363, 7
        %v2365 = vsub.s32 0, %v2364
        %v2366 = vrot.slane %v384, %v2365
        %v2367 = vmul.f32 %v2362, %v2366
        %v2368 = vlaneseq
        %v2369 = vshrl.u32 %v2368, 7
        %v2370 = vsub.s32 0, %v2369
        %v2371 = vrot.slane %v385, %v2370
        %v2372 = vadd.f32 %v2367, %v2371
        %v2373 = vpack.c.bf16 %v2372, %v2372
        %v2374 = vld [vmem:[%s5] sm:$0xff]
        %v2375 = vld [vmem:[%s5 + $0x8] sm:$0xff]
        %v2376 = vld [vmem:[%s5 + $0x10] sm:$0xff]
        %v2377 = vld [vmem:[%s5 + $0x18] sm:$0xff]
        %v2378 = vld [vmem:[%s5 + $0x20] sm:$0xff]
        %v2379 = vld [vmem:[%s5 + $0x28] sm:$0xff]
        %v2380 = vld [vmem:[%s5 + $0x30] sm:$0xff]
        %v2381 = vld [vmem:[%s5 + $0x38] sm:$0xff]
        %v2382 = vld [vmem:[%s5 + $0x40] sm:$0xff]
        %v2383 = vld [vmem:[%s5 + $0x48] sm:$0xff]
        %v2384 = vld [vmem:[%s5 + $0x50] sm:$0xff]
        %v2385 = vld [vmem:[%s5 + $0x58] sm:$0xff]
        %v2386 = vld [vmem:[%s5 + $0x60] sm:$0xff]
        %v2387 = vld [vmem:[%s5 + $0x68] sm:$0xff]
        %v2388 = vld [vmem:[%s5 + $0x70] sm:$0xff]
        %v2389 = vld [vmem:[%s5 + $0x78] sm:$0xff]
        %v2390 = vld [vmem:[%s5 + $0x80] sm:$0xff]
        %v2391 = vld [vmem:[%s5 + $0x88] sm:$0xff]
        %v2392 = vld [vmem:[%s5 + $0x90] sm:$0xff]
        %v2393 = vld [vmem:[%s5 + $0x98] sm:$0xff]
        %v2394 = vld [vmem:[%s5 + $0xa0] sm:$0xff]
        %v2395 = vld [vmem:[%s5 + $0xa8] sm:$0xff]
        %v2396 = vld [vmem:[%s5 + $0xb0] sm:$0xff]
        %v2397 = vld [vmem:[%s5 + $0xb8] sm:$0xff]
        %v2398 = vld [vmem:[%s5 + $0xc0] sm:$0xff]
        %v2399 = vld [vmem:[%s5 + $0xc8] sm:$0xff]
        %v2400 = vld [vmem:[%s5 + $0xd0] sm:$0xff]
        %v2401 = vld [vmem:[%s5 + $0xd8] sm:$0xff]
        %v2402 = vld [vmem:[%s5 + $0xe0] sm:$0xff]
        %v2403 = vld [vmem:[%s5 + $0xe8] sm:$0xff]
        %v2404 = vld [vmem:[%s5 + $0xf0] sm:$0xff]
        %v2405 = vld [vmem:[%s5 + $0xf8] sm:$0xff]
        %v2406 = vld [vmem:[%s7] sm:$0xf]
        %v2408 = vlaneseq
        %v2409 = vshrl.u32 %v2408, 7
        %v2410 = vsub.s32 0, %v2409
        %v2411 = vrot.slane %v2406, %v2410
        %v2412 = vlaneseq
        %v2413 = vshrl.u32 %v2412, 7
        %v2414 = vsub.s32 1, %v2413
        %v2415 = vrot.slane %v2406, %v2414
        %v2416 = vlaneseq
        %v2417 = vshrl.u32 %v2416, 7
        %v2418 = vsub.s32 2, %v2417
        %v2419 = vrot.slane %v2406, %v2418
        %v2420 = vlaneseq
        %v2421 = vshrl.u32 %v2420, 7
        %v2422 = vsub.s32 3, %v2421
        %v2423 = vrot.slane %v2406, %v2422
        %v2460 = vunpack.c.l.b16 %v2374
        %v2461 = vunpack.c.h.b16 %v2374
        %v2462 = vunpack.c.l.b16 %v2375
        %v2463 = vunpack.c.h.b16 %v2375
        %v2464 = vunpack.c.l.b16 %v2376
        %v2465 = vunpack.c.h.b16 %v2376
        %v2466 = vunpack.c.l.b16 %v2377
        %v2467 = vunpack.c.h.b16 %v2377
        %v2468 = vunpack.c.l.b16 %v2378
        %v2469 = vunpack.c.h.b16 %v2378
        %v2470 = vunpack.c.l.b16 %v2379
        %v2471 = vunpack.c.h.b16 %v2379
        %v2472 = vunpack.c.l.b16 %v2380
        %v2473 = vunpack.c.h.b16 %v2380
        %v2474 = vunpack.c.l.b16 %v2381
        %v2475 = vunpack.c.h.b16 %v2381
        %v2476 = vunpack.c.l.b16 %v2382
        %v2477 = vunpack.c.h.b16 %v2382
        %v2478 = vunpack.c.l.b16 %v2383
        %v2479 = vunpack.c.h.b16 %v2383
        %v2480 = vunpack.c.l.b16 %v2384
        %v2481 = vunpack.c.h.b16 %v2384
        %v2482 = vunpack.c.l.b16 %v2385
        %v2483 = vunpack.c.h.b16 %v2385
        %v2484 = vunpack.c.l.b16 %v2386
        %v2485 = vunpack.c.h.b16 %v2386
        %v2486 = vunpack.c.l.b16 %v2387
        %v2487 = vunpack.c.h.b16 %v2387
        %v2488 = vunpack.c.l.b16 %v2388
        %v2489 = vunpack.c.h.b16 %v2388
        %v2490 = vunpack.c.l.b16 %v2389
        %v2491 = vunpack.c.h.b16 %v2389
        %v2492 = vunpack.c.l.b16 %v2390
        %v2493 = vunpack.c.h.b16 %v2390
        %v2494 = vunpack.c.l.b16 %v2391
        %v2495 = vunpack.c.h.b16 %v2391
        %v2496 = vunpack.c.l.b16 %v2392
        %v2497 = vunpack.c.h.b16 %v2392
        %v2498 = vunpack.c.l.b16 %v2393
        %v2499 = vunpack.c.h.b16 %v2393
        %v2500 = vunpack.c.l.b16 %v2394
        %v2501 = vunpack.c.h.b16 %v2394
        %v2502 = vunpack.c.l.b16 %v2395
        %v2503 = vunpack.c.h.b16 %v2395
        %v2504 = vunpack.c.l.b16 %v2396
        %v2505 = vunpack.c.h.b16 %v2396
        %v2506 = vunpack.c.l.b16 %v2397
        %v2507 = vunpack.c.h.b16 %v2397
        %v2508 = vunpack.c.l.b16 %v2398
        %v2509 = vunpack.c.h.b16 %v2398
        %v2510 = vunpack.c.l.b16 %v2399
        %v2511 = vunpack.c.h.b16 %v2399
        %v2512 = vunpack.c.l.b16 %v2400
        %v2513 = vunpack.c.h.b16 %v2400
        %v2514 = vunpack.c.l.b16 %v2401
        %v2515 = vunpack.c.h.b16 %v2401
        %v2516 = vunpack.c.l.b16 %v2402
        %v2517 = vunpack.c.h.b16 %v2402
        %v2518 = vunpack.c.l.b16 %v2403
        %v2519 = vunpack.c.h.b16 %v2403
        %v2520 = vunpack.c.l.b16 %v2404
        %v2521 = vunpack.c.h.b16 %v2404
        %v2522 = vunpack.c.l.b16 %v2405
        %v2523 = vunpack.c.h.b16 %v2405
        %v2524 = vpack.c.b16 %v2464, %v2460
        %v2525 = vpack.c.b16 %v2465, %v2461
        %v2526 = vpack.c.b16 %v2466, %v2462
        %v2527 = vpack.c.b16 %v2467, %v2463
        %v2528 = vpack.c.b16 %v2472, %v2468
        %v2529 = vpack.c.b16 %v2473, %v2469
        %v2530 = vpack.c.b16 %v2474, %v2470
        %v2531 = vpack.c.b16 %v2475, %v2471
        %v2532 = vpack.c.b16 %v2480, %v2476
        %v2533 = vpack.c.b16 %v2481, %v2477
        %v2534 = vpack.c.b16 %v2482, %v2478
        %v2535 = vpack.c.b16 %v2483, %v2479
        %v2536 = vpack.c.b16 %v2488, %v2484
        %v2537 = vpack.c.b16 %v2489, %v2485
        %v2538 = vpack.c.b16 %v2490, %v2486
        %v2539 = vpack.c.b16 %v2491, %v2487
        %v2540 = vpack.c.b16 %v2496, %v2492
        %v2541 = vpack.c.b16 %v2497, %v2493
        %v2542 = vpack.c.b16 %v2498, %v2494
        %v2543 = vpack.c.b16 %v2499, %v2495
        %v2544 = vpack.c.b16 %v2504, %v2500
        %v2545 = vpack.c.b16 %v2505, %v2501
        %v2546 = vpack.c.b16 %v2506, %v2502
        %v2547 = vpack.c.b16 %v2507, %v2503
        %v2548 = vpack.c.b16 %v2512, %v2508
        %v2549 = vpack.c.b16 %v2513, %v2509
        %v2550 = vpack.c.b16 %v2514, %v2510
        %v2551 = vpack.c.b16 %v2515, %v2511
        %v2552 = vpack.c.b16 %v2520, %v2516
        %v2553 = vpack.c.b16 %v2521, %v2517
        %v2554 = vpack.c.b16 %v2522, %v2518
        %v2555 = vpack.c.b16 %v2523, %v2519
        %2588 = vmatprep.subr.bf16.mxu0 %v2525
        %2589 = vmatpush1.bf16.msra.mxu0 %v2524
        %2590 = vmatprep.subr.bf16.mxu0 %v2529
        %2591 = vmatpush1.bf16.msra.mxu0 %v2528
        %2592 = vmatprep.subr.bf16.mxu0 %v2533
        %2593 = vmatpush1.bf16.msra.mxu0 %v2532
        %2594 = vmatprep.subr.bf16.mxu0 %v2537
        %2595 = vmatpush1.bf16.msra.mxu0 %v2536
        %2596 = vmatprep.subr.bf16.mxu0 %v2541
        %2597 = vmatpush1.bf16.msra.mxu0 %v2540
        %2598 = vmatprep.subr.bf16.mxu0 %v2545
        %2599 = vmatpush1.bf16.msra.mxu0 %v2544
        %2600 = vmatprep.subr.bf16.mxu0 %v2549
        %2601 = vmatpush1.bf16.msra.mxu0 %v2548
        %2602 = vmatprep.subr.bf16.mxu0 %v2553
        %2603 = vmatpush1.bf16.msra.mxu0 %v2552
        %2604 = vmatprep.subr.bf16.mxu0 0
        %2605 = vmatpush1.bf16.msra.mxu0 0
        %2606 = vmatprep.subr.bf16.mxu0 0
        %2607 = vmatpush1.bf16.msra.mxu0 0
        %2608 = vmatprep.subr.bf16.mxu0 0
        %2609 = vmatpush1.bf16.msra.mxu0 0
        %2610 = vmatprep.subr.bf16.mxu0 0
        %2611 = vmatpush1.bf16.msra.mxu0 0
        %2612 = vmatprep.subr.bf16.mxu0 0
        %2613 = vmatpush1.bf16.msra.mxu0 0
        %2614 = vmatprep.subr.bf16.mxu0 0
        %2615 = vmatpush1.bf16.msra.mxu0 0
        %2616 = vmatprep.subr.bf16.mxu0 0
        %2617 = vmatpush1.bf16.msra.mxu0 0
        %2618 = vmatprep.subr.bf16.mxu0 0
        %2619 = vmatpush1.bf16.msra.mxu0 0
        %2620 = vmatprep.mubr.bf16.mxu0 0
        %2621 = vmatmul.mubr.bf16.gmra.mrb[0].mxu0 %v2373
        %v2622 = vpop.f32.mrb[0].mxu0
        %v2623 = vadd.f32 %v2411, %v2622
        %v2624 = vpop.f32.mrb[0].mxu0
        %v2625 = vadd.f32 %v2415, %v2624
        %v2626 = vpop.f32.mrb[0].mxu0
        %v2627 = vpop.f32.mrb[0].mxu0
        %2628 = vdwg.mxu0
        %2629 = vmatprep.subr.bf16.mxu0 %v2527
        %2630 = vmatpush1.bf16.msra.mxu0 %v2526
        %2631 = vmatprep.subr.bf16.mxu0 %v2531
        %2632 = vmatpush1.bf16.msra.mxu0 %v2530
        %2633 = vmatprep.subr.bf16.mxu0 %v2535
        %2634 = vmatpush1.bf16.msra.mxu0 %v2534
        %2635 = vmatprep.subr.bf16.mxu0 %v2539
        %2636 = vmatpush1.bf16.msra.mxu0 %v2538
        %2637 = vmatprep.subr.bf16.mxu0 %v2543
        %2638 = vmatpush1.bf16.msra.mxu0 %v2542
        %2639 = vmatprep.subr.bf16.mxu0 %v2547
        %2640 = vmatpush1.bf16.msra.mxu0 %v2546
        %2641 = vmatprep.subr.bf16.mxu0 %v2551
        %2642 = vmatpush1.bf16.msra.mxu0 %v2550
        %2643 = vmatprep.subr.bf16.mxu0 %v2555
        %2644 = vmatpush1.bf16.msra.mxu0 %v2554
        %2645 = vmatprep.subr.bf16.mxu0 0
        %2646 = vmatpush1.bf16.msra.mxu0 0
        %2647 = vmatprep.subr.bf16.mxu0 0
        %2648 = vmatpush1.bf16.msra.mxu0 0
        %2649 = vmatprep.subr.bf16.mxu0 0
        %2650 = vmatpush1.bf16.msra.mxu0 0
        %2651 = vmatprep.subr.bf16.mxu0 0
        %2652 = vmatpush1.bf16.msra.mxu0 0
        %2653 = vmatprep.subr.bf16.mxu0 0
        %2654 = vmatpush1.bf16.msra.mxu0 0
        %2655 = vmatprep.subr.bf16.mxu0 0
        %2656 = vmatpush1.bf16.msra.mxu0 0
        %2657 = vmatprep.subr.bf16.mxu0 0
        %2658 = vmatpush1.bf16.msra.mxu0 0
        %2659 = vmatprep.subr.bf16.mxu0 0
        %2660 = vmatpush1.bf16.msra.mxu0 0
        %2661 = vmatprep.mubr.bf16.mxu0 0
        %2662 = vmatmul.mubr.bf16.gmra.mrb[0].mxu0 %v2373
        %v2663 = vpop.f32.mrb[0].mxu0
        %v2664 = vadd.f32 %v2419, %v2663
        %v2665 = vpop.f32.mrb[0].mxu0
        %v2666 = vadd.f32 %v2423, %v2665
        %v2667 = vpop.f32.mrb[0].mxu0
        %v2668 = vpop.f32.mrb[0].mxu0
        %2669 = vdwg.mxu0
        %v2670 = vmax.f32 %v2623, 0.0
        %v2671 = vmax.f32 %v2625, 0.0
        %v2672 = vmax.f32 %v2664, 0.0
        %v2673 = vmax.f32 %v2666, 0.0
        %v2674 = vpack.c.bf16 %v2670, %v2670
        %v2675 = vpack.c.bf16 %v2671, %v2671
        %v2676 = vpack.c.bf16 %v2672, %v2672
        %v2677 = vpack.c.bf16 %v2673, %v2673
        %v2678 = vld [vmem:[%s6] sm:$0xf]
        %v2679 = vld [vmem:[%s6 + $0x4] sm:$0xf]
        %v2680 = vld [vmem:[%s6 + $0x8] sm:$0xf]
        %v2681 = vld [vmem:[%s6 + $0xc] sm:$0xf]
        %v2682 = vld [vmem:[%s6 + $0x10] sm:$0xf]
        %v2683 = vld [vmem:[%s6 + $0x14] sm:$0xf]
        %v2684 = vld [vmem:[%s6 + $0x18] sm:$0xf]
        %v2685 = vld [vmem:[%s6 + $0x1c] sm:$0xf]
        %v2686 = vld [vmem:[%s6 + $0x20] sm:$0xf]
        %v2687 = vld [vmem:[%s6 + $0x24] sm:$0xf]
        %v2688 = vld [vmem:[%s6 + $0x28] sm:$0xf]
        %v2689 = vld [vmem:[%s6 + $0x2c] sm:$0xf]
        %v2690 = vld [vmem:[%s6 + $0x30] sm:$0xf]
        %v2691 = vld [vmem:[%s6 + $0x34] sm:$0xf]
        %v2692 = vld [vmem:[%s6 + $0x38] sm:$0xf]
        %v2693 = vld [vmem:[%s6 + $0x3c] sm:$0xf]
        %v2694 = vld [vmem:[%s6 + $0x40] sm:$0xf]
        %v2695 = vld [vmem:[%s6 + $0x44] sm:$0xf]
        %v2696 = vld [vmem:[%s6 + $0x48] sm:$0xf]
        %v2697 = vld [vmem:[%s6 + $0x4c] sm:$0xf]
        %v2698 = vld [vmem:[%s6 + $0x50] sm:$0xf]
        %v2699 = vld [vmem:[%s6 + $0x54] sm:$0xf]
        %v2700 = vld [vmem:[%s6 + $0x58] sm:$0xf]
        %v2701 = vld [vmem:[%s6 + $0x5c] sm:$0xf]
        %v2702 = vld [vmem:[%s6 + $0x60] sm:$0xf]
        %v2703 = vld [vmem:[%s6 + $0x64] sm:$0xf]
        %v2704 = vld [vmem:[%s6 + $0x68] sm:$0xf]
        %v2705 = vld [vmem:[%s6 + $0x6c] sm:$0xf]
        %v2706 = vld [vmem:[%s6 + $0x70] sm:$0xf]
        %v2707 = vld [vmem:[%s6 + $0x74] sm:$0xf]
        %v2708 = vld [vmem:[%s6 + $0x78] sm:$0xf]
        %v2709 = vld [vmem:[%s6 + $0x7c] sm:$0xf]
        %v2710 = vld [vmem:[%s6 + $0x80] sm:$0xf]
        %v2711 = vld [vmem:[%s6 + $0x84] sm:$0xf]
        %v2712 = vld [vmem:[%s6 + $0x88] sm:$0xf]
        %v2713 = vld [vmem:[%s6 + $0x8c] sm:$0xf]
        %v2714 = vld [vmem:[%s6 + $0x90] sm:$0xf]
        %v2715 = vld [vmem:[%s6 + $0x94] sm:$0xf]
        %v2716 = vld [vmem:[%s6 + $0x98] sm:$0xf]
        %v2717 = vld [vmem:[%s6 + $0x9c] sm:$0xf]
        %v2718 = vld [vmem:[%s6 + $0xa0] sm:$0xf]
        %v2719 = vld [vmem:[%s6 + $0xa4] sm:$0xf]
        %v2720 = vld [vmem:[%s6 + $0xa8] sm:$0xf]
        %v2721 = vld [vmem:[%s6 + $0xac] sm:$0xf]
        %v2722 = vld [vmem:[%s6 + $0xb0] sm:$0xf]
        %v2723 = vld [vmem:[%s6 + $0xb4] sm:$0xf]
        %v2724 = vld [vmem:[%s6 + $0xb8] sm:$0xf]
        %v2725 = vld [vmem:[%s6 + $0xbc] sm:$0xf]
        %v2726 = vld [vmem:[%s6 + $0xc0] sm:$0xf]
        %v2727 = vld [vmem:[%s6 + $0xc4] sm:$0xf]
        %v2728 = vld [vmem:[%s6 + $0xc8] sm:$0xf]
        %v2729 = vld [vmem:[%s6 + $0xcc] sm:$0xf]
        %v2730 = vld [vmem:[%s6 + $0xd0] sm:$0xf]
        %v2731 = vld [vmem:[%s6 + $0xd4] sm:$0xf]
        %v2732 = vld [vmem:[%s6 + $0xd8] sm:$0xf]
        %v2733 = vld [vmem:[%s6 + $0xdc] sm:$0xf]
        %v2734 = vld [vmem:[%s6 + $0xe0] sm:$0xf]
        %v2735 = vld [vmem:[%s6 + $0xe4] sm:$0xf]
        %v2736 = vld [vmem:[%s6 + $0xe8] sm:$0xf]
        %v2737 = vld [vmem:[%s6 + $0xec] sm:$0xf]
        %v2738 = vld [vmem:[%s6 + $0xf0] sm:$0xf]
        %v2739 = vld [vmem:[%s6 + $0xf4] sm:$0xf]
        %v2740 = vld [vmem:[%s6 + $0xf8] sm:$0xf]
        %v2741 = vld [vmem:[%s6 + $0xfc] sm:$0xf]
        %v2742 = vlaneseq
        %v2743 = vshrl.u32 %v2742, 7
        %v2744 = vsub.s32 0, %v2743
        %v2745 = vrot.slane %v387, %v2744
        %v2810 = vunpack.c.l.b16 %v2678
        %v2811 = vunpack.c.l.b16 %v2679
        %v2812 = vunpack.c.l.b16 %v2680
        %v2813 = vunpack.c.l.b16 %v2681
        %v2814 = vunpack.c.l.b16 %v2682
        %v2815 = vunpack.c.l.b16 %v2683
        %v2816 = vunpack.c.l.b16 %v2684
        %v2817 = vunpack.c.l.b16 %v2685
        %v2818 = vunpack.c.l.b16 %v2686
        %v2819 = vunpack.c.l.b16 %v2687
        %v2820 = vunpack.c.l.b16 %v2688
        %v2821 = vunpack.c.l.b16 %v2689
        %v2822 = vunpack.c.l.b16 %v2690
        %v2823 = vunpack.c.l.b16 %v2691
        %v2824 = vunpack.c.l.b16 %v2692
        %v2825 = vunpack.c.l.b16 %v2693
        %v2826 = vunpack.c.l.b16 %v2694
        %v2827 = vunpack.c.l.b16 %v2695
        %v2828 = vunpack.c.l.b16 %v2696
        %v2829 = vunpack.c.l.b16 %v2697
        %v2830 = vunpack.c.l.b16 %v2698
        %v2831 = vunpack.c.l.b16 %v2699
        %v2832 = vunpack.c.l.b16 %v2700
        %v2833 = vunpack.c.l.b16 %v2701
        %v2834 = vunpack.c.l.b16 %v2702
        %v2835 = vunpack.c.l.b16 %v2703
        %v2836 = vunpack.c.l.b16 %v2704
        %v2837 = vunpack.c.l.b16 %v2705
        %v2838 = vunpack.c.l.b16 %v2706
        %v2839 = vunpack.c.l.b16 %v2707
        %v2840 = vunpack.c.l.b16 %v2708
        %v2841 = vunpack.c.l.b16 %v2709
        %v2842 = vunpack.c.l.b16 %v2710
        %v2843 = vunpack.c.l.b16 %v2711
        %v2844 = vunpack.c.l.b16 %v2712
        %v2845 = vunpack.c.l.b16 %v2713
        %v2846 = vunpack.c.l.b16 %v2714
        %v2847 = vunpack.c.l.b16 %v2715
        %v2848 = vunpack.c.l.b16 %v2716
        %v2849 = vunpack.c.l.b16 %v2717
        %v2850 = vunpack.c.l.b16 %v2718
        %v2851 = vunpack.c.l.b16 %v2719
        %v2852 = vunpack.c.l.b16 %v2720
        %v2853 = vunpack.c.l.b16 %v2721
        %v2854 = vunpack.c.l.b16 %v2722
        %v2855 = vunpack.c.l.b16 %v2723
        %v2856 = vunpack.c.l.b16 %v2724
        %v2857 = vunpack.c.l.b16 %v2725
        %v2858 = vunpack.c.l.b16 %v2726
        %v2859 = vunpack.c.l.b16 %v2727
        %v2860 = vunpack.c.l.b16 %v2728
        %v2861 = vunpack.c.l.b16 %v2729
        %v2862 = vunpack.c.l.b16 %v2730
        %v2863 = vunpack.c.l.b16 %v2731
        %v2864 = vunpack.c.l.b16 %v2732
        %v2865 = vunpack.c.l.b16 %v2733
        %v2866 = vunpack.c.l.b16 %v2734
        %v2867 = vunpack.c.l.b16 %v2735
        %v2868 = vunpack.c.l.b16 %v2736
        %v2869 = vunpack.c.l.b16 %v2737
        %v2870 = vunpack.c.l.b16 %v2738
        %v2871 = vunpack.c.l.b16 %v2739
        %v2872 = vunpack.c.l.b16 %v2740
        %v2873 = vunpack.c.l.b16 %v2741
        %v2874 = vpack.c.b16 %v2811, %v2810
        %v2875 = vpack.c.b16 %v2813, %v2812
        %v2876 = vpack.c.b16 %v2815, %v2814
        %v2877 = vpack.c.b16 %v2817, %v2816
        %v2878 = vpack.c.b16 %v2819, %v2818
        %v2879 = vpack.c.b16 %v2821, %v2820
        %v2880 = vpack.c.b16 %v2823, %v2822
        %v2881 = vpack.c.b16 %v2825, %v2824
        %v2882 = vpack.c.b16 %v2827, %v2826
        %v2883 = vpack.c.b16 %v2829, %v2828
        %v2884 = vpack.c.b16 %v2831, %v2830
        %v2885 = vpack.c.b16 %v2833, %v2832
        %v2886 = vpack.c.b16 %v2835, %v2834
        %v2887 = vpack.c.b16 %v2837, %v2836
        %v2888 = vpack.c.b16 %v2839, %v2838
        %v2889 = vpack.c.b16 %v2841, %v2840
        %v2890 = vpack.c.b16 %v2843, %v2842
        %v2891 = vpack.c.b16 %v2845, %v2844
        %v2892 = vpack.c.b16 %v2847, %v2846
        %v2893 = vpack.c.b16 %v2849, %v2848
        %v2894 = vpack.c.b16 %v2851, %v2850
        %v2895 = vpack.c.b16 %v2853, %v2852
        %v2896 = vpack.c.b16 %v2855, %v2854
        %v2897 = vpack.c.b16 %v2857, %v2856
        %v2898 = vpack.c.b16 %v2859, %v2858
        %v2899 = vpack.c.b16 %v2861, %v2860
        %v2900 = vpack.c.b16 %v2863, %v2862
        %v2901 = vpack.c.b16 %v2865, %v2864
        %v2902 = vpack.c.b16 %v2867, %v2866
        %v2903 = vpack.c.b16 %v2869, %v2868
        %v2904 = vpack.c.b16 %v2871, %v2870
        %v2905 = vpack.c.b16 %v2873, %v2872
        %2938 = vmatprep.subr.bf16.mxu0 0
        %2939 = vmatpush1.bf16.msra.mxu0 %v2874
        %2940 = vmatprep.subr.bf16.mxu0 0
        %2941 = vmatpush1.bf16.msra.mxu0 %v2875
        %2942 = vmatprep.subr.bf16.mxu0 0
        %2943 = vmatpush1.bf16.msra.mxu0 %v2876
        %2944 = vmatprep.subr.bf16.mxu0 0
        %2945 = vmatpush1.bf16.msra.mxu0 %v2877
        %2946 = vmatprep.subr.bf16.mxu0 0
        %2947 = vmatpush1.bf16.msra.mxu0 %v2878
        %2948 = vmatprep.subr.bf16.mxu0 0
        %2949 = vmatpush1.bf16.msra.mxu0 %v2879
        %2950 = vmatprep.subr.bf16.mxu0 0
        %2951 = vmatpush1.bf16.msra.mxu0 %v2880
        %2952 = vmatprep.subr.bf16.mxu0 0
        %2953 = vmatpush1.bf16.msra.mxu0 %v2881
        %2954 = vmatprep.subr.bf16.mxu0 0
        %2955 = vmatpush1.bf16.msra.mxu0 %v2882
        %2956 = vmatprep.subr.bf16.mxu0 0
        %2957 = vmatpush1.bf16.msra.mxu0 %v2883
        %2958 = vmatprep.subr.bf16.mxu0 0
        %2959 = vmatpush1.bf16.msra.mxu0 %v2884
        %2960 = vmatprep.subr.bf16.mxu0 0
        %2961 = vmatpush1.bf16.msra.mxu0 %v2885
        %2962 = vmatprep.subr.bf16.mxu0 0
        %2963 = vmatpush1.bf16.msra.mxu0 %v2886
        %2964 = vmatprep.subr.bf16.mxu0 0
        %2965 = vmatpush1.bf16.msra.mxu0 %v2887
        %2966 = vmatprep.subr.bf16.mxu0 0
        %2967 = vmatpush1.bf16.msra.mxu0 %v2888
        %2968 = vmatprep.subr.bf16.mxu0 0
        %2969 = vmatpush1.bf16.msra.mxu0 %v2889
        %2970 = vmatprep.mubr.bf16.mxu0 %v2675
        %2971 = vmatmul.mubr.bf16.gmra.mrb[0].mxu0 %v2674
        %v2972 = vpop.f32.mrb[0].mxu0
        %v2973 = vadd.f32 %v2745, %v2972
        %v2974 = vpop.f32.mrb[0].mxu0
        %v2975 = vpop.f32.mrb[0].mxu0
        %v2976 = vpop.f32.mrb[0].mxu0
        %2977 = vdwg.mxu0
        %2978 = vmatprep.subr.bf16.mxu0 0
        %2979 = vmatpush1.bf16.msra.mxu0 %v2890
        %2980 = vmatprep.subr.bf16.mxu0 0
        %2981 = vmatpush1.bf16.msra.mxu0 %v2891
        %2982 = vmatprep.subr.bf16.mxu0 0
        %2983 = vmatpush1.bf16.msra.mxu0 %v2892
        %2984 = vmatprep.subr.bf16.mxu0 0
        %2985 = vmatpush1.bf16.msra.mxu0 %v2893
        %2986 = vmatprep.subr.bf16.mxu0 0
        %2987 = vmatpush1.bf16.msra.mxu0 %v2894
        %2988 = vmatprep.subr.bf16.mxu0 0
        %2989 = vmatpush1.bf16.msra.mxu0 %v2895
        %2990 = vmatprep.subr.bf16.mxu0 0
        %2991 = vmatpush1.bf16.msra.mxu0 %v2896
        %2992 = vmatprep.subr.bf16.mxu0 0
        %2993 = vmatpush1.bf16.msra.mxu0 %v2897
        %2994 = vmatprep.subr.bf16.mxu0 0
        %2995 = vmatpush1.bf16.msra.mxu0 %v2898
        %2996 = vmatprep.subr.bf16.mxu0 0
        %2997 = vmatpush1.bf16.msra.mxu0 %v2899
        %2998 = vmatprep.subr.bf16.mxu0 0
        %2999 = vmatpush1.bf16.msra.mxu0 %v2900
        %3000 = vmatprep.subr.bf16.mxu0 0
        %3001 = vmatpush1.bf16.msra.mxu0 %v2901
        %3002 = vmatprep.subr.bf16.mxu0 0
        %3003 = vmatpush1.bf16.msra.mxu0 %v2902
        %3004 = vmatprep.subr.bf16.mxu0 0
        %3005 = vmatpush1.bf16.msra.mxu0 %v2903
        %3006 = vmatprep.subr.bf16.mxu0 0
        %3007 = vmatpush1.bf16.msra.mxu0 %v2904
        %3008 = vmatprep.subr.bf16.mxu0 0
        %3009 = vmatpush1.bf16.msra.mxu0 %v2905
        %3010 = vmatprep.mubr.bf16.mxu0 %v2677
        %3011 = vmatmul.mubr.bf16.gmra.mrb[0].mxu0 %v2676
        %v3012 = vpop.f32.mrb[0].mxu0
        %v3013 = vadd.f32 %v2973, %v3012
        %v3014 = vpop.f32.mrb[0].mxu0
        %v3015 = vpop.f32.mrb[0].mxu0
        %v3016 = vpop.f32.mrb[0].mxu0
        %3017 = vdwg.mxu0
        %v3018 = vadd.f32 %v2351, %v3013
        %v3019 = vld [vmem:[%s8 + $0x6] sm:$0x1]
        %v3020 = vld [vmem:[%s8 + $0x7] sm:$0x1]
        %v3021 = vld [vmem:[%s8 + $0x8] sm:$0x1]
        %v3022 = vld [vmem:[%s8 + $0x9] sm:$0x1]
        %v3023 = vld [vmem:[%s8 + $0xa] sm:$0x1]
        %v3024 = vld [vmem:[%s8 + $0xb] sm:$0x1]
        %3025 = vadd.xlane.f32.xlu0 %v3018
        %v3026 = vpop.xlane.xlu0 %3025
        %v3027 = vmul.f32 %v3026, %v390
        %v3028 = vsub.f32 %v3018, %v3027
        %v3029 = vmul.f32 %v3028, %v3028
        %3030 = vadd.xlane.f32.xlu0 %v3029
        %v3031 = vpop.xlane.xlu0 %3030
        %v3032 = vmul.f32 %v3031, %v390
        %v3033 = vadd.f32 %v3032, 1e-05
        %v3034 = vrsqrt.pop %v3033
        %v3035 = vmul.f32 %v3028, %v3034
        %v3036 = vlaneseq
        %v3037 = vshrl.u32 %v3036, 7
        %v3038 = vsub.s32 0, %v3037
        %v3039 = vrot.slane %v3019, %v3038
        %v3040 = vmul.f32 %v3035, %v3039
        %v3041 = vlaneseq
        %v3042 = vshrl.u32 %v3041, 7
        %v3043 = vsub.s32 0, %v3042
        %v3044 = vrot.slane %v3020, %v3043
        %v3045 = vadd.f32 %v3040, %v3044
        %v3046 = vpack.c.bf16 %v3045, %v3045
        %s3047 = scalar_lea.vmem %s3, 768
        %v3048 = vld [vmem:[%s3047] sm:$0xf]
        %v3049 = vld [vmem:[%s3047 + $0x4] sm:$0xf]
        %v3050 = vld [vmem:[%s3047 + $0x8] sm:$0xf]
        %v3051 = vld [vmem:[%s3047 + $0xc] sm:$0xf]
        %v3052 = vld [vmem:[%s3047 + $0x10] sm:$0xf]
        %v3053 = vld [vmem:[%s3047 + $0x14] sm:$0xf]
        %v3054 = vld [vmem:[%s3047 + $0x18] sm:$0xf]
        %v3055 = vld [vmem:[%s3047 + $0x1c] sm:$0xf]
        %v3056 = vld [vmem:[%s3047 + $0x20] sm:$0xf]
        %v3057 = vld [vmem:[%s3047 + $0x24] sm:$0xf]
        %v3058 = vld [vmem:[%s3047 + $0x28] sm:$0xf]
        %v3059 = vld [vmem:[%s3047 + $0x2c] sm:$0xf]
        %v3060 = vld [vmem:[%s3047 + $0x30] sm:$0xf]
        %v3061 = vld [vmem:[%s3047 + $0x34] sm:$0xf]
        %v3062 = vld [vmem:[%s3047 + $0x38] sm:$0xf]
        %v3063 = vld [vmem:[%s3047 + $0x3c] sm:$0xf]
        %v3080 = vunpack.c.l.b16 %v3048
        %v3081 = vunpack.c.l.b16 %v3049
        %v3082 = vunpack.c.l.b16 %v3050
        %v3083 = vunpack.c.l.b16 %v3051
        %v3084 = vunpack.c.l.b16 %v3052
        %v3085 = vunpack.c.l.b16 %v3053
        %v3086 = vunpack.c.l.b16 %v3054
        %v3087 = vunpack.c.l.b16 %v3055
        %v3088 = vunpack.c.l.b16 %v3056
        %v3089 = vunpack.c.l.b16 %v3057
        %v3090 = vunpack.c.l.b16 %v3058
        %v3091 = vunpack.c.l.b16 %v3059
        %v3092 = vunpack.c.l.b16 %v3060
        %v3093 = vunpack.c.l.b16 %v3061
        %v3094 = vunpack.c.l.b16 %v3062
        %v3095 = vunpack.c.l.b16 %v3063
        %v3096 = vpack.c.b16 %v3081, %v3080
        %v3097 = vpack.c.b16 %v3083, %v3082
        %v3098 = vpack.c.b16 %v3085, %v3084
        %v3099 = vpack.c.b16 %v3087, %v3086
        %v3100 = vpack.c.b16 %v3089, %v3088
        %v3101 = vpack.c.b16 %v3091, %v3090
        %v3102 = vpack.c.b16 %v3093, %v3092
        %v3103 = vpack.c.b16 %v3095, %v3094
        %3112 = vmatprep.subr.bf16.mxu0 0
        %3113 = vmatpush1.bf16.msra.mxu0 %v3096
        %3114 = vmatprep.subr.bf16.mxu0 0
        %3115 = vmatpush1.bf16.msra.mxu0 %v3097
        %3116 = vmatprep.subr.bf16.mxu0 0
        %3117 = vmatpush1.bf16.msra.mxu0 %v3098
        %3118 = vmatprep.subr.bf16.mxu0 0
        %3119 = vmatpush1.bf16.msra.mxu0 %v3099
        %3120 = vmatprep.subr.bf16.mxu0 0
        %3121 = vmatpush1.bf16.msra.mxu0 %v3100
        %3122 = vmatprep.subr.bf16.mxu0 0
        %3123 = vmatpush1.bf16.msra.mxu0 %v3101
        %3124 = vmatprep.subr.bf16.mxu0 0
        %3125 = vmatpush1.bf16.msra.mxu0 %v3102
        %3126 = vmatprep.subr.bf16.mxu0 0
        %3127 = vmatpush1.bf16.msra.mxu0 %v3103
        %3128 = vmatprep.subr.bf16.mxu0 0
        %3129 = vmatpush1.bf16.msra.mxu0 0
        %3130 = vmatprep.subr.bf16.mxu0 0
        %3131 = vmatpush1.bf16.msra.mxu0 0
        %3132 = vmatprep.subr.bf16.mxu0 0
        %3133 = vmatpush1.bf16.msra.mxu0 0
        %3134 = vmatprep.subr.bf16.mxu0 0
        %3135 = vmatpush1.bf16.msra.mxu0 0
        %3136 = vmatprep.subr.bf16.mxu0 0
        %3137 = vmatpush1.bf16.msra.mxu0 0
        %3138 = vmatprep.subr.bf16.mxu0 0
        %3139 = vmatpush1.bf16.msra.mxu0 0
        %3140 = vmatprep.subr.bf16.mxu0 0
        %3141 = vmatpush1.bf16.msra.mxu0 0
        %3142 = vmatprep.subr.bf16.mxu0 0
        %3143 = vmatpush1.bf16.msra.mxu0 0
        %3144 = vmatprep.mubr.bf16.mxu0 0
        %3145 = vmatmul.mubr.bf16.gmra.mrb[0].mxu0 %v3046
        %v3146 = vpop.f32.mrb[0].mxu0
        %v3147 = vadd.f32 0.0, %v3146
        %v3148 = vpop.f32.mrb[0].mxu0
        %v3149 = vpop.f32.mrb[0].mxu0
        %v3150 = vpop.f32.mrb[0].mxu0
        %3151 = vdwg.mxu0
        %s3152 = scalar_lea.vmem %s3, 1024
        %v3153 = vld [vmem:[%s3152] sm:$0xf]
        %v3154 = vld [vmem:[%s3152 + $0x4] sm:$0xf]
        %v3155 = vld [vmem:[%s3152 + $0x8] sm:$0xf]
        %v3156 = vld [vmem:[%s3152 + $0xc] sm:$0xf]
        %v3157 = vld [vmem:[%s3152 + $0x10] sm:$0xf]
        %v3158 = vld [vmem:[%s3152 + $0x14] sm:$0xf]
        %v3159 = vld [vmem:[%s3152 + $0x18] sm:$0xf]
        %v3160 = vld [vmem:[%s3152 + $0x1c] sm:$0xf]
        %v3161 = vld [vmem:[%s3152 + $0x20] sm:$0xf]
        %v3162 = vld [vmem:[%s3152 + $0x24] sm:$0xf]
        %v3163 = vld [vmem:[%s3152 + $0x28] sm:$0xf]
        %v3164 = vld [vmem:[%s3152 + $0x2c] sm:$0xf]
        %v3165 = vld [vmem:[%s3152 + $0x30] sm:$0xf]
        %v3166 = vld [vmem:[%s3152 + $0x34] sm:$0xf]
        %v3167 = vld [vmem:[%s3152 + $0x38] sm:$0xf]
        %v3168 = vld [vmem:[%s3152 + $0x3c] sm:$0xf]
        %v3185 = vunpack.c.l.b16 %v3153
        %v3186 = vunpack.c.l.b16 %v3154
        %v3187 = vunpack.c.l.b16 %v3155
        %v3188 = vunpack.c.l.b16 %v3156
        %v3189 = vunpack.c.l.b16 %v3157
        %v3190 = vunpack.c.l.b16 %v3158
        %v3191 = vunpack.c.l.b16 %v3159
        %v3192 = vunpack.c.l.b16 %v3160
        %v3193 = vunpack.c.l.b16 %v3161
        %v3194 = vunpack.c.l.b16 %v3162
        %v3195 = vunpack.c.l.b16 %v3163
        %v3196 = vunpack.c.l.b16 %v3164
        %v3197 = vunpack.c.l.b16 %v3165
        %v3198 = vunpack.c.l.b16 %v3166
        %v3199 = vunpack.c.l.b16 %v3167
        %v3200 = vunpack.c.l.b16 %v3168
        %v3201 = vpack.c.b16 %v3186, %v3185
        %v3202 = vpack.c.b16 %v3188, %v3187
        %v3203 = vpack.c.b16 %v3190, %v3189
        %v3204 = vpack.c.b16 %v3192, %v3191
        %v3205 = vpack.c.b16 %v3194, %v3193
        %v3206 = vpack.c.b16 %v3196, %v3195
        %v3207 = vpack.c.b16 %v3198, %v3197
        %v3208 = vpack.c.b16 %v3200, %v3199
        %3217 = vmatprep.subr.bf16.mxu0 0
        %3218 = vmatpush1.bf16.msra.mxu0 %v3201
        %3219 = vmatprep.subr.bf16.mxu0 0
        %3220 = vmatpush1.bf16.msra.mxu0 %v3202
        %3221 = vmatprep.subr.bf16.mxu0 0
        %3222 = vmatpush1.bf16.msra.mxu0 %v3203
        %3223 = vmatprep.subr.bf16.mxu0 0
        %3224 = vmatpush1.bf16.msra.mxu0 %v3204
        %3225 = vmatprep.subr.bf16.mxu0 0
        %3226 = vmatpush1.bf16.msra.mxu0 %v3205
        %3227 = vmatprep.subr.bf16.mxu0 0
        %3228 = vmatpush1.bf16.msra.mxu0 %v3206
        %3229 = vmatprep.subr.bf16.mxu0 0
        %3230 = vmatpush1.bf16.msra.mxu0 %v3207
        %3231 = vmatprep.subr.bf16.mxu0 0
        %3232 = vmatpush1.bf16.msra.mxu0 %v3208
        %3233 = vmatprep.subr.bf16.mxu0 0
        %3234 = vmatpush1.bf16.msra.mxu0 0
        %3235 = vmatprep.subr.bf16.mxu0 0
        %3236 = vmatpush1.bf16.msra.mxu0 0
        %3237 = vmatprep.subr.bf16.mxu0 0
        %3238 = vmatpush1.bf16.msra.mxu0 0
        %3239 = vmatprep.subr.bf16.mxu0 0
        %3240 = vmatpush1.bf16.msra.mxu0 0
        %3241 = vmatprep.subr.bf16.mxu0 0
        %3242 = vmatpush1.bf16.msra.mxu0 0
        %3243 = vmatprep.subr.bf16.mxu0 0
        %3244 = vmatpush1.bf16.msra.mxu0 0
        %3245 = vmatprep.subr.bf16.mxu0 0
        %3246 = vmatpush1.bf16.msra.mxu0 0
        %3247 = vmatprep.subr.bf16.mxu0 0
        %3248 = vmatpush1.bf16.msra.mxu0 0
        %3249 = vmatprep.mubr.bf16.mxu0 0
        %3250 = vmatmul.mubr.bf16.gmra.mrb[0].mxu0 %v3046
        %v3251 = vpop.f32.mrb[0].mxu0
        %v3252 = vadd.f32 0.0, %v3251
        %v3253 = vpop.f32.mrb[0].mxu0
        %v3254 = vpop.f32.mrb[0].mxu0
        %v3255 = vpop.f32.mrb[0].mxu0
        %3256 = vdwg.mxu0
        %s3257 = scalar_lea.vmem %s3, 1280
        %v3258 = vld [vmem:[%s3257] sm:$0xf]
        %v3259 = vld [vmem:[%s3257 + $0x4] sm:$0xf]
        %v3260 = vld [vmem:[%s3257 + $0x8] sm:$0xf]
        %v3261 = vld [vmem:[%s3257 + $0xc] sm:$0xf]
        %v3262 = vld [vmem:[%s3257 + $0x10] sm:$0xf]
        %v3263 = vld [vmem:[%s3257 + $0x14] sm:$0xf]
        %v3264 = vld [vmem:[%s3257 + $0x18] sm:$0xf]
        %v3265 = vld [vmem:[%s3257 + $0x1c] sm:$0xf]
        %v3266 = vld [vmem:[%s3257 + $0x20] sm:$0xf]
        %v3267 = vld [vmem:[%s3257 + $0x24] sm:$0xf]
        %v3268 = vld [vmem:[%s3257 + $0x28] sm:$0xf]
        %v3269 = vld [vmem:[%s3257 + $0x2c] sm:$0xf]
        %v3270 = vld [vmem:[%s3257 + $0x30] sm:$0xf]
        %v3271 = vld [vmem:[%s3257 + $0x34] sm:$0xf]
        %v3272 = vld [vmem:[%s3257 + $0x38] sm:$0xf]
        %v3273 = vld [vmem:[%s3257 + $0x3c] sm:$0xf]
        %v3290 = vunpack.c.l.b16 %v3258
        %v3291 = vunpack.c.l.b16 %v3259
        %v3292 = vunpack.c.l.b16 %v3260
        %v3293 = vunpack.c.l.b16 %v3261
        %v3294 = vunpack.c.l.b16 %v3262
        %v3295 = vunpack.c.l.b16 %v3263
        %v3296 = vunpack.c.l.b16 %v3264
        %v3297 = vunpack.c.l.b16 %v3265
        %v3298 = vunpack.c.l.b16 %v3266
        %v3299 = vunpack.c.l.b16 %v3267
        %v3300 = vunpack.c.l.b16 %v3268
        %v3301 = vunpack.c.l.b16 %v3269
        %v3302 = vunpack.c.l.b16 %v3270
        %v3303 = vunpack.c.l.b16 %v3271
        %v3304 = vunpack.c.l.b16 %v3272
        %v3305 = vunpack.c.l.b16 %v3273
        %v3306 = vpack.c.b16 %v3291, %v3290
        %v3307 = vpack.c.b16 %v3293, %v3292
        %v3308 = vpack.c.b16 %v3295, %v3294
        %v3309 = vpack.c.b16 %v3297, %v3296
        %v3310 = vpack.c.b16 %v3299, %v3298
        %v3311 = vpack.c.b16 %v3301, %v3300
        %v3312 = vpack.c.b16 %v3303, %v3302
        %v3313 = vpack.c.b16 %v3305, %v3304
        %3322 = vmatprep.subr.bf16.mxu0 0
        %3323 = vmatpush1.bf16.msra.mxu0 %v3306
        %3324 = vmatprep.subr.bf16.mxu0 0
        %3325 = vmatpush1.bf16.msra.mxu0 %v3307
        %3326 = vmatprep.subr.bf16.mxu0 0
        %3327 = vmatpush1.bf16.msra.mxu0 %v3308
        %3328 = vmatprep.subr.bf16.mxu0 0
        %3329 = vmatpush1.bf16.msra.mxu0 %v3309
        %3330 = vmatprep.subr.bf16.mxu0 0
        %3331 = vmatpush1.bf16.msra.mxu0 %v3310
        %3332 = vmatprep.subr.bf16.mxu0 0
        %3333 = vmatpush1.bf16.msra.mxu0 %v3311
        %3334 = vmatprep.subr.bf16.mxu0 0
        %3335 = vmatpush1.bf16.msra.mxu0 %v3312
        %3336 = vmatprep.subr.bf16.mxu0 0
        %3337 = vmatpush1.bf16.msra.mxu0 %v3313
        %3338 = vmatprep.subr.bf16.mxu0 0
        %3339 = vmatpush1.bf16.msra.mxu0 0
        %3340 = vmatprep.subr.bf16.mxu0 0
        %3341 = vmatpush1.bf16.msra.mxu0 0
        %3342 = vmatprep.subr.bf16.mxu0 0
        %3343 = vmatpush1.bf16.msra.mxu0 0
        %3344 = vmatprep.subr.bf16.mxu0 0
        %3345 = vmatpush1.bf16.msra.mxu0 0
        %3346 = vmatprep.subr.bf16.mxu0 0
        %3347 = vmatpush1.bf16.msra.mxu0 0
        %3348 = vmatprep.subr.bf16.mxu0 0
        %3349 = vmatpush1.bf16.msra.mxu0 0
        %3350 = vmatprep.subr.bf16.mxu0 0
        %3351 = vmatpush1.bf16.msra.mxu0 0
        %3352 = vmatprep.subr.bf16.mxu0 0
        %3353 = vmatpush1.bf16.msra.mxu0 0
        %3354 = vmatprep.mubr.bf16.mxu0 0
        %3355 = vmatmul.mubr.bf16.gmra.mrb[0].mxu0 %v3046
        %v3356 = vpop.f32.mrb[0].mxu0
        %v3357 = vadd.f32 0.0, %v3356
        %v3358 = vpop.f32.mrb[0].mxu0
        %v3359 = vpop.f32.mrb[0].mxu0
        %v3360 = vpop.f32.mrb[0].mxu0
        %3361 = vdwg.mxu0
        %v3362 = vpack.c.bf16 %v3147, %v3147
        %v3363 = vpack.c.bf16 %v3252, %v3252
        %v3365 = vsel %vm727, %v3362, 0
        %v3368 = vsel %vm727, %v3363, 0
        %3370 = vmatprep.subr.bf16.mxu0 0
        %3371 = vmatpush1.bf16.xpose.msra.mxu0 %v3368
        %3372 = vmatprep.subr.bf16.mxu0 0
        %3373 = vmatpush1.bf16.xpose.msra.mxu0 0
        %3374 = vmatprep.subr.bf16.mxu0 0
        %3375 = vmatpush1.bf16.xpose.msra.mxu0 0
        %3376 = vmatprep.subr.bf16.mxu0 0
        %3377 = vmatpush1.bf16.xpose.msra.mxu0 0
        %3378 = vmatprep.subr.bf16.mxu0 0
        %3379 = vmatpush1.bf16.xpose.msra.mxu0 0
        %3380 = vmatprep.subr.bf16.mxu0 0
        %3381 = vmatpush1.bf16.xpose.msra.mxu0 0
        %3382 = vmatprep.subr.bf16.mxu0 0
        %3383 = vmatpush1.bf16.xpose.msra.mxu0 0
        %3384 = vmatprep.subr.bf16.mxu0 0
        %3385 = vmatpush1.bf16.xpose.msra.mxu0 0
        %3386 = vmatprep.subr.bf16.mxu0 0
        %3387 = vmatpush1.bf16.xpose.msra.mxu0 0
        %3388 = vmatprep.subr.bf16.mxu0 0
        %3389 = vmatpush1.bf16.xpose.msra.mxu0 0
        %3390 = vmatprep.subr.bf16.mxu0 0
        %3391 = vmatpush1.bf16.xpose.msra.mxu0 0
        %3392 = vmatprep.subr.bf16.mxu0 0
        %3393 = vmatpush1.bf16.xpose.msra.mxu0 0
        %3394 = vmatprep.subr.bf16.mxu0 0
        %3395 = vmatpush1.bf16.xpose.msra.mxu0 0
        %3396 = vmatprep.subr.bf16.mxu0 0
        %3397 = vmatpush1.bf16.xpose.msra.mxu0 0
        %3398 = vmatprep.subr.bf16.mxu0 0
        %3399 = vmatpush1.bf16.xpose.msra.mxu0 0
        %3400 = vmatprep.subr.bf16.mxu0 0
        %3401 = vmatpush1.bf16.xpose.msra.mxu0 0
        %3402 = vmatprep.mubr.bf16.mxu0 0
        %3403 = vmatmul.mubr.bf16.gmra.mrb[0].mxu0 %v3365
        %v3404 = vpop.f32.mrb[0].mxu0
        %v3405 = vadd.f32 %v381, %v3404
        %v3406 = vpop.f32.mrb[0].mxu0
        %v3407 = vpop.f32.mrb[0].mxu0
        %v3408 = vpop.f32.mrb[0].mxu0
        %3409 = vdwg.mxu0
        %v3410 = vsel %vm774, %v3405, -inf
        %3411 = vmax.xlane.f32.xlu0 %v3410
        %v3412 = vpop.xlane.xlu0 %3411
        %v3413 = vsub.f32 %v3405, %v3412
        %v3414 = vmul.f32 %v3413, 1.442695
        %v3415 = vpow.pop %v3414
        %v3416 = vsel %vm774, %v3415, 0.0
        %3417 = vadd.xlane.f32.xlu0 %v3416
        %v3418 = vpop.xlane.xlu0 %3417
        %v3419 = vrcp.pop %v3418
        %v3420 = vmul.f32 %v3415, %v3419
        %v3421 = vpack.c.bf16 %v3420, %v3420
        %v3422 = vpack.c.bf16 %v3357, %v3357
        %v3424 = vsel %vm774, %v3421, 0
        %v3427 = vsel %vm791, %v3422, 0
        %3429 = vmatprep.subr.bf16.mxu0 0
        %3430 = vmatpush1.bf16.msra.mxu0 %v3427
        %3431 = vmatprep.subr.bf16.mxu0 0
        %3432 = vmatpush1.bf16.msra.mxu0 0
        %3433 = vmatprep.subr.bf16.mxu0 0
        %3434 = vmatpush1.bf16.msra.mxu0 0
        %3435 = vmatprep.subr.bf16.mxu0 0
        %3436 = vmatpush1.bf16.msra.mxu0 0
        %3437 = vmatprep.subr.bf16.mxu0 0
        %3438 = vmatpush1.bf16.msra.mxu0 0
        %3439 = vmatprep.subr.bf16.mxu0 0
        %3440 = vmatpush1.bf16.msra.mxu0 0
        %3441 = vmatprep.subr.bf16.mxu0 0
        %3442 = vmatpush1.bf16.msra.mxu0 0
        %3443 = vmatprep.subr.bf16.mxu0 0
        %3444 = vmatpush1.bf16.msra.mxu0 0
        %3445 = vmatprep.subr.bf16.mxu0 0
        %3446 = vmatpush1.bf16.msra.mxu0 0
        %3447 = vmatprep.subr.bf16.mxu0 0
        %3448 = vmatpush1.bf16.msra.mxu0 0
        %3449 = vmatprep.subr.bf16.mxu0 0
        %3450 = vmatpush1.bf16.msra.mxu0 0
        %3451 = vmatprep.subr.bf16.mxu0 0
        %3452 = vmatpush1.bf16.msra.mxu0 0
        %3453 = vmatprep.subr.bf16.mxu0 0
        %3454 = vmatpush1.bf16.msra.mxu0 0
        %3455 = vmatprep.subr.bf16.mxu0 0
        %3456 = vmatpush1.bf16.msra.mxu0 0
        %3457 = vmatprep.subr.bf16.mxu0 0
        %3458 = vmatpush1.bf16.msra.mxu0 0
        %3459 = vmatprep.subr.bf16.mxu0 0
        %3460 = vmatpush1.bf16.msra.mxu0 0
        %3461 = vmatprep.mubr.bf16.mxu0 0
        %3462 = vmatmul.mubr.bf16.gmra.mrb[0].mxu0 %v3424
        %v3463 = vpop.f32.mrb[0].mxu0
        %v3464 = vadd.f32 0.0, %v3463
        %v3465 = vpop.f32.mrb[0].mxu0
        %v3466 = vpop.f32.mrb[0].mxu0
        %v3467 = vpop.f32.mrb[0].mxu0
        %3468 = vdwg.mxu0
        %v3469 = vpack.c.bf16 %v3464, %v3464
        %s3470 = scalar_lea.vmem %s4, 64
        %v3471 = vld [vmem:[%s3470] sm:$0xf]
        %v3472 = vld [vmem:[%s3470 + $0x4] sm:$0xf]
        %v3473 = vld [vmem:[%s3470 + $0x8] sm:$0xf]
        %v3474 = vld [vmem:[%s3470 + $0xc] sm:$0xf]
        %s3475 = scalar_lea.vmem %s3, 832
        %v3476 = vld [vmem:[%s3475] sm:$0xf]
        %v3477 = vld [vmem:[%s3475 + $0x4] sm:$0xf]
        %v3478 = vld [vmem:[%s3475 + $0x8] sm:$0xf]
        %v3479 = vld [vmem:[%s3475 + $0xc] sm:$0xf]
        %v3480 = vld [vmem:[%s3475 + $0x10] sm:$0xf]
        %v3481 = vld [vmem:[%s3475 + $0x14] sm:$0xf]
        %v3482 = vld [vmem:[%s3475 + $0x18] sm:$0xf]
        %v3483 = vld [vmem:[%s3475 + $0x1c] sm:$0xf]
        %v3484 = vld [vmem:[%s3475 + $0x20] sm:$0xf]
        %v3485 = vld [vmem:[%s3475 + $0x24] sm:$0xf]
        %v3486 = vld [vmem:[%s3475 + $0x28] sm:$0xf]
        %v3487 = vld [vmem:[%s3475 + $0x2c] sm:$0xf]
        %v3488 = vld [vmem:[%s3475 + $0x30] sm:$0xf]
        %v3489 = vld [vmem:[%s3475 + $0x34] sm:$0xf]
        %v3490 = vld [vmem:[%s3475 + $0x38] sm:$0xf]
        %v3491 = vld [vmem:[%s3475 + $0x3c] sm:$0xf]
        %v3508 = vunpack.c.l.b16 %v3476
        %v3509 = vunpack.c.l.b16 %v3477
        %v3510 = vunpack.c.l.b16 %v3478
        %v3511 = vunpack.c.l.b16 %v3479
        %v3512 = vunpack.c.l.b16 %v3480
        %v3513 = vunpack.c.l.b16 %v3481
        %v3514 = vunpack.c.l.b16 %v3482
        %v3515 = vunpack.c.l.b16 %v3483
        %v3516 = vunpack.c.l.b16 %v3484
        %v3517 = vunpack.c.l.b16 %v3485
        %v3518 = vunpack.c.l.b16 %v3486
        %v3519 = vunpack.c.l.b16 %v3487
        %v3520 = vunpack.c.l.b16 %v3488
        %v3521 = vunpack.c.l.b16 %v3489
        %v3522 = vunpack.c.l.b16 %v3490
        %v3523 = vunpack.c.l.b16 %v3491
        %v3524 = vpack.c.b16 %v3509, %v3508
        %v3525 = vpack.c.b16 %v3511, %v3510
        %v3526 = vpack.c.b16 %v3513, %v3512
        %v3527 = vpack.c.b16 %v3515, %v3514
        %v3528 = vpack.c.b16 %v3517, %v3516
        %v3529 = vpack.c.b16 %v3519, %v3518
        %v3530 = vpack.c.b16 %v3521, %v3520
        %v3531 = vpack.c.b16 %v3523, %v3522
        %3540 = vmatprep.subr.bf16.mxu0 0
        %3541 = vmatpush1.bf16.msra.mxu0 %v3524
        %3542 = vmatprep.subr.bf16.mxu0 0
        %3543 = vmatpush1.bf16.msra.mxu0 %v3525
        %3544 = vmatprep.subr.bf16.mxu0 0
        %3545 = vmatpush1.bf16.msra.mxu0 %v3526
        %3546 = vmatprep.subr.bf16.mxu0 0
        %3547 = vmatpush1.bf16.msra.mxu0 %v3527
        %3548 = vmatprep.subr.bf16.mxu0 0
        %3549 = vmatpush1.bf16.msra.mxu0 %v3528
        %3550 = vmatprep.subr.bf16.mxu0 0
        %3551 = vmatpush1.bf16.msra.mxu0 %v3529
        %3552 = vmatprep.subr.bf16.mxu0 0
        %3553 = vmatpush1.bf16.msra.mxu0 %v3530
        %3554 = vmatprep.subr.bf16.mxu0 0
        %3555 = vmatpush1.bf16.msra.mxu0 %v3531
        %3556 = vmatprep.subr.bf16.mxu0 0
        %3557 = vmatpush1.bf16.msra.mxu0 0
        %3558 = vmatprep.subr.bf16.mxu0 0
        %3559 = vmatpush1.bf16.msra.mxu0 0
        %3560 = vmatprep.subr.bf16.mxu0 0
        %3561 = vmatpush1.bf16.msra.mxu0 0
        %3562 = vmatprep.subr.bf16.mxu0 0
        %3563 = vmatpush1.bf16.msra.mxu0 0
        %3564 = vmatprep.subr.bf16.mxu0 0
        %3565 = vmatpush1.bf16.msra.mxu0 0
        %3566 = vmatprep.subr.bf16.mxu0 0
        %3567 = vmatpush1.bf16.msra.mxu0 0
        %3568 = vmatprep.subr.bf16.mxu0 0
        %3569 = vmatpush1.bf16.msra.mxu0 0
        %3570 = vmatprep.subr.bf16.mxu0 0
        %3571 = vmatpush1.bf16.msra.mxu0 0
        %3572 = vmatprep.mubr.bf16.mxu0 0
        %3573 = vmatmul.mubr.bf16.gmra.mrb[0].mxu0 %v3046
        %v3574 = vpop.f32.mrb[0].mxu0
        %v3575 = vadd.f32 0.0, %v3574
        %v3576 = vpop.f32.mrb[0].mxu0
        %v3577 = vpop.f32.mrb[0].mxu0
        %v3578 = vpop.f32.mrb[0].mxu0
        %3579 = vdwg.mxu0
        %s3580 = scalar_lea.vmem %s3, 1088
        %v3581 = vld [vmem:[%s3580] sm:$0xf]
        %v3582 = vld [vmem:[%s3580 + $0x4] sm:$0xf]
        %v3583 = vld [vmem:[%s3580 + $0x8] sm:$0xf]
        %v3584 = vld [vmem:[%s3580 + $0xc] sm:$0xf]
        %v3585 = vld [vmem:[%s3580 + $0x10] sm:$0xf]
        %v3586 = vld [vmem:[%s3580 + $0x14] sm:$0xf]
        %v3587 = vld [vmem:[%s3580 + $0x18] sm:$0xf]
        %v3588 = vld [vmem:[%s3580 + $0x1c] sm:$0xf]
        %v3589 = vld [vmem:[%s3580 + $0x20] sm:$0xf]
        %v3590 = vld [vmem:[%s3580 + $0x24] sm:$0xf]
        %v3591 = vld [vmem:[%s3580 + $0x28] sm:$0xf]
        %v3592 = vld [vmem:[%s3580 + $0x2c] sm:$0xf]
        %v3593 = vld [vmem:[%s3580 + $0x30] sm:$0xf]
        %v3594 = vld [vmem:[%s3580 + $0x34] sm:$0xf]
        %v3595 = vld [vmem:[%s3580 + $0x38] sm:$0xf]
        %v3596 = vld [vmem:[%s3580 + $0x3c] sm:$0xf]
        %v3613 = vunpack.c.l.b16 %v3581
        %v3614 = vunpack.c.l.b16 %v3582
        %v3615 = vunpack.c.l.b16 %v3583
        %v3616 = vunpack.c.l.b16 %v3584
        %v3617 = vunpack.c.l.b16 %v3585
        %v3618 = vunpack.c.l.b16 %v3586
        %v3619 = vunpack.c.l.b16 %v3587
        %v3620 = vunpack.c.l.b16 %v3588
        %v3621 = vunpack.c.l.b16 %v3589
        %v3622 = vunpack.c.l.b16 %v3590
        %v3623 = vunpack.c.l.b16 %v3591
        %v3624 = vunpack.c.l.b16 %v3592
        %v3625 = vunpack.c.l.b16 %v3593
        %v3626 = vunpack.c.l.b16 %v3594
        %v3627 = vunpack.c.l.b16 %v3595
        %v3628 = vunpack.c.l.b16 %v3596
        %v3629 = vpack.c.b16 %v3614, %v3613
        %v3630 = vpack.c.b16 %v3616, %v3615
        %v3631 = vpack.c.b16 %v3618, %v3617
        %v3632 = vpack.c.b16 %v3620, %v3619
        %v3633 = vpack.c.b16 %v3622, %v3621
        %v3634 = vpack.c.b16 %v3624, %v3623
        %v3635 = vpack.c.b16 %v3626, %v3625
        %v3636 = vpack.c.b16 %v3628, %v3627
        %3645 = vmatprep.subr.bf16.mxu0 0
        %3646 = vmatpush1.bf16.msra.mxu0 %v3629
        %3647 = vmatprep.subr.bf16.mxu0 0
        %3648 = vmatpush1.bf16.msra.mxu0 %v3630
        %3649 = vmatprep.subr.bf16.mxu0 0
        %3650 = vmatpush1.bf16.msra.mxu0 %v3631
        %3651 = vmatprep.subr.bf16.mxu0 0
        %3652 = vmatpush1.bf16.msra.mxu0 %v3632
        %3653 = vmatprep.subr.bf16.mxu0 0
        %3654 = vmatpush1.bf16.msra.mxu0 %v3633
        %3655 = vmatprep.subr.bf16.mxu0 0
        %3656 = vmatpush1.bf16.msra.mxu0 %v3634
        %3657 = vmatprep.subr.bf16.mxu0 0
        %3658 = vmatpush1.bf16.msra.mxu0 %v3635
        %3659 = vmatprep.subr.bf16.mxu0 0
        %3660 = vmatpush1.bf16.msra.mxu0 %v3636
        %3661 = vmatprep.subr.bf16.mxu0 0
        %3662 = vmatpush1.bf16.msra.mxu0 0
        %3663 = vmatprep.subr.bf16.mxu0 0
        %3664 = vmatpush1.bf16.msra.mxu0 0
        %3665 = vmatprep.subr.bf16.mxu0 0
        %3666 = vmatpush1.bf16.msra.mxu0 0
        %3667 = vmatprep.subr.bf16.mxu0 0
        %3668 = vmatpush1.bf16.msra.mxu0 0
        %3669 = vmatprep.subr.bf16.mxu0 0
        %3670 = vmatpush1.bf16.msra.mxu0 0
        %3671 = vmatprep.subr.bf16.mxu0 0
        %3672 = vmatpush1.bf16.msra.mxu0 0
        %3673 = vmatprep.subr.bf16.mxu0 0
        %3674 = vmatpush1.bf16.msra.mxu0 0
        %3675 = vmatprep.subr.bf16.mxu0 0
        %3676 = vmatpush1.bf16.msra.mxu0 0
        %3677 = vmatprep.mubr.bf16.mxu0 0
        %3678 = vmatmul.mubr.bf16.gmra.mrb[0].mxu0 %v3046
        %v3679 = vpop.f32.mrb[0].mxu0
        %v3680 = vadd.f32 0.0, %v3679
        %v3681 = vpop.f32.mrb[0].mxu0
        %v3682 = vpop.f32.mrb[0].mxu0
        %v3683 = vpop.f32.mrb[0].mxu0
        %3684 = vdwg.mxu0
        %s3685 = scalar_lea.vmem %s3, 1344
        %v3686 = vld [vmem:[%s3685] sm:$0xf]
        %v3687 = vld [vmem:[%s3685 + $0x4] sm:$0xf]
        %v3688 = vld [vmem:[%s3685 + $0x8] sm:$0xf]
        %v3689 = vld [vmem:[%s3685 + $0xc] sm:$0xf]
        %v3690 = vld [vmem:[%s3685 + $0x10] sm:$0xf]
        %v3691 = vld [vmem:[%s3685 + $0x14] sm:$0xf]
        %v3692 = vld [vmem:[%s3685 + $0x18] sm:$0xf]
        %v3693 = vld [vmem:[%s3685 + $0x1c] sm:$0xf]
        %v3694 = vld [vmem:[%s3685 + $0x20] sm:$0xf]
        %v3695 = vld [vmem:[%s3685 + $0x24] sm:$0xf]
        %v3696 = vld [vmem:[%s3685 + $0x28] sm:$0xf]
        %v3697 = vld [vmem:[%s3685 + $0x2c] sm:$0xf]
        %v3698 = vld [vmem:[%s3685 + $0x30] sm:$0xf]
        %v3699 = vld [vmem:[%s3685 + $0x34] sm:$0xf]
        %v3700 = vld [vmem:[%s3685 + $0x38] sm:$0xf]
        %v3701 = vld [vmem:[%s3685 + $0x3c] sm:$0xf]
        %v3718 = vunpack.c.l.b16 %v3686
        %v3719 = vunpack.c.l.b16 %v3687
        %v3720 = vunpack.c.l.b16 %v3688
        %v3721 = vunpack.c.l.b16 %v3689
        %v3722 = vunpack.c.l.b16 %v3690
        %v3723 = vunpack.c.l.b16 %v3691
        %v3724 = vunpack.c.l.b16 %v3692
        %v3725 = vunpack.c.l.b16 %v3693
        %v3726 = vunpack.c.l.b16 %v3694
        %v3727 = vunpack.c.l.b16 %v3695
        %v3728 = vunpack.c.l.b16 %v3696
        %v3729 = vunpack.c.l.b16 %v3697
        %v3730 = vunpack.c.l.b16 %v3698
        %v3731 = vunpack.c.l.b16 %v3699
        %v3732 = vunpack.c.l.b16 %v3700
        %v3733 = vunpack.c.l.b16 %v3701
        %v3734 = vpack.c.b16 %v3719, %v3718
        %v3735 = vpack.c.b16 %v3721, %v3720
        %v3736 = vpack.c.b16 %v3723, %v3722
        %v3737 = vpack.c.b16 %v3725, %v3724
        %v3738 = vpack.c.b16 %v3727, %v3726
        %v3739 = vpack.c.b16 %v3729, %v3728
        %v3740 = vpack.c.b16 %v3731, %v3730
        %v3741 = vpack.c.b16 %v3733, %v3732
        %3750 = vmatprep.subr.bf16.mxu0 0
        %3751 = vmatpush1.bf16.msra.mxu0 %v3734
        %3752 = vmatprep.subr.bf16.mxu0 0
        %3753 = vmatpush1.bf16.msra.mxu0 %v3735
        %3754 = vmatprep.subr.bf16.mxu0 0
        %3755 = vmatpush1.bf16.msra.mxu0 %v3736
        %3756 = vmatprep.subr.bf16.mxu0 0
        %3757 = vmatpush1.bf16.msra.mxu0 %v3737
        %3758 = vmatprep.subr.bf16.mxu0 0
        %3759 = vmatpush1.bf16.msra.mxu0 %v3738
        %3760 = vmatprep.subr.bf16.mxu0 0
        %3761 = vmatpush1.bf16.msra.mxu0 %v3739
        %3762 = vmatprep.subr.bf16.mxu0 0
        %3763 = vmatpush1.bf16.msra.mxu0 %v3740
        %3764 = vmatprep.subr.bf16.mxu0 0
        %3765 = vmatpush1.bf16.msra.mxu0 %v3741
        %3766 = vmatprep.subr.bf16.mxu0 0
        %3767 = vmatpush1.bf16.msra.mxu0 0
        %3768 = vmatprep.subr.bf16.mxu0 0
        %3769 = vmatpush1.bf16.msra.mxu0 0
        %3770 = vmatprep.subr.bf16.mxu0 0
        %3771 = vmatpush1.bf16.msra.mxu0 0
        %3772 = vmatprep.subr.bf16.mxu0 0
        %3773 = vmatpush1.bf16.msra.mxu0 0
        %3774 = vmatprep.subr.bf16.mxu0 0
        %3775 = vmatpush1.bf16.msra.mxu0 0
        %3776 = vmatprep.subr.bf16.mxu0 0
        %3777 = vmatpush1.bf16.msra.mxu0 0
        %3778 = vmatprep.subr.bf16.mxu0 0
        %3779 = vmatpush1.bf16.msra.mxu0 0
        %3780 = vmatprep.subr.bf16.mxu0 0
        %3781 = vmatpush1.bf16.msra.mxu0 0
        %3782 = vmatprep.mubr.bf16.mxu0 0
        %3783 = vmatmul.mubr.bf16.gmra.mrb[0].mxu0 %v3046
        %v3784 = vpop.f32.mrb[0].mxu0
        %v3785 = vadd.f32 0.0, %v3784
        %v3786 = vpop.f32.mrb[0].mxu0
        %v3787 = vpop.f32.mrb[0].mxu0
        %v3788 = vpop.f32.mrb[0].mxu0
        %3789 = vdwg.mxu0
        %v3790 = vpack.c.bf16 %v3575, %v3575
        %v3791 = vpack.c.bf16 %v3680, %v3680
        %v3793 = vsel %vm727, %v3790, 0
        %v3796 = vsel %vm727, %v3791, 0
        %3798 = vmatprep.subr.bf16.mxu0 0
        %3799 = vmatpush1.bf16.xpose.msra.mxu0 %v3796
        %3800 = vmatprep.subr.bf16.mxu0 0
        %3801 = vmatpush1.bf16.xpose.msra.mxu0 0
        %3802 = vmatprep.subr.bf16.mxu0 0
        %3803 = vmatpush1.bf16.xpose.msra.mxu0 0
        %3804 = vmatprep.subr.bf16.mxu0 0
        %3805 = vmatpush1.bf16.xpose.msra.mxu0 0
        %3806 = vmatprep.subr.bf16.mxu0 0
        %3807 = vmatpush1.bf16.xpose.msra.mxu0 0
        %3808 = vmatprep.subr.bf16.mxu0 0
        %3809 = vmatpush1.bf16.xpose.msra.mxu0 0
        %3810 = vmatprep.subr.bf16.mxu0 0
        %3811 = vmatpush1.bf16.xpose.msra.mxu0 0
        %3812 = vmatprep.subr.bf16.mxu0 0
        %3813 = vmatpush1.bf16.xpose.msra.mxu0 0
        %3814 = vmatprep.subr.bf16.mxu0 0
        %3815 = vmatpush1.bf16.xpose.msra.mxu0 0
        %3816 = vmatprep.subr.bf16.mxu0 0
        %3817 = vmatpush1.bf16.xpose.msra.mxu0 0
        %3818 = vmatprep.subr.bf16.mxu0 0
        %3819 = vmatpush1.bf16.xpose.msra.mxu0 0
        %3820 = vmatprep.subr.bf16.mxu0 0
        %3821 = vmatpush1.bf16.xpose.msra.mxu0 0
        %3822 = vmatprep.subr.bf16.mxu0 0
        %3823 = vmatpush1.bf16.xpose.msra.mxu0 0
        %3824 = vmatprep.subr.bf16.mxu0 0
        %3825 = vmatpush1.bf16.xpose.msra.mxu0 0
        %3826 = vmatprep.subr.bf16.mxu0 0
        %3827 = vmatpush1.bf16.xpose.msra.mxu0 0
        %3828 = vmatprep.subr.bf16.mxu0 0
        %3829 = vmatpush1.bf16.xpose.msra.mxu0 0
        %3830 = vmatprep.mubr.bf16.mxu0 0
        %3831 = vmatmul.mubr.bf16.gmra.mrb[0].mxu0 %v3793
        %v3832 = vpop.f32.mrb[0].mxu0
        %v3833 = vadd.f32 %v381, %v3832
        %v3834 = vpop.f32.mrb[0].mxu0
        %v3835 = vpop.f32.mrb[0].mxu0
        %v3836 = vpop.f32.mrb[0].mxu0
        %3837 = vdwg.mxu0
        %v3838 = vsel %vm774, %v3833, -inf
        %3839 = vmax.xlane.f32.xlu0 %v3838
        %v3840 = vpop.xlane.xlu0 %3839
        %v3841 = vsub.f32 %v3833, %v3840
        %v3842 = vmul.f32 %v3841, 1.442695
        %v3843 = vpow.pop %v3842
        %v3844 = vsel %vm774, %v3843, 0.0
        %3845 = vadd.xlane.f32.xlu0 %v3844
        %v3846 = vpop.xlane.xlu0 %3845
        %v3847 = vrcp.pop %v3846
        %v3848 = vmul.f32 %v3843, %v3847
        %v3849 = vpack.c.bf16 %v3848, %v3848
        %v3850 = vpack.c.bf16 %v3785, %v3785
        %v3852 = vsel %vm774, %v3849, 0
        %v3855 = vsel %vm791, %v3850, 0
        %3857 = vmatprep.subr.bf16.mxu0 0
        %3858 = vmatpush1.bf16.msra.mxu0 %v3855
        %3859 = vmatprep.subr.bf16.mxu0 0
        %3860 = vmatpush1.bf16.msra.mxu0 0
        %3861 = vmatprep.subr.bf16.mxu0 0
        %3862 = vmatpush1.bf16.msra.mxu0 0
        %3863 = vmatprep.subr.bf16.mxu0 0
        %3864 = vmatpush1.bf16.msra.mxu0 0
        %3865 = vmatprep.subr.bf16.mxu0 0
        %3866 = vmatpush1.bf16.msra.mxu0 0
        %3867 = vmatprep.subr.bf16.mxu0 0
        %3868 = vmatpush1.bf16.msra.mxu0 0
        %3869 = vmatprep.subr.bf16.mxu0 0
        %3870 = vmatpush1.bf16.msra.mxu0 0
        %3871 = vmatprep.subr.bf16.mxu0 0
        %3872 = vmatpush1.bf16.msra.mxu0 0
        %3873 = vmatprep.subr.bf16.mxu0 0
        %3874 = vmatpush1.bf16.msra.mxu0 0
        %3875 = vmatprep.subr.bf16.mxu0 0
        %3876 = vmatpush1.bf16.msra.mxu0 0
        %3877 = vmatprep.subr.bf16.mxu0 0
        %3878 = vmatpush1.bf16.msra.mxu0 0
        %3879 = vmatprep.subr.bf16.mxu0 0
        %3880 = vmatpush1.bf16.msra.mxu0 0
        %3881 = vmatprep.subr.bf16.mxu0 0
        %3882 = vmatpush1.bf16.msra.mxu0 0
        %3883 = vmatprep.subr.bf16.mxu0 0
        %3884 = vmatpush1.bf16.msra.mxu0 0
        %3885 = vmatprep.subr.bf16.mxu0 0
        %3886 = vmatpush1.bf16.msra.mxu0 0
        %3887 = vmatprep.subr.bf16.mxu0 0
        %3888 = vmatpush1.bf16.msra.mxu0 0
        %3889 = vmatprep.mubr.bf16.mxu0 0
        %3890 = vmatmul.mubr.bf16.gmra.mrb[0].mxu0 %v3852
        %v3891 = vpop.f32.mrb[0].mxu0
        %v3892 = vadd.f32 0.0, %v3891
        %v3893 = vpop.f32.mrb[0].mxu0
        %v3894 = vpop.f32.mrb[0].mxu0
        %v3895 = vpop.f32.mrb[0].mxu0
        %3896 = vdwg.mxu0
        %v3897 = vpack.c.bf16 %v3892, %v3892
        %s3898 = scalar_lea.vmem %s4, 80
        %v3899 = vld [vmem:[%s3898] sm:$0xf]
        %v3900 = vld [vmem:[%s3898 + $0x4] sm:$0xf]
        %v3901 = vld [vmem:[%s3898 + $0x8] sm:$0xf]
        %v3902 = vld [vmem:[%s3898 + $0xc] sm:$0xf]
        %v3907 = vunpack.c.l.b16 %v3899
        %v3908 = vunpack.c.l.b16 %v3900
        %v3909 = vunpack.c.l.b16 %v3901
        %v3910 = vunpack.c.l.b16 %v3902
        %v3911 = vpack.c.b16 %v3908, %v3907
        %v3912 = vpack.c.b16 %v3910, %v3909
        %v3916 = vsel %vm727, %v3897, 0
        %3918 = vmatprep.subr.bf16.mxu0 0
        %3919 = vmatpush1.bf16.msra.mxu0 %v3911
        %3920 = vmatprep.subr.bf16.mxu0 0
        %3921 = vmatpush1.bf16.msra.mxu0 %v3912
        %3922 = vmatprep.subr.bf16.mxu0 0
        %3923 = vmatpush1.bf16.msra.mxu0 0
        %3924 = vmatprep.subr.bf16.mxu0 0
        %3925 = vmatpush1.bf16.msra.mxu0 0
        %3926 = vmatprep.subr.bf16.mxu0 0
        %3927 = vmatpush1.bf16.msra.mxu0 0
        %3928 = vmatprep.subr.bf16.mxu0 0
        %3929 = vmatpush1.bf16.msra.mxu0 0
        %3930 = vmatprep.subr.bf16.mxu0 0
        %3931 = vmatpush1.bf16.msra.mxu0 0
        %3932 = vmatprep.subr.bf16.mxu0 0
        %3933 = vmatpush1.bf16.msra.mxu0 0
        %3934 = vmatprep.subr.bf16.mxu0 0
        %3935 = vmatpush1.bf16.msra.mxu0 0
        %3936 = vmatprep.subr.bf16.mxu0 0
        %3937 = vmatpush1.bf16.msra.mxu0 0
        %3938 = vmatprep.subr.bf16.mxu0 0
        %3939 = vmatpush1.bf16.msra.mxu0 0
        %3940 = vmatprep.subr.bf16.mxu0 0
        %3941 = vmatpush1.bf16.msra.mxu0 0
        %3942 = vmatprep.subr.bf16.mxu0 0
        %3943 = vmatpush1.bf16.msra.mxu0 0
        %3944 = vmatprep.subr.bf16.mxu0 0
        %3945 = vmatpush1.bf16.msra.mxu0 0
        %3946 = vmatprep.subr.bf16.mxu0 0
        %3947 = vmatpush1.bf16.msra.mxu0 0
        %3948 = vmatprep.subr.bf16.mxu0 0
        %3949 = vmatpush1.bf16.msra.mxu0 0
        %3950 = vmatprep.mubr.bf16.mxu0 0
        %3951 = vmatmul.mubr.bf16.gmra.mrb[0].mxu0 %v3916
        %v3952 = vpop.f32.mrb[0].mxu0
        %v3953 = vadd.f32 0.0, %v3952
        %v3954 = vpop.f32.mrb[0].mxu0
        %v3955 = vpop.f32.mrb[0].mxu0
        %v3956 = vpop.f32.mrb[0].mxu0
        %3957 = vdwg.mxu0
        %v3962 = vunpack.c.l.b16 %v3471
        %v3963 = vunpack.c.l.b16 %v3472
        %v3964 = vunpack.c.l.b16 %v3473
        %v3965 = vunpack.c.l.b16 %v3474
        %v3966 = vpack.c.b16 %v3963, %v3962
        %v3967 = vpack.c.b16 %v3965, %v3964
        %v3971 = vsel %vm727, %v3469, 0
        %3973 = vmatprep.subr.bf16.mxu0 0
        %3974 = vmatpush1.bf16.msra.mxu0 %v3966
        %3975 = vmatprep.subr.bf16.mxu0 0
        %3976 = vmatpush1.bf16.msra.mxu0 %v3967
        %3977 = vmatprep.subr.bf16.mxu0 0
        %3978 = vmatpush1.bf16.msra.mxu0 0
        %3979 = vmatprep.subr.bf16.mxu0 0
        %3980 = vmatpush1.bf16.msra.mxu0 0
        %3981 = vmatprep.subr.bf16.mxu0 0
        %3982 = vmatpush1.bf16.msra.mxu0 0
        %3983 = vmatprep.subr.bf16.mxu0 0
        %3984 = vmatpush1.bf16.msra.mxu0 0
        %3985 = vmatprep.subr.bf16.mxu0 0
        %3986 = vmatpush1.bf16.msra.mxu0 0
        %3987 = vmatprep.subr.bf16.mxu0 0
        %3988 = vmatpush1.bf16.msra.mxu0 0
        %3989 = vmatprep.subr.bf16.mxu0 0
        %3990 = vmatpush1.bf16.msra.mxu0 0
        %3991 = vmatprep.subr.bf16.mxu0 0
        %3992 = vmatpush1.bf16.msra.mxu0 0
        %3993 = vmatprep.subr.bf16.mxu0 0
        %3994 = vmatpush1.bf16.msra.mxu0 0
        %3995 = vmatprep.subr.bf16.mxu0 0
        %3996 = vmatpush1.bf16.msra.mxu0 0
        %3997 = vmatprep.subr.bf16.mxu0 0
        %3998 = vmatpush1.bf16.msra.mxu0 0
        %3999 = vmatprep.subr.bf16.mxu0 0
        %4000 = vmatpush1.bf16.msra.mxu0 0
        %4001 = vmatprep.subr.bf16.mxu0 0
        %4002 = vmatpush1.bf16.msra.mxu0 0
        %4003 = vmatprep.subr.bf16.mxu0 0
        %4004 = vmatpush1.bf16.msra.mxu0 0
        %4005 = vmatprep.mubr.bf16.mxu0 0
        %4006 = vmatmul.mubr.bf16.gmra.mrb[0].mxu0 %v3971
        %v4007 = vpop.f32.mrb[0].mxu0
        %v4008 = vadd.f32 %v3953, %v4007
        %v4009 = vpop.f32.mrb[0].mxu0
        %v4010 = vpop.f32.mrb[0].mxu0
        %v4011 = vpop.f32.mrb[0].mxu0
        %4012 = vdwg.mxu0
        %s4013 = scalar_lea.vmem %s3, 896
        %v4014 = vld [vmem:[%s4013] sm:$0xf]
        %v4015 = vld [vmem:[%s4013 + $0x4] sm:$0xf]
        %v4016 = vld [vmem:[%s4013 + $0x8] sm:$0xf]
        %v4017 = vld [vmem:[%s4013 + $0xc] sm:$0xf]
        %v4018 = vld [vmem:[%s4013 + $0x10] sm:$0xf]
        %v4019 = vld [vmem:[%s4013 + $0x14] sm:$0xf]
        %v4020 = vld [vmem:[%s4013 + $0x18] sm:$0xf]
        %v4021 = vld [vmem:[%s4013 + $0x1c] sm:$0xf]
        %v4022 = vld [vmem:[%s4013 + $0x20] sm:$0xf]
        %v4023 = vld [vmem:[%s4013 + $0x24] sm:$0xf]
        %v4024 = vld [vmem:[%s4013 + $0x28] sm:$0xf]
        %v4025 = vld [vmem:[%s4013 + $0x2c] sm:$0xf]
        %v4026 = vld [vmem:[%s4013 + $0x30] sm:$0xf]
        %v4027 = vld [vmem:[%s4013 + $0x34] sm:$0xf]
        %v4028 = vld [vmem:[%s4013 + $0x38] sm:$0xf]
        %v4029 = vld [vmem:[%s4013 + $0x3c] sm:$0xf]
        %v4046 = vunpack.c.l.b16 %v4014
        %v4047 = vunpack.c.l.b16 %v4015
        %v4048 = vunpack.c.l.b16 %v4016
        %v4049 = vunpack.c.l.b16 %v4017
        %v4050 = vunpack.c.l.b16 %v4018
        %v4051 = vunpack.c.l.b16 %v4019
        %v4052 = vunpack.c.l.b16 %v4020
        %v4053 = vunpack.c.l.b16 %v4021
        %v4054 = vunpack.c.l.b16 %v4022
        %v4055 = vunpack.c.l.b16 %v4023
        %v4056 = vunpack.c.l.b16 %v4024
        %v4057 = vunpack.c.l.b16 %v4025
        %v4058 = vunpack.c.l.b16 %v4026
        %v4059 = vunpack.c.l.b16 %v4027
        %v4060 = vunpack.c.l.b16 %v4028
        %v4061 = vunpack.c.l.b16 %v4029
        %v4062 = vpack.c.b16 %v4047, %v4046
        %v4063 = vpack.c.b16 %v4049, %v4048
        %v4064 = vpack.c.b16 %v4051, %v4050
        %v4065 = vpack.c.b16 %v4053, %v4052
        %v4066 = vpack.c.b16 %v4055, %v4054
        %v4067 = vpack.c.b16 %v4057, %v4056
        %v4068 = vpack.c.b16 %v4059, %v4058
        %v4069 = vpack.c.b16 %v4061, %v4060
        %4078 = vmatprep.subr.bf16.mxu0 0
        %4079 = vmatpush1.bf16.msra.mxu0 %v4062
        %4080 = vmatprep.subr.bf16.mxu0 0
        %4081 = vmatpush1.bf16.msra.mxu0 %v4063
        %4082 = vmatprep.subr.bf16.mxu0 0
        %4083 = vmatpush1.bf16.msra.mxu0 %v4064
        %4084 = vmatprep.subr.bf16.mxu0 0
        %4085 = vmatpush1.bf16.msra.mxu0 %v4065
        %4086 = vmatprep.subr.bf16.mxu0 0
        %4087 = vmatpush1.bf16.msra.mxu0 %v4066
        %4088 = vmatprep.subr.bf16.mxu0 0
        %4089 = vmatpush1.bf16.msra.mxu0 %v4067
        %4090 = vmatprep.subr.bf16.mxu0 0
        %4091 = vmatpush1.bf16.msra.mxu0 %v4068
        %4092 = vmatprep.subr.bf16.mxu0 0
        %4093 = vmatpush1.bf16.msra.mxu0 %v4069
        %4094 = vmatprep.subr.bf16.mxu0 0
        %4095 = vmatpush1.bf16.msra.mxu0 0
        %4096 = vmatprep.subr.bf16.mxu0 0
        %4097 = vmatpush1.bf16.msra.mxu0 0
        %4098 = vmatprep.subr.bf16.mxu0 0
        %4099 = vmatpush1.bf16.msra.mxu0 0
        %4100 = vmatprep.subr.bf16.mxu0 0
        %4101 = vmatpush1.bf16.msra.mxu0 0
        %4102 = vmatprep.subr.bf16.mxu0 0
        %4103 = vmatpush1.bf16.msra.mxu0 0
        %4104 = vmatprep.subr.bf16.mxu0 0
        %4105 = vmatpush1.bf16.msra.mxu0 0
        %4106 = vmatprep.subr.bf16.mxu0 0
        %4107 = vmatpush1.bf16.msra.mxu0 0
        %4108 = vmatprep.subr.bf16.mxu0 0
        %4109 = vmatpush1.bf16.msra.mxu0 0
        %4110 = vmatprep.mubr.bf16.mxu0 0
        %4111 = vmatmul.mubr.bf16.gmra.mrb[0].mxu0 %v3046
        %v4112 = vpop.f32.mrb[0].mxu0
        %v4113 = vadd.f32 0.0, %v4112
        %v4114 = vpop.f32.mrb[0].mxu0
        %v4115 = vpop.f32.mrb[0].mxu0
        %v4116 = vpop.f32.mrb[0].mxu0
        %4117 = vdwg.mxu0
        %s4118 = scalar_lea.vmem %s3, 1152
        %v4119 = vld [vmem:[%s4118] sm:$0xf]
        %v4120 = vld [vmem:[%s4118 + $0x4] sm:$0xf]
        %v4121 = vld [vmem:[%s4118 + $0x8] sm:$0xf]
        %v4122 = vld [vmem:[%s4118 + $0xc] sm:$0xf]
        %v4123 = vld [vmem:[%s4118 + $0x10] sm:$0xf]
        %v4124 = vld [vmem:[%s4118 + $0x14] sm:$0xf]
        %v4125 = vld [vmem:[%s4118 + $0x18] sm:$0xf]
        %v4126 = vld [vmem:[%s4118 + $0x1c] sm:$0xf]
        %v4127 = vld [vmem:[%s4118 + $0x20] sm:$0xf]
        %v4128 = vld [vmem:[%s4118 + $0x24] sm:$0xf]
        %v4129 = vld [vmem:[%s4118 + $0x28] sm:$0xf]
        %v4130 = vld [vmem:[%s4118 + $0x2c] sm:$0xf]
        %v4131 = vld [vmem:[%s4118 + $0x30] sm:$0xf]
        %v4132 = vld [vmem:[%s4118 + $0x34] sm:$0xf]
        %v4133 = vld [vmem:[%s4118 + $0x38] sm:$0xf]
        %v4134 = vld [vmem:[%s4118 + $0x3c] sm:$0xf]
        %v4151 = vunpack.c.l.b16 %v4119
        %v4152 = vunpack.c.l.b16 %v4120
        %v4153 = vunpack.c.l.b16 %v4121
        %v4154 = vunpack.c.l.b16 %v4122
        %v4155 = vunpack.c.l.b16 %v4123
        %v4156 = vunpack.c.l.b16 %v4124
        %v4157 = vunpack.c.l.b16 %v4125
        %v4158 = vunpack.c.l.b16 %v4126
        %v4159 = vunpack.c.l.b16 %v4127
        %v4160 = vunpack.c.l.b16 %v4128
        %v4161 = vunpack.c.l.b16 %v4129
        %v4162 = vunpack.c.l.b16 %v4130
        %v4163 = vunpack.c.l.b16 %v4131
        %v4164 = vunpack.c.l.b16 %v4132
        %v4165 = vunpack.c.l.b16 %v4133
        %v4166 = vunpack.c.l.b16 %v4134
        %v4167 = vpack.c.b16 %v4152, %v4151
        %v4168 = vpack.c.b16 %v4154, %v4153
        %v4169 = vpack.c.b16 %v4156, %v4155
        %v4170 = vpack.c.b16 %v4158, %v4157
        %v4171 = vpack.c.b16 %v4160, %v4159
        %v4172 = vpack.c.b16 %v4162, %v4161
        %v4173 = vpack.c.b16 %v4164, %v4163
        %v4174 = vpack.c.b16 %v4166, %v4165
        %4183 = vmatprep.subr.bf16.mxu0 0
        %4184 = vmatpush1.bf16.msra.mxu0 %v4167
        %4185 = vmatprep.subr.bf16.mxu0 0
        %4186 = vmatpush1.bf16.msra.mxu0 %v4168
        %4187 = vmatprep.subr.bf16.mxu0 0
        %4188 = vmatpush1.bf16.msra.mxu0 %v4169
        %4189 = vmatprep.subr.bf16.mxu0 0
        %4190 = vmatpush1.bf16.msra.mxu0 %v4170
        %4191 = vmatprep.subr.bf16.mxu0 0
        %4192 = vmatpush1.bf16.msra.mxu0 %v4171
        %4193 = vmatprep.subr.bf16.mxu0 0
        %4194 = vmatpush1.bf16.msra.mxu0 %v4172
        %4195 = vmatprep.subr.bf16.mxu0 0
        %4196 = vmatpush1.bf16.msra.mxu0 %v4173
        %4197 = vmatprep.subr.bf16.mxu0 0
        %4198 = vmatpush1.bf16.msra.mxu0 %v4174
        %4199 = vmatprep.subr.bf16.mxu0 0
        %4200 = vmatpush1.bf16.msra.mxu0 0
        %4201 = vmatprep.subr.bf16.mxu0 0
        %4202 = vmatpush1.bf16.msra.mxu0 0
        %4203 = vmatprep.subr.bf16.mxu0 0
        %4204 = vmatpush1.bf16.msra.mxu0 0
        %4205 = vmatprep.subr.bf16.mxu0 0
        %4206 = vmatpush1.bf16.msra.mxu0 0
        %4207 = vmatprep.subr.bf16.mxu0 0
        %4208 = vmatpush1.bf16.msra.mxu0 0
        %4209 = vmatprep.subr.bf16.mxu0 0
        %4210 = vmatpush1.bf16.msra.mxu0 0
        %4211 = vmatprep.subr.bf16.mxu0 0
        %4212 = vmatpush1.bf16.msra.mxu0 0
        %4213 = vmatprep.subr.bf16.mxu0 0
        %4214 = vmatpush1.bf16.msra.mxu0 0
        %4215 = vmatprep.mubr.bf16.mxu0 0
        %4216 = vmatmul.mubr.bf16.gmra.mrb[0].mxu0 %v3046
        %v4217 = vpop.f32.mrb[0].mxu0
        %v4218 = vadd.f32 0.0, %v4217
        %v4219 = vpop.f32.mrb[0].mxu0
        %v4220 = vpop.f32.mrb[0].mxu0
        %v4221 = vpop.f32.mrb[0].mxu0
        %4222 = vdwg.mxu0
        %s4223 = scalar_lea.vmem %s3, 1408
        %v4224 = vld [vmem:[%s4223] sm:$0xf]
        %v4225 = vld [vmem:[%s4223 + $0x4] sm:$0xf]
        %v4226 = vld [vmem:[%s4223 + $0x8] sm:$0xf]
        %v4227 = vld [vmem:[%s4223 + $0xc] sm:$0xf]
        %v4228 = vld [vmem:[%s4223 + $0x10] sm:$0xf]
        %v4229 = vld [vmem:[%s4223 + $0x14] sm:$0xf]
        %v4230 = vld [vmem:[%s4223 + $0x18] sm:$0xf]
        %v4231 = vld [vmem:[%s4223 + $0x1c] sm:$0xf]
        %v4232 = vld [vmem:[%s4223 + $0x20] sm:$0xf]
        %v4233 = vld [vmem:[%s4223 + $0x24] sm:$0xf]
        %v4234 = vld [vmem:[%s4223 + $0x28] sm:$0xf]
        %v4235 = vld [vmem:[%s4223 + $0x2c] sm:$0xf]
        %v4236 = vld [vmem:[%s4223 + $0x30] sm:$0xf]
        %v4237 = vld [vmem:[%s4223 + $0x34] sm:$0xf]
        %v4238 = vld [vmem:[%s4223 + $0x38] sm:$0xf]
        %v4239 = vld [vmem:[%s4223 + $0x3c] sm:$0xf]
        %v4256 = vunpack.c.l.b16 %v4224
        %v4257 = vunpack.c.l.b16 %v4225
        %v4258 = vunpack.c.l.b16 %v4226
        %v4259 = vunpack.c.l.b16 %v4227
        %v4260 = vunpack.c.l.b16 %v4228
        %v4261 = vunpack.c.l.b16 %v4229
        %v4262 = vunpack.c.l.b16 %v4230
        %v4263 = vunpack.c.l.b16 %v4231
        %v4264 = vunpack.c.l.b16 %v4232
        %v4265 = vunpack.c.l.b16 %v4233
        %v4266 = vunpack.c.l.b16 %v4234
        %v4267 = vunpack.c.l.b16 %v4235
        %v4268 = vunpack.c.l.b16 %v4236
        %v4269 = vunpack.c.l.b16 %v4237
        %v4270 = vunpack.c.l.b16 %v4238
        %v4271 = vunpack.c.l.b16 %v4239
        %v4272 = vpack.c.b16 %v4257, %v4256
        %v4273 = vpack.c.b16 %v4259, %v4258
        %v4274 = vpack.c.b16 %v4261, %v4260
        %v4275 = vpack.c.b16 %v4263, %v4262
        %v4276 = vpack.c.b16 %v4265, %v4264
        %v4277 = vpack.c.b16 %v4267, %v4266
        %v4278 = vpack.c.b16 %v4269, %v4268
        %v4279 = vpack.c.b16 %v4271, %v4270
        %4288 = vmatprep.subr.bf16.mxu0 0
        %4289 = vmatpush1.bf16.msra.mxu0 %v4272
        %4290 = vmatprep.subr.bf16.mxu0 0
        %4291 = vmatpush1.bf16.msra.mxu0 %v4273
        %4292 = vmatprep.subr.bf16.mxu0 0
        %4293 = vmatpush1.bf16.msra.mxu0 %v4274
        %4294 = vmatprep.subr.bf16.mxu0 0
        %4295 = vmatpush1.bf16.msra.mxu0 %v4275
        %4296 = vmatprep.subr.bf16.mxu0 0
        %4297 = vmatpush1.bf16.msra.mxu0 %v4276
        %4298 = vmatprep.subr.bf16.mxu0 0
        %4299 = vmatpush1.bf16.msra.mxu0 %v4277
        %4300 = vmatprep.subr.bf16.mxu0 0
        %4301 = vmatpush1.bf16.msra.mxu0 %v4278
        %4302 = vmatprep.subr.bf16.mxu0 0
        %4303 = vmatpush1.bf16.msra.mxu0 %v4279
        %4304 = vmatprep.subr.bf16.mxu0 0
        %4305 = vmatpush1.bf16.msra.mxu0 0
        %4306 = vmatprep.subr.bf16.mxu0 0
        %4307 = vmatpush1.bf16.msra.mxu0 0
        %4308 = vmatprep.subr.bf16.mxu0 0
        %4309 = vmatpush1.bf16.msra.mxu0 0
        %4310 = vmatprep.subr.bf16.mxu0 0
        %4311 = vmatpush1.bf16.msra.mxu0 0
        %4312 = vmatprep.subr.bf16.mxu0 0
        %4313 = vmatpush1.bf16.msra.mxu0 0
        %4314 = vmatprep.subr.bf16.mxu0 0
        %4315 = vmatpush1.bf16.msra.mxu0 0
        %4316 = vmatprep.subr.bf16.mxu0 0
        %4317 = vmatpush1.bf16.msra.mxu0 0
        %4318 = vmatprep.subr.bf16.mxu0 0
        %4319 = vmatpush1.bf16.msra.mxu0 0
        %4320 = vmatprep.mubr.bf16.mxu0 0
        %4321 = vmatmul.mubr.bf16.gmra.mrb[0].mxu0 %v3046
        %v4322 = vpop.f32.mrb[0].mxu0
        %v4323 = vadd.f32 0.0, %v4322
        %v4324 = vpop.f32.mrb[0].mxu0
        %v4325 = vpop.f32.mrb[0].mxu0
        %v4326 = vpop.f32.mrb[0].mxu0
        %4327 = vdwg.mxu0
        %v4328 = vpack.c.bf16 %v4113, %v4113
        %v4329 = vpack.c.bf16 %v4218, %v4218
        %v4331 = vsel %vm727, %v4328, 0
        %v4334 = vsel %vm727, %v4329, 0
        %4336 = vmatprep.subr.bf16.mxu0 0
        %4337 = vmatpush1.bf16.xpose.msra.mxu0 %v4334
        %4338 = vmatprep.subr.bf16.mxu0 0
        %4339 = vmatpush1.bf16.xpose.msra.mxu0 0
        %4340 = vmatprep.subr.bf16.mxu0 0
        %4341 = vmatpush1.bf16.xpose.msra.mxu0 0
        %4342 = vmatprep.subr.bf16.mxu0 0
        %4343 = vmatpush1.bf16.xpose.msra.mxu0 0
        %4344 = vmatprep.subr.bf16.mxu0 0
        %4345 = vmatpush1.bf16.xpose.msra.mxu0 0
        %4346 = vmatprep.subr.bf16.mxu0 0
        %4347 = vmatpush1.bf16.xpose.msra.mxu0 0
        %4348 = vmatprep.subr.bf16.mxu0 0
        %4349 = vmatpush1.bf16.xpose.msra.mxu0 0
        %4350 = vmatprep.subr.bf16.mxu0 0
        %4351 = vmatpush1.bf16.xpose.msra.mxu0 0
        %4352 = vmatprep.subr.bf16.mxu0 0
        %4353 = vmatpush1.bf16.xpose.msra.mxu0 0
        %4354 = vmatprep.subr.bf16.mxu0 0
        %4355 = vmatpush1.bf16.xpose.msra.mxu0 0
        %4356 = vmatprep.subr.bf16.mxu0 0
        %4357 = vmatpush1.bf16.xpose.msra.mxu0 0
        %4358 = vmatprep.subr.bf16.mxu0 0
        %4359 = vmatpush1.bf16.xpose.msra.mxu0 0
        %4360 = vmatprep.subr.bf16.mxu0 0
        %4361 = vmatpush1.bf16.xpose.msra.mxu0 0
        %4362 = vmatprep.subr.bf16.mxu0 0
        %4363 = vmatpush1.bf16.xpose.msra.mxu0 0
        %4364 = vmatprep.subr.bf16.mxu0 0
        %4365 = vmatpush1.bf16.xpose.msra.mxu0 0
        %4366 = vmatprep.subr.bf16.mxu0 0
        %4367 = vmatpush1.bf16.xpose.msra.mxu0 0
        %4368 = vmatprep.mubr.bf16.mxu0 0
        %4369 = vmatmul.mubr.bf16.gmra.mrb[0].mxu0 %v4331
        %v4370 = vpop.f32.mrb[0].mxu0
        %v4371 = vadd.f32 %v381, %v4370
        %v4372 = vpop.f32.mrb[0].mxu0
        %v4373 = vpop.f32.mrb[0].mxu0
        %v4374 = vpop.f32.mrb[0].mxu0
        %4375 = vdwg.mxu0
        %v4376 = vsel %vm774, %v4371, -inf
        %4377 = vmax.xlane.f32.xlu0 %v4376
        %v4378 = vpop.xlane.xlu0 %4377
        %v4379 = vsub.f32 %v4371, %v4378
        %v4380 = vmul.f32 %v4379, 1.442695
        %v4381 = vpow.pop %v4380
        %v4382 = vsel %vm774, %v4381, 0.0
        %4383 = vadd.xlane.f32.xlu0 %v4382
        %v4384 = vpop.xlane.xlu0 %4383
        %v4385 = vrcp.pop %v4384
        %v4386 = vmul.f32 %v4381, %v4385
        %v4387 = vpack.c.bf16 %v4386, %v4386
        %v4388 = vpack.c.bf16 %v4323, %v4323
        %v4390 = vsel %vm774, %v4387, 0
        %v4393 = vsel %vm791, %v4388, 0
        %4395 = vmatprep.subr.bf16.mxu0 0
        %4396 = vmatpush1.bf16.msra.mxu0 %v4393
        %4397 = vmatprep.subr.bf16.mxu0 0
        %4398 = vmatpush1.bf16.msra.mxu0 0
        %4399 = vmatprep.subr.bf16.mxu0 0
        %4400 = vmatpush1.bf16.msra.mxu0 0
        %4401 = vmatprep.subr.bf16.mxu0 0
        %4402 = vmatpush1.bf16.msra.mxu0 0
        %4403 = vmatprep.subr.bf16.mxu0 0
        %4404 = vmatpush1.bf16.msra.mxu0 0
        %4405 = vmatprep.subr.bf16.mxu0 0
        %4406 = vmatpush1.bf16.msra.mxu0 0
        %4407 = vmatprep.subr.bf16.mxu0 0
        %4408 = vmatpush1.bf16.msra.mxu0 0
        %4409 = vmatprep.subr.bf16.mxu0 0
        %4410 = vmatpush1.bf16.msra.mxu0 0
        %4411 = vmatprep.subr.bf16.mxu0 0
        %4412 = vmatpush1.bf16.msra.mxu0 0
        %4413 = vmatprep.subr.bf16.mxu0 0
        %4414 = vmatpush1.bf16.msra.mxu0 0
        %4415 = vmatprep.subr.bf16.mxu0 0
        %4416 = vmatpush1.bf16.msra.mxu0 0
        %4417 = vmatprep.subr.bf16.mxu0 0
        %4418 = vmatpush1.bf16.msra.mxu0 0
        %4419 = vmatprep.subr.bf16.mxu0 0
        %4420 = vmatpush1.bf16.msra.mxu0 0
        %4421 = vmatprep.subr.bf16.mxu0 0
        %4422 = vmatpush1.bf16.msra.mxu0 0
        %4423 = vmatprep.subr.bf16.mxu0 0
        %4424 = vmatpush1.bf16.msra.mxu0 0
        %4425 = vmatprep.subr.bf16.mxu0 0
        %4426 = vmatpush1.bf16.msra.mxu0 0
        %4427 = vmatprep.mubr.bf16.mxu0 0
        %4428 = vmatmul.mubr.bf16.gmra.mrb[0].mxu0 %v4390
        %v4429 = vpop.f32.mrb[0].mxu0
        %v4430 = vadd.f32 0.0, %v4429
        %v4431 = vpop.f32.mrb[0].mxu0
        %v4432 = vpop.f32.mrb[0].mxu0
        %v4433 = vpop.f32.mrb[0].mxu0
        %4434 = vdwg.mxu0
        %v4435 = vpack.c.bf16 %v4430, %v4430
        %s4436 = scalar_lea.vmem %s4, 96
        %v4437 = vld [vmem:[%s4436] sm:$0xf]
        %v4438 = vld [vmem:[%s4436 + $0x4] sm:$0xf]
        %v4439 = vld [vmem:[%s4436 + $0x8] sm:$0xf]
        %v4440 = vld [vmem:[%s4436 + $0xc] sm:$0xf]
        %v4445 = vunpack.c.l.b16 %v4437
        %v4446 = vunpack.c.l.b16 %v4438
        %v4447 = vunpack.c.l.b16 %v4439
        %v4448 = vunpack.c.l.b16 %v4440
        %v4449 = vpack.c.b16 %v4446, %v4445
        %v4450 = vpack.c.b16 %v4448, %v4447
        %v4454 = vsel %vm727, %v4435, 0
        %4456 = vmatprep.subr.bf16.mxu0 0
        %4457 = vmatpush1.bf16.msra.mxu0 %v4449
        %4458 = vmatprep.subr.bf16.mxu0 0
        %4459 = vmatpush1.bf16.msra.mxu0 %v4450
        %4460 = vmatprep.subr.bf16.mxu0 0
        %4461 = vmatpush1.bf16.msra.mxu0 0
        %4462 = vmatprep.subr.bf16.mxu0 0
        %4463 = vmatpush1.bf16.msra.mxu0 0
        %4464 = vmatprep.subr.bf16.mxu0 0
        %4465 = vmatpush1.bf16.msra.mxu0 0
        %4466 = vmatprep.subr.bf16.mxu0 0
        %4467 = vmatpush1.bf16.msra.mxu0 0
        %4468 = vmatprep.subr.bf16.mxu0 0
        %4469 = vmatpush1.bf16.msra.mxu0 0
        %4470 = vmatprep.subr.bf16.mxu0 0
        %4471 = vmatpush1.bf16.msra.mxu0 0
        %4472 = vmatprep.subr.bf16.mxu0 0
        %4473 = vmatpush1.bf16.msra.mxu0 0
        %4474 = vmatprep.subr.bf16.mxu0 0
        %4475 = vmatpush1.bf16.msra.mxu0 0
        %4476 = vmatprep.subr.bf16.mxu0 0
        %4477 = vmatpush1.bf16.msra.mxu0 0
        %4478 = vmatprep.subr.bf16.mxu0 0
        %4479 = vmatpush1.bf16.msra.mxu0 0
        %4480 = vmatprep.subr.bf16.mxu0 0
        %4481 = vmatpush1.bf16.msra.mxu0 0
        %4482 = vmatprep.subr.bf16.mxu0 0
        %4483 = vmatpush1.bf16.msra.mxu0 0
        %4484 = vmatprep.subr.bf16.mxu0 0
        %4485 = vmatpush1.bf16.msra.mxu0 0
        %4486 = vmatprep.subr.bf16.mxu0 0
        %4487 = vmatpush1.bf16.msra.mxu0 0
        %4488 = vmatprep.mubr.bf16.mxu0 0
        %4489 = vmatmul.mubr.bf16.gmra.mrb[0].mxu0 %v4454
        %v4490 = vpop.f32.mrb[0].mxu0
        %v4491 = vadd.f32 0.0, %v4490
        %v4492 = vpop.f32.mrb[0].mxu0
        %v4493 = vpop.f32.mrb[0].mxu0
        %v4494 = vpop.f32.mrb[0].mxu0
        %4495 = vdwg.mxu0
        %v4496 = vadd.f32 %v4008, %v4491
        %s4497 = scalar_lea.vmem %s3, 960
        %v4498 = vld [vmem:[%s4497] sm:$0xf]
        %v4499 = vld [vmem:[%s4497 + $0x4] sm:$0xf]
        %v4500 = vld [vmem:[%s4497 + $0x8] sm:$0xf]
        %v4501 = vld [vmem:[%s4497 + $0xc] sm:$0xf]
        %v4502 = vld [vmem:[%s4497 + $0x10] sm:$0xf]
        %v4503 = vld [vmem:[%s4497 + $0x14] sm:$0xf]
        %v4504 = vld [vmem:[%s4497 + $0x18] sm:$0xf]
        %v4505 = vld [vmem:[%s4497 + $0x1c] sm:$0xf]
        %v4506 = vld [vmem:[%s4497 + $0x20] sm:$0xf]
        %v4507 = vld [vmem:[%s4497 + $0x24] sm:$0xf]
        %v4508 = vld [vmem:[%s4497 + $0x28] sm:$0xf]
        %v4509 = vld [vmem:[%s4497 + $0x2c] sm:$0xf]
        %v4510 = vld [vmem:[%s4497 + $0x30] sm:$0xf]
        %v4511 = vld [vmem:[%s4497 + $0x34] sm:$0xf]
        %v4512 = vld [vmem:[%s4497 + $0x38] sm:$0xf]
        %v4513 = vld [vmem:[%s4497 + $0x3c] sm:$0xf]
        %v4530 = vunpack.c.l.b16 %v4498
        %v4531 = vunpack.c.l.b16 %v4499
        %v4532 = vunpack.c.l.b16 %v4500
        %v4533 = vunpack.c.l.b16 %v4501
        %v4534 = vunpack.c.l.b16 %v4502
        %v4535 = vunpack.c.l.b16 %v4503
        %v4536 = vunpack.c.l.b16 %v4504
        %v4537 = vunpack.c.l.b16 %v4505
        %v4538 = vunpack.c.l.b16 %v4506
        %v4539 = vunpack.c.l.b16 %v4507
        %v4540 = vunpack.c.l.b16 %v4508
        %v4541 = vunpack.c.l.b16 %v4509
        %v4542 = vunpack.c.l.b16 %v4510
        %v4543 = vunpack.c.l.b16 %v4511
        %v4544 = vunpack.c.l.b16 %v4512
        %v4545 = vunpack.c.l.b16 %v4513
        %v4546 = vpack.c.b16 %v4531, %v4530
        %v4547 = vpack.c.b16 %v4533, %v4532
        %v4548 = vpack.c.b16 %v4535, %v4534
        %v4549 = vpack.c.b16 %v4537, %v4536
        %v4550 = vpack.c.b16 %v4539, %v4538
        %v4551 = vpack.c.b16 %v4541, %v4540
        %v4552 = vpack.c.b16 %v4543, %v4542
        %v4553 = vpack.c.b16 %v4545, %v4544
        %4562 = vmatprep.subr.bf16.mxu0 0
        %4563 = vmatpush1.bf16.msra.mxu0 %v4546
        %4564 = vmatprep.subr.bf16.mxu0 0
        %4565 = vmatpush1.bf16.msra.mxu0 %v4547
        %4566 = vmatprep.subr.bf16.mxu0 0
        %4567 = vmatpush1.bf16.msra.mxu0 %v4548
        %4568 = vmatprep.subr.bf16.mxu0 0
        %4569 = vmatpush1.bf16.msra.mxu0 %v4549
        %4570 = vmatprep.subr.bf16.mxu0 0
        %4571 = vmatpush1.bf16.msra.mxu0 %v4550
        %4572 = vmatprep.subr.bf16.mxu0 0
        %4573 = vmatpush1.bf16.msra.mxu0 %v4551
        %4574 = vmatprep.subr.bf16.mxu0 0
        %4575 = vmatpush1.bf16.msra.mxu0 %v4552
        %4576 = vmatprep.subr.bf16.mxu0 0
        %4577 = vmatpush1.bf16.msra.mxu0 %v4553
        %4578 = vmatprep.subr.bf16.mxu0 0
        %4579 = vmatpush1.bf16.msra.mxu0 0
        %4580 = vmatprep.subr.bf16.mxu0 0
        %4581 = vmatpush1.bf16.msra.mxu0 0
        %4582 = vmatprep.subr.bf16.mxu0 0
        %4583 = vmatpush1.bf16.msra.mxu0 0
        %4584 = vmatprep.subr.bf16.mxu0 0
        %4585 = vmatpush1.bf16.msra.mxu0 0
        %4586 = vmatprep.subr.bf16.mxu0 0
        %4587 = vmatpush1.bf16.msra.mxu0 0
        %4588 = vmatprep.subr.bf16.mxu0 0
        %4589 = vmatpush1.bf16.msra.mxu0 0
        %4590 = vmatprep.subr.bf16.mxu0 0
        %4591 = vmatpush1.bf16.msra.mxu0 0
        %4592 = vmatprep.subr.bf16.mxu0 0
        %4593 = vmatpush1.bf16.msra.mxu0 0
        %4594 = vmatprep.mubr.bf16.mxu0 0
        %4595 = vmatmul.mubr.bf16.gmra.mrb[0].mxu0 %v3046
        %v4596 = vpop.f32.mrb[0].mxu0
        %v4597 = vadd.f32 0.0, %v4596
        %v4598 = vpop.f32.mrb[0].mxu0
        %v4599 = vpop.f32.mrb[0].mxu0
        %v4600 = vpop.f32.mrb[0].mxu0
        %4601 = vdwg.mxu0
        %s4602 = scalar_lea.vmem %s3, 1216
        %v4603 = vld [vmem:[%s4602] sm:$0xf]
        %v4604 = vld [vmem:[%s4602 + $0x4] sm:$0xf]
        %v4605 = vld [vmem:[%s4602 + $0x8] sm:$0xf]
        %v4606 = vld [vmem:[%s4602 + $0xc] sm:$0xf]
        %v4607 = vld [vmem:[%s4602 + $0x10] sm:$0xf]
        %v4608 = vld [vmem:[%s4602 + $0x14] sm:$0xf]
        %v4609 = vld [vmem:[%s4602 + $0x18] sm:$0xf]
        %v4610 = vld [vmem:[%s4602 + $0x1c] sm:$0xf]
        %v4611 = vld [vmem:[%s4602 + $0x20] sm:$0xf]
        %v4612 = vld [vmem:[%s4602 + $0x24] sm:$0xf]
        %v4613 = vld [vmem:[%s4602 + $0x28] sm:$0xf]
        %v4614 = vld [vmem:[%s4602 + $0x2c] sm:$0xf]
        %v4615 = vld [vmem:[%s4602 + $0x30] sm:$0xf]
        %v4616 = vld [vmem:[%s4602 + $0x34] sm:$0xf]
        %v4617 = vld [vmem:[%s4602 + $0x38] sm:$0xf]
        %v4618 = vld [vmem:[%s4602 + $0x3c] sm:$0xf]
        %v4635 = vunpack.c.l.b16 %v4603
        %v4636 = vunpack.c.l.b16 %v4604
        %v4637 = vunpack.c.l.b16 %v4605
        %v4638 = vunpack.c.l.b16 %v4606
        %v4639 = vunpack.c.l.b16 %v4607
        %v4640 = vunpack.c.l.b16 %v4608
        %v4641 = vunpack.c.l.b16 %v4609
        %v4642 = vunpack.c.l.b16 %v4610
        %v4643 = vunpack.c.l.b16 %v4611
        %v4644 = vunpack.c.l.b16 %v4612
        %v4645 = vunpack.c.l.b16 %v4613
        %v4646 = vunpack.c.l.b16 %v4614
        %v4647 = vunpack.c.l.b16 %v4615
        %v4648 = vunpack.c.l.b16 %v4616
        %v4649 = vunpack.c.l.b16 %v4617
        %v4650 = vunpack.c.l.b16 %v4618
        %v4651 = vpack.c.b16 %v4636, %v4635
        %v4652 = vpack.c.b16 %v4638, %v4637
        %v4653 = vpack.c.b16 %v4640, %v4639
        %v4654 = vpack.c.b16 %v4642, %v4641
        %v4655 = vpack.c.b16 %v4644, %v4643
        %v4656 = vpack.c.b16 %v4646, %v4645
        %v4657 = vpack.c.b16 %v4648, %v4647
        %v4658 = vpack.c.b16 %v4650, %v4649
        %4667 = vmatprep.subr.bf16.mxu0 0
        %4668 = vmatpush1.bf16.msra.mxu0 %v4651
        %4669 = vmatprep.subr.bf16.mxu0 0
        %4670 = vmatpush1.bf16.msra.mxu0 %v4652
        %4671 = vmatprep.subr.bf16.mxu0 0
        %4672 = vmatpush1.bf16.msra.mxu0 %v4653
        %4673 = vmatprep.subr.bf16.mxu0 0
        %4674 = vmatpush1.bf16.msra.mxu0 %v4654
        %4675 = vmatprep.subr.bf16.mxu0 0
        %4676 = vmatpush1.bf16.msra.mxu0 %v4655
        %4677 = vmatprep.subr.bf16.mxu0 0
        %4678 = vmatpush1.bf16.msra.mxu0 %v4656
        %4679 = vmatprep.subr.bf16.mxu0 0
        %4680 = vmatpush1.bf16.msra.mxu0 %v4657
        %4681 = vmatprep.subr.bf16.mxu0 0
        %4682 = vmatpush1.bf16.msra.mxu0 %v4658
        %4683 = vmatprep.subr.bf16.mxu0 0
        %4684 = vmatpush1.bf16.msra.mxu0 0
        %4685 = vmatprep.subr.bf16.mxu0 0
        %4686 = vmatpush1.bf16.msra.mxu0 0
        %4687 = vmatprep.subr.bf16.mxu0 0
        %4688 = vmatpush1.bf16.msra.mxu0 0
        %4689 = vmatprep.subr.bf16.mxu0 0
        %4690 = vmatpush1.bf16.msra.mxu0 0
        %4691 = vmatprep.subr.bf16.mxu0 0
        %4692 = vmatpush1.bf16.msra.mxu0 0
        %4693 = vmatprep.subr.bf16.mxu0 0
        %4694 = vmatpush1.bf16.msra.mxu0 0
        %4695 = vmatprep.subr.bf16.mxu0 0
        %4696 = vmatpush1.bf16.msra.mxu0 0
        %4697 = vmatprep.subr.bf16.mxu0 0
        %4698 = vmatpush1.bf16.msra.mxu0 0
        %4699 = vmatprep.mubr.bf16.mxu0 0
        %4700 = vmatmul.mubr.bf16.gmra.mrb[0].mxu0 %v3046
        %v4701 = vpop.f32.mrb[0].mxu0
        %v4702 = vadd.f32 0.0, %v4701
        %v4703 = vpop.f32.mrb[0].mxu0
        %v4704 = vpop.f32.mrb[0].mxu0
        %v4705 = vpop.f32.mrb[0].mxu0
        %4706 = vdwg.mxu0
        %s4707 = scalar_lea.vmem %s3, 1472
        %v4708 = vld [vmem:[%s4707] sm:$0xf]
        %v4709 = vld [vmem:[%s4707 + $0x4] sm:$0xf]
        %v4710 = vld [vmem:[%s4707 + $0x8] sm:$0xf]
        %v4711 = vld [vmem:[%s4707 + $0xc] sm:$0xf]
        %v4712 = vld [vmem:[%s4707 + $0x10] sm:$0xf]
        %v4713 = vld [vmem:[%s4707 + $0x14] sm:$0xf]
        %v4714 = vld [vmem:[%s4707 + $0x18] sm:$0xf]
        %v4715 = vld [vmem:[%s4707 + $0x1c] sm:$0xf]
        %v4716 = vld [vmem:[%s4707 + $0x20] sm:$0xf]
        %v4717 = vld [vmem:[%s4707 + $0x24] sm:$0xf]
        %v4718 = vld [vmem:[%s4707 + $0x28] sm:$0xf]
        %v4719 = vld [vmem:[%s4707 + $0x2c] sm:$0xf]
        %v4720 = vld [vmem:[%s4707 + $0x30] sm:$0xf]
        %v4721 = vld [vmem:[%s4707 + $0x34] sm:$0xf]
        %v4722 = vld [vmem:[%s4707 + $0x38] sm:$0xf]
        %v4723 = vld [vmem:[%s4707 + $0x3c] sm:$0xf]
        %v4740 = vunpack.c.l.b16 %v4708
        %v4741 = vunpack.c.l.b16 %v4709
        %v4742 = vunpack.c.l.b16 %v4710
        %v4743 = vunpack.c.l.b16 %v4711
        %v4744 = vunpack.c.l.b16 %v4712
        %v4745 = vunpack.c.l.b16 %v4713
        %v4746 = vunpack.c.l.b16 %v4714
        %v4747 = vunpack.c.l.b16 %v4715
        %v4748 = vunpack.c.l.b16 %v4716
        %v4749 = vunpack.c.l.b16 %v4717
        %v4750 = vunpack.c.l.b16 %v4718
        %v4751 = vunpack.c.l.b16 %v4719
        %v4752 = vunpack.c.l.b16 %v4720
        %v4753 = vunpack.c.l.b16 %v4721
        %v4754 = vunpack.c.l.b16 %v4722
        %v4755 = vunpack.c.l.b16 %v4723
        %v4756 = vpack.c.b16 %v4741, %v4740
        %v4757 = vpack.c.b16 %v4743, %v4742
        %v4758 = vpack.c.b16 %v4745, %v4744
        %v4759 = vpack.c.b16 %v4747, %v4746
        %v4760 = vpack.c.b16 %v4749, %v4748
        %v4761 = vpack.c.b16 %v4751, %v4750
        %v4762 = vpack.c.b16 %v4753, %v4752
        %v4763 = vpack.c.b16 %v4755, %v4754
        %4772 = vmatprep.subr.bf16.mxu0 0
        %4773 = vmatpush1.bf16.msra.mxu0 %v4756
        %4774 = vmatprep.subr.bf16.mxu0 0
        %4775 = vmatpush1.bf16.msra.mxu0 %v4757
        %4776 = vmatprep.subr.bf16.mxu0 0
        %4777 = vmatpush1.bf16.msra.mxu0 %v4758
        %4778 = vmatprep.subr.bf16.mxu0 0
        %4779 = vmatpush1.bf16.msra.mxu0 %v4759
        %4780 = vmatprep.subr.bf16.mxu0 0
        %4781 = vmatpush1.bf16.msra.mxu0 %v4760
        %4782 = vmatprep.subr.bf16.mxu0 0
        %4783 = vmatpush1.bf16.msra.mxu0 %v4761
        %4784 = vmatprep.subr.bf16.mxu0 0
        %4785 = vmatpush1.bf16.msra.mxu0 %v4762
        %4786 = vmatprep.subr.bf16.mxu0 0
        %4787 = vmatpush1.bf16.msra.mxu0 %v4763
        %4788 = vmatprep.subr.bf16.mxu0 0
        %4789 = vmatpush1.bf16.msra.mxu0 0
        %4790 = vmatprep.subr.bf16.mxu0 0
        %4791 = vmatpush1.bf16.msra.mxu0 0
        %4792 = vmatprep.subr.bf16.mxu0 0
        %4793 = vmatpush1.bf16.msra.mxu0 0
        %4794 = vmatprep.subr.bf16.mxu0 0
        %4795 = vmatpush1.bf16.msra.mxu0 0
        %4796 = vmatprep.subr.bf16.mxu0 0
        %4797 = vmatpush1.bf16.msra.mxu0 0
        %4798 = vmatprep.subr.bf16.mxu0 0
        %4799 = vmatpush1.bf16.msra.mxu0 0
        %4800 = vmatprep.subr.bf16.mxu0 0
        %4801 = vmatpush1.bf16.msra.mxu0 0
        %4802 = vmatprep.subr.bf16.mxu0 0
        %4803 = vmatpush1.bf16.msra.mxu0 0
        %4804 = vmatprep.mubr.bf16.mxu0 0
        %4805 = vmatmul.mubr.bf16.gmra.mrb[0].mxu0 %v3046
        %v4806 = vpop.f32.mrb[0].mxu0
        %v4807 = vadd.f32 0.0, %v4806
        %v4808 = vpop.f32.mrb[0].mxu0
        %v4809 = vpop.f32.mrb[0].mxu0
        %v4810 = vpop.f32.mrb[0].mxu0
        %4811 = vdwg.mxu0
        %v4812 = vpack.c.bf16 %v4597, %v4597
        %v4813 = vpack.c.bf16 %v4702, %v4702
        %v4815 = vsel %vm727, %v4812, 0
        %v4818 = vsel %vm727, %v4813, 0
        %4820 = vmatprep.subr.bf16.mxu0 0
        %4821 = vmatpush1.bf16.xpose.msra.mxu0 %v4818
        %4822 = vmatprep.subr.bf16.mxu0 0
        %4823 = vmatpush1.bf16.xpose.msra.mxu0 0
        %4824 = vmatprep.subr.bf16.mxu0 0
        %4825 = vmatpush1.bf16.xpose.msra.mxu0 0
        %4826 = vmatprep.subr.bf16.mxu0 0
        %4827 = vmatpush1.bf16.xpose.msra.mxu0 0
        %4828 = vmatprep.subr.bf16.mxu0 0
        %4829 = vmatpush1.bf16.xpose.msra.mxu0 0
        %4830 = vmatprep.subr.bf16.mxu0 0
        %4831 = vmatpush1.bf16.xpose.msra.mxu0 0
        %4832 = vmatprep.subr.bf16.mxu0 0
        %4833 = vmatpush1.bf16.xpose.msra.mxu0 0
        %4834 = vmatprep.subr.bf16.mxu0 0
        %4835 = vmatpush1.bf16.xpose.msra.mxu0 0
        %4836 = vmatprep.subr.bf16.mxu0 0
        %4837 = vmatpush1.bf16.xpose.msra.mxu0 0
        %4838 = vmatprep.subr.bf16.mxu0 0
        %4839 = vmatpush1.bf16.xpose.msra.mxu0 0
        %4840 = vmatprep.subr.bf16.mxu0 0
        %4841 = vmatpush1.bf16.xpose.msra.mxu0 0
        %4842 = vmatprep.subr.bf16.mxu0 0
        %4843 = vmatpush1.bf16.xpose.msra.mxu0 0
        %4844 = vmatprep.subr.bf16.mxu0 0
        %4845 = vmatpush1.bf16.xpose.msra.mxu0 0
        %4846 = vmatprep.subr.bf16.mxu0 0
        %4847 = vmatpush1.bf16.xpose.msra.mxu0 0
        %4848 = vmatprep.subr.bf16.mxu0 0
        %4849 = vmatpush1.bf16.xpose.msra.mxu0 0
        %4850 = vmatprep.subr.bf16.mxu0 0
        %4851 = vmatpush1.bf16.xpose.msra.mxu0 0
        %4852 = vmatprep.mubr.bf16.mxu0 0
        %4853 = vmatmul.mubr.bf16.gmra.mrb[0].mxu0 %v4815
        %v4854 = vpop.f32.mrb[0].mxu0
        %v4855 = vadd.f32 %v381, %v4854
        %v4856 = vpop.f32.mrb[0].mxu0
        %v4857 = vpop.f32.mrb[0].mxu0
        %v4858 = vpop.f32.mrb[0].mxu0
        %4859 = vdwg.mxu0
        %v4860 = vsel %vm774, %v4855, -inf
        %4861 = vmax.xlane.f32.xlu0 %v4860
        %v4862 = vpop.xlane.xlu0 %4861
        %v4863 = vsub.f32 %v4855, %v4862
        %v4864 = vmul.f32 %v4863, 1.442695
        %v4865 = vpow.pop %v4864
        %v4866 = vsel %vm774, %v4865, 0.0
        %4867 = vadd.xlane.f32.xlu0 %v4866
        %v4868 = vpop.xlane.xlu0 %4867
        %v4869 = vrcp.pop %v4868
        %v4870 = vmul.f32 %v4865, %v4869
        %v4871 = vpack.c.bf16 %v4870, %v4870
        %v4872 = vpack.c.bf16 %v4807, %v4807
        %v4874 = vsel %vm774, %v4871, 0
        %v4877 = vsel %vm791, %v4872, 0
        %4879 = vmatprep.subr.bf16.mxu0 0
        %4880 = vmatpush1.bf16.msra.mxu0 %v4877
        %4881 = vmatprep.subr.bf16.mxu0 0
        %4882 = vmatpush1.bf16.msra.mxu0 0
        %4883 = vmatprep.subr.bf16.mxu0 0
        %4884 = vmatpush1.bf16.msra.mxu0 0
        %4885 = vmatprep.subr.bf16.mxu0 0
        %4886 = vmatpush1.bf16.msra.mxu0 0
        %4887 = vmatprep.subr.bf16.mxu0 0
        %4888 = vmatpush1.bf16.msra.mxu0 0
        %4889 = vmatprep.subr.bf16.mxu0 0
        %4890 = vmatpush1.bf16.msra.mxu0 0
        %4891 = vmatprep.subr.bf16.mxu0 0
        %4892 = vmatpush1.bf16.msra.mxu0 0
        %4893 = vmatprep.subr.bf16.mxu0 0
        %4894 = vmatpush1.bf16.msra.mxu0 0
        %4895 = vmatprep.subr.bf16.mxu0 0
        %4896 = vmatpush1.bf16.msra.mxu0 0
        %4897 = vmatprep.subr.bf16.mxu0 0
        %4898 = vmatpush1.bf16.msra.mxu0 0
        %4899 = vmatprep.subr.bf16.mxu0 0
        %4900 = vmatpush1.bf16.msra.mxu0 0
        %4901 = vmatprep.subr.bf16.mxu0 0
        %4902 = vmatpush1.bf16.msra.mxu0 0
        %4903 = vmatprep.subr.bf16.mxu0 0
        %4904 = vmatpush1.bf16.msra.mxu0 0
        %4905 = vmatprep.subr.bf16.mxu0 0
        %4906 = vmatpush1.bf16.msra.mxu0 0
        %4907 = vmatprep.subr.bf16.mxu0 0
        %4908 = vmatpush1.bf16.msra.mxu0 0
        %4909 = vmatprep.subr.bf16.mxu0 0
        %4910 = vmatpush1.bf16.msra.mxu0 0
        %4911 = vmatprep.mubr.bf16.mxu0 0
        %4912 = vmatmul.mubr.bf16.gmra.mrb[0].mxu0 %v4874
        %v4913 = vpop.f32.mrb[0].mxu0
        %v4914 = vadd.f32 0.0, %v4913
        %v4915 = vpop.f32.mrb[0].mxu0
        %v4916 = vpop.f32.mrb[0].mxu0
        %v4917 = vpop.f32.mrb[0].mxu0
        %4918 = vdwg.mxu0
        %v4919 = vpack.c.bf16 %v4914, %v4914
        %s4920 = scalar_lea.vmem %s4, 112
        %v4921 = vld [vmem:[%s4920] sm:$0xf]
        %v4922 = vld [vmem:[%s4920 + $0x4] sm:$0xf]
        %v4923 = vld [vmem:[%s4920 + $0x8] sm:$0xf]
        %v4924 = vld [vmem:[%s4920 + $0xc] sm:$0xf]
        %v4929 = vunpack.c.l.b16 %v4921
        %v4930 = vunpack.c.l.b16 %v4922
        %v4931 = vunpack.c.l.b16 %v4923
        %v4932 = vunpack.c.l.b16 %v4924
        %v4933 = vpack.c.b16 %v4930, %v4929
        %v4934 = vpack.c.b16 %v4932, %v4931
        %v4938 = vsel %vm727, %v4919, 0
        %4940 = vmatprep.subr.bf16.mxu0 0
        %4941 = vmatpush1.bf16.msra.mxu0 %v4933
        %4942 = vmatprep.subr.bf16.mxu0 0
        %4943 = vmatpush1.bf16.msra.mxu0 %v4934
        %4944 = vmatprep.subr.bf16.mxu0 0
        %4945 = vmatpush1.bf16.msra.mxu0 0
        %4946 = vmatprep.subr.bf16.mxu0 0
        %4947 = vmatpush1.bf16.msra.mxu0 0
        %4948 = vmatprep.subr.bf16.mxu0 0
        %4949 = vmatpush1.bf16.msra.mxu0 0
        %4950 = vmatprep.subr.bf16.mxu0 0
        %4951 = vmatpush1.bf16.msra.mxu0 0
        %4952 = vmatprep.subr.bf16.mxu0 0
        %4953 = vmatpush1.bf16.msra.mxu0 0
        %4954 = vmatprep.subr.bf16.mxu0 0
        %4955 = vmatpush1.bf16.msra.mxu0 0
        %4956 = vmatprep.subr.bf16.mxu0 0
        %4957 = vmatpush1.bf16.msra.mxu0 0
        %4958 = vmatprep.subr.bf16.mxu0 0
        %4959 = vmatpush1.bf16.msra.mxu0 0
        %4960 = vmatprep.subr.bf16.mxu0 0
        %4961 = vmatpush1.bf16.msra.mxu0 0
        %4962 = vmatprep.subr.bf16.mxu0 0
        %4963 = vmatpush1.bf16.msra.mxu0 0
        %4964 = vmatprep.subr.bf16.mxu0 0
        %4965 = vmatpush1.bf16.msra.mxu0 0
        %4966 = vmatprep.subr.bf16.mxu0 0
        %4967 = vmatpush1.bf16.msra.mxu0 0
        %4968 = vmatprep.subr.bf16.mxu0 0
        %4969 = vmatpush1.bf16.msra.mxu0 0
        %4970 = vmatprep.subr.bf16.mxu0 0
        %4971 = vmatpush1.bf16.msra.mxu0 0
        %4972 = vmatprep.mubr.bf16.mxu0 0
        %4973 = vmatmul.mubr.bf16.gmra.mrb[0].mxu0 %v4938
        %v4974 = vpop.f32.mrb[0].mxu0
        %v4975 = vadd.f32 0.0, %v4974
        %v4976 = vpop.f32.mrb[0].mxu0
        %v4977 = vpop.f32.mrb[0].mxu0
        %v4978 = vpop.f32.mrb[0].mxu0
        %4979 = vdwg.mxu0
        %v4980 = vadd.f32 %v4496, %v4975
        %v4981 = vadd.f32 %v3018, %v4980
        %v4982 = vlaneseq
        %v4983 = vshrl.u32 %v4982, 7
        %v4984 = vsub.s32 0, %v4983
        %v4985 = vrot.slane %v3023, %v4984
        %v4986 = vadd.f32 %v4981, %v4985
        %4987 = vadd.xlane.f32.xlu0 %v4986
        %v4988 = vpop.xlane.xlu0 %4987
        %v4989 = vmul.f32 %v4988, %v390
        %v4990 = vsub.f32 %v4986, %v4989
        %v4991 = vmul.f32 %v4990, %v4990
        %4992 = vadd.xlane.f32.xlu0 %v4991
        %v4993 = vpop.xlane.xlu0 %4992
        %v4994 = vmul.f32 %v4993, %v390
        %v4995 = vadd.f32 %v4994, 1e-05
        %v4996 = vrsqrt.pop %v4995
        %v4997 = vmul.f32 %v4990, %v4996
        %v4998 = vlaneseq
        %v4999 = vshrl.u32 %v4998, 7
        %v5000 = vsub.s32 0, %v4999
        %v5001 = vrot.slane %v3021, %v5000
        %v5002 = vmul.f32 %v4997, %v5001
        %v5003 = vlaneseq
        %v5004 = vshrl.u32 %v5003, 7
        %v5005 = vsub.s32 0, %v5004
        %v5006 = vrot.slane %v3022, %v5005
        %v5007 = vadd.f32 %v5002, %v5006
        %v5008 = vpack.c.bf16 %v5007, %v5007
        %s5009 = scalar_lea.vmem %s5, 256
        %v5010 = vld [vmem:[%s5009] sm:$0xff]
        %v5011 = vld [vmem:[%s5009 + $0x8] sm:$0xff]
        %v5012 = vld [vmem:[%s5009 + $0x10] sm:$0xff]
        %v5013 = vld [vmem:[%s5009 + $0x18] sm:$0xff]
        %v5014 = vld [vmem:[%s5009 + $0x20] sm:$0xff]
        %v5015 = vld [vmem:[%s5009 + $0x28] sm:$0xff]
        %v5016 = vld [vmem:[%s5009 + $0x30] sm:$0xff]
        %v5017 = vld [vmem:[%s5009 + $0x38] sm:$0xff]
        %v5018 = vld [vmem:[%s5009 + $0x40] sm:$0xff]
        %v5019 = vld [vmem:[%s5009 + $0x48] sm:$0xff]
        %v5020 = vld [vmem:[%s5009 + $0x50] sm:$0xff]
        %v5021 = vld [vmem:[%s5009 + $0x58] sm:$0xff]
        %v5022 = vld [vmem:[%s5009 + $0x60] sm:$0xff]
        %v5023 = vld [vmem:[%s5009 + $0x68] sm:$0xff]
        %v5024 = vld [vmem:[%s5009 + $0x70] sm:$0xff]
        %v5025 = vld [vmem:[%s5009 + $0x78] sm:$0xff]
        %v5026 = vld [vmem:[%s5009 + $0x80] sm:$0xff]
        %v5027 = vld [vmem:[%s5009 + $0x88] sm:$0xff]
        %v5028 = vld [vmem:[%s5009 + $0x90] sm:$0xff]
        %v5029 = vld [vmem:[%s5009 + $0x98] sm:$0xff]
        %v5030 = vld [vmem:[%s5009 + $0xa0] sm:$0xff]
        %v5031 = vld [vmem:[%s5009 + $0xa8] sm:$0xff]
        %v5032 = vld [vmem:[%s5009 + $0xb0] sm:$0xff]
        %v5033 = vld [vmem:[%s5009 + $0xb8] sm:$0xff]
        %v5034 = vld [vmem:[%s5009 + $0xc0] sm:$0xff]
        %v5035 = vld [vmem:[%s5009 + $0xc8] sm:$0xff]
        %v5036 = vld [vmem:[%s5009 + $0xd0] sm:$0xff]
        %v5037 = vld [vmem:[%s5009 + $0xd8] sm:$0xff]
        %v5038 = vld [vmem:[%s5009 + $0xe0] sm:$0xff]
        %v5039 = vld [vmem:[%s5009 + $0xe8] sm:$0xff]
        %v5040 = vld [vmem:[%s5009 + $0xf0] sm:$0xff]
        %v5041 = vld [vmem:[%s5009 + $0xf8] sm:$0xff]
        %s5042 = scalar_lea.vmem %s7, 4
        %v5043 = vld [vmem:[%s5042] sm:$0xf]
        %v5045 = vlaneseq
        %v5046 = vshrl.u32 %v5045, 7
        %v5047 = vsub.s32 0, %v5046
        %v5048 = vrot.slane %v5043, %v5047
        %v5049 = vlaneseq
        %v5050 = vshrl.u32 %v5049, 7
        %v5051 = vsub.s32 1, %v5050
        %v5052 = vrot.slane %v5043, %v5051
        %v5053 = vlaneseq
        %v5054 = vshrl.u32 %v5053, 7
        %v5055 = vsub.s32 2, %v5054
        %v5056 = vrot.slane %v5043, %v5055
        %v5057 = vlaneseq
        %v5058 = vshrl.u32 %v5057, 7
        %v5059 = vsub.s32 3, %v5058
        %v5060 = vrot.slane %v5043, %v5059
        %v5097 = vunpack.c.l.b16 %v5010
        %v5098 = vunpack.c.h.b16 %v5010
        %v5099 = vunpack.c.l.b16 %v5011
        %v5100 = vunpack.c.h.b16 %v5011
        %v5101 = vunpack.c.l.b16 %v5012
        %v5102 = vunpack.c.h.b16 %v5012
        %v5103 = vunpack.c.l.b16 %v5013
        %v5104 = vunpack.c.h.b16 %v5013
        %v5105 = vunpack.c.l.b16 %v5014
        %v5106 = vunpack.c.h.b16 %v5014
        %v5107 = vunpack.c.l.b16 %v5015
        %v5108 = vunpack.c.h.b16 %v5015
        %v5109 = vunpack.c.l.b16 %v5016
        %v5110 = vunpack.c.h.b16 %v5016
        %v5111 = vunpack.c.l.b16 %v5017
        %v5112 = vunpack.c.h.b16 %v5017
        %v5113 = vunpack.c.l.b16 %v5018
        %v5114 = vunpack.c.h.b16 %v5018
        %v5115 = vunpack.c.l.b16 %v5019
        %v5116 = vunpack.c.h.b16 %v5019
        %v5117 = vunpack.c.l.b16 %v5020
        %v5118 = vunpack.c.h.b16 %v5020
        %v5119 = vunpack.c.l.b16 %v5021
        %v5120 = vunpack.c.h.b16 %v5021
        %v5121 = vunpack.c.l.b16 %v5022
        %v5122 = vunpack.c.h.b16 %v5022
        %v5123 = vunpack.c.l.b16 %v5023
        %v5124 = vunpack.c.h.b16 %v5023
        %v5125 = vunpack.c.l.b16 %v5024
        %v5126 = vunpack.c.h.b16 %v5024
        %v5127 = vunpack.c.l.b16 %v5025
        %v5128 = vunpack.c.h.b16 %v5025
        %v5129 = vunpack.c.l.b16 %v5026
        %v5130 = vunpack.c.h.b16 %v5026
        %v5131 = vunpack.c.l.b16 %v5027
        %v5132 = vunpack.c.h.b16 %v5027
        %v5133 = vunpack.c.l.b16 %v5028
        %v5134 = vunpack.c.h.b16 %v5028
        %v5135 = vunpack.c.l.b16 %v5029
        %v5136 = vunpack.c.h.b16 %v5029
        %v5137 = vunpack.c.l.b16 %v5030
        %v5138 = vunpack.c.h.b16 %v5030
        %v5139 = vunpack.c.l.b16 %v5031
        %v5140 = vunpack.c.h.b16 %v5031
        %v5141 = vunpack.c.l.b16 %v5032
        %v5142 = vunpack.c.h.b16 %v5032
        %v5143 = vunpack.c.l.b16 %v5033
        %v5144 = vunpack.c.h.b16 %v5033
        %v5145 = vunpack.c.l.b16 %v5034
        %v5146 = vunpack.c.h.b16 %v5034
        %v5147 = vunpack.c.l.b16 %v5035
        %v5148 = vunpack.c.h.b16 %v5035
        %v5149 = vunpack.c.l.b16 %v5036
        %v5150 = vunpack.c.h.b16 %v5036
        %v5151 = vunpack.c.l.b16 %v5037
        %v5152 = vunpack.c.h.b16 %v5037
        %v5153 = vunpack.c.l.b16 %v5038
        %v5154 = vunpack.c.h.b16 %v5038
        %v5155 = vunpack.c.l.b16 %v5039
        %v5156 = vunpack.c.h.b16 %v5039
        %v5157 = vunpack.c.l.b16 %v5040
        %v5158 = vunpack.c.h.b16 %v5040
        %v5159 = vunpack.c.l.b16 %v5041
        %v5160 = vunpack.c.h.b16 %v5041
        %v5161 = vpack.c.b16 %v5101, %v5097
        %v5162 = vpack.c.b16 %v5102, %v5098
        %v5163 = vpack.c.b16 %v5103, %v5099
        %v5164 = vpack.c.b16 %v5104, %v5100
        %v5165 = vpack.c.b16 %v5109, %v5105
        %v5166 = vpack.c.b16 %v5110, %v5106
        %v5167 = vpack.c.b16 %v5111, %v5107
        %v5168 = vpack.c.b16 %v5112, %v5108
        %v5169 = vpack.c.b16 %v5117, %v5113
        %v5170 = vpack.c.b16 %v5118, %v5114
        %v5171 = vpack.c.b16 %v5119, %v5115
        %v5172 = vpack.c.b16 %v5120, %v5116
        %v5173 = vpack.c.b16 %v5125, %v5121
        %v5174 = vpack.c.b16 %v5126, %v5122
        %v5175 = vpack.c.b16 %v5127, %v5123
        %v5176 = vpack.c.b16 %v5128, %v5124
        %v5177 = vpack.c.b16 %v5133, %v5129
        %v5178 = vpack.c.b16 %v5134, %v5130
        %v5179 = vpack.c.b16 %v5135, %v5131
        %v5180 = vpack.c.b16 %v5136, %v5132
        %v5181 = vpack.c.b16 %v5141, %v5137
        %v5182 = vpack.c.b16 %v5142, %v5138
        %v5183 = vpack.c.b16 %v5143, %v5139
        %v5184 = vpack.c.b16 %v5144, %v5140
        %v5185 = vpack.c.b16 %v5149, %v5145
        %v5186 = vpack.c.b16 %v5150, %v5146
        %v5187 = vpack.c.b16 %v5151, %v5147
        %v5188 = vpack.c.b16 %v5152, %v5148
        %v5189 = vpack.c.b16 %v5157, %v5153
        %v5190 = vpack.c.b16 %v5158, %v5154
        %v5191 = vpack.c.b16 %v5159, %v5155
        %v5192 = vpack.c.b16 %v5160, %v5156
        %5225 = vmatprep.subr.bf16.mxu0 %v5162
        %5226 = vmatpush1.bf16.msra.mxu0 %v5161
        %5227 = vmatprep.subr.bf16.mxu0 %v5166
        %5228 = vmatpush1.bf16.msra.mxu0 %v5165
        %5229 = vmatprep.subr.bf16.mxu0 %v5170
        %5230 = vmatpush1.bf16.msra.mxu0 %v5169
        %5231 = vmatprep.subr.bf16.mxu0 %v5174
        %5232 = vmatpush1.bf16.msra.mxu0 %v5173
        %5233 = vmatprep.subr.bf16.mxu0 %v5178
        %5234 = vmatpush1.bf16.msra.mxu0 %v5177
        %5235 = vmatprep.subr.bf16.mxu0 %v5182
        %5236 = vmatpush1.bf16.msra.mxu0 %v5181
        %5237 = vmatprep.subr.bf16.mxu0 %v5186
        %5238 = vmatpush1.bf16.msra.mxu0 %v5185
        %5239 = vmatprep.subr.bf16.mxu0 %v5190
        %5240 = vmatpush1.bf16.msra.mxu0 %v5189
        %5241 = vmatprep.subr.bf16.mxu0 0
        %5242 = vmatpush1.bf16.msra.mxu0 0
        %5243 = vmatprep.subr.bf16.mxu0 0
        %5244 = vmatpush1.bf16.msra.mxu0 0
        %5245 = vmatprep.subr.bf16.mxu0 0
        %5246 = vmatpush1.bf16.msra.mxu0 0
        %5247 = vmatprep.subr.bf16.mxu0 0
        %5248 = vmatpush1.bf16.msra.mxu0 0
        %5249 = vmatprep.subr.bf16.mxu0 0
        %5250 = vmatpush1.bf16.msra.mxu0 0
        %5251 = vmatprep.subr.bf16.mxu0 0
        %5252 = vmatpush1.bf16.msra.mxu0 0
        %5253 = vmatprep.subr.bf16.mxu0 0
        %5254 = vmatpush1.bf16.msra.mxu0 0
        %5255 = vmatprep.subr.bf16.mxu0 0
        %5256 = vmatpush1.bf16.msra.mxu0 0
        %5257 = vmatprep.mubr.bf16.mxu0 0
        %5258 = vmatmul.mubr.bf16.gmra.mrb[0].mxu0 %v5008
        %v5259 = vpop.f32.mrb[0].mxu0
        %v5260 = vadd.f32 %v5048, %v5259
        %v5261 = vpop.f32.mrb[0].mxu0
        %v5262 = vadd.f32 %v5052, %v5261
        %v5263 = vpop.f32.mrb[0].mxu0
        %v5264 = vpop.f32.mrb[0].mxu0
        %5265 = vdwg.mxu0
        %5266 = vmatprep.subr.bf16.mxu0 %v5164
        %5267 = vmatpush1.bf16.msra.mxu0 %v5163
        %5268 = vmatprep.subr.bf16.mxu0 %v5168
        %5269 = vmatpush1.bf16.msra.mxu0 %v5167
        %5270 = vmatprep.subr.bf16.mxu0 %v5172
        %5271 = vmatpush1.bf16.msra.mxu0 %v5171
        %5272 = vmatprep.subr.bf16.mxu0 %v5176
        %5273 = vmatpush1.bf16.msra.mxu0 %v5175
        %5274 = vmatprep.subr.bf16.mxu0 %v5180
        %5275 = vmatpush1.bf16.msra.mxu0 %v5179
        %5276 = vmatprep.subr.bf16.mxu0 %v5184
        %5277 = vmatpush1.bf16.msra.mxu0 %v5183
        %5278 = vmatprep.subr.bf16.mxu0 %v5188
        %5279 = vmatpush1.bf16.msra.mxu0 %v5187
        %5280 = vmatprep.subr.bf16.mxu0 %v5192
        %5281 = vmatpush1.bf16.msra.mxu0 %v5191
        %5282 = vmatprep.subr.bf16.mxu0 0
        %5283 = vmatpush1.bf16.msra.mxu0 0
        %5284 = vmatprep.subr.bf16.mxu0 0
        %5285 = vmatpush1.bf16.msra.mxu0 0
        %5286 = vmatprep.subr.bf16.mxu0 0
        %5287 = vmatpush1.bf16.msra.mxu0 0
        %5288 = vmatprep.subr.bf16.mxu0 0
        %5289 = vmatpush1.bf16.msra.mxu0 0
        %5290 = vmatprep.subr.bf16.mxu0 0
        %5291 = vmatpush1.bf16.msra.mxu0 0
        %5292 = vmatprep.subr.bf16.mxu0 0
        %5293 = vmatpush1.bf16.msra.mxu0 0
        %5294 = vmatprep.subr.bf16.mxu0 0
        %5295 = vmatpush1.bf16.msra.mxu0 0
        %5296 = vmatprep.subr.bf16.mxu0 0
        %5297 = vmatpush1.bf16.msra.mxu0 0
        %5298 = vmatprep.mubr.bf16.mxu0 0
        %5299 = vmatmul.mubr.bf16.gmra.mrb[0].mxu0 %v5008
        %v5300 = vpop.f32.mrb[0].mxu0
        %v5301 = vadd.f32 %v5056, %v5300
        %v5302 = vpop.f32.mrb[0].mxu0
        %v5303 = vadd.f32 %v5060, %v5302
        %v5304 = vpop.f32.mrb[0].mxu0
        %v5305 = vpop.f32.mrb[0].mxu0
        %5306 = vdwg.mxu0
        %v5307 = vmax.f32 %v5260, 0.0
        %v5308 = vmax.f32 %v5262, 0.0
        %v5309 = vmax.f32 %v5301, 0.0
        %v5310 = vmax.f32 %v5303, 0.0
        %v5311 = vpack.c.bf16 %v5307, %v5307
        %v5312 = vpack.c.bf16 %v5308, %v5308
        %v5313 = vpack.c.bf16 %v5309, %v5309
        %v5314 = vpack.c.bf16 %v5310, %v5310
        %s5315 = scalar_lea.vmem %s6, 256
        %v5316 = vld [vmem:[%s5315] sm:$0xf]
        %v5317 = vld [vmem:[%s5315 + $0x4] sm:$0xf]
        %v5318 = vld [vmem:[%s5315 + $0x8] sm:$0xf]
        %v5319 = vld [vmem:[%s5315 + $0xc] sm:$0xf]
        %v5320 = vld [vmem:[%s5315 + $0x10] sm:$0xf]
        %v5321 = vld [vmem:[%s5315 + $0x14] sm:$0xf]
        %v5322 = vld [vmem:[%s5315 + $0x18] sm:$0xf]
        %v5323 = vld [vmem:[%s5315 + $0x1c] sm:$0xf]
        %v5324 = vld [vmem:[%s5315 + $0x20] sm:$0xf]
        %v5325 = vld [vmem:[%s5315 + $0x24] sm:$0xf]
        %v5326 = vld [vmem:[%s5315 + $0x28] sm:$0xf]
        %v5327 = vld [vmem:[%s5315 + $0x2c] sm:$0xf]
        %v5328 = vld [vmem:[%s5315 + $0x30] sm:$0xf]
        %v5329 = vld [vmem:[%s5315 + $0x34] sm:$0xf]
        %v5330 = vld [vmem:[%s5315 + $0x38] sm:$0xf]
        %v5331 = vld [vmem:[%s5315 + $0x3c] sm:$0xf]
        %v5332 = vld [vmem:[%s5315 + $0x40] sm:$0xf]
        %v5333 = vld [vmem:[%s5315 + $0x44] sm:$0xf]
        %v5334 = vld [vmem:[%s5315 + $0x48] sm:$0xf]
        %v5335 = vld [vmem:[%s5315 + $0x4c] sm:$0xf]
        %v5336 = vld [vmem:[%s5315 + $0x50] sm:$0xf]
        %v5337 = vld [vmem:[%s5315 + $0x54] sm:$0xf]
        %v5338 = vld [vmem:[%s5315 + $0x58] sm:$0xf]
        %v5339 = vld [vmem:[%s5315 + $0x5c] sm:$0xf]
        %v5340 = vld [vmem:[%s5315 + $0x60] sm:$0xf]
        %v5341 = vld [vmem:[%s5315 + $0x64] sm:$0xf]
        %v5342 = vld [vmem:[%s5315 + $0x68] sm:$0xf]
        %v5343 = vld [vmem:[%s5315 + $0x6c] sm:$0xf]
        %v5344 = vld [vmem:[%s5315 + $0x70] sm:$0xf]
        %v5345 = vld [vmem:[%s5315 + $0x74] sm:$0xf]
        %v5346 = vld [vmem:[%s5315 + $0x78] sm:$0xf]
        %v5347 = vld [vmem:[%s5315 + $0x7c] sm:$0xf]
        %v5348 = vld [vmem:[%s5315 + $0x80] sm:$0xf]
        %v5349 = vld [vmem:[%s5315 + $0x84] sm:$0xf]
        %v5350 = vld [vmem:[%s5315 + $0x88] sm:$0xf]
        %v5351 = vld [vmem:[%s5315 + $0x8c] sm:$0xf]
        %v5352 = vld [vmem:[%s5315 + $0x90] sm:$0xf]
        %v5353 = vld [vmem:[%s5315 + $0x94] sm:$0xf]
        %v5354 = vld [vmem:[%s5315 + $0x98] sm:$0xf]
        %v5355 = vld [vmem:[%s5315 + $0x9c] sm:$0xf]
        %v5356 = vld [vmem:[%s5315 + $0xa0] sm:$0xf]
        %v5357 = vld [vmem:[%s5315 + $0xa4] sm:$0xf]
        %v5358 = vld [vmem:[%s5315 + $0xa8] sm:$0xf]
        %v5359 = vld [vmem:[%s5315 + $0xac] sm:$0xf]
        %v5360 = vld [vmem:[%s5315 + $0xb0] sm:$0xf]
        %v5361 = vld [vmem:[%s5315 + $0xb4] sm:$0xf]
        %v5362 = vld [vmem:[%s5315 + $0xb8] sm:$0xf]
        %v5363 = vld [vmem:[%s5315 + $0xbc] sm:$0xf]
        %v5364 = vld [vmem:[%s5315 + $0xc0] sm:$0xf]
        %v5365 = vld [vmem:[%s5315 + $0xc4] sm:$0xf]
        %v5366 = vld [vmem:[%s5315 + $0xc8] sm:$0xf]
        %v5367 = vld [vmem:[%s5315 + $0xcc] sm:$0xf]
        %v5368 = vld [vmem:[%s5315 + $0xd0] sm:$0xf]
        %v5369 = vld [vmem:[%s5315 + $0xd4] sm:$0xf]
        %v5370 = vld [vmem:[%s5315 + $0xd8] sm:$0xf]
        %v5371 = vld [vmem:[%s5315 + $0xdc] sm:$0xf]
        %v5372 = vld [vmem:[%s5315 + $0xe0] sm:$0xf]
        %v5373 = vld [vmem:[%s5315 + $0xe4] sm:$0xf]
        %v5374 = vld [vmem:[%s5315 + $0xe8] sm:$0xf]
        %v5375 = vld [vmem:[%s5315 + $0xec] sm:$0xf]
        %v5376 = vld [vmem:[%s5315 + $0xf0] sm:$0xf]
        %v5377 = vld [vmem:[%s5315 + $0xf4] sm:$0xf]
        %v5378 = vld [vmem:[%s5315 + $0xf8] sm:$0xf]
        %v5379 = vld [vmem:[%s5315 + $0xfc] sm:$0xf]
        %v5380 = vlaneseq
        %v5381 = vshrl.u32 %v5380, 7
        %v5382 = vsub.s32 0, %v5381
        %v5383 = vrot.slane %v3024, %v5382
        %v5448 = vunpack.c.l.b16 %v5316
        %v5449 = vunpack.c.l.b16 %v5317
        %v5450 = vunpack.c.l.b16 %v5318
        %v5451 = vunpack.c.l.b16 %v5319
        %v5452 = vunpack.c.l.b16 %v5320
        %v5453 = vunpack.c.l.b16 %v5321
        %v5454 = vunpack.c.l.b16 %v5322
        %v5455 = vunpack.c.l.b16 %v5323
        %v5456 = vunpack.c.l.b16 %v5324
        %v5457 = vunpack.c.l.b16 %v5325
        %v5458 = vunpack.c.l.b16 %v5326
        %v5459 = vunpack.c.l.b16 %v5327
        %v5460 = vunpack.c.l.b16 %v5328
        %v5461 = vunpack.c.l.b16 %v5329
        %v5462 = vunpack.c.l.b16 %v5330
        %v5463 = vunpack.c.l.b16 %v5331
        %v5464 = vunpack.c.l.b16 %v5332
        %v5465 = vunpack.c.l.b16 %v5333
        %v5466 = vunpack.c.l.b16 %v5334
        %v5467 = vunpack.c.l.b16 %v5335
        %v5468 = vunpack.c.l.b16 %v5336
        %v5469 = vunpack.c.l.b16 %v5337
        %v5470 = vunpack.c.l.b16 %v5338
        %v5471 = vunpack.c.l.b16 %v5339
        %v5472 = vunpack.c.l.b16 %v5340
        %v5473 = vunpack.c.l.b16 %v5341
        %v5474 = vunpack.c.l.b16 %v5342
        %v5475 = vunpack.c.l.b16 %v5343
        %v5476 = vunpack.c.l.b16 %v5344
        %v5477 = vunpack.c.l.b16 %v5345
        %v5478 = vunpack.c.l.b16 %v5346
        %v5479 = vunpack.c.l.b16 %v5347
        %v5480 = vunpack.c.l.b16 %v5348
        %v5481 = vunpack.c.l.b16 %v5349
        %v5482 = vunpack.c.l.b16 %v5350
        %v5483 = vunpack.c.l.b16 %v5351
        %v5484 = vunpack.c.l.b16 %v5352
        %v5485 = vunpack.c.l.b16 %v5353
        %v5486 = vunpack.c.l.b16 %v5354
        %v5487 = vunpack.c.l.b16 %v5355
        %v5488 = vunpack.c.l.b16 %v5356
        %v5489 = vunpack.c.l.b16 %v5357
        %v5490 = vunpack.c.l.b16 %v5358
        %v5491 = vunpack.c.l.b16 %v5359
        %v5492 = vunpack.c.l.b16 %v5360
        %v5493 = vunpack.c.l.b16 %v5361
        %v5494 = vunpack.c.l.b16 %v5362
        %v5495 = vunpack.c.l.b16 %v5363
        %v5496 = vunpack.c.l.b16 %v5364
        %v5497 = vunpack.c.l.b16 %v5365
        %v5498 = vunpack.c.l.b16 %v5366
        %v5499 = vunpack.c.l.b16 %v5367
        %v5500 = vunpack.c.l.b16 %v5368
        %v5501 = vunpack.c.l.b16 %v5369
        %v5502 = vunpack.c.l.b16 %v5370
        %v5503 = vunpack.c.l.b16 %v5371
        %v5504 = vunpack.c.l.b16 %v5372
        %v5505 = vunpack.c.l.b16 %v5373
        %v5506 = vunpack.c.l.b16 %v5374
        %v5507 = vunpack.c.l.b16 %v5375
        %v5508 = vunpack.c.l.b16 %v5376
        %v5509 = vunpack.c.l.b16 %v5377
        %v5510 = vunpack.c.l.b16 %v5378
        %v5511 = vunpack.c.l.b16 %v5379
        %v5512 = vpack.c.b16 %v5449, %v5448
        %v5513 = vpack.c.b16 %v5451, %v5450
        %v5514 = vpack.c.b16 %v5453, %v5452
        %v5515 = vpack.c.b16 %v5455, %v5454
        %v5516 = vpack.c.b16 %v5457, %v5456
        %v5517 = vpack.c.b16 %v5459, %v5458
        %v5518 = vpack.c.b16 %v5461, %v5460
        %v5519 = vpack.c.b16 %v5463, %v5462
        %v5520 = vpack.c.b16 %v5465, %v5464
        %v5521 = vpack.c.b16 %v5467, %v5466
        %v5522 = vpack.c.b16 %v5469, %v5468
        %v5523 = vpack.c.b16 %v5471, %v5470
        %v5524 = vpack.c.b16 %v5473, %v5472
        %v5525 = vpack.c.b16 %v5475, %v5474
        %v5526 = vpack.c.b16 %v5477, %v5476
        %v5527 = vpack.c.b16 %v5479, %v5478
        %v5528 = vpack.c.b16 %v5481, %v5480
        %v5529 = vpack.c.b16 %v5483, %v5482
        %v5530 = vpack.c.b16 %v5485, %v5484
        %v5531 = vpack.c.b16 %v5487, %v5486
        %v5532 = vpack.c.b16 %v5489, %v5488
        %v5533 = vpack.c.b16 %v5491, %v5490
        %v5534 = vpack.c.b16 %v5493, %v5492
        %v5535 = vpack.c.b16 %v5495, %v5494
        %v5536 = vpack.c.b16 %v5497, %v5496
        %v5537 = vpack.c.b16 %v5499, %v5498
        %v5538 = vpack.c.b16 %v5501, %v5500
        %v5539 = vpack.c.b16 %v5503, %v5502
        %v5540 = vpack.c.b16 %v5505, %v5504
        %v5541 = vpack.c.b16 %v5507, %v5506
        %v5542 = vpack.c.b16 %v5509, %v5508
        %v5543 = vpack.c.b16 %v5511, %v5510
        %5576 = vmatprep.subr.bf16.mxu0 0
        %5577 = vmatpush1.bf16.msra.mxu0 %v5512
        %5578 = vmatprep.subr.bf16.mxu0 0
        %5579 = vmatpush1.bf16.msra.mxu0 %v5513
        %5580 = vmatprep.subr.bf16.mxu0 0
        %5581 = vmatpush1.bf16.msra.mxu0 %v5514
        %5582 = vmatprep.subr.bf16.mxu0 0
        %5583 = vmatpush1.bf16.msra.mxu0 %v5515
        %5584 = vmatprep.subr.bf16.mxu0 0
        %5585 = vmatpush1.bf16.msra.mxu0 %v5516
        %5586 = vmatprep.subr.bf16.mxu0 0
        %5587 = vmatpush1.bf16.msra.mxu0 %v5517
        %5588 = vmatprep.subr.bf16.mxu0 0
        %5589 = vmatpush1.bf16.msra.mxu0 %v5518
        %5590 = vmatprep.subr.bf16.mxu0 0
        %5591 = vmatpush1.bf16.msra.mxu0 %v5519
        %5592 = vmatprep.subr.bf16.mxu0 0
        %5593 = vmatpush1.bf16.msra.mxu0 %v5520
        %5594 = vmatprep.subr.bf16.mxu0 0
        %5595 = vmatpush1.bf16.msra.mxu0 %v5521
        %5596 = vmatprep.subr.bf16.mxu0 0
        %5597 = vmatpush1.bf16.msra.mxu0 %v5522
        %5598 = vmatprep.subr.bf16.mxu0 0
        %5599 = vmatpush1.bf16.msra.mxu0 %v5523
        %5600 = vmatprep.subr.bf16.mxu0 0
        %5601 = vmatpush1.bf16.msra.mxu0 %v5524
        %5602 = vmatprep.subr.bf16.mxu0 0
        %5603 = vmatpush1.bf16.msra.mxu0 %v5525
        %5604 = vmatprep.subr.bf16.mxu0 0
        %5605 = vmatpush1.bf16.msra.mxu0 %v5526
        %5606 = vmatprep.subr.bf16.mxu0 0
        %5607 = vmatpush1.bf16.msra.mxu0 %v5527
        %5608 = vmatprep.mubr.bf16.mxu0 %v5312
        %5609 = vmatmul.mubr.bf16.gmra.mrb[0].mxu0 %v5311
        %v5610 = vpop.f32.mrb[0].mxu0
        %v5611 = vadd.f32 %v5383, %v5610
        %v5612 = vpop.f32.mrb[0].mxu0
        %v5613 = vpop.f32.mrb[0].mxu0
        %v5614 = vpop.f32.mrb[0].mxu0
        %5615 = vdwg.mxu0
        %5616 = vmatprep.subr.bf16.mxu0 0
        %5617 = vmatpush1.bf16.msra.mxu0 %v5528
        %5618 = vmatprep.subr.bf16.mxu0 0
        %5619 = vmatpush1.bf16.msra.mxu0 %v5529
        %5620 = vmatprep.subr.bf16.mxu0 0
        %5621 = vmatpush1.bf16.msra.mxu0 %v5530
        %5622 = vmatprep.subr.bf16.mxu0 0
        %5623 = vmatpush1.bf16.msra.mxu0 %v5531
        %5624 = vmatprep.subr.bf16.mxu0 0
        %5625 = vmatpush1.bf16.msra.mxu0 %v5532
        %5626 = vmatprep.subr.bf16.mxu0 0
        %5627 = vmatpush1.bf16.msra.mxu0 %v5533
        %5628 = vmatprep.subr.bf16.mxu0 0
        %5629 = vmatpush1.bf16.msra.mxu0 %v5534
        %5630 = vmatprep.subr.bf16.mxu0 0
        %5631 = vmatpush1.bf16.msra.mxu0 %v5535
        %5632 = vmatprep.subr.bf16.mxu0 0
        %5633 = vmatpush1.bf16.msra.mxu0 %v5536
        %5634 = vmatprep.subr.bf16.mxu0 0
        %5635 = vmatpush1.bf16.msra.mxu0 %v5537
        %5636 = vmatprep.subr.bf16.mxu0 0
        %5637 = vmatpush1.bf16.msra.mxu0 %v5538
        %5638 = vmatprep.subr.bf16.mxu0 0
        %5639 = vmatpush1.bf16.msra.mxu0 %v5539
        %5640 = vmatprep.subr.bf16.mxu0 0
        %5641 = vmatpush1.bf16.msra.mxu0 %v5540
        %5642 = vmatprep.subr.bf16.mxu0 0
        %5643 = vmatpush1.bf16.msra.mxu0 %v5541
        %5644 = vmatprep.subr.bf16.mxu0 0
        %5645 = vmatpush1.bf16.msra.mxu0 %v5542
        %5646 = vmatprep.subr.bf16.mxu0 0
        %5647 = vmatpush1.bf16.msra.mxu0 %v5543
        %5648 = vmatprep.mubr.bf16.mxu0 %v5314
        %5649 = vmatmul.mubr.bf16.gmra.mrb[0].mxu0 %v5313
        %v5650 = vpop.f32.mrb[0].mxu0
        %v5651 = vadd.f32 %v5611, %v5650
        %v5652 = vpop.f32.mrb[0].mxu0
        %v5653 = vpop.f32.mrb[0].mxu0
        %v5654 = vpop.f32.mrb[0].mxu0
        %5655 = vdwg.mxu0
        %v5656 = vadd.f32 %v4986, %v5651
        %v5657 = vld [vmem:[%s8 + $0xc] sm:$0x1]
        %v5658 = vld [vmem:[%s8 + $0xd] sm:$0x1]
        %v5659 = vld [vmem:[%s8 + $0xe] sm:$0x1]
        %5660 = vadd.xlane.f32.xlu0 %v5656
        %v5661 = vpop.xlane.xlu0 %5660
        %v5662 = vmul.f32 %v5661, %v390
        %v5663 = vsub.f32 %v5656, %v5662
        %v5664 = vmul.f32 %v5663, %v5663
        %5665 = vadd.xlane.f32.xlu0 %v5664
        %v5666 = vpop.xlane.xlu0 %5665
        %v5667 = vmul.f32 %v5666, %v390
        %v5668 = vadd.f32 %v5667, 1e-05
        %v5669 = vrsqrt.pop %v5668
        %v5670 = vmul.f32 %v5663, %v5669
        %v5671 = vlaneseq
        %v5672 = vshrl.u32 %v5671, 7
        %v5673 = vsub.s32 0, %v5672
        %v5674 = vrot.slane %v5657, %v5673
        %v5675 = vmul.f32 %v5670, %v5674
        %v5676 = vlaneseq
        %v5677 = vshrl.u32 %v5676, 7
        %v5678 = vsub.s32 0, %v5677
        %v5679 = vrot.slane %v5658, %v5678
        %v5680 = vadd.f32 %v5675, %v5679
        %v5681 = vpack.c.bf16 %v5680, %v5680
        %v5682 = vld [vmem:[%s9] sm:$0xf]
        %v5683 = vld [vmem:[%s9 + $0x4] sm:$0xf]
        %v5684 = vld [vmem:[%s9 + $0x8] sm:$0xf]
        %v5685 = vld [vmem:[%s9 + $0xc] sm:$0xf]
        %v5686 = vld [vmem:[%s9 + $0x10] sm:$0xf]
        %v5687 = vld [vmem:[%s9 + $0x14] sm:$0xf]
        %v5688 = vld [vmem:[%s9 + $0x18] sm:$0xf]
        %v5689 = vld [vmem:[%s9 + $0x1c] sm:$0xf]
        %v5690 = vld [vmem:[%s9 + $0x20] sm:$0xf]
        %v5691 = vld [vmem:[%s9 + $0x24] sm:$0xf]
        %v5692 = vld [vmem:[%s9 + $0x28] sm:$0xf]
        %v5693 = vld [vmem:[%s9 + $0x2c] sm:$0xf]
        %v5694 = vld [vmem:[%s9 + $0x30] sm:$0xf]
        %v5695 = vld [vmem:[%s9 + $0x34] sm:$0xf]
        %v5696 = vld [vmem:[%s9 + $0x38] sm:$0xf]
        %v5697 = vld [vmem:[%s9 + $0x3c] sm:$0xf]
        %v5698 = vlaneseq
        %v5699 = vshrl.u32 %v5698, 7
        %v5700 = vsub.s32 0, %v5699
        %v5701 = vrot.slane %v5659, %v5700
        %v5718 = vunpack.c.l.b16 %v5682
        %v5719 = vunpack.c.l.b16 %v5683
        %v5720 = vunpack.c.l.b16 %v5684
        %v5721 = vunpack.c.l.b16 %v5685
        %v5722 = vunpack.c.l.b16 %v5686
        %v5723 = vunpack.c.l.b16 %v5687
        %v5724 = vunpack.c.l.b16 %v5688
        %v5725 = vunpack.c.l.b16 %v5689
        %v5726 = vunpack.c.l.b16 %v5690
        %v5727 = vunpack.c.l.b16 %v5691
        %v5728 = vunpack.c.l.b16 %v5692
        %v5729 = vunpack.c.l.b16 %v5693
        %v5730 = vunpack.c.l.b16 %v5694
        %v5731 = vunpack.c.l.b16 %v5695
        %v5732 = vunpack.c.l.b16 %v5696
        %v5733 = vunpack.c.l.b16 %v5697
        %v5734 = vpack.c.b16 %v5719, %v5718
        %v5735 = vpack.c.b16 %v5721, %v5720
        %v5736 = vpack.c.b16 %v5723, %v5722
        %v5737 = vpack.c.b16 %v5725, %v5724
        %v5738 = vpack.c.b16 %v5727, %v5726
        %v5739 = vpack.c.b16 %v5729, %v5728
        %v5740 = vpack.c.b16 %v5731, %v5730
        %v5741 = vpack.c.b16 %v5733, %v5732
        %5750 = vmatprep.subr.bf16.mxu0 0
        %5751 = vmatpush1.bf16.msra.mxu0 %v5734
        %5752 = vmatprep.subr.bf16.mxu0 0
        %5753 = vmatpush1.bf16.msra.mxu0 %v5735
        %5754 = vmatprep.subr.bf16.mxu0 0
        %5755 = vmatpush1.bf16.msra.mxu0 %v5736
        %5756 = vmatprep.subr.bf16.mxu0 0
        %5757 = vmatpush1.bf16.msra.mxu0 %v5737
        %5758 = vmatprep.subr.bf16.mxu0 0
        %5759 = vmatpush1.bf16.msra.mxu0 %v5738
        %5760 = vmatprep.subr.bf16.mxu0 0
        %5761 = vmatpush1.bf16.msra.mxu0 %v5739
        %5762 = vmatprep.subr.bf16.mxu0 0
        %5763 = vmatpush1.bf16.msra.mxu0 %v5740
        %5764 = vmatprep.subr.bf16.mxu0 0
        %5765 = vmatpush1.bf16.msra.mxu0 %v5741
        %5766 = vmatprep.subr.bf16.mxu0 0
        %5767 = vmatpush1.bf16.msra.mxu0 0
        %5768 = vmatprep.subr.bf16.mxu0 0
        %5769 = vmatpush1.bf16.msra.mxu0 0
        %5770 = vmatprep.subr.bf16.mxu0 0
        %5771 = vmatpush1.bf16.msra.mxu0 0
        %5772 = vmatprep.subr.bf16.mxu0 0
        %5773 = vmatpush1.bf16.msra.mxu0 0
        %5774 = vmatprep.subr.bf16.mxu0 0
        %5775 = vmatpush1.bf16.msra.mxu0 0
        %5776 = vmatprep.subr.bf16.mxu0 0
        %5777 = vmatpush1.bf16.msra.mxu0 0
        %5778 = vmatprep.subr.bf16.mxu0 0
        %5779 = vmatpush1.bf16.msra.mxu0 0
        %5780 = vmatprep.subr.bf16.mxu0 0
        %5781 = vmatpush1.bf16.msra.mxu0 0
        %5782 = vmatprep.mubr.bf16.mxu0 0
        %5783 = vmatmul.mubr.bf16.gmra.mrb[0].mxu0 %v5681
        %v5784 = vpop.f32.mrb[0].mxu0
        %v5785 = vadd.f32 %v5701, %v5784
        %v5786 = vpop.f32.mrb[0].mxu0
        %v5787 = vpop.f32.mrb[0].mxu0
        %v5788 = vpop.f32.mrb[0].mxu0
        %5789 = vdwg.mxu0
        %5790 = vst [vmem:[%s317] sm:$0xff] %v5785
        %s5791 = sand.u32 %s227, 1
        %s5792 = scalar_lea.sflag [#allocation6], %s5791
        %s5793 = sand.u32 %s227, 1
        %s5794 = smul.addr %s5793, 8
        %s5795 = scalar_lea.vmem [#allocation5], %s5794
        // Predicated region
        $region57: #{transformer_forward.1} parent=55 // pred_check
          %p5796 = pneg %p237
        $region58: #{transformer_forward.1} parent=55 // pred_check_branch
          %5798 = sbr.rel (%p5796) target = $region60
        $region59: #{transformer_forward.1} parent=55 // pred_region
          %s5800 = ssub.s32 128, 128
          %5801 = vsyncadd %s5792, %s5800
          %s5802 = smul.addr %s30, 128
          %s5803 = scalar_lea.hbm %s10, %s5802
          %s5805 = sshll.u32 %s5795, 4
          %s5806 = int_to_ptr.vmem [resolvable:$true] %s5805
          %5808 = dma.vmem_to_hbm [thread:$0]  %s5806, 128, %s5803, %s5792
        $region60: #{transformer_forward.1} parent=55 // pred_fallthru
          _
      $region56: #{transformer_forward.1} parent=5 // pred_fallthru
        _
      %p5809 = scmp.le.s32.totalorder 2, %s25
      // Predicated region
      $region61: #{transformer_forward.1} parent=5 // pred_check
        %p5810 = pneg %p5809
      $region62: #{transformer_forward.1} parent=5 // pred_check_branch
        %5812 = sbr.rel (%p5810) target = $region64
      $region63: #{transformer_forward.1} parent=5 // pred_region
        %s5813 = ssub.s32 %s25, 2
        // Predicated region
        $region65: #{transformer_forward.1} parent=63 // pred_check
          %p5814 = pneg %p243
        $region66: #{transformer_forward.1} parent=63 // pred_check_branch
          %5816 = sbr.rel (%p5814) target = $region68
        $region67: #{transformer_forward.1} parent=63 // pred_region
          %s5817 = sand.u32 %s228, 1
          %s5818 = scalar_lea.sflag [#allocation6], %s5817
          %s5819 = sand.u32 %s228, 1
          %s5820 = smul.addr %s5819, 8
          %s5821 = scalar_lea.vmem [#allocation5], %s5820
          %5822 = dma.done %s5818, 128
        $region68: #{transformer_forward.1} parent=63 // pred_fallthru
          _
      $region64: #{transformer_forward.1} parent=5 // pred_fallthru
        _
    $region6: #{transformer_forward.1} parent=1 // loop_footer
      %s29 = sadd.s32 1, %s25
    $region7: #{transformer_forward.1} parent=1 // loop_footer_branch
      %24 = sbr.rel target = $region3
    $region8: #{transformer_forward.1} parent=1 // loop_exit
      _
    %5823 = vsyncpa [#allocation6], 1
    %s5824 = scalar_lea.sflag [#allocation6], 1
    %5825 = vsyncpa %s5824, 1

</llo_original>
